<compile_context>
chip_gen: v6e
topology: v6e:2x2x1
jax: 0.10.0
libtpu: 0.0.40
codegen_flags: <defaults>
</compile_context>

<pallas_src>
import math
import jax
import jax.numpy as jnp
import numpy as np
from jax.experimental import pallas as pl
from jax.experimental.pallas import tpu as pltpu

LN_EPS = 1e-12
NEG_BIAS = -1e9                      # finite "-inf": exp(x + NEG_BIAS - max) underflows to exactly 0
_VMEM_LIMIT = 32 * 1024 * 1024       # fits v7x (64 MiB physical) as well as v5e/v6e
_HI = jax.lax.Precision.HIGHEST


# ----------------------------- tile sizing helpers -----------------------------

def _pick_row_tile(m, row_bytes, target_bytes=2 << 20, cap=512):
    """Largest divisor of m that is a multiple of 8 (f32 sublane) and fits the VMEM budget."""
    limit = max(1, min(cap, target_bytes // max(row_bytes, 1), m))
    for tm in range(limit, 0, -1):
        if m % tm == 0 and tm % 8 == 0:
            return tm
    return m            # fall back to the full extent (always a legal block shape)


def _pick_col_tile(n, cap=1024):
    """Lane-dense output tile: multiple of 128 if n is tiled, else the full extent."""
    if n <= cap:
        return n
    for tn in range(cap, 127, -1):
        if n % tn == 0 and tn % 128 == 0:
            return tn
    return n


def _pick_group_tile(g, l, e, target_bytes=1 << 19, cap=256):
    """How many (batch, segment) attention groups to process per grid step."""
    row = l * e * 4
    limit = max(1, min(cap, target_bytes // max(row, 1), g))
    for gb in range(limit, 0, -1):
        if g % gb == 0:
            return gb
    return 1


# ----------------------------- Pallas kernels -----------------------------

def _add_ln_kernel(x_ref, p_ref, g_ref, b_ref, o_ref):
    # embeddings: word + position, then LayerNorm (token-type contribution is 0)
    x = x_ref[0] + p_ref[...]                                   # (ts, H)
    mu = jnp.mean(x, axis=-1, keepdims=True)
    var = jnp.mean(jnp.square(x - mu), axis=-1, keepdims=True)
    o_ref[0] = (x - mu) * jax.lax.rsqrt(var + LN_EPS) * g_ref[...] + b_ref[...]


def _linear_ln_kernel(x_ref, w_ref, b_ref, g_ref, beta_ref, o_ref):
    # fused Linear + bias + LayerNorm epilogue (no intermediate HBM round trip)
    y = jnp.dot(x_ref[...], w_ref[...], preferred_element_type=jnp.float32) + b_ref[...]
    mu = jnp.mean(y, axis=-1, keepdims=True)
    var = jnp.mean(jnp.square(y - mu), axis=-1, keepdims=True)
    o_ref[...] = (y - mu) * jax.lax.rsqrt(var + LN_EPS) * g_ref[...] + beta_ref[...]


def _linear_bias_kernel(x_ref, w_ref, b_ref, o_ref):
    o_ref[...] = jnp.dot(x_ref[...], w_ref[...],
                         preferred_element_type=jnp.float32) + b_ref[...]


def _make_fused_attn_kernel(n_head):
    def kernel(x_ref, w_ref, bias_ref, o_ref):
        gb, L, E = x_ref.shape                                  # gb (batch,segment) groups per step
        d = E // n_head
        inv_sqrt_d = 1.0 / math.sqrt(d)
        x = x_ref[...]                                          # (gb, L, E)
        # shared projection: the reference applies q_proj to q, k AND v.
        proj = jnp.dot(x.reshape(gb * L, E), w_ref[...],
                       preferred_element_type=jnp.float32).reshape(gb, L, E)
        bias = bias_ref[...]                                    # (gb, 1, L): 0.0 valid / NEG_BIAS padded
        # any valid key in the group?  fully-masked group -> 0 (matches nan_to_num semantics)
        valid = (jnp.max(bias, axis=-1, keepdims=True) >= 0.0).astype(jnp.float32)  # (gb,1,1)
        for h in range(n_head):                                 # static unroll over heads
            ph = proj[:, :, h * d:(h + 1) * d]                  # (gb, L, d) lane slice
            s = jnp.einsum('gqd,gkd->gqk', ph * inv_sqrt_d, ph,
                           preferred_element_type=jnp.float32)  # (gb, L, L)
            s = s + bias                                        # additive key-padding bias
            m = jnp.max(s, axis=-1, keepdims=True)
            e = jnp.exp(s - m)
            denom = jnp.sum(e, axis=-1, keepdims=True)
            p = (e * pl.reciprocal(denom, approx=True)) * valid
            o_ref[:, :, h * d:(h + 1) * d] = jnp.einsum(
                'gqk,gkd->gqd', p, ph, preferred_element_type=jnp.float32)
    return kernel


# ----------------------------- Pallas wrappers -----------------------------

def embed_ln_pallas(word, pos, gamma, beta):
    B, S, H = word.shape
    ts = _pick_row_tile(S, H * 4)
    return pl.pallas_call(
        _add_ln_kernel,
        out_shape=jax.ShapeDtypeStruct((B, S, H), jnp.float32),
        grid=(B, S // ts),
        in_specs=[pl.BlockSpec((1, ts, H), lambda b, s: (b, s, 0)),
                  pl.BlockSpec((ts, H), lambda b, s: (s, 0)),
                  pl.BlockSpec((1, H), lambda b, s: (0, 0)),
                  pl.BlockSpec((1, H), lambda b, s: (0, 0))],
        out_specs=pl.BlockSpec((1, ts, H), lambda b, s: (b, s, 0)),
        compiler_params=pltpu.CompilerParams(
            dimension_semantics=("parallel", "parallel"),
            vmem_limit_bytes=_VMEM_LIMIT),
    )(word, pos, gamma.reshape(1, H), beta.reshape(1, H))


def linear_ln_pallas(x, w, b, gamma, beta):
    M, K = x.shape
    N = w.shape[1]
    tm = _pick_row_tile(M, max(K, N) * 4)
    return pl.pallas_call(
        _linear_ln_kernel,
        out_shape=jax.ShapeDtypeStruct((M, N), jnp.float32),
        grid=(M // tm,),
        in_specs=[pl.BlockSpec((tm, K), lambda i: (i, 0)),
                  pl.BlockSpec((K, N), lambda i: (0, 0)),
                  pl.BlockSpec((1, N), lambda i: (0, 0)),
                  pl.BlockSpec((1, N), lambda i: (0, 0)),
                  pl.BlockSpec((1, N), lambda i: (0, 0))],
        out_specs=pl.BlockSpec((tm, N), lambda i: (i, 0)),
        compiler_params=pltpu.CompilerParams(
            dimension_semantics=("parallel",), vmem_limit_bytes=_VMEM_LIMIT),
    )(x, w, b.reshape(1, N), gamma.reshape(1, N), beta.reshape(1, N))


def linear_pallas(x, w, b):
    M, K = x.shape
    N = w.shape[1]
    tn = _pick_col_tile(N)
    tm = _pick_row_tile(M, max(K, tn) * 4)
    return pl.pallas_call(
        _linear_bias_kernel,
        out_shape=jax.ShapeDtypeStruct((M, N), jnp.float32),
        grid=(M // tm, N // tn),
        in_specs=[pl.BlockSpec((tm, K), lambda i, j: (i, 0)),
                  pl.BlockSpec((K, tn), lambda i, j: (0, j)),
                  pl.BlockSpec((1, tn), lambda i, j: (0, j))],
        out_specs=pl.BlockSpec((tm, tn), lambda i, j: (i, j)),
        compiler_params=pltpu.CompilerParams(
            dimension_semantics=("parallel", "parallel"),
            vmem_limit_bytes=_VMEM_LIMIT),
    )(x, w, b.reshape(1, N))


def fused_dilated_attn_pallas(xg, q_w, bias, n_head):
    # xg: (G, L, E) dilated segment rows; bias: (G, 1, L) additive key-padding bias.
    G, L, E = xg.shape
    gb = _pick_group_tile(G, L, E)
    return pl.pallas_call(
        _make_fused_attn_kernel(n_head),
        out_shape=jax.ShapeDtypeStruct((G, L, E), jnp.float32),
        grid=(G // gb,),
        in_specs=[pl.BlockSpec((gb, L, E), lambda g: (g, 0, 0)),
                  pl.BlockSpec((E, E), lambda g: (0, 0)),
                  pl.BlockSpec((gb, 1, L), lambda g: (g, 0, 0))],
        out_specs=pl.BlockSpec((gb, L, E), lambda g: (g, 0, 0)),
        compiler_params=pltpu.CompilerParams(
            dimension_semantics=("parallel",), vmem_limit_bytes=_VMEM_LIMIT),
    )(xg, q_w, bias)


# ----------------------------- dilated MHA glue (Pallas path) -----------------------------

def dilated_mha_pallas(x, kpm, q_w, n_head, seg_sizes, dil_rates):
    B, S, E = x.shape
    ncfg = len(seg_sizes)
    out = None
    for seg, dil in zip(seg_sizes, dil_rates):
        pad = (-S) % seg
        Sp = S + pad
        xp = jnp.pad(x, ((0, 0), (0, pad), (0, 0))) if pad else x
        kp = jnp.pad(kpm, ((0, 0), (0, pad))) if pad else kpm        # pads with False (attendable zeros)
        ns = Sp // seg
        L = -(-seg // dil)                                           # len(range(0, seg, dil))
        if dil == 1:
            xg = xp.reshape(B * ns, seg, E)
            maskd = kp.reshape(B * ns, 1, seg)
        else:
            xg = xp.reshape(B, ns, seg, E)[:, :, ::dil, :].reshape(B * ns, L, E)
            maskd = kp.reshape(B, ns, seg)[:, :, ::dil].reshape(B * ns, 1, L)
        bias = jnp.where(maskd, NEG_BIAS, 0.0).astype(jnp.float32)
        o = fused_dilated_attn_pallas(xg, q_w, bias, n_head)         # (B*ns, L, E)
        if dil == 1:
            attn = o.reshape(B, Sp, E)
        else:
            # re-expand dilated rows without a scatter: pad a new "dil" axis and reshape.
            o5 = o.reshape(B, ns, L, 1, E)
            full = jnp.pad(o5, ((0, 0), (0, 0), (0, 0), (0, dil - 1), (0, 0)))
            attn = full.reshape(B, ns, L * dil, E)[:, :, :seg, :].reshape(B, Sp, E)
        if pad:
            attn = attn[:, :S, :]
        contrib = attn / ncfg
        out = contrib if out is None else out + contrib
    return out


# ----------------------------- pure-JAX reference (for checking) -----------------------------

def layernorm_ref(x, w, b):
    mu = jnp.mean(x, -1, keepdims=True)
    var = jnp.mean(jnp.square(x - mu), -1, keepdims=True)
    return (x - mu) * jax.lax.rsqrt(var + LN_EPS) * w + b


def linear_ref(x, w, b):
    return jnp.dot(x, w, precision=_HI) + b


def dilated_mha_ref(x, kpm, q_w, n_head, seg_sizes, dil_rates):
    # mirrors the PyTorch code: -inf masking, softmax, nan_to_num, scatter back.
    B, S, E = x.shape
    d = E // n_head
    ncfg = len(seg_sizes)
    out = None
    for seg, dil in zip(seg_sizes, dil_rates):
        pad = (-S) % seg
        Sp = S + pad
        xp = jnp.pad(x, ((0, 0), (0, pad), (0, 0))) if pad else x
        kp = jnp.pad(kpm, ((0, 0), (0, pad))) if pad else kpm
        ns = Sp // seg
        xs = xp.reshape(B, ns, seg, E)[:, :, ::dil, :]               # (B, ns, L, E)
        L = xs.shape[2]
        proj = jnp.einsum('bnle,ef->bnlf', xs, q_w, precision=_HI)   # q_proj applied to q, k and v
        qh = proj.reshape(B, ns, L, n_head, d).transpose(0, 3, 1, 2, 4)   # (B,h,ns,L,d)
        s = jnp.einsum('bhnld,bhnmd->bhnlm', qh, qh, precision=_HI) / math.sqrt(d)
        m = kp.reshape(B, ns, seg)[:, :, ::dil]                      # (B,ns,L) bool
        s = jnp.where(m[:, None, :, None, :], -jnp.inf, s)
        p = jnp.nan_to_num(jax.nn.softmax(s, axis=-1))
        o = jnp.einsum('bhnlm,bhnmd->bhnld', p, qh, precision=_HI)
        o = o.transpose(0, 2, 3, 1, 4)                               # (B,ns,L,h,d)
        full = jnp.zeros((B, ns, seg, n_head, d), jnp.float32).at[:, :, ::dil].set(o)
        attn = full.reshape(B, Sp, E)[:, :S, :]
        contrib = attn / ncfg
        out = contrib if out is None else out + contrib
    return out


# ----------------------------- model forward -----------------------------

def forward(params, input_ids, attention_mask, cfg, *, use_pallas=True):
    B, S = input_ids.shape
    H = cfg['hidden_size']
    word = jnp.take(params['word_emb'], input_ids, axis=0)           # embedding gather stays in XLA
    pos = params['pos_emb'][:S]                                      # token_type_ids is None -> 0
    if use_pallas:
        x = embed_ln_pallas(word, pos, params['emb_ln_w'], params['emb_ln_b'])
    else:
        x = layernorm_ref(word + pos[None], params['emb_ln_w'], params['emb_ln_b'])
    kpm = (attention_mask == 0)                                      # ~attention_mask.bool()
    mha = dilated_mha_pallas if use_pallas else dilated_mha_ref
    for lyr in params['layers']:
        attn = mha(x, kpm, lyr['q_w'], cfg['num_attention_heads'],
                   cfg['segment_size'], cfg['dilated_rate'])
        if use_pallas:
            y = linear_ln_pallas(attn.reshape(B * S, H), lyr['out_w'], lyr['out_b'],
                                 lyr['out_ln_w'], lyr['out_ln_b'])
        else:
            y = layernorm_ref(linear_ref(attn.reshape(B * S, H), lyr['out_w'], lyr['out_b']),
                              lyr['out_ln_w'], lyr['out_ln_b'])
        x = y.reshape(B, S, H)                                       # NOTE: no residual (as in reference)
    head = linear_pallas if use_pallas else linear_ref
    logits = head(x.reshape(B * S, H), params['head_w'], params['head_b'])
    return logits.reshape(B, S, -1)                                  # Model returns (loss=None, logits)


# ----------------------------- main -----------------------------

if __name__ == "__main__":
    cfg = dict(vocab_size=64, hidden_size=32, max_position_embeddings=32,
               num_attention_heads=4, num_hidden_layers=2,
               segment_size=(8, 12, 16), dilated_rate=(1, 2, 3))
    H, V, P = cfg['hidden_size'], cfg['vocab_size'], cfg['max_position_embeddings']

    key = jax.random.PRNGKey(0)
    ks = jax.random.split(key, 20)

    def nrm(k, shape, scale=0.02):
        return scale * jax.random.normal(k, shape, jnp.float32)

    params = dict(
        word_emb=nrm(ks[0], (V, H)).at[0].set(0.0),    # padding_idx = 0
        pos_emb=nrm(ks[1], (P, H)),
        emb_ln_w=1.0 + nrm(ks[2], (H,), 0.1),
        emb_ln_b=nrm(ks[3], (H,), 0.1),
        layers=[],
        head_w=nrm(ks[4], (H, V)),
        head_b=nrm(ks[5], (V,), 0.02),
    )
    for i in range(cfg['num_hidden_layers']):
        kq, kw, kb, kg, k2 = jax.random.split(ks[6 + i], 5)
        params['layers'].append(dict(
            q_w=nrm(kq, (H, H)),                       # stored as (in, out): y = x @ q_w
            out_w=nrm(kw, (H, H)),
            out_b=nrm(kb, (H,), 0.02),
            out_ln_w=1.0 + nrm(kg, (H,), 0.1),
            out_ln_b=nrm(k2, (H,), 0.1),
        ))

    B, S = 2, 16
    input_ids = jax.random.randint(ks[12], (B, S), 1, V, dtype=jnp.int32)
    # batch 0: second half fully padded -> exercises the fully-masked-segment path.
    attention_mask = jnp.ones((B, S), jnp.int32).at[0, 8:].set(0)

    fwd = jax.jit(lambda p, ids, m: forward(p, ids, m, cfg, use_pallas=True))
    logits = fwd(params, input_ids, attention_mask)
    jax.block_until_ready(logits)

    ref = forward(params, input_ids, attention_mask, cfg, use_pallas=False)
    np.testing.assert_allclose(np.asarray(logits), np.asarray(ref), rtol=3e-3, atol=3e-3)

    print("KERNEL_OK")
</pallas_src>

<mosaic_0001>
module attributes {stable_mosaic.version = 11 : i64} {
  func.func @_add_ln_kernel(%arg0: i32, %arg1: i32, %arg2: memref<1x16x32xf32, #tpu.memory_space<vmem>>, %arg3: memref<16x32xf32, #tpu.memory_space<vmem>>, %arg4: memref<1x32xf32, #tpu.memory_space<vmem>>, %arg5: memref<1x32xf32, #tpu.memory_space<vmem>>, %arg6: memref<1x16x32xf32, #tpu.memory_space<vmem>>) attributes {dimension_semantics = [#tpu.dimension_semantics<parallel>, #tpu.dimension_semantics<parallel>], iteration_bounds = array<i64: 2, 1>, scalar_prefetch = 0 : i64, scratch_operands = 0 : i64, tpu.core_type = #tpu.core_type<tc>, window_params = [{transform_indices = @transform_0, window_bounds = array<i64: 1, 16, 32>}, {transform_indices = @transform_1, window_bounds = array<i64: 16, 32>}, {pipeline_mode = #tpu.pipeline_mode<synchronous>, transform_indices = @transform_2, window_bounds = array<i64: 1, 32>}, {pipeline_mode = #tpu.pipeline_mode<synchronous>, transform_indices = @transform_3, window_bounds = array<i64: 1, 32>}, {transform_indices = @transform_4, window_bounds = array<i64: 1, 16, 32>}]} {
    %c0 = arith.constant 0 : index
    %c0_0 = arith.constant 0 : index
    %c0_1 = arith.constant 0 : index
    %0 = vector.load %arg2[%c0, %c0_0, %c0_1] : memref<1x16x32xf32, #tpu.memory_space<vmem>>, vector<1x16x32xf32>
    %1 = vector.shape_cast %0 : vector<1x16x32xf32> to vector<16x32xf32>
    %c0_2 = arith.constant 0 : index
    %c0_3 = arith.constant 0 : index
    %2 = vector.load %arg3[%c0_2, %c0_3] : memref<16x32xf32, #tpu.memory_space<vmem>>, vector<16x32xf32>
    %3 = arith.addf %1, %2 : vector<16x32xf32>
    %cst = arith.constant dense<0.000000e+00> : vector<16xf32>
    %4 = vector.multi_reduction <add>, %3, %cst [1] : vector<16x32xf32> to vector<16xf32>
    %5 = vector.shape_cast %4 : vector<16xf32> to vector<16x1xf32>
    %cst_4 = arith.constant 3.200000e+01 : f32
    %6 = vector.broadcast %cst_4 : f32 to vector<16x1xf32>
    %7 = arith.divf %5, %6 : vector<16x1xf32>
    %8 = vector.broadcast %7 : vector<16x1xf32> to vector<16x32xf32>
    %9 = arith.subf %3, %8 : vector<16x32xf32>
    %10 = arith.mulf %9, %9 : vector<16x32xf32>
    %cst_5 = arith.constant dense<0.000000e+00> : vector<16xf32>
    %11 = vector.multi_reduction <add>, %10, %cst_5 [1] : vector<16x32xf32> to vector<16xf32>
    %12 = vector.shape_cast %11 : vector<16xf32> to vector<16x1xf32>
    %cst_6 = arith.constant 3.200000e+01 : f32
    %13 = vector.broadcast %cst_6 : f32 to vector<16x1xf32>
    %14 = arith.divf %12, %13 : vector<16x1xf32>
    %15 = vector.broadcast %7 : vector<16x1xf32> to vector<16x32xf32>
    %16 = arith.subf %3, %15 : vector<16x32xf32>
    %cst_7 = arith.constant 9.99999996E-13 : f32
    %17 = vector.broadcast %cst_7 : f32 to vector<16x1xf32>
    %18 = arith.addf %14, %17 : vector<16x1xf32>
    %19 = math.rsqrt %18 : vector<16x1xf32>
    %20 = vector.broadcast %19 : vector<16x1xf32> to vector<16x32xf32>
    %21 = arith.mulf %16, %20 : vector<16x32xf32>
    %c0_8 = arith.constant 0 : index
    %c0_9 = arith.constant 0 : index
    %22 = vector.load %arg4[%c0_8, %c0_9] : memref<1x32xf32, #tpu.memory_space<vmem>>, vector<1x32xf32>
    %23 = vector.broadcast %22 : vector<1x32xf32> to vector<16x32xf32>
    %24 = arith.mulf %21, %23 : vector<16x32xf32>
    %c0_10 = arith.constant 0 : index
    %c0_11 = arith.constant 0 : index
    %25 = vector.load %arg5[%c0_10, %c0_11] : memref<1x32xf32, #tpu.memory_space<vmem>>, vector<1x32xf32>
    %26 = vector.broadcast %25 : vector<1x32xf32> to vector<16x32xf32>
    %27 = arith.addf %24, %26 : vector<16x32xf32>
    %c0_12 = arith.constant 0 : index
    %c0_13 = arith.constant 0 : index
    %c0_14 = arith.constant 0 : index
    %28 = vector.load %arg6[%c0_12, %c0_13, %c0_14] : memref<1x16x32xf32, #tpu.memory_space<vmem>>, vector<1x16x32xf32>
    %29 = vector.shape_cast %28 : vector<1x16x32xf32> to vector<16x32xf32>
    %30 = vector.shape_cast %27 : vector<16x32xf32> to vector<1x16x32xf32>
    tpu.vector_store %arg6[%c0_12, %c0_13, %c0_14], %30 {strides = array<i32>} : memref<1x16x32xf32, #tpu.memory_space<vmem>>, vector<1x16x32xf32>,
    return
  }
  func.func @transform_0(%arg0: i32, %arg1: i32) -> (i32, i32, i32) {
    %c0_i32 = arith.constant 0 : i32
    %c0_i32_0 = arith.constant 0 : i32
    return %arg0, %arg1, %c0_i32 : i32, i32, i32
  }
  func.func @transform_1(%arg0: i32, %arg1: i32) -> (i32, i32) {
    %c0_i32 = arith.constant 0 : i32
    %c0_i32_0 = arith.constant 0 : i32
    return %arg1, %c0_i32 : i32, i32
  }
  func.func @transform_2(%arg0: i32, %arg1: i32) -> (i32, i32) {
    %c0_i32 = arith.constant 0 : i32
    %c0_i32_0 = arith.constant 0 : i32
    %c0_i32_1 = arith.constant 0 : i32
    return %c0_i32, %c0_i32_0 : i32, i32
  }
  func.func @transform_3(%arg0: i32, %arg1: i32) -> (i32, i32) {
    %c0_i32 = arith.constant 0 : i32
    %c0_i32_0 = arith.constant 0 : i32
    %c0_i32_1 = arith.constant 0 : i32
    return %c0_i32, %c0_i32_0 : i32, i32
  }
  func.func @transform_4(%arg0: i32, %arg1: i32) -> (i32, i32, i32) {
    %c0_i32 = arith.constant 0 : i32
    %c0_i32_0 = arith.constant 0 : i32
    return %arg0, %arg1, %c0_i32 : i32, i32, i32
  }
}

module attributes {stable_mosaic.version = 11 : i64} {
  func.func @kernel(%arg0: i32, %arg1: memref<2x6x32xf32, #tpu.memory_space<vmem>>, %arg2: memref<32x32xf32, #tpu.memory_space<vmem>>, %arg3: memref<2x1x6xf32, #tpu.memory_space<vmem>>, %arg4: memref<2x6x32xf32, #tpu.memory_space<vmem>>) attributes {dimension_semantics = [#tpu.dimension_semantics<parallel>], iteration_bounds = array<i64: 1>, scalar_prefetch = 0 : i64, scratch_operands = 0 : i64, tpu.core_type = #tpu.core_type<tc>, window_params = [{transform_indices = @transform_0, window_bounds = array<i64: 2, 6, 32>}, {pipeline_mode = #tpu.pipeline_mode<synchronous>, transform_indices = @transform_1, window_bounds = array<i64: 32, 32>}, {transform_indices = @transform_2, window_bounds = array<i64: 2, 1, 6>}, {transform_indices = @transform_3, window_bounds = array<i64: 2, 6, 32>}]} {
    %c0 = arith.constant 0 : index
    %c0_0 = arith.constant 0 : index
    %c0_1 = arith.constant 0 : index
    %0 = vector.load %arg1[%c0, %c0_0, %c0_1] : memref<2x6x32xf32, #tpu.memory_space<vmem>>, vector<2x6x32xf32>
    %1 = vector.shape_cast %0 : vector<2x6x32xf32> to vector<12x32xf32>
    %c0_2 = arith.constant 0 : index
    %c0_3 = arith.constant 0 : index
    %2 = vector.load %arg2[%c0_2, %c0_3] : memref<32x32xf32, #tpu.memory_space<vmem>>, vector<32x32xf32>
    %cst = arith.constant dense<0.000000e+00> : vector<12x32xf32>
    %3 = tpu.matmul %1, %2, %cst {dimension_numbers = #tpu.dot_dimension_numbers<[1], [0], [0], [1], [0, 0, 1, 1], [], []>} : vector<12x32xf32>, vector<32x32xf32>, vector<12x32xf32> -> vector<12x32xf32>
    %4 = vector.shape_cast %3 : vector<12x32xf32> to vector<2x6x32xf32>
    %c0_4 = arith.constant 0 : index
    %c0_5 = arith.constant 0 : index
    %c0_6 = arith.constant 0 : index
    %5 = vector.load %arg3[%c0_4, %c0_5, %c0_6] : memref<2x1x6xf32, #tpu.memory_space<vmem>>, vector<2x1x6xf32>
    %cst_7 = arith.constant dense<0xFF800000> : vector<2x1xf32>
    %6 = vector.multi_reduction <maximumf>, %5, %cst_7 [2] : vector<2x1x6xf32> to vector<2x1xf32>
    %7 = vector.shape_cast %6 : vector<2x1xf32> to vector<2x1x1xf32>
    %cst_8 = arith.constant 0.000000e+00 : f32
    %8 = vector.broadcast %cst_8 : f32 to vector<2x1x1xf32>
    %9 = arith.cmpf oge, %7, %8 : vector<2x1x1xf32>
    %10 = arith.extui %9 : vector<2x1x1xi1> to vector<2x1x1xi32>
    %11 = arith.sitofp %10 : vector<2x1x1xi32> to vector<2x1x1xf32>
    %12 = vector.extract_strided_slice %4 {offsets = [0, 0, 0], sizes = [2, 6, 8], strides = [1, 1, 1]} : vector<2x6x32xf32> to vector<2x6x8xf32>
    %cst_9 = arith.constant 0.353553385 : f32
    %13 = vector.broadcast %cst_9 : f32 to vector<2x6x8xf32>
    %14 = arith.mulf %12, %13 : vector<2x6x8xf32>
    "tpu.trace_start"() <{level = 10 : i32, message = "gqd,gkd->gqk"}> : () -> ()
    %cst_10 = arith.constant dense<0.000000e+00> : vector<2x6x6xf32>
    %15 = tpu.matmul %14, %12, %cst_10 {dimension_numbers = #tpu.dot_dimension_numbers<[2], [2], [1], [1], [0, 0, 0, 1, 1, 1], [0], [0]>} : vector<2x6x8xf32>, vector<2x6x8xf32>, vector<2x6x6xf32> -> vector<2x6x6xf32>
    "tpu.trace_stop"() : () -> ()
    %16 = vector.broadcast %5 : vector<2x1x6xf32> to vector<2x6x6xf32>
    %17 = arith.addf %15, %16 : vector<2x6x6xf32>
    %cst_11 = arith.constant dense<0xFF800000> : vector<2x6xf32>
    %18 = vector.multi_reduction <maximumf>, %17, %cst_11 [2] : vector<2x6x6xf32> to vector<2x6xf32>
    %19 = vector.shape_cast %18 : vector<2x6xf32> to vector<2x6x1xf32>
    %20 = vector.broadcast %19 : vector<2x6x1xf32> to vector<2x6x6xf32>
    %21 = arith.subf %17, %20 : vector<2x6x6xf32>
    %22 = math.exp %21 : vector<2x6x6xf32>
    %cst_12 = arith.constant dense<0.000000e+00> : vector<2x6xf32>
    %23 = vector.multi_reduction <add>, %22, %cst_12 [2] : vector<2x6x6xf32> to vector<2x6xf32>
    %24 = vector.shape_cast %23 : vector<2x6xf32> to vector<2x6x1xf32>
    %25 = tpu.reciprocal %24 {approx = true} : vector<2x6x1xf32> -> vector<2x6x1xf32>
    %26 = vector.broadcast %25 : vector<2x6x1xf32> to vector<2x6x6xf32>
    %27 = arith.mulf %22, %26 : vector<2x6x6xf32>
    %28 = vector.broadcast %11 : vector<2x1x1xf32> to vector<2x6x6xf32>
    %29 = arith.mulf %27, %28 : vector<2x6x6xf32>
    "tpu.trace_start"() <{level = 10 : i32, message = "gqk,gkd->gqd"}> : () -> ()
    %cst_13 = arith.constant dense<0.000000e+00> : vector<2x6x8xf32>
    %30 = tpu.matmul %29, %12, %cst_13 {dimension_numbers = #tpu.dot_dimension_numbers<[2], [1], [1], [2], [0, 0, 0, 1, 1, 2], [0], [0]>} : vector<2x6x6xf32>, vector<2x6x8xf32>, vector<2x6x8xf32> -> vector<2x6x8xf32>
    "tpu.trace_stop"() : () -> ()
    %c0_14 = arith.constant 0 : index
    %c0_15 = arith.constant 0 : index
    %c0_16 = arith.constant 0 : index
    %31 = vector.load %arg4[%c0_14, %c0_15, %c0_16] : memref<2x6x32xf32, #tpu.memory_space<vmem>>, vector<2x6x8xf32>
    tpu.vector_store %arg4[%c0_14, %c0_15, %c0_16], %30 {strides = array<i32>} : memref<2x6x32xf32, #tpu.memory_space<vmem>>, vector<2x6x8xf32>,
    %32 = vector.extract_strided_slice %4 {offsets = [0, 0, 8], sizes = [2, 6, 8], strides = [1, 1, 1]} : vector<2x6x32xf32> to vector<2x6x8xf32>
    %cst_17 = arith.constant 0.353553385 : f32
    %33 = vector.broadcast %cst_17 : f32 to vector<2x6x8xf32>
    %34 = arith.mulf %32, %33 : vector<2x6x8xf32>
    "tpu.trace_start"() <{level = 10 : i32, message = "gqd,gkd->gqk"}> : () -> ()
    %cst_18 = arith.constant dense<0.000000e+00> : vector<2x6x6xf32>
    %35 = tpu.matmul %34, %32, %cst_18 {dimension_numbers = #tpu.dot_dimension_numbers<[2], [2], [1], [1], [0, 0, 0, 1, 1, 1], [0], [0]>} : vector<2x6x8xf32>, vector<2x6x8xf32>, vector<2x6x6xf32> -> vector<2x6x6xf32>
    "tpu.trace_stop"() : () -> ()
    %36 = vector.broadcast %5 : vector<2x1x6xf32> to vector<2x6x6xf32>
    %37 = arith.addf %35, %36 : vector<2x6x6xf32>
    %cst_19 = arith.constant dense<0xFF800000> : vector<2x6xf32>
    %38 = vector.multi_reduction <maximumf>, %37, %cst_19 [2] : vector<2x6x6xf32> to vector<2x6xf32>
    %39 = vector.shape_cast %38 : vector<2x6xf32> to vector<2x6x1xf32>
    %40 = vector.broadcast %39 : vector<2x6x1xf32> to vector<2x6x6xf32>
    %41 = arith.subf %37, %40 : vector<2x6x6xf32>
    %42 = math.exp %41 : vector<2x6x6xf32>
    %cst_20 = arith.constant dense<0.000000e+00> : vector<2x6xf32>
    %43 = vector.multi_reduction <add>, %42, %cst_20 [2] : vector<2x6x6xf32> to vector<2x6xf32>
    %44 = vector.shape_cast %43 : vector<2x6xf32> to vector<2x6x1xf32>
    %45 = tpu.reciprocal %44 {approx = true} : vector<2x6x1xf32> -> vector<2x6x1xf32>
    %46 = vector.broadcast %45 : vector<2x6x1xf32> to vector<2x6x6xf32>
    %47 = arith.mulf %42, %46 : vector<2x6x6xf32>
    %48 = vector.broadcast %11 : vector<2x1x1xf32> to vector<2x6x6xf32>
    %49 = arith.mulf %47, %48 : vector<2x6x6xf32>
    "tpu.trace_start"() <{level = 10 : i32, message = "gqk,gkd->gqd"}> : () -> ()
    %cst_21 = arith.constant dense<0.000000e+00> : vector<2x6x8xf32>
    %50 = tpu.matmul %49, %32, %cst_21 {dimension_numbers = #tpu.dot_dimension_numbers<[2], [1], [1], [2], [0, 0, 0, 1, 1, 2], [0], [0]>} : vector<2x6x6xf32>, vector<2x6x8xf32>, vector<2x6x8xf32> -> vector<2x6x8xf32>
    "tpu.trace_stop"() : () -> ()
    %c0_22 = arith.constant 0 : index
    %c0_23 = arith.constant 0 : index
    %c8 = arith.constant 8 : index
    %51 = vector.load %arg4[%c0_22, %c0_23, %c8] : memref<2x6x32xf32, #tpu.memory_space<vmem>>, vector<2x6x8xf32>
    tpu.vector_store %arg4[%c0_22, %c0_23, %c8], %50 {strides = array<i32>} : memref<2x6x32xf32, #tpu.memory_space<vmem>>, vector<2x6x8xf32>,
    %52 = vector.extract_strided_slice %4 {offsets = [0, 0, 16], sizes = [2, 6, 8], strides = [1, 1, 1]} : vector<2x6x32xf32> to vector<2x6x8xf32>
    %cst_24 = arith.constant 0.353553385 : f32
    %53 = vector.broadcast %cst_24 : f32 to vector<2x6x8xf32>
    %54 = arith.mulf %52, %53 : vector<2x6x8xf32>
    "tpu.trace_start"() <{level = 10 : i32, message = "gqd,gkd->gqk"}> : () -> ()
    %cst_25 = arith.constant dense<0.000000e+00> : vector<2x6x6xf32>
    %55 = tpu.matmul %54, %52, %cst_25 {dimension_numbers = #tpu.dot_dimension_numbers<[2], [2], [1], [1], [0, 0, 0, 1, 1, 1], [0], [0]>} : vector<2x6x8xf32>, vector<2x6x8xf32>, vector<2x6x6xf32> -> vector<2x6x6xf32>
    "tpu.trace_stop"() : () -> ()
    %56 = vector.broadcast %5 : vector<2x1x6xf32> to vector<2x6x6xf32>
    %57 = arith.addf %55, %56 : vector<2x6x6xf32>
    %cst_26 = arith.constant dense<0xFF800000> : vector<2x6xf32>
    %58 = vector.multi_reduction <maximumf>, %57, %cst_26 [2] : vector<2x6x6xf32> to vector<2x6xf32>
    %59 = vector.shape_cast %58 : vector<2x6xf32> to vector<2x6x1xf32>
    %60 = vector.broadcast %59 : vector<2x6x1xf32> to vector<2x6x6xf32>
    %61 = arith.subf %57, %60 : vector<2x6x6xf32>
    %62 = math.exp %61 : vector<2x6x6xf32>
    %cst_27 = arith.constant dense<0.000000e+00> : vector<2x6xf32>
    %63 = vector.multi_reduction <add>, %62, %cst_27 [2] : vector<2x6x6xf32> to vector<2x6xf32>
    %64 = vector.shape_cast %63 : vector<2x6xf32> to vector<2x6x1xf32>
    %65 = tpu.reciprocal %64 {approx = true} : vector<2x6x1xf32> -> vector<2x6x1xf32>
    %66 = vector.broadcast %65 : vector<2x6x1xf32> to vector<2x6x6xf32>
    %67 = arith.mulf %62, %66 : vector<2x6x6xf32>
    %68 = vector.broadcast %11 : vector<2x1x1xf32> to vector<2x6x6xf32>
    %69 = arith.mulf %67, %68 : vector<2x6x6xf32>
    "tpu.trace_start"() <{level = 10 : i32, message = "gqk,gkd->gqd"}> : () -> ()
    %cst_28 = arith.constant dense<0.000000e+00> : vector<2x6x8xf32>
    %70 = tpu.matmul %69, %52, %cst_28 {dimension_numbers = #tpu.dot_dimension_numbers<[2], [1], [1], [2], [0, 0, 0, 1, 1, 2], [0], [0]>} : vector<2x6x6xf32>, vector<2x6x8xf32>, vector<2x6x8xf32> -> vector<2x6x8xf32>
    "tpu.trace_stop"() : () -> ()
    %c0_29 = arith.constant 0 : index
    %c0_30 = arith.constant 0 : index
    %c16 = arith.constant 16 : index
    %71 = vector.load %arg4[%c0_29, %c0_30, %c16] : memref<2x6x32xf32, #tpu.memory_space<vmem>>, vector<2x6x8xf32>
    tpu.vector_store %arg4[%c0_29, %c0_30, %c16], %70 {strides = array<i32>} : memref<2x6x32xf32, #tpu.memory_space<vmem>>, vector<2x6x8xf32>,
    %72 = vector.extract_strided_slice %4 {offsets = [0, 0, 24], sizes = [2, 6, 8], strides = [1, 1, 1]} : vector<2x6x32xf32> to vector<2x6x8xf32>
    %cst_31 = arith.constant 0.353553385 : f32
    %73 = vector.broadcast %cst_31 : f32 to vector<2x6x8xf32>
    %74 = arith.mulf %72, %73 : vector<2x6x8xf32>
    "tpu.trace_start"() <{level = 10 : i32, message = "gqd,gkd->gqk"}> : () -> ()
    %cst_32 = arith.constant dense<0.000000e+00> : vector<2x6x6xf32>
    %75 = tpu.matmul %74, %72, %cst_32 {dimension_numbers = #tpu.dot_dimension_numbers<[2], [2], [1], [1], [0, 0, 0, 1, 1, 1], [0], [0]>} : vector<2x6x8xf32>, vector<2x6x8xf32>, vector<2x6x6xf32> -> vector<2x6x6xf32>
    "tpu.trace_stop"() : () -> ()
    %76 = vector.broadcast %5 : vector<2x1x6xf32> to vector<2x6x6xf32>
    %77 = arith.addf %75, %76 : vector<2x6x6xf32>
    %cst_33 = arith.constant dense<0xFF800000> : vector<2x6xf32>
    %78 = vector.multi_reduction <maximumf>, %77, %cst_33 [2] : vector<2x6x6xf32> to vector<2x6xf32>
    %79 = vector.shape_cast %78 : vector<2x6xf32> to vector<2x6x1xf32>
    %80 = vector.broadcast %79 : vector<2x6x1xf32> to vector<2x6x6xf32>
    %81 = arith.subf %77, %80 : vector<2x6x6xf32>
    %82 = math.exp %81 : vector<2x6x6xf32>
    %cst_34 = arith.constant dense<0.000000e+00> : vector<2x6xf32>
    %83 = vector.multi_reduction <add>, %82, %cst_34 [2] : vector<2x6x6xf32> to vector<2x6xf32>
    %84 = vector.shape_cast %83 : vector<2x6xf32> to vector<2x6x1xf32>
    %85 = tpu.reciprocal %84 {approx = true} : vector<2x6x1xf32> -> vector<2x6x1xf32>
    %86 = vector.broadcast %85 : vector<2x6x1xf32> to vector<2x6x6xf32>
    %87 = arith.mulf %82, %86 : vector<2x6x6xf32>
    %88 = vector.broadcast %11 : vector<2x1x1xf32> to vector<2x6x6xf32>
    %89 = arith.mulf %87, %88 : vector<2x6x6xf32>
    "tpu.trace_start"() <{level = 10 : i32, message = "gqk,gkd->gqd"}> : () -> ()
    %cst_35 = arith.constant dense<0.000000e+00> : vector<2x6x8xf32>
    %90 = tpu.matmul %89, %72, %cst_35 {dimension_numbers = #tpu.dot_dimension_numbers<[2], [1], [1], [2], [0, 0, 0, 1, 1, 2], [0], [0]>} : vector<2x6x6xf32>, vector<2x6x8xf32>, vector<2x6x8xf32> -> vector<2x6x8xf32>
    "tpu.trace_stop"() : () -> ()
    %c0_36 = arith.constant 0 : index
    %c0_37 = arith.constant 0 : index
    %c24 = arith.constant 24 : index
    %91 = vector.load %arg4[%c0_36, %c0_37, %c24] : memref<2x6x32xf32, #tpu.memory_space<vmem>>, vector<2x6x8xf32>
    tpu.vector_store %arg4[%c0_36, %c0_37, %c24], %90 {strides = array<i32>} : memref<2x6x32xf32, #tpu.memory_space<vmem>>, vector<2x6x8xf32>,
    return
  }
  func.func @transform_0(%arg0: i32) -> (i32, i32, i32) {
    %c0_i32 = arith.constant 0 : i32
    %c0_i32_0 = arith.constant 0 : i32
    %c0_i32_1 = arith.constant 0 : i32
    return %arg0, %c0_i32, %c0_i32_0 : i32, i32, i32
  }
  func.func @transform_1(%arg0: i32) -> (i32, i32) {
    %c0_i32 = arith.constant 0 : i32
    %c0_i32_0 = arith.constant 0 : i32
    %c0_i32_1 = arith.constant 0 : i32
    return %c0_i32, %c0_i32_0 : i32, i32
  }
  func.func @transform_2(%arg0: i32) -> (i32, i32, i32) {
    %c0_i32 = arith.constant 0 : i32
    %c0_i32_0 = arith.constant 0 : i32
    %c0_i32_1 = arith.constant 0 : i32
    return %arg0, %c0_i32, %c0_i32_0 : i32, i32, i32
  }
  func.func @transform_3(%arg0: i32) -> (i32, i32, i32) {
    %c0_i32 = arith.constant 0 : i32
    %c0_i32_0 = arith.constant 0 : i32
    %c0_i32_1 = arith.constant 0 : i32
    return %arg0, %c0_i32, %c0_i32_0 : i32, i32, i32
  }
}

module attributes {stable_mosaic.version = 11 : i64} {
  func.func @kernel(%arg0: i32, %arg1: memref<4x8x32xf32, #tpu.memory_space<vmem>>, %arg2: memref<32x32xf32, #tpu.memory_space<vmem>>, %arg3: memref<4x1x8xf32, #tpu.memory_space<vmem>>, %arg4: memref<4x8x32xf32, #tpu.memory_space<vmem>>) attributes {dimension_semantics = [#tpu.dimension_semantics<parallel>], iteration_bounds = array<i64: 1>, scalar_prefetch = 0 : i64, scratch_operands = 0 : i64, tpu.core_type = #tpu.core_type<tc>, window_params = [{transform_indices = @transform_0, window_bounds = array<i64: 4, 8, 32>}, {pipeline_mode = #tpu.pipeline_mode<synchronous>, transform_indices = @transform_1, window_bounds = array<i64: 32, 32>}, {transform_indices = @transform_2, window_bounds = array<i64: 4, 1, 8>}, {transform_indices = @transform_3, window_bounds = array<i64: 4, 8, 32>}]} {
    %c0 = arith.constant 0 : index
    %c0_0 = arith.constant 0 : index
    %c0_1 = arith.constant 0 : index
    %0 = vector.load %arg1[%c0, %c0_0, %c0_1] : memref<4x8x32xf32, #tpu.memory_space<vmem>>, vector<4x8x32xf32>
    %1 = vector.shape_cast %0 : vector<4x8x32xf32> to vector<32x32xf32>
    %c0_2 = arith.constant 0 : index
    %c0_3 = arith.constant 0 : index
    %2 = vector.load %arg2[%c0_2, %c0_3] : memref<32x32xf32, #tpu.memory_space<vmem>>, vector<32x32xf32>
    %cst = arith.constant dense<0.000000e+00> : vector<32x32xf32>
    %3 = tpu.matmul %1, %2, %cst {dimension_numbers = #tpu.dot_dimension_numbers<[1], [0], [0], [1], [0, 0, 1, 1], [], []>} : vector<32x32xf32>, vector<32x32xf32>, vector<32x32xf32> -> vector<32x32xf32>
    %4 = vector.shape_cast %3 : vector<32x32xf32> to vector<4x8x32xf32>
    %c0_4 = arith.constant 0 : index
    %c0_5 = arith.constant 0 : index
    %c0_6 = arith.constant 0 : index
    %5 = vector.load %arg3[%c0_4, %c0_5, %c0_6] : memref<4x1x8xf32, #tpu.memory_space<vmem>>, vector<4x1x8xf32>
    %cst_7 = arith.constant dense<0xFF800000> : vector<4x1xf32>
    %6 = vector.multi_reduction <maximumf>, %5, %cst_7 [2] : vector<4x1x8xf32> to vector<4x1xf32>
    %7 = vector.shape_cast %6 : vector<4x1xf32> to vector<4x1x1xf32>
    %cst_8 = arith.constant 0.000000e+00 : f32
    %8 = vector.broadcast %cst_8 : f32 to vector<4x1x1xf32>
    %9 = arith.cmpf oge, %7, %8 : vector<4x1x1xf32>
    %10 = arith.extui %9 : vector<4x1x1xi1> to vector<4x1x1xi32>
    %11 = arith.sitofp %10 : vector<4x1x1xi32> to vector<4x1x1xf32>
    %12 = vector.extract_strided_slice %4 {offsets = [0, 0, 0], sizes = [4, 8, 8], strides = [1, 1, 1]} : vector<4x8x32xf32> to vector<4x8x8xf32>
    %cst_9 = arith.constant 0.353553385 : f32
    %13 = vector.broadcast %cst_9 : f32 to vector<4x8x8xf32>
    %14 = arith.mulf %12, %13 : vector<4x8x8xf32>
    "tpu.trace_start"() <{level = 10 : i32, message = "gqd,gkd->gqk"}> : () -> ()
    %cst_10 = arith.constant dense<0.000000e+00> : vector<4x8x8xf32>
    %15 = tpu.matmul %14, %12, %cst_10 {dimension_numbers = #tpu.dot_dimension_numbers<[2], [2], [1], [1], [0, 0, 0, 1, 1, 1], [0], [0]>} : vector<4x8x8xf32>, vector<4x8x8xf32>, vector<4x8x8xf32> -> vector<4x8x8xf32>
    "tpu.trace_stop"() : () -> ()
    %16 = vector.broadcast %5 : vector<4x1x8xf32> to vector<4x8x8xf32>
    %17 = arith.addf %15, %16 : vector<4x8x8xf32>
    %cst_11 = arith.constant dense<0xFF800000> : vector<4x8xf32>
    %18 = vector.multi_reduction <maximumf>, %17, %cst_11 [2] : vector<4x8x8xf32> to vector<4x8xf32>
    %19 = vector.shape_cast %18 : vector<4x8xf32> to vector<4x8x1xf32>
    %20 = vector.broadcast %19 : vector<4x8x1xf32> to vector<4x8x8xf32>
    %21 = arith.subf %17, %20 : vector<4x8x8xf32>
    %22 = math.exp %21 : vector<4x8x8xf32>
    %cst_12 = arith.constant dense<0.000000e+00> : vector<4x8xf32>
    %23 = vector.multi_reduction <add>, %22, %cst_12 [2] : vector<4x8x8xf32> to vector<4x8xf32>
    %24 = vector.shape_cast %23 : vector<4x8xf32> to vector<4x8x1xf32>
    %25 = tpu.reciprocal %24 {approx = true} : vector<4x8x1xf32> -> vector<4x8x1xf32>
    %26 = vector.broadcast %25 : vector<4x8x1xf32> to vector<4x8x8xf32>
    %27 = arith.mulf %22, %26 : vector<4x8x8xf32>
    %28 = vector.broadcast %11 : vector<4x1x1xf32> to vector<4x8x8xf32>
    %29 = arith.mulf %27, %28 : vector<4x8x8xf32>
    "tpu.trace_start"() <{level = 10 : i32, message = "gqk,gkd->gqd"}> : () -> ()
    %cst_13 = arith.constant dense<0.000000e+00> : vector<4x8x8xf32>
    %30 = tpu.matmul %29, %12, %cst_13 {dimension_numbers = #tpu.dot_dimension_numbers<[2], [1], [1], [2], [0, 0, 0, 1, 1, 2], [0], [0]>} : vector<4x8x8xf32>, vector<4x8x8xf32>, vector<4x8x8xf32> -> vector<4x8x8xf32>
    "tpu.trace_stop"() : () -> ()
    %c0_14 = arith.constant 0 : index
    %c0_15 = arith.constant 0 : index
    %c0_16 = arith.constant 0 : index
    %31 = vector.load %arg4[%c0_14, %c0_15, %c0_16] : memref<4x8x32xf32, #tpu.memory_space<vmem>>, vector<4x8x8xf32>
    tpu.vector_store %arg4[%c0_14, %c0_15, %c0_16], %30 {strides = array<i32>} : memref<4x8x32xf32, #tpu.memory_space<vmem>>, vector<4x8x8xf32>,
    %32 = vector.extract_strided_slice %4 {offsets = [0, 0, 8], sizes = [4, 8, 8], strides = [1, 1, 1]} : vector<4x8x32xf32> to vector<4x8x8xf32>
    %cst_17 = arith.constant 0.353553385 : f32
    %33 = vector.broadcast %cst_17 : f32 to vector<4x8x8xf32>
    %34 = arith.mulf %32, %33 : vector<4x8x8xf32>
    "tpu.trace_start"() <{level = 10 : i32, message = "gqd,gkd->gqk"}> : () -> ()
    %cst_18 = arith.constant dense<0.000000e+00> : vector<4x8x8xf32>
    %35 = tpu.matmul %34, %32, %cst_18 {dimension_numbers = #tpu.dot_dimension_numbers<[2], [2], [1], [1], [0, 0, 0, 1, 1, 1], [0], [0]>} : vector<4x8x8xf32>, vector<4x8x8xf32>, vector<4x8x8xf32> -> vector<4x8x8xf32>
    "tpu.trace_stop"() : () -> ()
    %36 = vector.broadcast %5 : vector<4x1x8xf32> to vector<4x8x8xf32>
    %37 = arith.addf %35, %36 : vector<4x8x8xf32>
    %cst_19 = arith.constant dense<0xFF800000> : vector<4x8xf32>
    %38 = vector.multi_reduction <maximumf>, %37, %cst_19 [2] : vector<4x8x8xf32> to vector<4x8xf32>
    %39 = vector.shape_cast %38 : vector<4x8xf32> to vector<4x8x1xf32>
    %40 = vector.broadcast %39 : vector<4x8x1xf32> to vector<4x8x8xf32>
    %41 = arith.subf %37, %40 : vector<4x8x8xf32>
    %42 = math.exp %41 : vector<4x8x8xf32>
    %cst_20 = arith.constant dense<0.000000e+00> : vector<4x8xf32>
    %43 = vector.multi_reduction <add>, %42, %cst_20 [2] : vector<4x8x8xf32> to vector<4x8xf32>
    %44 = vector.shape_cast %43 : vector<4x8xf32> to vector<4x8x1xf32>
    %45 = tpu.reciprocal %44 {approx = true} : vector<4x8x1xf32> -> vector<4x8x1xf32>
    %46 = vector.broadcast %45 : vector<4x8x1xf32> to vector<4x8x8xf32>
    %47 = arith.mulf %42, %46 : vector<4x8x8xf32>
    %48 = vector.broadcast %11 : vector<4x1x1xf32> to vector<4x8x8xf32>
    %49 = arith.mulf %47, %48 : vector<4x8x8xf32>
    "tpu.trace_start"() <{level = 10 : i32, message = "gqk,gkd->gqd"}> : () -> ()
    %cst_21 = arith.constant dense<0.000000e+00> : vector<4x8x8xf32>
    %50 = tpu.matmul %49, %32, %cst_21 {dimension_numbers = #tpu.dot_dimension_numbers<[2], [1], [1], [2], [0, 0, 0, 1, 1, 2], [0], [0]>} : vector<4x8x8xf32>, vector<4x8x8xf32>, vector<4x8x8xf32> -> vector<4x8x8xf32>
    "tpu.trace_stop"() : () -> ()
    %c0_22 = arith.constant 0 : index
    %c0_23 = arith.constant 0 : index
    %c8 = arith.constant 8 : index
    %51 = vector.load %arg4[%c0_22, %c0_23, %c8] : memref<4x8x32xf32, #tpu.memory_space<vmem>>, vector<4x8x8xf32>
    tpu.vector_store %arg4[%c0_22, %c0_23, %c8], %50 {strides = array<i32>} : memref<4x8x32xf32, #tpu.memory_space<vmem>>, vector<4x8x8xf32>,
    %52 = vector.extract_strided_slice %4 {offsets = [0, 0, 16], sizes = [4, 8, 8], strides = [1, 1, 1]} : vector<4x8x32xf32> to vector<4x8x8xf32>
    %cst_24 = arith.constant 0.353553385 : f32
    %53 = vector.broadcast %cst_24 : f32 to vector<4x8x8xf32>
    %54 = arith.mulf %52, %53 : vector<4x8x8xf32>
    "tpu.trace_start"() <{level = 10 : i32, message = "gqd,gkd->gqk"}> : () -> ()
    %cst_25 = arith.constant dense<0.000000e+00> : vector<4x8x8xf32>
    %55 = tpu.matmul %54, %52, %cst_25 {dimension_numbers = #tpu.dot_dimension_numbers<[2], [2], [1], [1], [0, 0, 0, 1, 1, 1], [0], [0]>} : vector<4x8x8xf32>, vector<4x8x8xf32>, vector<4x8x8xf32> -> vector<4x8x8xf32>
    "tpu.trace_stop"() : () -> ()
    %56 = vector.broadcast %5 : vector<4x1x8xf32> to vector<4x8x8xf32>
    %57 = arith.addf %55, %56 : vector<4x8x8xf32>
    %cst_26 = arith.constant dense<0xFF800000> : vector<4x8xf32>
    %58 = vector.multi_reduction <maximumf>, %57, %cst_26 [2] : vector<4x8x8xf32> to vector<4x8xf32>
    %59 = vector.shape_cast %58 : vector<4x8xf32> to vector<4x8x1xf32>
    %60 = vector.broadcast %59 : vector<4x8x1xf32> to vector<4x8x8xf32>
    %61 = arith.subf %57, %60 : vector<4x8x8xf32>
    %62 = math.exp %61 : vector<4x8x8xf32>
    %cst_27 = arith.constant dense<0.000000e+00> : vector<4x8xf32>
    %63 = vector.multi_reduction <add>, %62, %cst_27 [2] : vector<4x8x8xf32> to vector<4x8xf32>
    %64 = vector.shape_cast %63 : vector<4x8xf32> to vector<4x8x1xf32>
    %65 = tpu.reciprocal %64 {approx = true} : vector<4x8x1xf32> -> vector<4x8x1xf32>
    %66 = vector.broadcast %65 : vector<4x8x1xf32> to vector<4x8x8xf32>
    %67 = arith.mulf %62, %66 : vector<4x8x8xf32>
    %68 = vector.broadcast %11 : vector<4x1x1xf32> to vector<4x8x8xf32>
    %69 = arith.mulf %67, %68 : vector<4x8x8xf32>
    "tpu.trace_start"() <{level = 10 : i32, message = "gqk,gkd->gqd"}> : () -> ()
    %cst_28 = arith.constant dense<0.000000e+00> : vector<4x8x8xf32>
    %70 = tpu.matmul %69, %52, %cst_28 {dimension_numbers = #tpu.dot_dimension_numbers<[2], [1], [1], [2], [0, 0, 0, 1, 1, 2], [0], [0]>} : vector<4x8x8xf32>, vector<4x8x8xf32>, vector<4x8x8xf32> -> vector<4x8x8xf32>
    "tpu.trace_stop"() : () -> ()
    %c0_29 = arith.constant 0 : index
    %c0_30 = arith.constant 0 : index
    %c16 = arith.constant 16 : index
    %71 = vector.load %arg4[%c0_29, %c0_30, %c16] : memref<4x8x32xf32, #tpu.memory_space<vmem>>, vector<4x8x8xf32>
    tpu.vector_store %arg4[%c0_29, %c0_30, %c16], %70 {strides = array<i32>} : memref<4x8x32xf32, #tpu.memory_space<vmem>>, vector<4x8x8xf32>,
    %72 = vector.extract_strided_slice %4 {offsets = [0, 0, 24], sizes = [4, 8, 8], strides = [1, 1, 1]} : vector<4x8x32xf32> to vector<4x8x8xf32>
    %cst_31 = arith.constant 0.353553385 : f32
    %73 = vector.broadcast %cst_31 : f32 to vector<4x8x8xf32>
    %74 = arith.mulf %72, %73 : vector<4x8x8xf32>
    "tpu.trace_start"() <{level = 10 : i32, message = "gqd,gkd->gqk"}> : () -> ()
    %cst_32 = arith.constant dense<0.000000e+00> : vector<4x8x8xf32>
    %75 = tpu.matmul %74, %72, %cst_32 {dimension_numbers = #tpu.dot_dimension_numbers<[2], [2], [1], [1], [0, 0, 0, 1, 1, 1], [0], [0]>} : vector<4x8x8xf32>, vector<4x8x8xf32>, vector<4x8x8xf32> -> vector<4x8x8xf32>
    "tpu.trace_stop"() : () -> ()
    %76 = vector.broadcast %5 : vector<4x1x8xf32> to vector<4x8x8xf32>
    %77 = arith.addf %75, %76 : vector<4x8x8xf32>
    %cst_33 = arith.constant dense<0xFF800000> : vector<4x8xf32>
    %78 = vector.multi_reduction <maximumf>, %77, %cst_33 [2] : vector<4x8x8xf32> to vector<4x8xf32>
    %79 = vector.shape_cast %78 : vector<4x8xf32> to vector<4x8x1xf32>
    %80 = vector.broadcast %79 : vector<4x8x1xf32> to vector<4x8x8xf32>
    %81 = arith.subf %77, %80 : vector<4x8x8xf32>
    %82 = math.exp %81 : vector<4x8x8xf32>
    %cst_34 = arith.constant dense<0.000000e+00> : vector<4x8xf32>
    %83 = vector.multi_reduction <add>, %82, %cst_34 [2] : vector<4x8x8xf32> to vector<4x8xf32>
    %84 = vector.shape_cast %83 : vector<4x8xf32> to vector<4x8x1xf32>
    %85 = tpu.reciprocal %84 {approx = true} : vector<4x8x1xf32> -> vector<4x8x1xf32>
    %86 = vector.broadcast %85 : vector<4x8x1xf32> to vector<4x8x8xf32>
    %87 = arith.mulf %82, %86 : vector<4x8x8xf32>
    %88 = vector.broadcast %11 : vector<4x1x1xf32> to vector<4x8x8xf32>
    %89 = arith.mulf %87, %88 : vector<4x8x8xf32>
    "tpu.trace_start"() <{level = 10 : i32, message = "gqk,gkd->gqd"}> : () -> ()
    %cst_35 = arith.constant dense<0.000000e+00> : vector<4x8x8xf32>
    %90 = tpu.matmul %89, %72, %cst_35 {dimension_numbers = #tpu.dot_dimension_numbers<[2], [1], [1], [2], [0, 0, 0, 1, 1, 2], [0], [0]>} : vector<4x8x8xf32>, vector<4x8x8xf32>, vector<4x8x8xf32> -> vector<4x8x8xf32>
    "tpu.trace_stop"() : () -> ()
    %c0_36 = arith.constant 0 : index
    %c0_37 = arith.constant 0 : index
    %c24 = arith.constant 24 : index
    %91 = vector.load %arg4[%c0_36, %c0_37, %c24] : memref<4x8x32xf32, #tpu.memory_space<vmem>>, vector<4x8x8xf32>
    tpu.vector_store %arg4[%c0_36, %c0_37, %c24], %90 {strides = array<i32>} : memref<4x8x32xf32, #tpu.memory_space<vmem>>, vector<4x8x8xf32>,
    return
  }
  func.func @transform_0(%arg0: i32) -> (i32, i32, i32) {
    %c0_i32 = arith.constant 0 : i32
    %c0_i32_0 = arith.constant 0 : i32
    %c0_i32_1 = arith.constant 0 : i32
    return %arg0, %c0_i32, %c0_i32_0 : i32, i32, i32
  }
  func.func @transform_1(%arg0: i32) -> (i32, i32) {
    %c0_i32 = arith.constant 0 : i32
    %c0_i32_0 = arith.constant 0 : i32
    %c0_i32_1 = arith.constant 0 : i32
    return %c0_i32, %c0_i32_0 : i32, i32
  }
  func.func @transform_2(%arg0: i32) -> (i32, i32, i32) {
    %c0_i32 = arith.constant 0 : i32
    %c0_i32_0 = arith.constant 0 : i32
    %c0_i32_1 = arith.constant 0 : i32
    return %arg0, %c0_i32, %c0_i32_0 : i32, i32, i32
  }
  func.func @transform_3(%arg0: i32) -> (i32, i32, i32) {
    %c0_i32 = arith.constant 0 : i32
    %c0_i32_0 = arith.constant 0 : i32
    %c0_i32_1 = arith.constant 0 : i32
    return %arg0, %c0_i32, %c0_i32_0 : i32, i32, i32
  }
}

module attributes {stable_mosaic.version = 11 : i64} {
  func.func @kernel(%arg0: i32, %arg1: memref<4x6x32xf32, #tpu.memory_space<vmem>>, %arg2: memref<32x32xf32, #tpu.memory_space<vmem>>, %arg3: memref<4x1x6xf32, #tpu.memory_space<vmem>>, %arg4: memref<4x6x32xf32, #tpu.memory_space<vmem>>) attributes {dimension_semantics = [#tpu.dimension_semantics<parallel>], iteration_bounds = array<i64: 1>, scalar_prefetch = 0 : i64, scratch_operands = 0 : i64, tpu.core_type = #tpu.core_type<tc>, window_params = [{transform_indices = @transform_0, window_bounds = array<i64: 4, 6, 32>}, {pipeline_mode = #tpu.pipeline_mode<synchronous>, transform_indices = @transform_1, window_bounds = array<i64: 32, 32>}, {transform_indices = @transform_2, window_bounds = array<i64: 4, 1, 6>}, {transform_indices = @transform_3, window_bounds = array<i64: 4, 6, 32>}]} {
    %c0 = arith.constant 0 : index
    %c0_0 = arith.constant 0 : index
    %c0_1 = arith.constant 0 : index
    %0 = vector.load %arg1[%c0, %c0_0, %c0_1] : memref<4x6x32xf32, #tpu.memory_space<vmem>>, vector<4x6x32xf32>
    %1 = vector.shape_cast %0 : vector<4x6x32xf32> to vector<24x32xf32>
    %c0_2 = arith.constant 0 : index
    %c0_3 = arith.constant 0 : index
    %2 = vector.load %arg2[%c0_2, %c0_3] : memref<32x32xf32, #tpu.memory_space<vmem>>, vector<32x32xf32>
    %cst = arith.constant dense<0.000000e+00> : vector<24x32xf32>
    %3 = tpu.matmul %1, %2, %cst {dimension_numbers = #tpu.dot_dimension_numbers<[1], [0], [0], [1], [0, 0, 1, 1], [], []>} : vector<24x32xf32>, vector<32x32xf32>, vector<24x32xf32> -> vector<24x32xf32>
    %4 = vector.shape_cast %3 : vector<24x32xf32> to vector<4x6x32xf32>
    %c0_4 = arith.constant 0 : index
    %c0_5 = arith.constant 0 : index
    %c0_6 = arith.constant 0 : index
    %5 = vector.load %arg3[%c0_4, %c0_5, %c0_6] : memref<4x1x6xf32, #tpu.memory_space<vmem>>, vector<4x1x6xf32>
    %cst_7 = arith.constant dense<0xFF800000> : vector<4x1xf32>
    %6 = vector.multi_reduction <maximumf>, %5, %cst_7 [2] : vector<4x1x6xf32> to vector<4x1xf32>
    %7 = vector.shape_cast %6 : vector<4x1xf32> to vector<4x1x1xf32>
    %cst_8 = arith.constant 0.000000e+00 : f32
    %8 = vector.broadcast %cst_8 : f32 to vector<4x1x1xf32>
    %9 = arith.cmpf oge, %7, %8 : vector<4x1x1xf32>
    %10 = arith.extui %9 : vector<4x1x1xi1> to vector<4x1x1xi32>
    %11 = arith.sitofp %10 : vector<4x1x1xi32> to vector<4x1x1xf32>
    %12 = vector.extract_strided_slice %4 {offsets = [0, 0, 0], sizes = [4, 6, 8], strides = [1, 1, 1]} : vector<4x6x32xf32> to vector<4x6x8xf32>
    %cst_9 = arith.constant 0.353553385 : f32
    %13 = vector.broadcast %cst_9 : f32 to vector<4x6x8xf32>
    %14 = arith.mulf %12, %13 : vector<4x6x8xf32>
    "tpu.trace_start"() <{level = 10 : i32, message = "gqd,gkd->gqk"}> : () -> ()
    %cst_10 = arith.constant dense<0.000000e+00> : vector<4x6x6xf32>
    %15 = tpu.matmul %14, %12, %cst_10 {dimension_numbers = #tpu.dot_dimension_numbers<[2], [2], [1], [1], [0, 0, 0, 1, 1, 1], [0], [0]>} : vector<4x6x8xf32>, vector<4x6x8xf32>, vector<4x6x6xf32> -> vector<4x6x6xf32>
    "tpu.trace_stop"() : () -> ()
    %16 = vector.broadcast %5 : vector<4x1x6xf32> to vector<4x6x6xf32>
    %17 = arith.addf %15, %16 : vector<4x6x6xf32>
    %cst_11 = arith.constant dense<0xFF800000> : vector<4x6xf32>
    %18 = vector.multi_reduction <maximumf>, %17, %cst_11 [2] : vector<4x6x6xf32> to vector<4x6xf32>
    %19 = vector.shape_cast %18 : vector<4x6xf32> to vector<4x6x1xf32>
    %20 = vector.broadcast %19 : vector<4x6x1xf32> to vector<4x6x6xf32>
    %21 = arith.subf %17, %20 : vector<4x6x6xf32>
    %22 = math.exp %21 : vector<4x6x6xf32>
    %cst_12 = arith.constant dense<0.000000e+00> : vector<4x6xf32>
    %23 = vector.multi_reduction <add>, %22, %cst_12 [2] : vector<4x6x6xf32> to vector<4x6xf32>
    %24 = vector.shape_cast %23 : vector<4x6xf32> to vector<4x6x1xf32>
    %25 = tpu.reciprocal %24 {approx = true} : vector<4x6x1xf32> -> vector<4x6x1xf32>
    %26 = vector.broadcast %25 : vector<4x6x1xf32> to vector<4x6x6xf32>
    %27 = arith.mulf %22, %26 : vector<4x6x6xf32>
    %28 = vector.broadcast %11 : vector<4x1x1xf32> to vector<4x6x6xf32>
    %29 = arith.mulf %27, %28 : vector<4x6x6xf32>
    "tpu.trace_start"() <{level = 10 : i32, message = "gqk,gkd->gqd"}> : () -> ()
    %cst_13 = arith.constant dense<0.000000e+00> : vector<4x6x8xf32>
    %30 = tpu.matmul %29, %12, %cst_13 {dimension_numbers = #tpu.dot_dimension_numbers<[2], [1], [1], [2], [0, 0, 0, 1, 1, 2], [0], [0]>} : vector<4x6x6xf32>, vector<4x6x8xf32>, vector<4x6x8xf32> -> vector<4x6x8xf32>
    "tpu.trace_stop"() : () -> ()
    %c0_14 = arith.constant 0 : index
    %c0_15 = arith.constant 0 : index
    %c0_16 = arith.constant 0 : index
    %31 = vector.load %arg4[%c0_14, %c0_15, %c0_16] : memref<4x6x32xf32, #tpu.memory_space<vmem>>, vector<4x6x8xf32>
    tpu.vector_store %arg4[%c0_14, %c0_15, %c0_16], %30 {strides = array<i32>} : memref<4x6x32xf32, #tpu.memory_space<vmem>>, vector<4x6x8xf32>,
    %32 = vector.extract_strided_slice %4 {offsets = [0, 0, 8], sizes = [4, 6, 8], strides = [1, 1, 1]} : vector<4x6x32xf32> to vector<4x6x8xf32>
    %cst_17 = arith.constant 0.353553385 : f32
    %33 = vector.broadcast %cst_17 : f32 to vector<4x6x8xf32>
    %34 = arith.mulf %32, %33 : vector<4x6x8xf32>
    "tpu.trace_start"() <{level = 10 : i32, message = "gqd,gkd->gqk"}> : () -> ()
    %cst_18 = arith.constant dense<0.000000e+00> : vector<4x6x6xf32>
    %35 = tpu.matmul %34, %32, %cst_18 {dimension_numbers = #tpu.dot_dimension_numbers<[2], [2], [1], [1], [0, 0, 0, 1, 1, 1], [0], [0]>} : vector<4x6x8xf32>, vector<4x6x8xf32>, vector<4x6x6xf32> -> vector<4x6x6xf32>
    "tpu.trace_stop"() : () -> ()
    %36 = vector.broadcast %5 : vector<4x1x6xf32> to vector<4x6x6xf32>
    %37 = arith.addf %35, %36 : vector<4x6x6xf32>
    %cst_19 = arith.constant dense<0xFF800000> : vector<4x6xf32>
    %38 = vector.multi_reduction <maximumf>, %37, %cst_19 [2] : vector<4x6x6xf32> to vector<4x6xf32>
    %39 = vector.shape_cast %38 : vector<4x6xf32> to vector<4x6x1xf32>
    %40 = vector.broadcast %39 : vector<4x6x1xf32> to vector<4x6x6xf32>
    %41 = arith.subf %37, %40 : vector<4x6x6xf32>
    %42 = math.exp %41 : vector<4x6x6xf32>
    %cst_20 = arith.constant dense<0.000000e+00> : vector<4x6xf32>
    %43 = vector.multi_reduction <add>, %42, %cst_20 [2] : vector<4x6x6xf32> to vector<4x6xf32>
    %44 = vector.shape_cast %43 : vector<4x6xf32> to vector<4x6x1xf32>
    %45 = tpu.reciprocal %44 {approx = true} : vector<4x6x1xf32> -> vector<4x6x1xf32>
    %46 = vector.broadcast %45 : vector<4x6x1xf32> to vector<4x6x6xf32>
    %47 = arith.mulf %42, %46 : vector<4x6x6xf32>
    %48 = vector.broadcast %11 : vector<4x1x1xf32> to vector<4x6x6xf32>
    %49 = arith.mulf %47, %48 : vector<4x6x6xf32>
    "tpu.trace_start"() <{level = 10 : i32, message = "gqk,gkd->gqd"}> : () -> ()
    %cst_21 = arith.constant dense<0.000000e+00> : vector<4x6x8xf32>
    %50 = tpu.matmul %49, %32, %cst_21 {dimension_numbers = #tpu.dot_dimension_numbers<[2], [1], [1], [2], [0, 0, 0, 1, 1, 2], [0], [0]>} : vector<4x6x6xf32>, vector<4x6x8xf32>, vector<4x6x8xf32> -> vector<4x6x8xf32>
    "tpu.trace_stop"() : () -> ()
    %c0_22 = arith.constant 0 : index
    %c0_23 = arith.constant 0 : index
    %c8 = arith.constant 8 : index
    %51 = vector.load %arg4[%c0_22, %c0_23, %c8] : memref<4x6x32xf32, #tpu.memory_space<vmem>>, vector<4x6x8xf32>
    tpu.vector_store %arg4[%c0_22, %c0_23, %c8], %50 {strides = array<i32>} : memref<4x6x32xf32, #tpu.memory_space<vmem>>, vector<4x6x8xf32>,
    %52 = vector.extract_strided_slice %4 {offsets = [0, 0, 16], sizes = [4, 6, 8], strides = [1, 1, 1]} : vector<4x6x32xf32> to vector<4x6x8xf32>
    %cst_24 = arith.constant 0.353553385 : f32
    %53 = vector.broadcast %cst_24 : f32 to vector<4x6x8xf32>
    %54 = arith.mulf %52, %53 : vector<4x6x8xf32>
    "tpu.trace_start"() <{level = 10 : i32, message = "gqd,gkd->gqk"}> : () -> ()
    %cst_25 = arith.constant dense<0.000000e+00> : vector<4x6x6xf32>
    %55 = tpu.matmul %54, %52, %cst_25 {dimension_numbers = #tpu.dot_dimension_numbers<[2], [2], [1], [1], [0, 0, 0, 1, 1, 1], [0], [0]>} : vector<4x6x8xf32>, vector<4x6x8xf32>, vector<4x6x6xf32> -> vector<4x6x6xf32>
    "tpu.trace_stop"() : () -> ()
    %56 = vector.broadcast %5 : vector<4x1x6xf32> to vector<4x6x6xf32>
    %57 = arith.addf %55, %56 : vector<4x6x6xf32>
    %cst_26 = arith.constant dense<0xFF800000> : vector<4x6xf32>
    %58 = vector.multi_reduction <maximumf>, %57, %cst_26 [2] : vector<4x6x6xf32> to vector<4x6xf32>
    %59 = vector.shape_cast %58 : vector<4x6xf32> to vector<4x6x1xf32>
    %60 = vector.broadcast %59 : vector<4x6x1xf32> to vector<4x6x6xf32>
    %61 = arith.subf %57, %60 : vector<4x6x6xf32>
    %62 = math.exp %61 : vector<4x6x6xf32>
    %cst_27 = arith.constant dense<0.000000e+00> : vector<4x6xf32>
    %63 = vector.multi_reduction <add>, %62, %cst_27 [2] : vector<4x6x6xf32> to vector<4x6xf32>
    %64 = vector.shape_cast %63 : vector<4x6xf32> to vector<4x6x1xf32>
    %65 = tpu.reciprocal %64 {approx = true} : vector<4x6x1xf32> -> vector<4x6x1xf32>
    %66 = vector.broadcast %65 : vector<4x6x1xf32> to vector<4x6x6xf32>
    %67 = arith.mulf %62, %66 : vector<4x6x6xf32>
    %68 = vector.broadcast %11 : vector<4x1x1xf32> to vector<4x6x6xf32>
    %69 = arith.mulf %67, %68 : vector<4x6x6xf32>
    "tpu.trace_start"() <{level = 10 : i32, message = "gqk,gkd->gqd"}> : () -> ()
    %cst_28 = arith.constant dense<0.000000e+00> : vector<4x6x8xf32>
    %70 = tpu.matmul %69, %52, %cst_28 {dimension_numbers = #tpu.dot_dimension_numbers<[2], [1], [1], [2], [0, 0, 0, 1, 1, 2], [0], [0]>} : vector<4x6x6xf32>, vector<4x6x8xf32>, vector<4x6x8xf32> -> vector<4x6x8xf32>
    "tpu.trace_stop"() : () -> ()
    %c0_29 = arith.constant 0 : index
    %c0_30 = arith.constant 0 : index
    %c16 = arith.constant 16 : index
    %71 = vector.load %arg4[%c0_29, %c0_30, %c16] : memref<4x6x32xf32, #tpu.memory_space<vmem>>, vector<4x6x8xf32>
    tpu.vector_store %arg4[%c0_29, %c0_30, %c16], %70 {strides = array<i32>} : memref<4x6x32xf32, #tpu.memory_space<vmem>>, vector<4x6x8xf32>,
    %72 = vector.extract_strided_slice %4 {offsets = [0, 0, 24], sizes = [4, 6, 8], strides = [1, 1, 1]} : vector<4x6x32xf32> to vector<4x6x8xf32>
    %cst_31 = arith.constant 0.353553385 : f32
    %73 = vector.broadcast %cst_31 : f32 to vector<4x6x8xf32>
    %74 = arith.mulf %72, %73 : vector<4x6x8xf32>
    "tpu.trace_start"() <{level = 10 : i32, message = "gqd,gkd->gqk"}> : () -> ()
    %cst_32 = arith.constant dense<0.000000e+00> : vector<4x6x6xf32>
    %75 = tpu.matmul %74, %72, %cst_32 {dimension_numbers = #tpu.dot_dimension_numbers<[2], [2], [1], [1], [0, 0, 0, 1, 1, 1], [0], [0]>} : vector<4x6x8xf32>, vector<4x6x8xf32>, vector<4x6x6xf32> -> vector<4x6x6xf32>
    "tpu.trace_stop"() : () -> ()
    %76 = vector.broadcast %5 : vector<4x1x6xf32> to vector<4x6x6xf32>
    %77 = arith.addf %75, %76 : vector<4x6x6xf32>
    %cst_33 = arith.constant dense<0xFF800000> : vector<4x6xf32>
    %78 = vector.multi_reduction <maximumf>, %77, %cst_33 [2] : vector<4x6x6xf32> to vector<4x6xf32>
    %79 = vector.shape_cast %78 : vector<4x6xf32> to vector<4x6x1xf32>
    %80 = vector.broadcast %79 : vector<4x6x1xf32> to vector<4x6x6xf32>
    %81 = arith.subf %77, %80 : vector<4x6x6xf32>
    %82 = math.exp %81 : vector<4x6x6xf32>
    %cst_34 = arith.constant dense<0.000000e+00> : vector<4x6xf32>
    %83 = vector.multi_reduction <add>, %82, %cst_34 [2] : vector<4x6x6xf32> to vector<4x6xf32>
    %84 = vector.shape_cast %83 : vector<4x6xf32> to vector<4x6x1xf32>
    %85 = tpu.reciprocal %84 {approx = true} : vector<4x6x1xf32> -> vector<4x6x1xf32>
    %86 = vector.broadcast %85 : vector<4x6x1xf32> to vector<4x6x6xf32>
    %87 = arith.mulf %82, %86 : vector<4x6x6xf32>
    %88 = vector.broadcast %11 : vector<4x1x1xf32> to vector<4x6x6xf32>
    %89 = arith.mulf %87, %88 : vector<4x6x6xf32>
    "tpu.trace_start"() <{level = 10 : i32, message = "gqk,gkd->gqd"}> : () -> ()
    %cst_35 = arith.constant dense<0.000000e+00> : vector<4x6x8xf32>
    %90 = tpu.matmul %89, %72, %cst_35 {dimension_numbers = #tpu.dot_dimension_numbers<[2], [1], [1], [2], [0, 0, 0, 1, 1, 2], [0], [0]>} : vector<4x6x6xf32>, vector<4x6x8xf32>, vector<4x6x8xf32> -> vector<4x6x8xf32>
    "tpu.trace_stop"() : () -> ()
    %c0_36 = arith.constant 0 : index
    %c0_37 = arith.constant 0 : index
    %c24 = arith.constant 24 : index
    %91 = vector.load %arg4[%c0_36, %c0_37, %c24] : memref<4x6x32xf32, #tpu.memory_space<vmem>>, vector<4x6x8xf32>
    tpu.vector_store %arg4[%c0_36, %c0_37, %c24], %90 {strides = array<i32>} : memref<4x6x32xf32, #tpu.memory_space<vmem>>, vector<4x6x8xf32>,
    return
  }
  func.func @transform_0(%arg0: i32) -> (i32, i32, i32) {
    %c0_i32 = arith.constant 0 : i32
    %c0_i32_0 = arith.constant 0 : i32
    %c0_i32_1 = arith.constant 0 : i32
    return %arg0, %c0_i32, %c0_i32_0 : i32, i32, i32
  }
  func.func @transform_1(%arg0: i32) -> (i32, i32) {
    %c0_i32 = arith.constant 0 : i32
    %c0_i32_0 = arith.constant 0 : i32
    %c0_i32_1 = arith.constant 0 : i32
    return %c0_i32, %c0_i32_0 : i32, i32
  }
  func.func @transform_2(%arg0: i32) -> (i32, i32, i32) {
    %c0_i32 = arith.constant 0 : i32
    %c0_i32_0 = arith.constant 0 : i32
    %c0_i32_1 = arith.constant 0 : i32
    return %arg0, %c0_i32, %c0_i32_0 : i32, i32, i32
  }
  func.func @transform_3(%arg0: i32) -> (i32, i32, i32) {
    %c0_i32 = arith.constant 0 : i32
    %c0_i32_0 = arith.constant 0 : i32
    %c0_i32_1 = arith.constant 0 : i32
    return %arg0, %c0_i32, %c0_i32_0 : i32, i32, i32
  }
}

module attributes {stable_mosaic.version = 11 : i64} {
  func.func @_linear_ln_kernel(%arg0: i32, %arg1: memref<32x32xf32, #tpu.memory_space<vmem>>, %arg2: memref<32x32xf32, #tpu.memory_space<vmem>>, %arg3: memref<1x32xf32, #tpu.memory_space<vmem>>, %arg4: memref<1x32xf32, #tpu.memory_space<vmem>>, %arg5: memref<1x32xf32, #tpu.memory_space<vmem>>, %arg6: memref<32x32xf32, #tpu.memory_space<vmem>>) attributes {dimension_semantics = [#tpu.dimension_semantics<parallel>], iteration_bounds = array<i64: 1>, scalar_prefetch = 0 : i64, scratch_operands = 0 : i64, tpu.core_type = #tpu.core_type<tc>, window_params = [{transform_indices = @transform_0, window_bounds = array<i64: 32, 32>}, {pipeline_mode = #tpu.pipeline_mode<synchronous>, transform_indices = @transform_1, window_bounds = array<i64: 32, 32>}, {pipeline_mode = #tpu.pipeline_mode<synchronous>, transform_indices = @transform_2, window_bounds = array<i64: 1, 32>}, {pipeline_mode = #tpu.pipeline_mode<synchronous>, transform_indices = @transform_3, window_bounds = array<i64: 1, 32>}, {pipeline_mode = #tpu.pipeline_mode<synchronous>, transform_indices = @transform_4, window_bounds = array<i64: 1, 32>}, {transform_indices = @transform_5, window_bounds = array<i64: 32, 32>}]} {
    %c0 = arith.constant 0 : index
    %c0_0 = arith.constant 0 : index
    %0 = vector.load %arg1[%c0, %c0_0] : memref<32x32xf32, #tpu.memory_space<vmem>>, vector<32x32xf32>
    %c0_1 = arith.constant 0 : index
    %c0_2 = arith.constant 0 : index
    %1 = vector.load %arg2[%c0_1, %c0_2] : memref<32x32xf32, #tpu.memory_space<vmem>>, vector<32x32xf32>
    %cst = arith.constant dense<0.000000e+00> : vector<32x32xf32>
    %2 = tpu.matmul %0, %1, %cst {dimension_numbers = #tpu.dot_dimension_numbers<[1], [0], [0], [1], [0, 0, 1, 1], [], []>} : vector<32x32xf32>, vector<32x32xf32>, vector<32x32xf32> -> vector<32x32xf32>
    %c0_3 = arith.constant 0 : index
    %c0_4 = arith.constant 0 : index
    %3 = vector.load %arg3[%c0_3, %c0_4] : memref<1x32xf32, #tpu.memory_space<vmem>>, vector<1x32xf32>
    %4 = vector.broadcast %3 : vector<1x32xf32> to vector<32x32xf32>
    %5 = arith.addf %2, %4 : vector<32x32xf32>
    %cst_5 = arith.constant dense<0.000000e+00> : vector<32xf32>
    %6 = vector.multi_reduction <add>, %5, %cst_5 [1] : vector<32x32xf32> to vector<32xf32>
    %7 = vector.shape_cast %6 : vector<32xf32> to vector<32x1xf32>
    %cst_6 = arith.constant 3.200000e+01 : f32
    %8 = vector.broadcast %cst_6 : f32 to vector<32x1xf32>
    %9 = arith.divf %7, %8 : vector<32x1xf32>
    %10 = vector.broadcast %9 : vector<32x1xf32> to vector<32x32xf32>
    %11 = arith.subf %5, %10 : vector<32x32xf32>
    %12 = arith.mulf %11, %11 : vector<32x32xf32>
    %cst_7 = arith.constant dense<0.000000e+00> : vector<32xf32>
    %13 = vector.multi_reduction <add>, %12, %cst_7 [1] : vector<32x32xf32> to vector<32xf32>
    %14 = vector.shape_cast %13 : vector<32xf32> to vector<32x1xf32>
    %cst_8 = arith.constant 3.200000e+01 : f32
    %15 = vector.broadcast %cst_8 : f32 to vector<32x1xf32>
    %16 = arith.divf %14, %15 : vector<32x1xf32>
    %17 = vector.broadcast %9 : vector<32x1xf32> to vector<32x32xf32>
    %18 = arith.subf %5, %17 : vector<32x32xf32>
    %cst_9 = arith.constant 9.99999996E-13 : f32
    %19 = vector.broadcast %cst_9 : f32 to vector<32x1xf32>
    %20 = arith.addf %16, %19 : vector<32x1xf32>
    %21 = math.rsqrt %20 : vector<32x1xf32>
    %22 = vector.broadcast %21 : vector<32x1xf32> to vector<32x32xf32>
    %23 = arith.mulf %18, %22 : vector<32x32xf32>
    %c0_10 = arith.constant 0 : index
    %c0_11 = arith.constant 0 : index
    %24 = vector.load %arg4[%c0_10, %c0_11] : memref<1x32xf32, #tpu.memory_space<vmem>>, vector<1x32xf32>
    %25 = vector.broadcast %24 : vector<1x32xf32> to vector<32x32xf32>
    %26 = arith.mulf %23, %25 : vector<32x32xf32>
    %c0_12 = arith.constant 0 : index
    %c0_13 = arith.constant 0 : index
    %27 = vector.load %arg5[%c0_12, %c0_13] : memref<1x32xf32, #tpu.memory_space<vmem>>, vector<1x32xf32>
    %28 = vector.broadcast %27 : vector<1x32xf32> to vector<32x32xf32>
    %29 = arith.addf %26, %28 : vector<32x32xf32>
    %c0_14 = arith.constant 0 : index
    %c0_15 = arith.constant 0 : index
    %30 = vector.load %arg6[%c0_14, %c0_15] : memref<32x32xf32, #tpu.memory_space<vmem>>, vector<32x32xf32>
    tpu.vector_store %arg6[%c0_14, %c0_15], %29 {strides = array<i32>} : memref<32x32xf32, #tpu.memory_space<vmem>>, vector<32x32xf32>,
    return
  }
  func.func @transform_0(%arg0: i32) -> (i32, i32) {
    %c0_i32 = arith.constant 0 : i32
    %c0_i32_0 = arith.constant 0 : i32
    return %arg0, %c0_i32 : i32, i32
  }
  func.func @transform_1(%arg0: i32) -> (i32, i32) {
    %c0_i32 = arith.constant 0 : i32
    %c0_i32_0 = arith.constant 0 : i32
    %c0_i32_1 = arith.constant 0 : i32
    return %c0_i32, %c0_i32_0 : i32, i32
  }
  func.func @transform_2(%arg0: i32) -> (i32, i32) {
    %c0_i32 = arith.constant 0 : i32
    %c0_i32_0 = arith.constant 0 : i32
    %c0_i32_1 = arith.constant 0 : i32
    return %c0_i32, %c0_i32_0 : i32, i32
  }
  func.func @transform_3(%arg0: i32) -> (i32, i32) {
    %c0_i32 = arith.constant 0 : i32
    %c0_i32_0 = arith.constant 0 : i32
    %c0_i32_1 = arith.constant 0 : i32
    return %c0_i32, %c0_i32_0 : i32, i32
  }
  func.func @transform_4(%arg0: i32) -> (i32, i32) {
    %c0_i32 = arith.constant 0 : i32
    %c0_i32_0 = arith.constant 0 : i32
    %c0_i32_1 = arith.constant 0 : i32
    return %c0_i32, %c0_i32_0 : i32, i32
  }
  func.func @transform_5(%arg0: i32) -> (i32, i32) {
    %c0_i32 = arith.constant 0 : i32
    %c0_i32_0 = arith.constant 0 : i32
    return %arg0, %c0_i32 : i32, i32
  }
}

module attributes {stable_mosaic.version = 11 : i64} {
  func.func @_linear_bias_kernel(%arg0: i32, %arg1: i32, %arg2: memref<32x32xf32, #tpu.memory_space<vmem>>, %arg3: memref<32x64xf32, #tpu.memory_space<vmem>>, %arg4: memref<1x64xf32, #tpu.memory_space<vmem>>, %arg5: memref<32x64xf32, #tpu.memory_space<vmem>>) attributes {dimension_semantics = [#tpu.dimension_semantics<parallel>, #tpu.dimension_semantics<parallel>], iteration_bounds = array<i64: 1, 1>, scalar_prefetch = 0 : i64, scratch_operands = 0 : i64, tpu.core_type = #tpu.core_type<tc>, window_params = [{transform_indices = @transform_0, window_bounds = array<i64: 32, 32>}, {transform_indices = @transform_1, window_bounds = array<i64: 32, 64>}, {transform_indices = @transform_2, window_bounds = array<i64: 1, 64>}, {transform_indices = @transform_3, window_bounds = array<i64: 32, 64>}]} {
    %c0 = arith.constant 0 : index
    %c0_0 = arith.constant 0 : index
    %0 = vector.load %arg2[%c0, %c0_0] : memref<32x32xf32, #tpu.memory_space<vmem>>, vector<32x32xf32>
    %c0_1 = arith.constant 0 : index
    %c0_2 = arith.constant 0 : index
    %1 = vector.load %arg3[%c0_1, %c0_2] : memref<32x64xf32, #tpu.memory_space<vmem>>, vector<32x64xf32>
    %cst = arith.constant dense<0.000000e+00> : vector<32x64xf32>
    %2 = tpu.matmul %0, %1, %cst {dimension_numbers = #tpu.dot_dimension_numbers<[1], [0], [0], [1], [0, 0, 1, 1], [], []>} : vector<32x32xf32>, vector<32x64xf32>, vector<32x64xf32> -> vector<32x64xf32>
    %c0_3 = arith.constant 0 : index
    %c0_4 = arith.constant 0 : index
    %3 = vector.load %arg4[%c0_3, %c0_4] : memref<1x64xf32, #tpu.memory_space<vmem>>, vector<1x64xf32>
    %4 = vector.broadcast %3 : vector<1x64xf32> to vector<32x64xf32>
    %5 = arith.addf %2, %4 : vector<32x64xf32>
    %c0_5 = arith.constant 0 : index
    %c0_6 = arith.constant 0 : index
    %6 = vector.load %arg5[%c0_5, %c0_6] : memref<32x64xf32, #tpu.memory_space<vmem>>, vector<32x64xf32>
    tpu.vector_store %arg5[%c0_5, %c0_6], %5 {strides = array<i32>} : memref<32x64xf32, #tpu.memory_space<vmem>>, vector<32x64xf32>,
    return
  }
  func.func @transform_0(%arg0: i32, %arg1: i32) -> (i32, i32) {
    %c0_i32 = arith.constant 0 : i32
    %c0_i32_0 = arith.constant 0 : i32
    return %arg0, %c0_i32 : i32, i32
  }
  func.func @transform_1(%arg0: i32, %arg1: i32) -> (i32, i32) {
    %c0_i32 = arith.constant 0 : i32
    %c0_i32_0 = arith.constant 0 : i32
    return %c0_i32, %arg1 : i32, i32
  }
  func.func @transform_2(%arg0: i32, %arg1: i32) -> (i32, i32) {
    %c0_i32 = arith.constant 0 : i32
    %c0_i32_0 = arith.constant 0 : i32
    return %c0_i32, %arg1 : i32, i32
  }
  func.func @transform_3(%arg0: i32, %arg1: i32) -> (i32, i32) {
    %c0_i32 = arith.constant 0 : i32
    return %arg0, %arg1 : i32, i32
  }
}

</mosaic_0001>

<llo_original>
// kernel: _lambda_.10
$region0: #{_lambda_.10}
  #allocation0 [shape = 'u32[]', space=smem, size = 0x4, offset = 0x4, fixed_abs, tag = 'smem constant byte address 0x4 - core index']
  #allocation1 [shape = 'u32[144,128]{1,0:T(1,128)}', space=vmem, size = 0x12000, scoped, tag = 'internal scratch']
  %s0 = inlined_call_operand.vmem [shape: f32[2,16,32], index: 0, kind: input, shape index: {}]
  %s1 = inlined_call_operand.vmem [shape: f32[16,32], index: 1, kind: input, shape index: {}]
  %s2 = inlined_call_operand.vmem [shape: f32[1,32], index: 2, kind: input, shape index: {}]
  %s3 = inlined_call_operand.vmem [shape: f32[1,32], index: 3, kind: input, shape index: {}]
  %s4 = inlined_call_operand.vmem [shape: f32[2,16,32], index: 4, kind: output, shape index: {}]
  %s5 = sld [smem:[#allocation0]]
  $region49: #{_lambda_.10} parent=0
    _
  %s7 = ssub.s32 1, %s5
  %s8 = scalar_select 0, %s7, %s5
  loop: start=0, step=1, limit=4
  $region2: #{_lambda_.10} parent=0 // loop_pre_header
    _
  $region3: #{_lambda_.10} parent=0 // loop_header
    %s10 = sphi 0, %s14
    %p11 = scmp.ge.s32.totalorder %s10, 4
    %s17 = sphi 0, %s29
    %s18 = sphi 0, %s25
    %s19 = sphi 0, %s17
    %s20 = sphi 0, %s18
    %s21 = sphi 0, %s19
    %s22 = sphi 0, %s20
    %s34 = sphi 0, %s36
    %s37 = sphi 0, %s34
    %s38 = sphi 0, %s37
    %s54 = sphi 0, %s38
    %s60 = sphi 0, %s62
    %s63 = sphi 0, %s60
    %s64 = sphi 0, %s63
    %s80 = sphi 0, %s64
    %s84 = sphi 0, %s84
    %s86 = sphi 0, %s84
    %s87 = sphi 0, %s86
    %s101 = sphi 0, %s87
    %s105 = sphi 0, %s105
    %s107 = sphi 0, %s105
    %s108 = sphi 0, %s107
    %s122 = sphi 0, %s108
    %s130 = sphi 0, %s132
    %s133 = sphi 0, %s130
    %s134 = sphi 0, %s133
    %s150 = sphi 0, %s134
  $region4: #{_lambda_.10} parent=0 // loop_header_branch
    %13 = sbr.rel (%p11) target = $region8
  $region5: #{_lambda_.10} parent=0 // loop_body
    %s15 = ssub.s32 %s10, 1
    %s16 = ssub.s32 %s10, 2
    %s23 = sadd.s32 1, %s18
    %p24 = scmp.ge.s32.totalorder %s23, 1
    %s25 = scalar_select %p24, 0, %s23
    %s26 = sadd.s32 1, %s17
    %s27 = scalar_select %p24, %s26, %s17
    %p28 = scmp.ge.s32.totalorder %s27, 2
    %s29 = scalar_select %p28, 0, %s27
    %s30 = ssub.s32 %s17, %s29
    %s31 = ssub.s32 %s18, %s25
    %s32 = sor.u32 %s30, %s31
    %p33 = scmp.eq.s32.totalorder %s32, 0
    %s35 = sadd.s32 %s34, 1
    %s36 = scalar_select %p33, %s34, %s35
    %p39 = pneg %p33
    %p40 = scmp.eq.s32.totalorder %s10, 1
    %p41 = por %p39, %p40
    %p42 = scmp.ne.s32.totalorder %s34, %s37
    %p43 = scmp.eq.s32.totalorder %s10, 0
    %p44 = por %p42, %p43
    %p45 = scmp.ne.s32.totalorder %s34, %s37
    %p46 = scmp.eq.s32.totalorder %s15, 1
    %p47 = por %p45, %p46
    %p48 = scmp.ne.s32.totalorder %s37, %s38
    %p49 = scmp.eq.s32.totalorder %s15, 0
    %p50 = por %p48, %p49
    %p51 = scmp.ne.s32.totalorder %s37, %s38
    %p52 = scmp.eq.s32.totalorder %s16, 1
    %p53 = por %p51, %p52
    %p55 = scmp.ne.s32.totalorder %s38, %s54
    %p56 = scmp.eq.s32.totalorder %s16, 0
    %p57 = por %p55, %p56
    %s58 = ssub.s32 %s18, %s25
    %p59 = scmp.eq.s32.totalorder %s58, 0
    %s61 = sadd.s32 %s60, 1
    %s62 = scalar_select %p59, %s60, %s61
    %p65 = pneg %p59
    %p66 = scmp.eq.s32.totalorder %s10, 1
    %p67 = por %p65, %p66
    %p68 = scmp.ne.s32.totalorder %s60, %s63
    %p69 = scmp.eq.s32.totalorder %s10, 0
    %p70 = por %p68, %p69
    %p71 = scmp.ne.s32.totalorder %s60, %s63
    %p72 = scmp.eq.s32.totalorder %s15, 1
    %p73 = por %p71, %p72
    %p74 = scmp.ne.s32.totalorder %s63, %s64
    %p75 = scmp.eq.s32.totalorder %s15, 0
    %p76 = por %p74, %p75
    %p77 = scmp.ne.s32.totalorder %s63, %s64
    %p78 = scmp.eq.s32.totalorder %s16, 1
    %p79 = por %p77, %p78
    %p81 = scmp.ne.s32.totalorder %s64, %s80
    %p82 = scmp.eq.s32.totalorder %s16, 0
    %p83 = por %p81, %p82
    %s85 = sadd.s32 %s84, 1
    %p88 = scmp.eq.s32.totalorder %s10, 1
    %p89 = scmp.ne.s32.totalorder %s84, %s86
    %p90 = scmp.eq.s32.totalorder %s10, 0
    %p91 = por %p89, %p90
    %p92 = scmp.ne.s32.totalorder %s84, %s86
    %p93 = scmp.eq.s32.totalorder %s15, 1
    %p94 = por %p92, %p93
    %p95 = scmp.ne.s32.totalorder %s86, %s87
    %p96 = scmp.eq.s32.totalorder %s15, 0
    %p97 = por %p95, %p96
    %p98 = scmp.ne.s32.totalorder %s86, %s87
    %p99 = scmp.eq.s32.totalorder %s16, 1
    %p100 = por %p98, %p99
    %p102 = scmp.ne.s32.totalorder %s87, %s101
    %p103 = scmp.eq.s32.totalorder %s16, 0
    %p104 = por %p102, %p103
    %s106 = sadd.s32 %s105, 1
    %p109 = scmp.eq.s32.totalorder %s10, 1
    %p110 = scmp.ne.s32.totalorder %s105, %s107
    %p111 = scmp.eq.s32.totalorder %s10, 0
    %p112 = por %p110, %p111
    %p113 = scmp.ne.s32.totalorder %s105, %s107
    %p114 = scmp.eq.s32.totalorder %s15, 1
    %p115 = por %p113, %p114
    %p116 = scmp.ne.s32.totalorder %s107, %s108
    %p117 = scmp.eq.s32.totalorder %s15, 0
    %p118 = por %p116, %p117
    %p119 = scmp.ne.s32.totalorder %s107, %s108
    %p120 = scmp.eq.s32.totalorder %s16, 1
    %p121 = por %p119, %p120
    %p123 = scmp.ne.s32.totalorder %s108, %s122
    %p124 = scmp.eq.s32.totalorder %s16, 0
    %p125 = por %p123, %p124
    %s126 = ssub.s32 %s17, %s29
    %s127 = ssub.s32 %s18, %s25
    %s128 = sor.u32 %s126, %s127
    %p129 = scmp.eq.s32.totalorder %s128, 0
    %s131 = sadd.s32 %s130, 1
    %s132 = scalar_select %p129, %s130, %s131
    %p135 = pneg %p129
    %p136 = scmp.eq.s32.totalorder %s10, 1
    %p137 = por %p135, %p136
    %p138 = scmp.ne.s32.totalorder %s130, %s133
    %p139 = scmp.eq.s32.totalorder %s10, 0
    %p140 = por %p138, %p139
    %p141 = scmp.ne.s32.totalorder %s130, %s133
    %p142 = scmp.eq.s32.totalorder %s15, 1
    %p143 = por %p141, %p142
    %p144 = scmp.ne.s32.totalorder %s133, %s134
    %p145 = scmp.eq.s32.totalorder %s15, 0
    %p146 = por %p144, %p145
    %p147 = scmp.ne.s32.totalorder %s133, %s134
    %p148 = scmp.eq.s32.totalorder %s16, 1
    %p149 = por %p147, %p148
    %p151 = scmp.ne.s32.totalorder %s134, %s150
    %p152 = scmp.eq.s32.totalorder %s16, 0
    %p153 = por %p151, %p152
    %p154 = scmp.le.s32.totalorder 1, %s10
    %p155 = scmp.lt.s32.totalorder %s10, 3
    %p156 = pnand %p154, %p155
    %p157 = pneg %p156
    // Predicated region
    $region9: #{_lambda_.10} parent=5 // pred_check
      _
    $region10: #{_lambda_.10} parent=5 // pred_check_branch
      %159 = sbr.rel (%p156) target = $region12
    $region11: #{_lambda_.10} parent=5 // pred_region
      %s160 = ssub.s32 %s10, 1
      // Predicated region
      $region13: #{_lambda_.10} parent=11 // pred_check
        %p161 = pneg %p76
      $region14: #{_lambda_.10} parent=11 // pred_check_branch
        %163 = sbr.rel (%p161) target = $region16
      $region15: #{_lambda_.10} parent=11 // pred_region
        %s164 = smul.u32 2, %s20
        %p165 = scmp.lt.s32.totalorder %s164, 1
        %s166 = scalar_select %p165, %s164, 1
        %s167 = smul.addr %s166, 8
        %s168 = scalar_lea.vmem %s1, %s167
        %s169 = smul.u32 2, %s20
      $region16: #{_lambda_.10} parent=11 // pred_fallthru
        _
      // Predicated region
      $region17: #{_lambda_.10} parent=11 // pred_check
        %p170 = pneg %p97
      $region18: #{_lambda_.10} parent=11 // pred_check_branch
        %172 = sbr.rel (%p170) target = $region20
      $region19: #{_lambda_.10} parent=11 // pred_region
        _
      $region20: #{_lambda_.10} parent=11 // pred_fallthru
        _
      // Predicated region
      $region21: #{_lambda_.10} parent=11 // pred_check
        %p173 = pneg %p118
      $region22: #{_lambda_.10} parent=11 // pred_check_branch
        %175 = sbr.rel (%p173) target = $region24
      $region23: #{_lambda_.10} parent=11 // pred_region
        _
      $region24: #{_lambda_.10} parent=11 // pred_fallthru
        _
    $region12: #{_lambda_.10} parent=5 // pred_fallthru
      _
    %p176 = scmp.lt.s32.totalorder %s10, 2
    // Predicated region
    $region25: #{_lambda_.10} parent=5 // pred_check
      %p177 = pneg %p176
    $region26: #{_lambda_.10} parent=5 // pred_check_branch
      %179 = sbr.rel (%p177) target = $region28
    $region27: #{_lambda_.10} parent=5 // pred_region
      // Predicated region
      $region29: #{_lambda_.10} parent=27 // pred_check
        %p180 = pneg %p44
      $region30: #{_lambda_.10} parent=27 // pred_check_branch
        %182 = sbr.rel (%p180) target = $region32
      $region31: #{_lambda_.10} parent=27 // pred_region
        %s183 = smul.u32 2, %s18
        %p184 = scmp.lt.s32.totalorder %s17, 1
        %s185 = scalar_select %p184, %s17, 1
        %p186 = scmp.lt.s32.totalorder %s183, 1
        %s187 = scalar_select %p186, %s183, 1
        %s188 = smul.addr %s185, 2
        %s189 = sadd.s32 %s187, %s188
        %s190 = smul.addr %s189, 8
        %s191 = scalar_lea.vmem %s0, %s190
        %s192 = smul.u32 2, %s18
      $region32: #{_lambda_.10} parent=27 // pred_fallthru
        _
    $region28: #{_lambda_.10} parent=5 // pred_fallthru
      _
    %p193 = scmp.le.s32.totalorder 1, %s10
    %p194 = scmp.lt.s32.totalorder %s10, 3
    %p195 = pnand %p193, %p194
    %p196 = pneg %p195
    // Predicated region
    $region33: #{_lambda_.10} parent=5 // pred_check
      _
    $region34: #{_lambda_.10} parent=5 // pred_check_branch
      %198 = sbr.rel (%p195) target = $region36
    $region35: #{_lambda_.10} parent=5 // pred_region
      %s199 = ssub.s32 %s10, 1
      %s200 = smul.u32 2, %s20
      %p201 = scmp.lt.s32.totalorder %s19, 1
      %s202 = scalar_select %p201, %s19, 1
      %p203 = scmp.lt.s32.totalorder %s200, 1
      %s204 = scalar_select %p203, %s200, 1
      %s205 = smul.addr %s202, 2
      %s206 = sadd.s32 %s204, %s205
      %s207 = smul.addr %s206, 8
      %s208 = scalar_lea.vmem %s0, %s207
      %p209 = pneg %p50
      %p210 = pneg %p47
      %s211 = smul.u32 2, %s20
      %p212 = scmp.lt.s32.totalorder %s211, 1
      %s213 = scalar_select %p212, %s211, 1
      %s214 = smul.addr %s213, 8
      %s215 = scalar_lea.vmem %s1, %s214
      %p216 = pneg %p76
      %p217 = pneg %p73
      %p218 = pneg %p97
      %p219 = pneg %p94
      %p220 = pneg %p118
      %p221 = pneg %p115
      %p222 = pneg %p146
      %p223 = pneg %p143
      %s224 = smul.u32 2, %s20
      %p225 = scmp.lt.s32.totalorder %s19, 1
      %s226 = scalar_select %p225, %s19, 1
      %p227 = scmp.lt.s32.totalorder %s224, 1
      %s228 = scalar_select %p227, %s224, 1
      %s229 = smul.addr %s226, 2
      %s230 = sadd.s32 %s228, %s229
      %s231 = smul.addr %s230, 8
      %s232 = scalar_lea.vmem %s4, %s231
      %s233 = smul.u32 2, %s20
      %p234 = scmp.lt.s32.totalorder %s19, 1
      %s235 = scalar_select %p234, %s19, 1
      %p236 = scmp.lt.s32.totalorder %s233, 1
      %s237 = scalar_select %p236, %s233, 1
      %s238 = smul.addr %s235, 2
      %s239 = sadd.s32 %s237, %s238
      %s240 = smul.addr %s239, 8
      %s241 = scalar_lea.vmem %s0, %s240
      %s242 = smul.u32 2, %s20
      %s243 = smul.u32 2, %s20
      %p244 = scmp.lt.s32.totalorder %s243, 1
      %s245 = scalar_select %p244, %s243, 1
      %s246 = smul.addr %s245, 8
      %s247 = scalar_lea.vmem %s1, %s246
      %s248 = smul.u32 2, %s20
      %s249 = smul.u32 2, %s20
      %p250 = scmp.lt.s32.totalorder %s19, 1
      %s251 = scalar_select %p250, %s19, 1
      %p252 = scmp.lt.s32.totalorder %s249, 1
      %s253 = scalar_select %p252, %s249, 1
      %s254 = smul.addr %s251, 2
      %s255 = sadd.s32 %s253, %s254
      %s256 = smul.addr %s255, 8
      %s257 = scalar_lea.vmem %s4, %s256
      %s258 = smul.u32 2, %s20
      %v259 = vld [vmem:[%s241] sm:$0xff]
      %v260 = vld [vmem:[%s241 + $0x8] sm:$0xff]
      %v261 = vld [vmem:[%s247] sm:$0xff]
      %v262 = vld [vmem:[%s247 + $0x8] sm:$0xff]
      %v263 = vadd.f32 %v259, %v261
      %v264 = vadd.f32 %v260, %v262
      %vm265 = vcmask 261120
      %v266 = vsel %vm265, %v263, 0.0
      %267 = vadd.xlane.f32.xlu0 %v266
      %v268 = vpop.xlane.xlu0 %267
      %v269 = vsel %vm265, %v264, 0.0
      %270 = vadd.xlane.f32.xlu0 %v269
      %v271 = vpop.xlane.xlu0 %270
      %v272 = vrcp.pop 32.0
      %v273 = vmul.f32 %v268, %v272
      %v274 = vmul.f32 %v271, %v272
      %v275 = vsub.f32 %v263, %v273
      %v276 = vsub.f32 %v264, %v274
      %v277 = vmul.f32 %v275, %v275
      %v278 = vmul.f32 %v276, %v276
      %v279 = vsel %vm265, %v277, 0.0
      %280 = vadd.xlane.f32.xlu0 %v279
      %v281 = vpop.xlane.xlu0 %280
      %v282 = vsel %vm265, %v278, 0.0
      %283 = vadd.xlane.f32.xlu0 %v282
      %v284 = vpop.xlane.xlu0 %283
      %v285 = vmul.f32 %v281, %v272
      %v286 = vmul.f32 %v284, %v272
      %v287 = vadd.f32 %v285, 1e-12
      %v288 = vadd.f32 %v286, 1e-12
      %v289 = vrsqrt.pop %v287
      %v290 = vrsqrt.pop %v288
      %v291 = vmul.f32 %v275, %v289
      %v292 = vmul.f32 %v276, %v290
      %v293 = vld [vmem:[%s2] sm:$0x1]
      %v295 = vlaneseq
      %v296 = vshrl.u32 %v295, 7
      %v297 = vsub.s32 0, %v296
      %v298 = vrot.slane %v293, %v297
      %v300 = vmul.f32 %v291, %v298
      %v301 = vmul.f32 %v292, %v298
      %v302 = vld [vmem:[%s3] sm:$0x1]
      %v304 = vlaneseq
      %v305 = vshrl.u32 %v304, 7
      %v306 = vsub.s32 0, %v305
      %v307 = vrot.slane %v302, %v306
      %v309 = vadd.f32 %v300, %v307
      %v310 = vadd.f32 %v301, %v307
      %311 = vst.msk [vmem:[%s257] sm:$0xff] %vm265, %v309
      %312 = vst.msk [vmem:[%s257 + $0x8] sm:$0xff] %vm265, %v310
      %s313 = smul.u32 2, %s20
      %p314 = scmp.lt.s32.totalorder %s19, 1
      %s315 = scalar_select %p314, %s19, 1
      %p316 = scmp.lt.s32.totalorder %s313, 1
      %s317 = scalar_select %p316, %s313, 1
      %s318 = smul.addr %s315, 2
      %s319 = sadd.s32 %s317, %s318
      %s320 = smul.addr %s319, 8
      %s321 = scalar_lea.vmem %s4, %s320
      // Predicated region
      $region37: #{_lambda_.10} parent=35 // pred_check
        %p322 = pneg %p143
      $region38: #{_lambda_.10} parent=35 // pred_check_branch
        %324 = sbr.rel (%p322) target = $region40
      $region39: #{_lambda_.10} parent=35 // pred_region
        %s325 = smul.u32 2, %s20
      $region40: #{_lambda_.10} parent=35 // pred_fallthru
        _
    $region36: #{_lambda_.10} parent=5 // pred_fallthru
      _
    %p326 = scmp.le.s32.totalorder 2, %s10
    // Predicated region
    $region41: #{_lambda_.10} parent=5 // pred_check
      %p327 = pneg %p326
    $region42: #{_lambda_.10} parent=5 // pred_check_branch
      %329 = sbr.rel (%p327) target = $region44
    $region43: #{_lambda_.10} parent=5 // pred_region
      %s330 = ssub.s32 %s10, 2
      // Predicated region
      $region45: #{_lambda_.10} parent=43 // pred_check
        %p331 = pneg %p149
      $region46: #{_lambda_.10} parent=43 // pred_check_branch
        %333 = sbr.rel (%p331) target = $region48
      $region47: #{_lambda_.10} parent=43 // pred_region
        %s334 = smul.u32 2, %s22
        %p335 = scmp.lt.s32.totalorder %s21, 1
        %s336 = scalar_select %p335, %s21, 1
        %p337 = scmp.lt.s32.totalorder %s334, 1
        %s338 = scalar_select %p337, %s334, 1
        %s339 = smul.addr %s336, 2
        %s340 = sadd.s32 %s338, %s339
        %s341 = smul.addr %s340, 8
        %s342 = scalar_lea.vmem %s4, %s341
      $region48: #{_lambda_.10} parent=43 // pred_fallthru
        _
    $region44: #{_lambda_.10} parent=5 // pred_fallthru
      _
  $region6: #{_lambda_.10} parent=0 // loop_footer
    %s14 = sadd.s32 1, %s10
  $region7: #{_lambda_.10} parent=0 // loop_footer_branch
    %9 = sbr.rel target = $region3
  $region8: #{_lambda_.10} parent=0 // loop_exit
    _

// kernel: _lambda_.13
$region0: #{_lambda_.13}
  #allocation0 [shape = 'u32[]', space=smem, size = 0x4, offset = 0x4, fixed_abs, tag = 'smem constant byte address 0x4 - core index']
  #allocation1 [shape = 'u32[144,128]{1,0:T(1,128)}', space=vmem, size = 0x12000, scoped, tag = 'internal scratch']
  %s0 = inlined_call_operand.vmem [shape: f32[2,6,32], index: 0, kind: input, shape index: {}]
  %s1 = inlined_call_operand.vmem [shape: f32[32,32], index: 1, kind: input, shape index: {}]
  %s2 = inlined_call_operand.vmem [shape: f32[2,1,6], index: 2, kind: input, shape index: {}]
  %s3 = inlined_call_operand.vmem [shape: f32[2,6,32], index: 3, kind: output, shape index: {}]
  %s4 = sld [smem:[#allocation0]]
  $region22: #{_lambda_.13} parent=0
    _
  %s6 = ssub.s32 1, %s4
  %s7 = scalar_select 0, %s6, %s4
  // Predicated region
  $region2: #{_lambda_.13} parent=0 // pred_check
    _
  $region3: #{_lambda_.13} parent=0 // pred_check_branch
    %9 = sbr.rel (0) target = $region5
  $region4: #{_lambda_.13} parent=0 // pred_region
    _
  $region5: #{_lambda_.13} parent=0 // pred_fallthru
    _
  // Predicated region
  $region6: #{_lambda_.13} parent=0 // pred_check
    _
  $region7: #{_lambda_.13} parent=0 // pred_check_branch
    %11 = sbr.rel (0) target = $region9
  $region8: #{_lambda_.13} parent=0 // pred_region
    _
  $region9: #{_lambda_.13} parent=0 // pred_fallthru
    _
  // Predicated region
  $region10: #{_lambda_.13} parent=0 // pred_check
    _
  $region11: #{_lambda_.13} parent=0 // pred_check_branch
    %13 = sbr.rel (0) target = $region13
  $region12: #{_lambda_.13} parent=0 // pred_region
    _
  $region13: #{_lambda_.13} parent=0 // pred_fallthru
    _
  %v14 = vld [vmem:[%s0] sm:$0x3f]
  %v15 = vld [vmem:[%s0 + $0x8] sm:$0x3f]
  %v18 = vcombine.high %v14, %v14
  %v20 = vunpack.c.l.s4 1983009808
  %v21 = vunpack.c.0.s8 %v20
  %v22 = vlaneseq
  %v23 = vshrl.u32 %v22, 7
  %v24 = vsub.s32 %v21, %v23
  %v25 = vrot.slane %v14, %v24
  %v27 = vunpack.c.l.s4 1983009808
  %v28 = vunpack.c.0.s8 %v27
  %v29 = vlaneseq
  %v30 = vshrl.u32 %v29, 7
  %v31 = vsub.s32 %v28, %v30
  %v32 = vrot.slane %v18, %v31
  %v33 = vcombine.high %v25, %v25
  %v34 = vcombine.high %v15, %v15
  %v36 = vunpack.c.l.s4 1983009808
  %v37 = vunpack.c.0.s8 %v36
  %v38 = vlaneseq
  %v39 = vshrl.u32 %v38, 7
  %v40 = vsub.s32 %v37, %v39
  %v41 = vrot.slane %v15, %v40
  %v43 = vunpack.c.l.s4 1983009808
  %v44 = vunpack.c.0.s8 %v43
  %v45 = vlaneseq
  %v46 = vshrl.u32 %v45, 7
  %v47 = vsub.s32 %v44, %v46
  %v48 = vrot.slane %v34, %v47
  %v49 = vcombine.high %v41, %v41
  %v50 = vld [vmem:[%s1] sm:$0xff]
  %v51 = vld [vmem:[%s1 + $0x8] sm:$0xff]
  %v52 = vld [vmem:[%s1 + $0x10] sm:$0xff]
  %v53 = vld [vmem:[%s1 + $0x18] sm:$0xff]
  %v54 = vcombine.low %v25, %v33
  %v55 = vcombine.low %v32, %v41
  %v57 = vunpack.c.l.s4 1983009808
  %v58 = vunpack.c.0.s8 %v57
  %v59 = vlaneseq
  %v60 = vshrl.u32 %v59, 7
  %v61 = vsub.s32 %v58, %v60
  %v62 = vrot.slane %v54, %v61
  %v64 = vunpack.c.l.s4 1983009808
  %v65 = vunpack.c.0.s8 %v64
  %v66 = vlaneseq
  %v67 = vshrl.u32 %v66, 7
  %v68 = vsub.s32 %v65, %v67
  %v69 = vrot.slane %v55, %v68
  %v70 = vcombine.low %v62, %v69
  %v71 = vcombine.low %v49, %v48
  %v73 = vunpack.c.l.s4 1983009808
  %v74 = vunpack.c.0.s8 %v73
  %v75 = vlaneseq
  %v76 = vshrl.u32 %v75, 7
  %v77 = vsub.s32 %v74, %v76
  %v78 = vrot.slane %v71, %v77
  %vm79 = vcmask 261120
  %v80 = vsel %vm79, %v70, 0
  %v82 = vsel %vm79, %v78, 0
  %84 = vmatprep.subr.mxu0 0.0
  %85 = vmatpush1.msra.mxu0 0.0
  %86 = vmatprep.subr.mxu0 0.0
  %87 = vmatpush1.msra.mxu0 0.0
  %88 = vmatprep.subr.mxu0 0.0
  %89 = vmatpush1.msra.mxu0 0.0
  %90 = vmatprep.subr.mxu0 0.0
  %91 = vmatpush1.msra.mxu0 0.0
  %92 = vmatprep.subr.mxu0 0.0
  %93 = vmatpush1.msra.mxu0 0.0
  %94 = vmatprep.subr.mxu0 0.0
  %95 = vmatpush1.msra.mxu0 0.0
  %96 = vmatprep.subr.mxu0 0.0
  %97 = vmatpush1.msra.mxu0 0.0
  %98 = vmatprep.subr.mxu0 0.0
  %99 = vmatpush1.msra.mxu0 0.0
  %100 = vmatprep.subr.mxu0 0.0
  %101 = vmatpush1.msra.mxu0 0.0
  %102 = vmatprep.subr.mxu0 0.0
  %103 = vmatpush1.msra.mxu0 0.0
  %104 = vmatprep.subr.mxu0 0.0
  %105 = vmatpush1.msra.mxu0 0.0
  %106 = vmatprep.subr.mxu0 0.0
  %107 = vmatpush1.msra.mxu0 0.0
  %108 = vmatprep.subr.mxu0 0.0
  %109 = vmatpush1.msra.mxu0 %v53
  %110 = vmatprep.subr.mxu0 0.0
  %111 = vmatpush1.msra.mxu0 %v52
  %112 = vmatprep.subr.mxu0 0.0
  %113 = vmatpush1.msra.mxu0 %v51
  %114 = vmatprep.subr.mxu0 0.0
  %115 = vmatpush1.msra.mxu0 %v50
  %116 = vmatprep.subr.mxu0 0.0
  %117 = vmatpush2.msra.mxu0 0.0
  %118 = vmatprep.subr.mxu0 0.0
  %119 = vmatpush2.msra.mxu0 0.0
  %120 = vmatprep.subr.mxu0 0.0
  %121 = vmatpush2.msra.mxu0 0.0
  %122 = vmatprep.subr.mxu0 0.0
  %123 = vmatpush2.msra.mxu0 0.0
  %124 = vmatprep.subr.mxu0 0.0
  %125 = vmatpush2.msra.mxu0 0.0
  %126 = vmatprep.subr.mxu0 0.0
  %127 = vmatpush2.msra.mxu0 0.0
  %128 = vmatprep.subr.mxu0 0.0
  %129 = vmatpush2.msra.mxu0 0.0
  %130 = vmatprep.subr.mxu0 0.0
  %131 = vmatpush2.msra.mxu0 0.0
  %132 = vmatprep.subr.mxu0 0.0
  %133 = vmatpush2.msra.mxu0 0.0
  %134 = vmatprep.subr.mxu0 0.0
  %135 = vmatpush2.msra.mxu0 0.0
  %136 = vmatprep.subr.mxu0 0.0
  %137 = vmatpush2.msra.mxu0 0.0
  %138 = vmatprep.subr.mxu0 0.0
  %139 = vmatpush2.msra.mxu0 0.0
  %140 = vmatprep.subr.mxu0 0.0
  %141 = vmatpush2.msra.mxu0 0.0
  %142 = vmatprep.subr.mxu0 0.0
  %143 = vmatpush2.msra.mxu0 0.0
  %144 = vmatprep.subr.mxu0 0.0
  %145 = vmatpush2.msra.mxu0 0.0
  %146 = vmatprep.subr.mxu0 0.0
  %147 = vmatpush2.msra.mxu0 0.0
  %148 = vmatprep.mubr.f32.mxu0 0.0
  %149 = vmatmul.mubr.f32.gmra.mxu0 %v80
  %v150 = vpop.f32.mrf.mxu0
  %v151 = vadd.f32 0.0, %v150
  %v152 = vpop.f32.mrf.mxu0
  %153 = vmatprep.mubr.f32.mxu0 0.0
  %154 = vmatmul.mubr.f32.gmra.mxu0 %v82
  %v155 = vpop.f32.mrf.mxu0
  %v156 = vadd.f32 0.0, %v155
  %v157 = vpop.f32.mrf.mxu0
  %158 = vdwg.mxu0
  %v161 = vcombine.high %v151, %v151
  %v163 = vunpack.c.l.s4 1983009808
  %v164 = vunpack.c.0.s8 %v163
  %v165 = vlaneseq
  %v166 = vshrl.u32 %v165, 7
  %v167 = vsub.s32 %v164, %v166
  %v168 = vrot.slane %v151, %v167
  %v170 = vunpack.c.l.s4 1983009808
  %v171 = vunpack.c.0.s8 %v170
  %v172 = vlaneseq
  %v173 = vshrl.u32 %v172, 7
  %v174 = vsub.s32 %v171, %v173
  %v175 = vrot.slane %v161, %v174
  %v176 = vcombine.high %v168, %v168
  %v177 = vcombine.high %v175, %v175
  %v179 = vunpack.c.l.s4 1983009808
  %v180 = vunpack.c.0.s8 %v179
  %v181 = vlaneseq
  %v182 = vshrl.u32 %v181, 7
  %v183 = vsub.s32 %v180, %v182
  %v184 = vrot.slane %v156, %v183
  %v185 = vcombine.high %v184, %v184
  %v192 = vld [vmem:[%s2] sm:$0x1]
  %v193 = vld [vmem:[%s2 + $0x1] sm:$0x1]
  %vm194 = vcmask 40960
  %v195 = vsel %vm194, %v192, -inf
  %196 = vmax.xlane.f32.xlu0 %v195
  %v197 = vpop.xlane.xlu0 %196
  %v198 = vsel %vm194, %v193, -inf
  %199 = vmax.xlane.f32.xlu0 %v198
  %v200 = vpop.xlane.xlu0 %199
  %vm201 = vcmp.ge.f32.partialorder %v197, 0.0
  %vm202 = vcmp.ge.f32.partialorder %v200, 0.0
  %v203 = vsel %vm201, 1, 0
  %v204 = vsel %vm202, 1, 0
  %v205 = vcvt.s32.f32 %v203
  %v206 = vcvt.s32.f32 %v204
  %v207 = vmul.f32 %v168, 0.35355338
  %v208 = vmul.f32 %v176, 0.35355338
  %v209 = vmul.f32 %v175, 0.35355338
  %v210 = vmul.f32 %v177, 0.35355338
  %v211 = vmul.f32 %v184, 0.35355338
  %v212 = vmul.f32 %v185, 0.35355338
  %v215 = vlaneseq
  %v216 = vshrl.u32 %v215, 7
  %v217 = vsub.s32 0, %v216
  %v218 = vrot.slane %v192, %v217
  %v219 = vlaneseq
  %v220 = vshrl.u32 %v219, 7
  %v221 = vsub.s32 0, %v220
  %v222 = vrot.slane %v193, %v221
  %v228 = vcombine.low %v207, %v208
  %v230 = vunpack.c.l.s4 1983009808
  %v231 = vunpack.c.0.s8 %v230
  %v232 = vlaneseq
  %v233 = vshrl.u32 %v232, 7
  %v234 = vsub.s32 %v231, %v233
  %v235 = vrot.slane %v228, %v234
  %v237 = vunpack.c.l.s4 1983009808
  %v238 = vunpack.c.0.s8 %v237
  %v239 = vlaneseq
  %v240 = vshrl.u32 %v239, 7
  %v241 = vsub.s32 %v238, %v240
  %v242 = vrot.slane %v209, %v241
  %v243 = vcombine.low %v235, %v242
  %v244 = vcombine.low %v168, %v176
  %v246 = vunpack.c.l.s4 1983009808
  %v247 = vunpack.c.0.s8 %v246
  %v248 = vlaneseq
  %v249 = vshrl.u32 %v248, 7
  %v250 = vsub.s32 %v247, %v249
  %v251 = vrot.slane %v244, %v250
  %v253 = vunpack.c.l.s4 1983009808
  %v254 = vunpack.c.0.s8 %v253
  %v255 = vlaneseq
  %v256 = vshrl.u32 %v255, 7
  %v257 = vsub.s32 %v254, %v256
  %v258 = vrot.slane %v175, %v257
  %v259 = vcombine.low %v251, %v258
  %vm260 = vcmask 64512
  %v261 = vsel %vm260, %v243, 0
  %v263 = vsel %vm260, %v259, 0
  %265 = vmatprep.subr.mxu0 0.0
  %266 = vmatpush1.xpose.msra.mxu0 0.0
  %267 = vmatprep.subr.mxu0 0.0
  %268 = vmatpush1.xpose.msra.mxu0 0.0
  %269 = vmatprep.subr.mxu0 0.0
  %270 = vmatpush1.xpose.msra.mxu0 0.0
  %271 = vmatprep.subr.mxu0 0.0
  %272 = vmatpush1.xpose.msra.mxu0 0.0
  %273 = vmatprep.subr.mxu0 0.0
  %274 = vmatpush1.xpose.msra.mxu0 0.0
  %275 = vmatprep.subr.mxu0 0.0
  %276 = vmatpush1.xpose.msra.mxu0 0.0
  %277 = vmatprep.subr.mxu0 0.0
  %278 = vmatpush1.xpose.msra.mxu0 0.0
  %279 = vmatprep.subr.mxu0 0.0
  %280 = vmatpush1.xpose.msra.mxu0 0.0
  %281 = vmatprep.subr.mxu0 0.0
  %282 = vmatpush1.xpose.msra.mxu0 0.0
  %283 = vmatprep.subr.mxu0 0.0
  %284 = vmatpush1.xpose.msra.mxu0 0.0
  %285 = vmatprep.subr.mxu0 0.0
  %286 = vmatpush1.xpose.msra.mxu0 0.0
  %287 = vmatprep.subr.mxu0 0.0
  %288 = vmatpush1.xpose.msra.mxu0 0.0
  %289 = vmatprep.subr.mxu0 0.0
  %290 = vmatpush1.xpose.msra.mxu0 0.0
  %291 = vmatprep.subr.mxu0 0.0
  %292 = vmatpush1.xpose.msra.mxu0 0.0
  %293 = vmatprep.subr.mxu0 0.0
  %294 = vmatpush1.xpose.msra.mxu0 0.0
  %295 = vmatprep.subr.mxu0 0.0
  %296 = vmatpush1.xpose.msra.mxu0 %v263
  %297 = vmatprep.subr.mxu0 0.0
  %298 = vmatpush2.xpose.msra.mxu0 0.0
  %299 = vmatprep.subr.mxu0 0.0
  %300 = vmatpush2.xpose.msra.mxu0 0.0
  %301 = vmatprep.subr.mxu0 0.0
  %302 = vmatpush2.xpose.msra.mxu0 0.0
  %303 = vmatprep.subr.mxu0 0.0
  %304 = vmatpush2.xpose.msra.mxu0 0.0
  %305 = vmatprep.subr.mxu0 0.0
  %306 = vmatpush2.xpose.msra.mxu0 0.0
  %307 = vmatprep.subr.mxu0 0.0
  %308 = vmatpush2.xpose.msra.mxu0 0.0
  %309 = vmatprep.subr.mxu0 0.0
  %310 = vmatpush2.xpose.msra.mxu0 0.0
  %311 = vmatprep.subr.mxu0 0.0
  %312 = vmatpush2.xpose.msra.mxu0 0.0
  %313 = vmatprep.subr.mxu0 0.0
  %314 = vmatpush2.xpose.msra.mxu0 0.0
  %315 = vmatprep.subr.mxu0 0.0
  %316 = vmatpush2.xpose.msra.mxu0 0.0
  %317 = vmatprep.subr.mxu0 0.0
  %318 = vmatpush2.xpose.msra.mxu0 0.0
  %319 = vmatprep.subr.mxu0 0.0
  %320 = vmatpush2.xpose.msra.mxu0 0.0
  %321 = vmatprep.subr.mxu0 0.0
  %322 = vmatpush2.xpose.msra.mxu0 0.0
  %323 = vmatprep.subr.mxu0 0.0
  %324 = vmatpush2.xpose.msra.mxu0 0.0
  %325 = vmatprep.subr.mxu0 0.0
  %326 = vmatpush2.xpose.msra.mxu0 0.0
  %327 = vmatprep.subr.mxu0 0.0
  %328 = vmatpush2.xpose.msra.mxu0 0.0
  %329 = vmatprep.mubr.f32.mxu0 0.0
  %330 = vmatmul.mubr.f32.gmra.mxu0 %v261
  %v331 = vpop.f32.mrf.mxu0
  %v332 = vadd.f32 %v218, %v331
  %v333 = vpop.f32.mrf.mxu0
  %334 = vdwg.mxu0
  %v338 = vcombine.low %v210, %v211
  %v340 = vunpack.c.l.s4 1983009808
  %v341 = vunpack.c.0.s8 %v340
  %v342 = vlaneseq
  %v343 = vshrl.u32 %v342, 7
  %v344 = vsub.s32 %v341, %v343
  %v345 = vrot.slane %v338, %v344
  %v347 = vunpack.c.l.s4 1983009808
  %v348 = vunpack.c.0.s8 %v347
  %v349 = vlaneseq
  %v350 = vshrl.u32 %v349, 7
  %v351 = vsub.s32 %v348, %v350
  %v352 = vrot.slane %v212, %v351
  %v353 = vcombine.low %v345, %v352
  %v354 = vcombine.low %v177, %v184
  %v356 = vunpack.c.l.s4 1983009808
  %v357 = vunpack.c.0.s8 %v356
  %v358 = vlaneseq
  %v359 = vshrl.u32 %v358, 7
  %v360 = vsub.s32 %v357, %v359
  %v361 = vrot.slane %v354, %v360
  %v363 = vunpack.c.l.s4 1983009808
  %v364 = vunpack.c.0.s8 %v363
  %v365 = vlaneseq
  %v366 = vshrl.u32 %v365, 7
  %v367 = vsub.s32 %v364, %v366
  %v368 = vrot.slane %v185, %v367
  %v369 = vcombine.low %v361, %v368
  %v370 = vsel %vm260, %v353, 0
  %v372 = vsel %vm260, %v369, 0
  %374 = vmatprep.subr.mxu0 0.0
  %375 = vmatpush1.xpose.msra.mxu0 0.0
  %376 = vmatprep.subr.mxu0 0.0
  %377 = vmatpush1.xpose.msra.mxu0 0.0
  %378 = vmatprep.subr.mxu0 0.0
  %379 = vmatpush1.xpose.msra.mxu0 0.0
  %380 = vmatprep.subr.mxu0 0.0
  %381 = vmatpush1.xpose.msra.mxu0 0.0
  %382 = vmatprep.subr.mxu0 0.0
  %383 = vmatpush1.xpose.msra.mxu0 0.0
  %384 = vmatprep.subr.mxu0 0.0
  %385 = vmatpush1.xpose.msra.mxu0 0.0
  %386 = vmatprep.subr.mxu0 0.0
  %387 = vmatpush1.xpose.msra.mxu0 0.0
  %388 = vmatprep.subr.mxu0 0.0
  %389 = vmatpush1.xpose.msra.mxu0 0.0
  %390 = vmatprep.subr.mxu0 0.0
  %391 = vmatpush1.xpose.msra.mxu0 0.0
  %392 = vmatprep.subr.mxu0 0.0
  %393 = vmatpush1.xpose.msra.mxu0 0.0
  %394 = vmatprep.subr.mxu0 0.0
  %395 = vmatpush1.xpose.msra.mxu0 0.0
  %396 = vmatprep.subr.mxu0 0.0
  %397 = vmatpush1.xpose.msra.mxu0 0.0
  %398 = vmatprep.subr.mxu0 0.0
  %399 = vmatpush1.xpose.msra.mxu0 0.0
  %400 = vmatprep.subr.mxu0 0.0
  %401 = vmatpush1.xpose.msra.mxu0 0.0
  %402 = vmatprep.subr.mxu0 0.0
  %403 = vmatpush1.xpose.msra.mxu0 0.0
  %404 = vmatprep.subr.mxu0 0.0
  %405 = vmatpush1.xpose.msra.mxu0 %v372
  %406 = vmatprep.subr.mxu0 0.0
  %407 = vmatpush2.xpose.msra.mxu0 0.0
  %408 = vmatprep.subr.mxu0 0.0
  %409 = vmatpush2.xpose.msra.mxu0 0.0
  %410 = vmatprep.subr.mxu0 0.0
  %411 = vmatpush2.xpose.msra.mxu0 0.0
  %412 = vmatprep.subr.mxu0 0.0
  %413 = vmatpush2.xpose.msra.mxu0 0.0
  %414 = vmatprep.subr.mxu0 0.0
  %415 = vmatpush2.xpose.msra.mxu0 0.0
  %416 = vmatprep.subr.mxu0 0.0
  %417 = vmatpush2.xpose.msra.mxu0 0.0
  %418 = vmatprep.subr.mxu0 0.0
  %419 = vmatpush2.xpose.msra.mxu0 0.0
  %420 = vmatprep.subr.mxu0 0.0
  %421 = vmatpush2.xpose.msra.mxu0 0.0
  %422 = vmatprep.subr.mxu0 0.0
  %423 = vmatpush2.xpose.msra.mxu0 0.0
  %424 = vmatprep.subr.mxu0 0.0
  %425 = vmatpush2.xpose.msra.mxu0 0.0
  %426 = vmatprep.subr.mxu0 0.0
  %427 = vmatpush2.xpose.msra.mxu0 0.0
  %428 = vmatprep.subr.mxu0 0.0
  %429 = vmatpush2.xpose.msra.mxu0 0.0
  %430 = vmatprep.subr.mxu0 0.0
  %431 = vmatpush2.xpose.msra.mxu0 0.0
  %432 = vmatprep.subr.mxu0 0.0
  %433 = vmatpush2.xpose.msra.mxu0 0.0
  %434 = vmatprep.subr.mxu0 0.0
  %435 = vmatpush2.xpose.msra.mxu0 0.0
  %436 = vmatprep.subr.mxu0 0.0
  %437 = vmatpush2.xpose.msra.mxu0 0.0
  %438 = vmatprep.mubr.f32.mxu0 0.0
  %439 = vmatmul.mubr.f32.gmra.mxu0 %v370
  %v440 = vpop.f32.mrf.mxu0
  %v441 = vadd.f32 %v222, %v440
  %v442 = vpop.f32.mrf.mxu0
  %443 = vdwg.mxu0
  %vm444 = vcmask 46080
  %v445 = vsel %vm444, %v332, -inf
  %446 = vmax.xlane.f32.xlu0 %v445
  %v447 = vpop.xlane.xlu0 %446
  %v448 = vsel %vm444, %v441, -inf
  %449 = vmax.xlane.f32.xlu0 %v448
  %v450 = vpop.xlane.xlu0 %449
  %v451 = vsub.f32 %v332, %v447
  %v452 = vsub.f32 %v441, %v450
  %v453 = vmul.f32 %v451, 1.442695
  %v454 = vpow.pop %v453
  %v455 = vmul.f32 %v452, 1.442695
  %v456 = vpow.pop %v455
  %v457 = vsel %vm444, %v454, 0.0
  %458 = vadd.xlane.f32.xlu0 %v457
  %v459 = vpop.xlane.xlu0 %458
  %v460 = vsel %vm444, %v456, 0.0
  %461 = vadd.xlane.f32.xlu0 %v460
  %v462 = vpop.xlane.xlu0 %461
  %v463 = vrcp.pop %v459
  %v464 = vrcp.pop %v462
  %v465 = vmul.f32 %v454, %v463
  %v466 = vmul.f32 %v456, %v464
  %v467 = vlaneseq
  %v468 = vshrl.u32 %v467, 7
  %v469 = vsub.s32 0, %v468
  %v470 = vrot.slane %v205, %v469
  %v471 = vlaneseq
  %v472 = vshrl.u32 %v471, 7
  %v473 = vsub.s32 0, %v472
  %v474 = vrot.slane %v206, %v473
  %v475 = vmul.f32 %v465, %v470
  %v476 = vmul.f32 %v466, %v474
  %vm477 = vcmask 48128
  %v479 = vsel %vm477, %v475, 0
  %vm481 = vcmask 1045504
  %v482 = vsel %vm481, %v259, 0
  %484 = vmatprep.subr.mxu0 0.0
  %485 = vmatpush1.msra.mxu0 0.0
  %486 = vmatprep.subr.mxu0 0.0
  %487 = vmatpush1.msra.mxu0 0.0
  %488 = vmatprep.subr.mxu0 0.0
  %489 = vmatpush1.msra.mxu0 0.0
  %490 = vmatprep.subr.mxu0 0.0
  %491 = vmatpush1.msra.mxu0 0.0
  %492 = vmatprep.subr.mxu0 0.0
  %493 = vmatpush1.msra.mxu0 0.0
  %494 = vmatprep.subr.mxu0 0.0
  %495 = vmatpush1.msra.mxu0 0.0
  %496 = vmatprep.subr.mxu0 0.0
  %497 = vmatpush1.msra.mxu0 0.0
  %498 = vmatprep.subr.mxu0 0.0
  %499 = vmatpush1.msra.mxu0 0.0
  %500 = vmatprep.subr.mxu0 0.0
  %501 = vmatpush1.msra.mxu0 0.0
  %502 = vmatprep.subr.mxu0 0.0
  %503 = vmatpush1.msra.mxu0 0.0
  %504 = vmatprep.subr.mxu0 0.0
  %505 = vmatpush1.msra.mxu0 0.0
  %506 = vmatprep.subr.mxu0 0.0
  %507 = vmatpush1.msra.mxu0 0.0
  %508 = vmatprep.subr.mxu0 0.0
  %509 = vmatpush1.msra.mxu0 0.0
  %510 = vmatprep.subr.mxu0 0.0
  %511 = vmatpush1.msra.mxu0 0.0
  %512 = vmatprep.subr.mxu0 0.0
  %513 = vmatpush1.msra.mxu0 0.0
  %514 = vmatprep.subr.mxu0 0.0
  %515 = vmatpush1.msra.mxu0 %v482
  %516 = vmatprep.subr.mxu0 0.0
  %517 = vmatpush2.msra.mxu0 0.0
  %518 = vmatprep.subr.mxu0 0.0
  %519 = vmatpush2.msra.mxu0 0.0
  %520 = vmatprep.subr.mxu0 0.0
  %521 = vmatpush2.msra.mxu0 0.0
  %522 = vmatprep.subr.mxu0 0.0
  %523 = vmatpush2.msra.mxu0 0.0
  %524 = vmatprep.subr.mxu0 0.0
  %525 = vmatpush2.msra.mxu0 0.0
  %526 = vmatprep.subr.mxu0 0.0
  %527 = vmatpush2.msra.mxu0 0.0
  %528 = vmatprep.subr.mxu0 0.0
  %529 = vmatpush2.msra.mxu0 0.0
  %530 = vmatprep.subr.mxu0 0.0
  %531 = vmatpush2.msra.mxu0 0.0
  %532 = vmatprep.subr.mxu0 0.0
  %533 = vmatpush2.msra.mxu0 0.0
  %534 = vmatprep.subr.mxu0 0.0
  %535 = vmatpush2.msra.mxu0 0.0
  %536 = vmatprep.subr.mxu0 0.0
  %537 = vmatpush2.msra.mxu0 0.0
  %538 = vmatprep.subr.mxu0 0.0
  %539 = vmatpush2.msra.mxu0 0.0
  %540 = vmatprep.subr.mxu0 0.0
  %541 = vmatpush2.msra.mxu0 0.0
  %542 = vmatprep.subr.mxu0 0.0
  %543 = vmatpush2.msra.mxu0 0.0
  %544 = vmatprep.subr.mxu0 0.0
  %545 = vmatpush2.msra.mxu0 0.0
  %546 = vmatprep.subr.mxu0 0.0
  %547 = vmatpush2.msra.mxu0 0.0
  %548 = vmatprep.mubr.f32.mxu0 0.0
  %549 = vmatmul.mubr.f32.gmra.mxu0 %v479
  %v550 = vpop.f32.mrf.mxu0
  %v551 = vadd.f32 0.0, %v550
  %v552 = vpop.f32.mrf.mxu0
  %553 = vdwg.mxu0
  %v555 = vsel %vm477, %v476, 0
  %v557 = vsel %vm481, %v369, 0
  %559 = vmatprep.subr.mxu0 0.0
  %560 = vmatpush1.msra.mxu0 0.0
  %561 = vmatprep.subr.mxu0 0.0
  %562 = vmatpush1.msra.mxu0 0.0
  %563 = vmatprep.subr.mxu0 0.0
  %564 = vmatpush1.msra.mxu0 0.0
  %565 = vmatprep.subr.mxu0 0.0
  %566 = vmatpush1.msra.mxu0 0.0
  %567 = vmatprep.subr.mxu0 0.0
  %568 = vmatpush1.msra.mxu0 0.0
  %569 = vmatprep.subr.mxu0 0.0
  %570 = vmatpush1.msra.mxu0 0.0
  %571 = vmatprep.subr.mxu0 0.0
  %572 = vmatpush1.msra.mxu0 0.0
  %573 = vmatprep.subr.mxu0 0.0
  %574 = vmatpush1.msra.mxu0 0.0
  %575 = vmatprep.subr.mxu0 0.0
  %576 = vmatpush1.msra.mxu0 0.0
  %577 = vmatprep.subr.mxu0 0.0
  %578 = vmatpush1.msra.mxu0 0.0
  %579 = vmatprep.subr.mxu0 0.0
  %580 = vmatpush1.msra.mxu0 0.0
  %581 = vmatprep.subr.mxu0 0.0
  %582 = vmatpush1.msra.mxu0 0.0
  %583 = vmatprep.subr.mxu0 0.0
  %584 = vmatpush1.msra.mxu0 0.0
  %585 = vmatprep.subr.mxu0 0.0
  %586 = vmatpush1.msra.mxu0 0.0
  %587 = vmatprep.subr.mxu0 0.0
  %588 = vmatpush1.msra.mxu0 0.0
  %589 = vmatprep.subr.mxu0 0.0
  %590 = vmatpush1.msra.mxu0 %v557
  %591 = vmatprep.subr.mxu0 0.0
  %592 = vmatpush2.msra.mxu0 0.0
  %593 = vmatprep.subr.mxu0 0.0
  %594 = vmatpush2.msra.mxu0 0.0
  %595 = vmatprep.subr.mxu0 0.0
  %596 = vmatpush2.msra.mxu0 0.0
  %597 = vmatprep.subr.mxu0 0.0
  %598 = vmatpush2.msra.mxu0 0.0
  %599 = vmatprep.subr.mxu0 0.0
  %600 = vmatpush2.msra.mxu0 0.0
  %601 = vmatprep.subr.mxu0 0.0
  %602 = vmatpush2.msra.mxu0 0.0
  %603 = vmatprep.subr.mxu0 0.0
  %604 = vmatpush2.msra.mxu0 0.0
  %605 = vmatprep.subr.mxu0 0.0
  %606 = vmatpush2.msra.mxu0 0.0
  %607 = vmatprep.subr.mxu0 0.0
  %608 = vmatpush2.msra.mxu0 0.0
  %609 = vmatprep.subr.mxu0 0.0
  %610 = vmatpush2.msra.mxu0 0.0
  %611 = vmatprep.subr.mxu0 0.0
  %612 = vmatpush2.msra.mxu0 0.0
  %613 = vmatprep.subr.mxu0 0.0
  %614 = vmatpush2.msra.mxu0 0.0
  %615 = vmatprep.subr.mxu0 0.0
  %616 = vmatpush2.msra.mxu0 0.0
  %617 = vmatprep.subr.mxu0 0.0
  %618 = vmatpush2.msra.mxu0 0.0
  %619 = vmatprep.subr.mxu0 0.0
  %620 = vmatpush2.msra.mxu0 0.0
  %621 = vmatprep.subr.mxu0 0.0
  %622 = vmatpush2.msra.mxu0 0.0
  %623 = vmatprep.mubr.f32.mxu0 0.0
  %624 = vmatmul.mubr.f32.gmra.mxu0 %v555
  %v625 = vpop.f32.mrf.mxu0
  %v626 = vadd.f32 0.0, %v625
  %v627 = vpop.f32.mrf.mxu0
  %628 = vdwg.mxu0
  %vm629 = vcmask 62464
  %630 = vst.msk [vmem:[%s3] sm:$0x3f] %vm629, %v551
  %631 = vst.msk [vmem:[%s3 + $0x8] sm:$0x3f] %vm629, %v626
  %632 = vrot.lane.b32.xlu0 %v243, 120
  %v633 = vpop.permute.xlu0 %632
  %634 = vrot.lane.b32.xlu0 %v259, 120
  %v635 = vpop.permute.xlu0 %634
  %v636 = vsel %vm260, %v633, 0
  %v638 = vsel %vm260, %v635, 0
  %640 = vmatprep.subr.mxu0 0.0
  %641 = vmatpush1.xpose.msra.mxu0 0.0
  %642 = vmatprep.subr.mxu0 0.0
  %643 = vmatpush1.xpose.msra.mxu0 0.0
  %644 = vmatprep.subr.mxu0 0.0
  %645 = vmatpush1.xpose.msra.mxu0 0.0
  %646 = vmatprep.subr.mxu0 0.0
  %647 = vmatpush1.xpose.msra.mxu0 0.0
  %648 = vmatprep.subr.mxu0 0.0
  %649 = vmatpush1.xpose.msra.mxu0 0.0
  %650 = vmatprep.subr.mxu0 0.0
  %651 = vmatpush1.xpose.msra.mxu0 0.0
  %652 = vmatprep.subr.mxu0 0.0
  %653 = vmatpush1.xpose.msra.mxu0 0.0
  %654 = vmatprep.subr.mxu0 0.0
  %655 = vmatpush1.xpose.msra.mxu0 0.0
  %656 = vmatprep.subr.mxu0 0.0
  %657 = vmatpush1.xpose.msra.mxu0 0.0
  %658 = vmatprep.subr.mxu0 0.0
  %659 = vmatpush1.xpose.msra.mxu0 0.0
  %660 = vmatprep.subr.mxu0 0.0
  %661 = vmatpush1.xpose.msra.mxu0 0.0
  %662 = vmatprep.subr.mxu0 0.0
  %663 = vmatpush1.xpose.msra.mxu0 0.0
  %664 = vmatprep.subr.mxu0 0.0
  %665 = vmatpush1.xpose.msra.mxu0 0.0
  %666 = vmatprep.subr.mxu0 0.0
  %667 = vmatpush1.xpose.msra.mxu0 0.0
  %668 = vmatprep.subr.mxu0 0.0
  %669 = vmatpush1.xpose.msra.mxu0 0.0
  %670 = vmatprep.subr.mxu0 0.0
  %671 = vmatpush1.xpose.msra.mxu0 %v638
  %672 = vmatprep.subr.mxu0 0.0
  %673 = vmatpush2.xpose.msra.mxu0 0.0
  %674 = vmatprep.subr.mxu0 0.0
  %675 = vmatpush2.xpose.msra.mxu0 0.0
  %676 = vmatprep.subr.mxu0 0.0
  %677 = vmatpush2.xpose.msra.mxu0 0.0
  %678 = vmatprep.subr.mxu0 0.0
  %679 = vmatpush2.xpose.msra.mxu0 0.0
  %680 = vmatprep.subr.mxu0 0.0
  %681 = vmatpush2.xpose.msra.mxu0 0.0
  %682 = vmatprep.subr.mxu0 0.0
  %683 = vmatpush2.xpose.msra.mxu0 0.0
  %684 = vmatprep.subr.mxu0 0.0
  %685 = vmatpush2.xpose.msra.mxu0 0.0
  %686 = vmatprep.subr.mxu0 0.0
  %687 = vmatpush2.xpose.msra.mxu0 0.0
  %688 = vmatprep.subr.mxu0 0.0
  %689 = vmatpush2.xpose.msra.mxu0 0.0
  %690 = vmatprep.subr.mxu0 0.0
  %691 = vmatpush2.xpose.msra.mxu0 0.0
  %692 = vmatprep.subr.mxu0 0.0
  %693 = vmatpush2.xpose.msra.mxu0 0.0
  %694 = vmatprep.subr.mxu0 0.0
  %695 = vmatpush2.xpose.msra.mxu0 0.0
  %696 = vmatprep.subr.mxu0 0.0
  %697 = vmatpush2.xpose.msra.mxu0 0.0
  %698 = vmatprep.subr.mxu0 0.0
  %699 = vmatpush2.xpose.msra.mxu0 0.0
  %700 = vmatprep.subr.mxu0 0.0
  %701 = vmatpush2.xpose.msra.mxu0 0.0
  %702 = vmatprep.subr.mxu0 0.0
  %703 = vmatpush2.xpose.msra.mxu0 0.0
  %704 = vmatprep.mubr.f32.mxu0 0.0
  %705 = vmatmul.mubr.f32.gmra.mxu0 %v636
  %v706 = vpop.f32.mrf.mxu0
  %v707 = vadd.f32 %v218, %v706
  %v708 = vpop.f32.mrf.mxu0
  %709 = vdwg.mxu0
  %710 = vrot.lane.b32.xlu0 %v353, 120
  %v711 = vpop.permute.xlu0 %710
  %712 = vrot.lane.b32.xlu0 %v369, 120
  %v713 = vpop.permute.xlu0 %712
  %v714 = vsel %vm260, %v711, 0
  %v716 = vsel %vm260, %v713, 0
  %718 = vmatprep.subr.mxu0 0.0
  %719 = vmatpush1.xpose.msra.mxu0 0.0
  %720 = vmatprep.subr.mxu0 0.0
  %721 = vmatpush1.xpose.msra.mxu0 0.0
  %722 = vmatprep.subr.mxu0 0.0
  %723 = vmatpush1.xpose.msra.mxu0 0.0
  %724 = vmatprep.subr.mxu0 0.0
  %725 = vmatpush1.xpose.msra.mxu0 0.0
  %726 = vmatprep.subr.mxu0 0.0
  %727 = vmatpush1.xpose.msra.mxu0 0.0
  %728 = vmatprep.subr.mxu0 0.0
  %729 = vmatpush1.xpose.msra.mxu0 0.0
  %730 = vmatprep.subr.mxu0 0.0
  %731 = vmatpush1.xpose.msra.mxu0 0.0
  %732 = vmatprep.subr.mxu0 0.0
  %733 = vmatpush1.xpose.msra.mxu0 0.0
  %734 = vmatprep.subr.mxu0 0.0
  %735 = vmatpush1.xpose.msra.mxu0 0.0
  %736 = vmatprep.subr.mxu0 0.0
  %737 = vmatpush1.xpose.msra.mxu0 0.0
  %738 = vmatprep.subr.mxu0 0.0
  %739 = vmatpush1.xpose.msra.mxu0 0.0
  %740 = vmatprep.subr.mxu0 0.0
  %741 = vmatpush1.xpose.msra.mxu0 0.0
  %742 = vmatprep.subr.mxu0 0.0
  %743 = vmatpush1.xpose.msra.mxu0 0.0
  %744 = vmatprep.subr.mxu0 0.0
  %745 = vmatpush1.xpose.msra.mxu0 0.0
  %746 = vmatprep.subr.mxu0 0.0
  %747 = vmatpush1.xpose.msra.mxu0 0.0
  %748 = vmatprep.subr.mxu0 0.0
  %749 = vmatpush1.xpose.msra.mxu0 %v716
  %750 = vmatprep.subr.mxu0 0.0
  %751 = vmatpush2.xpose.msra.mxu0 0.0
  %752 = vmatprep.subr.mxu0 0.0
  %753 = vmatpush2.xpose.msra.mxu0 0.0
  %754 = vmatprep.subr.mxu0 0.0
  %755 = vmatpush2.xpose.msra.mxu0 0.0
  %756 = vmatprep.subr.mxu0 0.0
  %757 = vmatpush2.xpose.msra.mxu0 0.0
  %758 = vmatprep.subr.mxu0 0.0
  %759 = vmatpush2.xpose.msra.mxu0 0.0
  %760 = vmatprep.subr.mxu0 0.0
  %761 = vmatpush2.xpose.msra.mxu0 0.0
  %762 = vmatprep.subr.mxu0 0.0
  %763 = vmatpush2.xpose.msra.mxu0 0.0
  %764 = vmatprep.subr.mxu0 0.0
  %765 = vmatpush2.xpose.msra.mxu0 0.0
  %766 = vmatprep.subr.mxu0 0.0
  %767 = vmatpush2.xpose.msra.mxu0 0.0
  %768 = vmatprep.subr.mxu0 0.0
  %769 = vmatpush2.xpose.msra.mxu0 0.0
  %770 = vmatprep.subr.mxu0 0.0
  %771 = vmatpush2.xpose.msra.mxu0 0.0
  %772 = vmatprep.subr.mxu0 0.0
  %773 = vmatpush2.xpose.msra.mxu0 0.0
  %774 = vmatprep.subr.mxu0 0.0
  %775 = vmatpush2.xpose.msra.mxu0 0.0
  %776 = vmatprep.subr.mxu0 0.0
  %777 = vmatpush2.xpose.msra.mxu0 0.0
  %778 = vmatprep.subr.mxu0 0.0
  %779 = vmatpush2.xpose.msra.mxu0 0.0
  %780 = vmatprep.subr.mxu0 0.0
  %781 = vmatpush2.xpose.msra.mxu0 0.0
  %782 = vmatprep.mubr.f32.mxu0 0.0
  %783 = vmatmul.mubr.f32.gmra.mxu0 %v714
  %v784 = vpop.f32.mrf.mxu0
  %v785 = vadd.f32 %v222, %v784
  %v786 = vpop.f32.mrf.mxu0
  %787 = vdwg.mxu0
  %v788 = vsel %vm444, %v707, -inf
  %789 = vmax.xlane.f32.xlu0 %v788
  %v790 = vpop.xlane.xlu0 %789
  %v791 = vsel %vm444, %v785, -inf
  %792 = vmax.xlane.f32.xlu0 %v791
  %v793 = vpop.xlane.xlu0 %792
  %v794 = vsub.f32 %v707, %v790
  %v795 = vsub.f32 %v785, %v793
  %v796 = vmul.f32 %v794, 1.442695
  %v797 = vpow.pop %v796
  %v798 = vmul.f32 %v795, 1.442695
  %v799 = vpow.pop %v798
  %v800 = vsel %vm444, %v797, 0.0
  %801 = vadd.xlane.f32.xlu0 %v800
  %v802 = vpop.xlane.xlu0 %801
  %v803 = vsel %vm444, %v799, 0.0
  %804 = vadd.xlane.f32.xlu0 %v803
  %v805 = vpop.xlane.xlu0 %804
  %v806 = vrcp.pop %v802
  %v807 = vrcp.pop %v805
  %v808 = vmul.f32 %v797, %v806
  %v809 = vmul.f32 %v799, %v807
  %v810 = vmul.f32 %v808, %v470
  %v811 = vmul.f32 %v809, %v474
  %v813 = vsel %vm477, %v810, 0
  %v815 = vsel %vm481, %v635, 0
  %817 = vmatprep.subr.mxu0 0.0
  %818 = vmatpush1.msra.mxu0 0.0
  %819 = vmatprep.subr.mxu0 0.0
  %820 = vmatpush1.msra.mxu0 0.0
  %821 = vmatprep.subr.mxu0 0.0
  %822 = vmatpush1.msra.mxu0 0.0
  %823 = vmatprep.subr.mxu0 0.0
  %824 = vmatpush1.msra.mxu0 0.0
  %825 = vmatprep.subr.mxu0 0.0
  %826 = vmatpush1.msra.mxu0 0.0
  %827 = vmatprep.subr.mxu0 0.0
  %828 = vmatpush1.msra.mxu0 0.0
  %829 = vmatprep.subr.mxu0 0.0
  %830 = vmatpush1.msra.mxu0 0.0
  %831 = vmatprep.subr.mxu0 0.0
  %832 = vmatpush1.msra.mxu0 0.0
  %833 = vmatprep.subr.mxu0 0.0
  %834 = vmatpush1.msra.mxu0 0.0
  %835 = vmatprep.subr.mxu0 0.0
  %836 = vmatpush1.msra.mxu0 0.0
  %837 = vmatprep.subr.mxu0 0.0
  %838 = vmatpush1.msra.mxu0 0.0
  %839 = vmatprep.subr.mxu0 0.0
  %840 = vmatpush1.msra.mxu0 0.0
  %841 = vmatprep.subr.mxu0 0.0
  %842 = vmatpush1.msra.mxu0 0.0
  %843 = vmatprep.subr.mxu0 0.0
  %844 = vmatpush1.msra.mxu0 0.0
  %845 = vmatprep.subr.mxu0 0.0
  %846 = vmatpush1.msra.mxu0 0.0
  %847 = vmatprep.subr.mxu0 0.0
  %848 = vmatpush1.msra.mxu0 %v815
  %849 = vmatprep.subr.mxu0 0.0
  %850 = vmatpush2.msra.mxu0 0.0
  %851 = vmatprep.subr.mxu0 0.0
  %852 = vmatpush2.msra.mxu0 0.0
  %853 = vmatprep.subr.mxu0 0.0
  %854 = vmatpush2.msra.mxu0 0.0
  %855 = vmatprep.subr.mxu0 0.0
  %856 = vmatpush2.msra.mxu0 0.0
  %857 = vmatprep.subr.mxu0 0.0
  %858 = vmatpush2.msra.mxu0 0.0
  %859 = vmatprep.subr.mxu0 0.0
  %860 = vmatpush2.msra.mxu0 0.0
  %861 = vmatprep.subr.mxu0 0.0
  %862 = vmatpush2.msra.mxu0 0.0
  %863 = vmatprep.subr.mxu0 0.0
  %864 = vmatpush2.msra.mxu0 0.0
  %865 = vmatprep.subr.mxu0 0.0
  %866 = vmatpush2.msra.mxu0 0.0
  %867 = vmatprep.subr.mxu0 0.0
  %868 = vmatpush2.msra.mxu0 0.0
  %869 = vmatprep.subr.mxu0 0.0
  %870 = vmatpush2.msra.mxu0 0.0
  %871 = vmatprep.subr.mxu0 0.0
  %872 = vmatpush2.msra.mxu0 0.0
  %873 = vmatprep.subr.mxu0 0.0
  %874 = vmatpush2.msra.mxu0 0.0
  %875 = vmatprep.subr.mxu0 0.0
  %876 = vmatpush2.msra.mxu0 0.0
  %877 = vmatprep.subr.mxu0 0.0
  %878 = vmatpush2.msra.mxu0 0.0
  %879 = vmatprep.subr.mxu0 0.0
  %880 = vmatpush2.msra.mxu0 0.0
  %881 = vmatprep.mubr.f32.mxu0 0.0
  %882 = vmatmul.mubr.f32.gmra.mxu0 %v813
  %v883 = vpop.f32.mrf.mxu0
  %v884 = vadd.f32 0.0, %v883
  %v885 = vpop.f32.mrf.mxu0
  %886 = vdwg.mxu0
  %v888 = vsel %vm477, %v811, 0
  %v890 = vsel %vm481, %v713, 0
  %892 = vmatprep.subr.mxu0 0.0
  %893 = vmatpush1.msra.mxu0 0.0
  %894 = vmatprep.subr.mxu0 0.0
  %895 = vmatpush1.msra.mxu0 0.0
  %896 = vmatprep.subr.mxu0 0.0
  %897 = vmatpush1.msra.mxu0 0.0
  %898 = vmatprep.subr.mxu0 0.0
  %899 = vmatpush1.msra.mxu0 0.0
  %900 = vmatprep.subr.mxu0 0.0
  %901 = vmatpush1.msra.mxu0 0.0
  %902 = vmatprep.subr.mxu0 0.0
  %903 = vmatpush1.msra.mxu0 0.0
  %904 = vmatprep.subr.mxu0 0.0
  %905 = vmatpush1.msra.mxu0 0.0
  %906 = vmatprep.subr.mxu0 0.0
  %907 = vmatpush1.msra.mxu0 0.0
  %908 = vmatprep.subr.mxu0 0.0
  %909 = vmatpush1.msra.mxu0 0.0
  %910 = vmatprep.subr.mxu0 0.0
  %911 = vmatpush1.msra.mxu0 0.0
  %912 = vmatprep.subr.mxu0 0.0
  %913 = vmatpush1.msra.mxu0 0.0
  %914 = vmatprep.subr.mxu0 0.0
  %915 = vmatpush1.msra.mxu0 0.0
  %916 = vmatprep.subr.mxu0 0.0
  %917 = vmatpush1.msra.mxu0 0.0
  %918 = vmatprep.subr.mxu0 0.0
  %919 = vmatpush1.msra.mxu0 0.0
  %920 = vmatprep.subr.mxu0 0.0
  %921 = vmatpush1.msra.mxu0 0.0
  %922 = vmatprep.subr.mxu0 0.0
  %923 = vmatpush1.msra.mxu0 %v890
  %924 = vmatprep.subr.mxu0 0.0
  %925 = vmatpush2.msra.mxu0 0.0
  %926 = vmatprep.subr.mxu0 0.0
  %927 = vmatpush2.msra.mxu0 0.0
  %928 = vmatprep.subr.mxu0 0.0
  %929 = vmatpush2.msra.mxu0 0.0
  %930 = vmatprep.subr.mxu0 0.0
  %931 = vmatpush2.msra.mxu0 0.0
  %932 = vmatprep.subr.mxu0 0.0
  %933 = vmatpush2.msra.mxu0 0.0
  %934 = vmatprep.subr.mxu0 0.0
  %935 = vmatpush2.msra.mxu0 0.0
  %936 = vmatprep.subr.mxu0 0.0
  %937 = vmatpush2.msra.mxu0 0.0
  %938 = vmatprep.subr.mxu0 0.0
  %939 = vmatpush2.msra.mxu0 0.0
  %940 = vmatprep.subr.mxu0 0.0
  %941 = vmatpush2.msra.mxu0 0.0
  %942 = vmatprep.subr.mxu0 0.0
  %943 = vmatpush2.msra.mxu0 0.0
  %944 = vmatprep.subr.mxu0 0.0
  %945 = vmatpush2.msra.mxu0 0.0
  %946 = vmatprep.subr.mxu0 0.0
  %947 = vmatpush2.msra.mxu0 0.0
  %948 = vmatprep.subr.mxu0 0.0
  %949 = vmatpush2.msra.mxu0 0.0
  %950 = vmatprep.subr.mxu0 0.0
  %951 = vmatpush2.msra.mxu0 0.0
  %952 = vmatprep.subr.mxu0 0.0
  %953 = vmatpush2.msra.mxu0 0.0
  %954 = vmatprep.subr.mxu0 0.0
  %955 = vmatpush2.msra.mxu0 0.0
  %956 = vmatprep.mubr.f32.mxu0 0.0
  %957 = vmatmul.mubr.f32.gmra.mxu0 %v888
  %v958 = vpop.f32.mrf.mxu0
  %v959 = vadd.f32 0.0, %v958
  %v960 = vpop.f32.mrf.mxu0
  %961 = vdwg.mxu0
  %964 = vrot.lane.b32.xlu0 %v884, 8
  %v965 = vpop.permute.xlu0 %964
  %966 = vrot.lane.b32.xlu0 %v959, 8
  %v967 = vpop.permute.xlu0 %966
  %vm970 = vcmask 128064
  %971 = vst.msk [vmem:[%s3] sm:$0x3f] %vm970, %v965
  %972 = vst.msk [vmem:[%s3 + $0x8] sm:$0x3f] %vm970, %v967
  %973 = vrot.lane.b32.xlu0 %v243, 112
  %v974 = vpop.permute.xlu0 %973
  %975 = vrot.lane.b32.xlu0 %v259, 112
  %v976 = vpop.permute.xlu0 %975
  %v977 = vsel %vm260, %v974, 0
  %v979 = vsel %vm260, %v976, 0
  %981 = vmatprep.subr.mxu0 0.0
  %982 = vmatpush1.xpose.msra.mxu0 0.0
  %983 = vmatprep.subr.mxu0 0.0
  %984 = vmatpush1.xpose.msra.mxu0 0.0
  %985 = vmatprep.subr.mxu0 0.0
  %986 = vmatpush1.xpose.msra.mxu0 0.0
  %987 = vmatprep.subr.mxu0 0.0
  %988 = vmatpush1.xpose.msra.mxu0 0.0
  %989 = vmatprep.subr.mxu0 0.0
  %990 = vmatpush1.xpose.msra.mxu0 0.0
  %991 = vmatprep.subr.mxu0 0.0
  %992 = vmatpush1.xpose.msra.mxu0 0.0
  %993 = vmatprep.subr.mxu0 0.0
  %994 = vmatpush1.xpose.msra.mxu0 0.0
  %995 = vmatprep.subr.mxu0 0.0
  %996 = vmatpush1.xpose.msra.mxu0 0.0
  %997 = vmatprep.subr.mxu0 0.0
  %998 = vmatpush1.xpose.msra.mxu0 0.0
  %999 = vmatprep.subr.mxu0 0.0
  %1000 = vmatpush1.xpose.msra.mxu0 0.0
  %1001 = vmatprep.subr.mxu0 0.0
  %1002 = vmatpush1.xpose.msra.mxu0 0.0
  %1003 = vmatprep.subr.mxu0 0.0
  %1004 = vmatpush1.xpose.msra.mxu0 0.0
  %1005 = vmatprep.subr.mxu0 0.0
  %1006 = vmatpush1.xpose.msra.mxu0 0.0
  %1007 = vmatprep.subr.mxu0 0.0
  %1008 = vmatpush1.xpose.msra.mxu0 0.0
  %1009 = vmatprep.subr.mxu0 0.0
  %1010 = vmatpush1.xpose.msra.mxu0 0.0
  %1011 = vmatprep.subr.mxu0 0.0
  %1012 = vmatpush1.xpose.msra.mxu0 %v979
  %1013 = vmatprep.subr.mxu0 0.0
  %1014 = vmatpush2.xpose.msra.mxu0 0.0
  %1015 = vmatprep.subr.mxu0 0.0
  %1016 = vmatpush2.xpose.msra.mxu0 0.0
  %1017 = vmatprep.subr.mxu0 0.0
  %1018 = vmatpush2.xpose.msra.mxu0 0.0
  %1019 = vmatprep.subr.mxu0 0.0
  %1020 = vmatpush2.xpose.msra.mxu0 0.0
  %1021 = vmatprep.subr.mxu0 0.0
  %1022 = vmatpush2.xpose.msra.mxu0 0.0
  %1023 = vmatprep.subr.mxu0 0.0
  %1024 = vmatpush2.xpose.msra.mxu0 0.0
  %1025 = vmatprep.subr.mxu0 0.0
  %1026 = vmatpush2.xpose.msra.mxu0 0.0
  %1027 = vmatprep.subr.mxu0 0.0
  %1028 = vmatpush2.xpose.msra.mxu0 0.0
  %1029 = vmatprep.subr.mxu0 0.0
  %1030 = vmatpush2.xpose.msra.mxu0 0.0
  %1031 = vmatprep.subr.mxu0 0.0
  %1032 = vmatpush2.xpose.msra.mxu0 0.0
  %1033 = vmatprep.subr.mxu0 0.0
  %1034 = vmatpush2.xpose.msra.mxu0 0.0
  %1035 = vmatprep.subr.mxu0 0.0
  %1036 = vmatpush2.xpose.msra.mxu0 0.0
  %1037 = vmatprep.subr.mxu0 0.0
  %1038 = vmatpush2.xpose.msra.mxu0 0.0
  %1039 = vmatprep.subr.mxu0 0.0
  %1040 = vmatpush2.xpose.msra.mxu0 0.0
  %1041 = vmatprep.subr.mxu0 0.0
  %1042 = vmatpush2.xpose.msra.mxu0 0.0
  %1043 = vmatprep.subr.mxu0 0.0
  %1044 = vmatpush2.xpose.msra.mxu0 0.0
  %1045 = vmatprep.mubr.f32.mxu0 0.0
  %1046 = vmatmul.mubr.f32.gmra.mxu0 %v977
  %v1047 = vpop.f32.mrf.mxu0
  %v1048 = vadd.f32 %v218, %v1047
  %v1049 = vpop.f32.mrf.mxu0
  %1050 = vdwg.mxu0
  %1051 = vrot.lane.b32.xlu0 %v353, 112
  %v1052 = vpop.permute.xlu0 %1051
  %1053 = vrot.lane.b32.xlu0 %v369, 112
  %v1054 = vpop.permute.xlu0 %1053
  %v1055 = vsel %vm260, %v1052, 0
  %v1057 = vsel %vm260, %v1054, 0
  %1059 = vmatprep.subr.mxu0 0.0
  %1060 = vmatpush1.xpose.msra.mxu0 0.0
  %1061 = vmatprep.subr.mxu0 0.0
  %1062 = vmatpush1.xpose.msra.mxu0 0.0
  %1063 = vmatprep.subr.mxu0 0.0
  %1064 = vmatpush1.xpose.msra.mxu0 0.0
  %1065 = vmatprep.subr.mxu0 0.0
  %1066 = vmatpush1.xpose.msra.mxu0 0.0
  %1067 = vmatprep.subr.mxu0 0.0
  %1068 = vmatpush1.xpose.msra.mxu0 0.0
  %1069 = vmatprep.subr.mxu0 0.0
  %1070 = vmatpush1.xpose.msra.mxu0 0.0
  %1071 = vmatprep.subr.mxu0 0.0
  %1072 = vmatpush1.xpose.msra.mxu0 0.0
  %1073 = vmatprep.subr.mxu0 0.0
  %1074 = vmatpush1.xpose.msra.mxu0 0.0
  %1075 = vmatprep.subr.mxu0 0.0
  %1076 = vmatpush1.xpose.msra.mxu0 0.0
  %1077 = vmatprep.subr.mxu0 0.0
  %1078 = vmatpush1.xpose.msra.mxu0 0.0
  %1079 = vmatprep.subr.mxu0 0.0
  %1080 = vmatpush1.xpose.msra.mxu0 0.0
  %1081 = vmatprep.subr.mxu0 0.0
  %1082 = vmatpush1.xpose.msra.mxu0 0.0
  %1083 = vmatprep.subr.mxu0 0.0
  %1084 = vmatpush1.xpose.msra.mxu0 0.0
  %1085 = vmatprep.subr.mxu0 0.0
  %1086 = vmatpush1.xpose.msra.mxu0 0.0
  %1087 = vmatprep.subr.mxu0 0.0
  %1088 = vmatpush1.xpose.msra.mxu0 0.0
  %1089 = vmatprep.subr.mxu0 0.0
  %1090 = vmatpush1.xpose.msra.mxu0 %v1057
  %1091 = vmatprep.subr.mxu0 0.0
  %1092 = vmatpush2.xpose.msra.mxu0 0.0
  %1093 = vmatprep.subr.mxu0 0.0
  %1094 = vmatpush2.xpose.msra.mxu0 0.0
  %1095 = vmatprep.subr.mxu0 0.0
  %1096 = vmatpush2.xpose.msra.mxu0 0.0
  %1097 = vmatprep.subr.mxu0 0.0
  %1098 = vmatpush2.xpose.msra.mxu0 0.0
  %1099 = vmatprep.subr.mxu0 0.0
  %1100 = vmatpush2.xpose.msra.mxu0 0.0
  %1101 = vmatprep.subr.mxu0 0.0
  %1102 = vmatpush2.xpose.msra.mxu0 0.0
  %1103 = vmatprep.subr.mxu0 0.0
  %1104 = vmatpush2.xpose.msra.mxu0 0.0
  %1105 = vmatprep.subr.mxu0 0.0
  %1106 = vmatpush2.xpose.msra.mxu0 0.0
  %1107 = vmatprep.subr.mxu0 0.0
  %1108 = vmatpush2.xpose.msra.mxu0 0.0
  %1109 = vmatprep.subr.mxu0 0.0
  %1110 = vmatpush2.xpose.msra.mxu0 0.0
  %1111 = vmatprep.subr.mxu0 0.0
  %1112 = vmatpush2.xpose.msra.mxu0 0.0
  %1113 = vmatprep.subr.mxu0 0.0
  %1114 = vmatpush2.xpose.msra.mxu0 0.0
  %1115 = vmatprep.subr.mxu0 0.0
  %1116 = vmatpush2.xpose.msra.mxu0 0.0
  %1117 = vmatprep.subr.mxu0 0.0
  %1118 = vmatpush2.xpose.msra.mxu0 0.0
  %1119 = vmatprep.subr.mxu0 0.0
  %1120 = vmatpush2.xpose.msra.mxu0 0.0
  %1121 = vmatprep.subr.mxu0 0.0
  %1122 = vmatpush2.xpose.msra.mxu0 0.0
  %1123 = vmatprep.mubr.f32.mxu0 0.0
  %1124 = vmatmul.mubr.f32.gmra.mxu0 %v1055
  %v1125 = vpop.f32.mrf.mxu0
  %v1126 = vadd.f32 %v222, %v1125
  %v1127 = vpop.f32.mrf.mxu0
  %1128 = vdwg.mxu0
  %v1129 = vsel %vm444, %v1048, -inf
  %1130 = vmax.xlane.f32.xlu0 %v1129
  %v1131 = vpop.xlane.xlu0 %1130
  %v1132 = vsel %vm444, %v1126, -inf
  %1133 = vmax.xlane.f32.xlu0 %v1132
  %v1134 = vpop.xlane.xlu0 %1133
  %v1135 = vsub.f32 %v1048, %v1131
  %v1136 = vsub.f32 %v1126, %v1134
  %v1137 = vmul.f32 %v1135, 1.442695
  %v1138 = vpow.pop %v1137
  %v1139 = vmul.f32 %v1136, 1.442695
  %v1140 = vpow.pop %v1139
  %v1141 = vsel %vm444, %v1138, 0.0
  %1142 = vadd.xlane.f32.xlu0 %v1141
  %v1143 = vpop.xlane.xlu0 %1142
  %v1144 = vsel %vm444, %v1140, 0.0
  %1145 = vadd.xlane.f32.xlu0 %v1144
  %v1146 = vpop.xlane.xlu0 %1145
  %v1147 = vrcp.pop %v1143
  %v1148 = vrcp.pop %v1146
  %v1149 = vmul.f32 %v1138, %v1147
  %v1150 = vmul.f32 %v1140, %v1148
  %v1151 = vmul.f32 %v1149, %v470
  %v1152 = vmul.f32 %v1150, %v474
  %v1154 = vsel %vm477, %v1151, 0
  %v1156 = vsel %vm481, %v976, 0
  %1158 = vmatprep.subr.mxu0 0.0
  %1159 = vmatpush1.msra.mxu0 0.0
  %1160 = vmatprep.subr.mxu0 0.0
  %1161 = vmatpush1.msra.mxu0 0.0
  %1162 = vmatprep.subr.mxu0 0.0
  %1163 = vmatpush1.msra.mxu0 0.0
  %1164 = vmatprep.subr.mxu0 0.0
  %1165 = vmatpush1.msra.mxu0 0.0
  %1166 = vmatprep.subr.mxu0 0.0
  %1167 = vmatpush1.msra.mxu0 0.0
  %1168 = vmatprep.subr.mxu0 0.0
  %1169 = vmatpush1.msra.mxu0 0.0
  %1170 = vmatprep.subr.mxu0 0.0
  %1171 = vmatpush1.msra.mxu0 0.0
  %1172 = vmatprep.subr.mxu0 0.0
  %1173 = vmatpush1.msra.mxu0 0.0
  %1174 = vmatprep.subr.mxu0 0.0
  %1175 = vmatpush1.msra.mxu0 0.0
  %1176 = vmatprep.subr.mxu0 0.0
  %1177 = vmatpush1.msra.mxu0 0.0
  %1178 = vmatprep.subr.mxu0 0.0
  %1179 = vmatpush1.msra.mxu0 0.0
  %1180 = vmatprep.subr.mxu0 0.0
  %1181 = vmatpush1.msra.mxu0 0.0
  %1182 = vmatprep.subr.mxu0 0.0
  %1183 = vmatpush1.msra.mxu0 0.0
  %1184 = vmatprep.subr.mxu0 0.0
  %1185 = vmatpush1.msra.mxu0 0.0
  %1186 = vmatprep.subr.mxu0 0.0
  %1187 = vmatpush1.msra.mxu0 0.0
  %1188 = vmatprep.subr.mxu0 0.0
  %1189 = vmatpush1.msra.mxu0 %v1156
  %1190 = vmatprep.subr.mxu0 0.0
  %1191 = vmatpush2.msra.mxu0 0.0
  %1192 = vmatprep.subr.mxu0 0.0
  %1193 = vmatpush2.msra.mxu0 0.0
  %1194 = vmatprep.subr.mxu0 0.0
  %1195 = vmatpush2.msra.mxu0 0.0
  %1196 = vmatprep.subr.mxu0 0.0
  %1197 = vmatpush2.msra.mxu0 0.0
  %1198 = vmatprep.subr.mxu0 0.0
  %1199 = vmatpush2.msra.mxu0 0.0
  %1200 = vmatprep.subr.mxu0 0.0
  %1201 = vmatpush2.msra.mxu0 0.0
  %1202 = vmatprep.subr.mxu0 0.0
  %1203 = vmatpush2.msra.mxu0 0.0
  %1204 = vmatprep.subr.mxu0 0.0
  %1205 = vmatpush2.msra.mxu0 0.0
  %1206 = vmatprep.subr.mxu0 0.0
  %1207 = vmatpush2.msra.mxu0 0.0
  %1208 = vmatprep.subr.mxu0 0.0
  %1209 = vmatpush2.msra.mxu0 0.0
  %1210 = vmatprep.subr.mxu0 0.0
  %1211 = vmatpush2.msra.mxu0 0.0
  %1212 = vmatprep.subr.mxu0 0.0
  %1213 = vmatpush2.msra.mxu0 0.0
  %1214 = vmatprep.subr.mxu0 0.0
  %1215 = vmatpush2.msra.mxu0 0.0
  %1216 = vmatprep.subr.mxu0 0.0
  %1217 = vmatpush2.msra.mxu0 0.0
  %1218 = vmatprep.subr.mxu0 0.0
  %1219 = vmatpush2.msra.mxu0 0.0
  %1220 = vmatprep.subr.mxu0 0.0
  %1221 = vmatpush2.msra.mxu0 0.0
  %1222 = vmatprep.mubr.f32.mxu0 0.0
  %1223 = vmatmul.mubr.f32.gmra.mxu0 %v1154
  %v1224 = vpop.f32.mrf.mxu0
  %v1225 = vadd.f32 0.0, %v1224
  %v1226 = vpop.f32.mrf.mxu0
  %1227 = vdwg.mxu0
  %v1229 = vsel %vm477, %v1152, 0
  %v1231 = vsel %vm481, %v1054, 0
  %1233 = vmatprep.subr.mxu0 0.0
  %1234 = vmatpush1.msra.mxu0 0.0
  %1235 = vmatprep.subr.mxu0 0.0
  %1236 = vmatpush1.msra.mxu0 0.0
  %1237 = vmatprep.subr.mxu0 0.0
  %1238 = vmatpush1.msra.mxu0 0.0
  %1239 = vmatprep.subr.mxu0 0.0
  %1240 = vmatpush1.msra.mxu0 0.0
  %1241 = vmatprep.subr.mxu0 0.0
  %1242 = vmatpush1.msra.mxu0 0.0
  %1243 = vmatprep.subr.mxu0 0.0
  %1244 = vmatpush1.msra.mxu0 0.0
  %1245 = vmatprep.subr.mxu0 0.0
  %1246 = vmatpush1.msra.mxu0 0.0
  %1247 = vmatprep.subr.mxu0 0.0
  %1248 = vmatpush1.msra.mxu0 0.0
  %1249 = vmatprep.subr.mxu0 0.0
  %1250 = vmatpush1.msra.mxu0 0.0
  %1251 = vmatprep.subr.mxu0 0.0
  %1252 = vmatpush1.msra.mxu0 0.0
  %1253 = vmatprep.subr.mxu0 0.0
  %1254 = vmatpush1.msra.mxu0 0.0
  %1255 = vmatprep.subr.mxu0 0.0
  %1256 = vmatpush1.msra.mxu0 0.0
  %1257 = vmatprep.subr.mxu0 0.0
  %1258 = vmatpush1.msra.mxu0 0.0
  %1259 = vmatprep.subr.mxu0 0.0
  %1260 = vmatpush1.msra.mxu0 0.0
  %1261 = vmatprep.subr.mxu0 0.0
  %1262 = vmatpush1.msra.mxu0 0.0
  %1263 = vmatprep.subr.mxu0 0.0
  %1264 = vmatpush1.msra.mxu0 %v1231
  %1265 = vmatprep.subr.mxu0 0.0
  %1266 = vmatpush2.msra.mxu0 0.0
  %1267 = vmatprep.subr.mxu0 0.0
  %1268 = vmatpush2.msra.mxu0 0.0
  %1269 = vmatprep.subr.mxu0 0.0
  %1270 = vmatpush2.msra.mxu0 0.0
  %1271 = vmatprep.subr.mxu0 0.0
  %1272 = vmatpush2.msra.mxu0 0.0
  %1273 = vmatprep.subr.mxu0 0.0
  %1274 = vmatpush2.msra.mxu0 0.0
  %1275 = vmatprep.subr.mxu0 0.0
  %1276 = vmatpush2.msra.mxu0 0.0
  %1277 = vmatprep.subr.mxu0 0.0
  %1278 = vmatpush2.msra.mxu0 0.0
  %1279 = vmatprep.subr.mxu0 0.0
  %1280 = vmatpush2.msra.mxu0 0.0
  %1281 = vmatprep.subr.mxu0 0.0
  %1282 = vmatpush2.msra.mxu0 0.0
  %1283 = vmatprep.subr.mxu0 0.0
  %1284 = vmatpush2.msra.mxu0 0.0
  %1285 = vmatprep.subr.mxu0 0.0
  %1286 = vmatpush2.msra.mxu0 0.0
  %1287 = vmatprep.subr.mxu0 0.0
  %1288 = vmatpush2.msra.mxu0 0.0
  %1289 = vmatprep.subr.mxu0 0.0
  %1290 = vmatpush2.msra.mxu0 0.0
  %1291 = vmatprep.subr.mxu0 0.0
  %1292 = vmatpush2.msra.mxu0 0.0
  %1293 = vmatprep.subr.mxu0 0.0
  %1294 = vmatpush2.msra.mxu0 0.0
  %1295 = vmatprep.subr.mxu0 0.0
  %1296 = vmatpush2.msra.mxu0 0.0
  %1297 = vmatprep.mubr.f32.mxu0 0.0
  %1298 = vmatmul.mubr.f32.gmra.mxu0 %v1229
  %v1299 = vpop.f32.mrf.mxu0
  %v1300 = vadd.f32 0.0, %v1299
  %v1301 = vpop.f32.mrf.mxu0
  %1302 = vdwg.mxu0
  %1305 = vrot.lane.b32.xlu0 %v1225, 16
  %v1306 = vpop.permute.xlu0 %1305
  %1307 = vrot.lane.b32.xlu0 %v1300, 16
  %v1308 = vpop.permute.xlu0 %1307
  %vm1311 = vcmask 193664
  %1312 = vst.msk [vmem:[%s3] sm:$0x3f] %vm1311, %v1306
  %1313 = vst.msk [vmem:[%s3 + $0x8] sm:$0x3f] %vm1311, %v1308
  %1314 = vrot.lane.b32.xlu0 %v243, 104
  %v1315 = vpop.permute.xlu0 %1314
  %1316 = vrot.lane.b32.xlu0 %v259, 104
  %v1317 = vpop.permute.xlu0 %1316
  %v1318 = vsel %vm260, %v1315, 0
  %v1320 = vsel %vm260, %v1317, 0
  %1322 = vmatprep.subr.mxu0 0.0
  %1323 = vmatpush1.xpose.msra.mxu0 0.0
  %1324 = vmatprep.subr.mxu0 0.0
  %1325 = vmatpush1.xpose.msra.mxu0 0.0
  %1326 = vmatprep.subr.mxu0 0.0
  %1327 = vmatpush1.xpose.msra.mxu0 0.0
  %1328 = vmatprep.subr.mxu0 0.0
  %1329 = vmatpush1.xpose.msra.mxu0 0.0
  %1330 = vmatprep.subr.mxu0 0.0
  %1331 = vmatpush1.xpose.msra.mxu0 0.0
  %1332 = vmatprep.subr.mxu0 0.0
  %1333 = vmatpush1.xpose.msra.mxu0 0.0
  %1334 = vmatprep.subr.mxu0 0.0
  %1335 = vmatpush1.xpose.msra.mxu0 0.0
  %1336 = vmatprep.subr.mxu0 0.0
  %1337 = vmatpush1.xpose.msra.mxu0 0.0
  %1338 = vmatprep.subr.mxu0 0.0
  %1339 = vmatpush1.xpose.msra.mxu0 0.0
  %1340 = vmatprep.subr.mxu0 0.0
  %1341 = vmatpush1.xpose.msra.mxu0 0.0
  %1342 = vmatprep.subr.mxu0 0.0
  %1343 = vmatpush1.xpose.msra.mxu0 0.0
  %1344 = vmatprep.subr.mxu0 0.0
  %1345 = vmatpush1.xpose.msra.mxu0 0.0
  %1346 = vmatprep.subr.mxu0 0.0
  %1347 = vmatpush1.xpose.msra.mxu0 0.0
  %1348 = vmatprep.subr.mxu0 0.0
  %1349 = vmatpush1.xpose.msra.mxu0 0.0
  %1350 = vmatprep.subr.mxu0 0.0
  %1351 = vmatpush1.xpose.msra.mxu0 0.0
  %1352 = vmatprep.subr.mxu0 0.0
  %1353 = vmatpush1.xpose.msra.mxu0 %v1320
  %1354 = vmatprep.subr.mxu0 0.0
  %1355 = vmatpush2.xpose.msra.mxu0 0.0
  %1356 = vmatprep.subr.mxu0 0.0
  %1357 = vmatpush2.xpose.msra.mxu0 0.0
  %1358 = vmatprep.subr.mxu0 0.0
  %1359 = vmatpush2.xpose.msra.mxu0 0.0
  %1360 = vmatprep.subr.mxu0 0.0
  %1361 = vmatpush2.xpose.msra.mxu0 0.0
  %1362 = vmatprep.subr.mxu0 0.0
  %1363 = vmatpush2.xpose.msra.mxu0 0.0
  %1364 = vmatprep.subr.mxu0 0.0
  %1365 = vmatpush2.xpose.msra.mxu0 0.0
  %1366 = vmatprep.subr.mxu0 0.0
  %1367 = vmatpush2.xpose.msra.mxu0 0.0
  %1368 = vmatprep.subr.mxu0 0.0
  %1369 = vmatpush2.xpose.msra.mxu0 0.0
  %1370 = vmatprep.subr.mxu0 0.0
  %1371 = vmatpush2.xpose.msra.mxu0 0.0
  %1372 = vmatprep.subr.mxu0 0.0
  %1373 = vmatpush2.xpose.msra.mxu0 0.0
  %1374 = vmatprep.subr.mxu0 0.0
  %1375 = vmatpush2.xpose.msra.mxu0 0.0
  %1376 = vmatprep.subr.mxu0 0.0
  %1377 = vmatpush2.xpose.msra.mxu0 0.0
  %1378 = vmatprep.subr.mxu0 0.0
  %1379 = vmatpush2.xpose.msra.mxu0 0.0
  %1380 = vmatprep.subr.mxu0 0.0
  %1381 = vmatpush2.xpose.msra.mxu0 0.0
  %1382 = vmatprep.subr.mxu0 0.0
  %1383 = vmatpush2.xpose.msra.mxu0 0.0
  %1384 = vmatprep.subr.mxu0 0.0
  %1385 = vmatpush2.xpose.msra.mxu0 0.0
  %1386 = vmatprep.mubr.f32.mxu0 0.0
  %1387 = vmatmul.mubr.f32.gmra.mxu0 %v1318
  %v1388 = vpop.f32.mrf.mxu0
  %v1389 = vadd.f32 %v218, %v1388
  %v1390 = vpop.f32.mrf.mxu0
  %1391 = vdwg.mxu0
  %1392 = vrot.lane.b32.xlu0 %v353, 104
  %v1393 = vpop.permute.xlu0 %1392
  %1394 = vrot.lane.b32.xlu0 %v369, 104
  %v1395 = vpop.permute.xlu0 %1394
  %v1396 = vsel %vm260, %v1393, 0
  %v1398 = vsel %vm260, %v1395, 0
  %1400 = vmatprep.subr.mxu0 0.0
  %1401 = vmatpush1.xpose.msra.mxu0 0.0
  %1402 = vmatprep.subr.mxu0 0.0
  %1403 = vmatpush1.xpose.msra.mxu0 0.0
  %1404 = vmatprep.subr.mxu0 0.0
  %1405 = vmatpush1.xpose.msra.mxu0 0.0
  %1406 = vmatprep.subr.mxu0 0.0
  %1407 = vmatpush1.xpose.msra.mxu0 0.0
  %1408 = vmatprep.subr.mxu0 0.0
  %1409 = vmatpush1.xpose.msra.mxu0 0.0
  %1410 = vmatprep.subr.mxu0 0.0
  %1411 = vmatpush1.xpose.msra.mxu0 0.0
  %1412 = vmatprep.subr.mxu0 0.0
  %1413 = vmatpush1.xpose.msra.mxu0 0.0
  %1414 = vmatprep.subr.mxu0 0.0
  %1415 = vmatpush1.xpose.msra.mxu0 0.0
  %1416 = vmatprep.subr.mxu0 0.0
  %1417 = vmatpush1.xpose.msra.mxu0 0.0
  %1418 = vmatprep.subr.mxu0 0.0
  %1419 = vmatpush1.xpose.msra.mxu0 0.0
  %1420 = vmatprep.subr.mxu0 0.0
  %1421 = vmatpush1.xpose.msra.mxu0 0.0
  %1422 = vmatprep.subr.mxu0 0.0
  %1423 = vmatpush1.xpose.msra.mxu0 0.0
  %1424 = vmatprep.subr.mxu0 0.0
  %1425 = vmatpush1.xpose.msra.mxu0 0.0
  %1426 = vmatprep.subr.mxu0 0.0
  %1427 = vmatpush1.xpose.msra.mxu0 0.0
  %1428 = vmatprep.subr.mxu0 0.0
  %1429 = vmatpush1.xpose.msra.mxu0 0.0
  %1430 = vmatprep.subr.mxu0 0.0
  %1431 = vmatpush1.xpose.msra.mxu0 %v1398
  %1432 = vmatprep.subr.mxu0 0.0
  %1433 = vmatpush2.xpose.msra.mxu0 0.0
  %1434 = vmatprep.subr.mxu0 0.0
  %1435 = vmatpush2.xpose.msra.mxu0 0.0
  %1436 = vmatprep.subr.mxu0 0.0
  %1437 = vmatpush2.xpose.msra.mxu0 0.0
  %1438 = vmatprep.subr.mxu0 0.0
  %1439 = vmatpush2.xpose.msra.mxu0 0.0
  %1440 = vmatprep.subr.mxu0 0.0
  %1441 = vmatpush2.xpose.msra.mxu0 0.0
  %1442 = vmatprep.subr.mxu0 0.0
  %1443 = vmatpush2.xpose.msra.mxu0 0.0
  %1444 = vmatprep.subr.mxu0 0.0
  %1445 = vmatpush2.xpose.msra.mxu0 0.0
  %1446 = vmatprep.subr.mxu0 0.0
  %1447 = vmatpush2.xpose.msra.mxu0 0.0
  %1448 = vmatprep.subr.mxu0 0.0
  %1449 = vmatpush2.xpose.msra.mxu0 0.0
  %1450 = vmatprep.subr.mxu0 0.0
  %1451 = vmatpush2.xpose.msra.mxu0 0.0
  %1452 = vmatprep.subr.mxu0 0.0
  %1453 = vmatpush2.xpose.msra.mxu0 0.0
  %1454 = vmatprep.subr.mxu0 0.0
  %1455 = vmatpush2.xpose.msra.mxu0 0.0
  %1456 = vmatprep.subr.mxu0 0.0
  %1457 = vmatpush2.xpose.msra.mxu0 0.0
  %1458 = vmatprep.subr.mxu0 0.0
  %1459 = vmatpush2.xpose.msra.mxu0 0.0
  %1460 = vmatprep.subr.mxu0 0.0
  %1461 = vmatpush2.xpose.msra.mxu0 0.0
  %1462 = vmatprep.subr.mxu0 0.0
  %1463 = vmatpush2.xpose.msra.mxu0 0.0
  %1464 = vmatprep.mubr.f32.mxu0 0.0
  %1465 = vmatmul.mubr.f32.gmra.mxu0 %v1396
  %v1466 = vpop.f32.mrf.mxu0
  %v1467 = vadd.f32 %v222, %v1466
  %v1468 = vpop.f32.mrf.mxu0
  %1469 = vdwg.mxu0
  %v1470 = vsel %vm444, %v1389, -inf
  %1471 = vmax.xlane.f32.xlu0 %v1470
  %v1472 = vpop.xlane.xlu0 %1471
  %v1473 = vsel %vm444, %v1467, -inf
  %1474 = vmax.xlane.f32.xlu0 %v1473
  %v1475 = vpop.xlane.xlu0 %1474
  %v1476 = vsub.f32 %v1389, %v1472
  %v1477 = vsub.f32 %v1467, %v1475
  %v1478 = vmul.f32 %v1476, 1.442695
  %v1479 = vpow.pop %v1478
  %v1480 = vmul.f32 %v1477, 1.442695
  %v1481 = vpow.pop %v1480
  %v1482 = vsel %vm444, %v1479, 0.0
  %1483 = vadd.xlane.f32.xlu0 %v1482
  %v1484 = vpop.xlane.xlu0 %1483
  %v1485 = vsel %vm444, %v1481, 0.0
  %1486 = vadd.xlane.f32.xlu0 %v1485
  %v1487 = vpop.xlane.xlu0 %1486
  %v1488 = vrcp.pop %v1484
  %v1489 = vrcp.pop %v1487
  %v1490 = vmul.f32 %v1479, %v1488
  %v1491 = vmul.f32 %v1481, %v1489
  %v1492 = vmul.f32 %v1490, %v470
  %v1493 = vmul.f32 %v1491, %v474
  %v1495 = vsel %vm477, %v1492, 0
  %v1497 = vsel %vm481, %v1317, 0
  %1499 = vmatprep.subr.mxu0 0.0
  %1500 = vmatpush1.msra.mxu0 0.0
  %1501 = vmatprep.subr.mxu0 0.0
  %1502 = vmatpush1.msra.mxu0 0.0
  %1503 = vmatprep.subr.mxu0 0.0
  %1504 = vmatpush1.msra.mxu0 0.0
  %1505 = vmatprep.subr.mxu0 0.0
  %1506 = vmatpush1.msra.mxu0 0.0
  %1507 = vmatprep.subr.mxu0 0.0
  %1508 = vmatpush1.msra.mxu0 0.0
  %1509 = vmatprep.subr.mxu0 0.0
  %1510 = vmatpush1.msra.mxu0 0.0
  %1511 = vmatprep.subr.mxu0 0.0
  %1512 = vmatpush1.msra.mxu0 0.0
  %1513 = vmatprep.subr.mxu0 0.0
  %1514 = vmatpush1.msra.mxu0 0.0
  %1515 = vmatprep.subr.mxu0 0.0
  %1516 = vmatpush1.msra.mxu0 0.0
  %1517 = vmatprep.subr.mxu0 0.0
  %1518 = vmatpush1.msra.mxu0 0.0
  %1519 = vmatprep.subr.mxu0 0.0
  %1520 = vmatpush1.msra.mxu0 0.0
  %1521 = vmatprep.subr.mxu0 0.0
  %1522 = vmatpush1.msra.mxu0 0.0
  %1523 = vmatprep.subr.mxu0 0.0
  %1524 = vmatpush1.msra.mxu0 0.0
  %1525 = vmatprep.subr.mxu0 0.0
  %1526 = vmatpush1.msra.mxu0 0.0
  %1527 = vmatprep.subr.mxu0 0.0
  %1528 = vmatpush1.msra.mxu0 0.0
  %1529 = vmatprep.subr.mxu0 0.0
  %1530 = vmatpush1.msra.mxu0 %v1497
  %1531 = vmatprep.subr.mxu0 0.0
  %1532 = vmatpush2.msra.mxu0 0.0
  %1533 = vmatprep.subr.mxu0 0.0
  %1534 = vmatpush2.msra.mxu0 0.0
  %1535 = vmatprep.subr.mxu0 0.0
  %1536 = vmatpush2.msra.mxu0 0.0
  %1537 = vmatprep.subr.mxu0 0.0
  %1538 = vmatpush2.msra.mxu0 0.0
  %1539 = vmatprep.subr.mxu0 0.0
  %1540 = vmatpush2.msra.mxu0 0.0
  %1541 = vmatprep.subr.mxu0 0.0
  %1542 = vmatpush2.msra.mxu0 0.0
  %1543 = vmatprep.subr.mxu0 0.0
  %1544 = vmatpush2.msra.mxu0 0.0
  %1545 = vmatprep.subr.mxu0 0.0
  %1546 = vmatpush2.msra.mxu0 0.0
  %1547 = vmatprep.subr.mxu0 0.0
  %1548 = vmatpush2.msra.mxu0 0.0
  %1549 = vmatprep.subr.mxu0 0.0
  %1550 = vmatpush2.msra.mxu0 0.0
  %1551 = vmatprep.subr.mxu0 0.0
  %1552 = vmatpush2.msra.mxu0 0.0
  %1553 = vmatprep.subr.mxu0 0.0
  %1554 = vmatpush2.msra.mxu0 0.0
  %1555 = vmatprep.subr.mxu0 0.0
  %1556 = vmatpush2.msra.mxu0 0.0
  %1557 = vmatprep.subr.mxu0 0.0
  %1558 = vmatpush2.msra.mxu0 0.0
  %1559 = vmatprep.subr.mxu0 0.0
  %1560 = vmatpush2.msra.mxu0 0.0
  %1561 = vmatprep.subr.mxu0 0.0
  %1562 = vmatpush2.msra.mxu0 0.0
  %1563 = vmatprep.mubr.f32.mxu0 0.0
  %1564 = vmatmul.mubr.f32.gmra.mxu0 %v1495
  %v1565 = vpop.f32.mrf.mxu0
  %v1566 = vadd.f32 0.0, %v1565
  %v1567 = vpop.f32.mrf.mxu0
  %1568 = vdwg.mxu0
  %v1570 = vsel %vm477, %v1493, 0
  %v1572 = vsel %vm481, %v1395, 0
  %1574 = vmatprep.subr.mxu0 0.0
  %1575 = vmatpush1.msra.mxu0 0.0
  %1576 = vmatprep.subr.mxu0 0.0
  %1577 = vmatpush1.msra.mxu0 0.0
  %1578 = vmatprep.subr.mxu0 0.0
  %1579 = vmatpush1.msra.mxu0 0.0
  %1580 = vmatprep.subr.mxu0 0.0
  %1581 = vmatpush1.msra.mxu0 0.0
  %1582 = vmatprep.subr.mxu0 0.0
  %1583 = vmatpush1.msra.mxu0 0.0
  %1584 = vmatprep.subr.mxu0 0.0
  %1585 = vmatpush1.msra.mxu0 0.0
  %1586 = vmatprep.subr.mxu0 0.0
  %1587 = vmatpush1.msra.mxu0 0.0
  %1588 = vmatprep.subr.mxu0 0.0
  %1589 = vmatpush1.msra.mxu0 0.0
  %1590 = vmatprep.subr.mxu0 0.0
  %1591 = vmatpush1.msra.mxu0 0.0
  %1592 = vmatprep.subr.mxu0 0.0
  %1593 = vmatpush1.msra.mxu0 0.0
  %1594 = vmatprep.subr.mxu0 0.0
  %1595 = vmatpush1.msra.mxu0 0.0
  %1596 = vmatprep.subr.mxu0 0.0
  %1597 = vmatpush1.msra.mxu0 0.0
  %1598 = vmatprep.subr.mxu0 0.0
  %1599 = vmatpush1.msra.mxu0 0.0
  %1600 = vmatprep.subr.mxu0 0.0
  %1601 = vmatpush1.msra.mxu0 0.0
  %1602 = vmatprep.subr.mxu0 0.0
  %1603 = vmatpush1.msra.mxu0 0.0
  %1604 = vmatprep.subr.mxu0 0.0
  %1605 = vmatpush1.msra.mxu0 %v1572
  %1606 = vmatprep.subr.mxu0 0.0
  %1607 = vmatpush2.msra.mxu0 0.0
  %1608 = vmatprep.subr.mxu0 0.0
  %1609 = vmatpush2.msra.mxu0 0.0
  %1610 = vmatprep.subr.mxu0 0.0
  %1611 = vmatpush2.msra.mxu0 0.0
  %1612 = vmatprep.subr.mxu0 0.0
  %1613 = vmatpush2.msra.mxu0 0.0
  %1614 = vmatprep.subr.mxu0 0.0
  %1615 = vmatpush2.msra.mxu0 0.0
  %1616 = vmatprep.subr.mxu0 0.0
  %1617 = vmatpush2.msra.mxu0 0.0
  %1618 = vmatprep.subr.mxu0 0.0
  %1619 = vmatpush2.msra.mxu0 0.0
  %1620 = vmatprep.subr.mxu0 0.0
  %1621 = vmatpush2.msra.mxu0 0.0
  %1622 = vmatprep.subr.mxu0 0.0
  %1623 = vmatpush2.msra.mxu0 0.0
  %1624 = vmatprep.subr.mxu0 0.0
  %1625 = vmatpush2.msra.mxu0 0.0
  %1626 = vmatprep.subr.mxu0 0.0
  %1627 = vmatpush2.msra.mxu0 0.0
  %1628 = vmatprep.subr.mxu0 0.0
  %1629 = vmatpush2.msra.mxu0 0.0
  %1630 = vmatprep.subr.mxu0 0.0
  %1631 = vmatpush2.msra.mxu0 0.0
  %1632 = vmatprep.subr.mxu0 0.0
  %1633 = vmatpush2.msra.mxu0 0.0
  %1634 = vmatprep.subr.mxu0 0.0
  %1635 = vmatpush2.msra.mxu0 0.0
  %1636 = vmatprep.subr.mxu0 0.0
  %1637 = vmatpush2.msra.mxu0 0.0
  %1638 = vmatprep.mubr.f32.mxu0 0.0
  %1639 = vmatmul.mubr.f32.gmra.mxu0 %v1570
  %v1640 = vpop.f32.mrf.mxu0
  %v1641 = vadd.f32 0.0, %v1640
  %v1642 = vpop.f32.mrf.mxu0
  %1643 = vdwg.mxu0
  %1646 = vrot.lane.b32.xlu0 %v1566, 24
  %v1647 = vpop.permute.xlu0 %1646
  %1648 = vrot.lane.b32.xlu0 %v1641, 24
  %v1649 = vpop.permute.xlu0 %1648
  %vm1652 = vcmask 259264
  %1653 = vst.msk [vmem:[%s3] sm:$0x3f] %vm1652, %v1647
  %1654 = vst.msk [vmem:[%s3 + $0x8] sm:$0x3f] %vm1652, %v1649
  // Predicated region
  $region14: #{_lambda_.13} parent=0 // pred_check
    _
  $region15: #{_lambda_.13} parent=0 // pred_check_branch
    %1656 = sbr.rel (0) target = $region17
  $region16: #{_lambda_.13} parent=0 // pred_region
    _
  $region17: #{_lambda_.13} parent=0 // pred_fallthru
    _
  // Predicated region
  $region18: #{_lambda_.13} parent=0 // pred_check
    _
  $region19: #{_lambda_.13} parent=0 // pred_check_branch
    %1658 = sbr.rel (0) target = $region21
  $region20: #{_lambda_.13} parent=0 // pred_region
    _
  $region21: #{_lambda_.13} parent=0 // pred_fallthru
    _

// kernel: _lambda_.11
$region0: #{_lambda_.11}
  #allocation0 [shape = 'u32[]', space=smem, size = 0x4, offset = 0x4, fixed_abs, tag = 'smem constant byte address 0x4 - core index']
  #allocation1 [shape = 'u32[144,128]{1,0:T(1,128)}', space=vmem, size = 0x12000, scoped, tag = 'internal scratch']
  %s0 = inlined_call_operand.vmem [shape: f32[4,8,32], index: 0, kind: input, shape index: {}]
  %s1 = inlined_call_operand.vmem [shape: f32[32,32], index: 1, kind: input, shape index: {}]
  %s2 = inlined_call_operand.vmem [shape: f32[4,1,8], index: 2, kind: input, shape index: {}]
  %s3 = inlined_call_operand.vmem [shape: f32[4,8,32], index: 3, kind: output, shape index: {}]
  %s4 = sld [smem:[#allocation0]]
  $region22: #{_lambda_.11} parent=0
    _
  %s6 = ssub.s32 1, %s4
  %s7 = scalar_select 0, %s6, %s4
  // Predicated region
  $region2: #{_lambda_.11} parent=0 // pred_check
    _
  $region3: #{_lambda_.11} parent=0 // pred_check_branch
    %9 = sbr.rel (0) target = $region5
  $region4: #{_lambda_.11} parent=0 // pred_region
    _
  $region5: #{_lambda_.11} parent=0 // pred_fallthru
    _
  // Predicated region
  $region6: #{_lambda_.11} parent=0 // pred_check
    _
  $region7: #{_lambda_.11} parent=0 // pred_check_branch
    %11 = sbr.rel (0) target = $region9
  $region8: #{_lambda_.11} parent=0 // pred_region
    _
  $region9: #{_lambda_.11} parent=0 // pred_fallthru
    _
  // Predicated region
  $region10: #{_lambda_.11} parent=0 // pred_check
    _
  $region11: #{_lambda_.11} parent=0 // pred_check_branch
    %13 = sbr.rel (0) target = $region13
  $region12: #{_lambda_.11} parent=0 // pred_region
    _
  $region13: #{_lambda_.11} parent=0 // pred_fallthru
    _
  %v14 = vld [vmem:[%s0] sm:$0xff]
  %v15 = vld [vmem:[%s0 + $0x8] sm:$0xff]
  %v16 = vld [vmem:[%s0 + $0x10] sm:$0xff]
  %v17 = vld [vmem:[%s0 + $0x18] sm:$0xff]
  %v18 = vld [vmem:[%s1] sm:$0xff]
  %v19 = vld [vmem:[%s1 + $0x8] sm:$0xff]
  %v20 = vld [vmem:[%s1 + $0x10] sm:$0xff]
  %v21 = vld [vmem:[%s1 + $0x18] sm:$0xff]
  %vm22 = vcmask 261120
  %v24 = vsel %vm22, %v14, 0
  %v27 = vsel %vm22, %v15, 0
  %v30 = vsel %vm22, %v16, 0
  %v33 = vsel %vm22, %v17, 0
  %35 = vmatprep.subr.mxu0 0.0
  %36 = vmatpush1.msra.mxu0 0.0
  %37 = vmatprep.subr.mxu0 0.0
  %38 = vmatpush1.msra.mxu0 0.0
  %39 = vmatprep.subr.mxu0 0.0
  %40 = vmatpush1.msra.mxu0 0.0
  %41 = vmatprep.subr.mxu0 0.0
  %42 = vmatpush1.msra.mxu0 0.0
  %43 = vmatprep.subr.mxu0 0.0
  %44 = vmatpush1.msra.mxu0 0.0
  %45 = vmatprep.subr.mxu0 0.0
  %46 = vmatpush1.msra.mxu0 0.0
  %47 = vmatprep.subr.mxu0 0.0
  %48 = vmatpush1.msra.mxu0 0.0
  %49 = vmatprep.subr.mxu0 0.0
  %50 = vmatpush1.msra.mxu0 0.0
  %51 = vmatprep.subr.mxu0 0.0
  %52 = vmatpush1.msra.mxu0 0.0
  %53 = vmatprep.subr.mxu0 0.0
  %54 = vmatpush1.msra.mxu0 0.0
  %55 = vmatprep.subr.mxu0 0.0
  %56 = vmatpush1.msra.mxu0 0.0
  %57 = vmatprep.subr.mxu0 0.0
  %58 = vmatpush1.msra.mxu0 0.0
  %59 = vmatprep.subr.mxu0 0.0
  %60 = vmatpush1.msra.mxu0 %v21
  %61 = vmatprep.subr.mxu0 0.0
  %62 = vmatpush1.msra.mxu0 %v20
  %63 = vmatprep.subr.mxu0 0.0
  %64 = vmatpush1.msra.mxu0 %v19
  %65 = vmatprep.subr.mxu0 0.0
  %66 = vmatpush1.msra.mxu0 %v18
  %67 = vmatprep.subr.mxu0 0.0
  %68 = vmatpush2.msra.mxu0 0.0
  %69 = vmatprep.subr.mxu0 0.0
  %70 = vmatpush2.msra.mxu0 0.0
  %71 = vmatprep.subr.mxu0 0.0
  %72 = vmatpush2.msra.mxu0 0.0
  %73 = vmatprep.subr.mxu0 0.0
  %74 = vmatpush2.msra.mxu0 0.0
  %75 = vmatprep.subr.mxu0 0.0
  %76 = vmatpush2.msra.mxu0 0.0
  %77 = vmatprep.subr.mxu0 0.0
  %78 = vmatpush2.msra.mxu0 0.0
  %79 = vmatprep.subr.mxu0 0.0
  %80 = vmatpush2.msra.mxu0 0.0
  %81 = vmatprep.subr.mxu0 0.0
  %82 = vmatpush2.msra.mxu0 0.0
  %83 = vmatprep.subr.mxu0 0.0
  %84 = vmatpush2.msra.mxu0 0.0
  %85 = vmatprep.subr.mxu0 0.0
  %86 = vmatpush2.msra.mxu0 0.0
  %87 = vmatprep.subr.mxu0 0.0
  %88 = vmatpush2.msra.mxu0 0.0
  %89 = vmatprep.subr.mxu0 0.0
  %90 = vmatpush2.msra.mxu0 0.0
  %91 = vmatprep.subr.mxu0 0.0
  %92 = vmatpush2.msra.mxu0 0.0
  %93 = vmatprep.subr.mxu0 0.0
  %94 = vmatpush2.msra.mxu0 0.0
  %95 = vmatprep.subr.mxu0 0.0
  %96 = vmatpush2.msra.mxu0 0.0
  %97 = vmatprep.subr.mxu0 0.0
  %98 = vmatpush2.msra.mxu0 0.0
  %99 = vmatprep.mubr.f32.mxu0 0.0
  %100 = vmatmul.mubr.f32.gmra.mxu0 %v24
  %v101 = vpop.f32.mrf.mxu0
  %v102 = vadd.f32 0.0, %v101
  %v103 = vpop.f32.mrf.mxu0
  %104 = vmatprep.mubr.f32.mxu0 0.0
  %105 = vmatmul.mubr.f32.gmra.mxu0 %v27
  %v106 = vpop.f32.mrf.mxu0
  %v107 = vadd.f32 0.0, %v106
  %v108 = vpop.f32.mrf.mxu0
  %109 = vmatprep.mubr.f32.mxu0 0.0
  %110 = vmatmul.mubr.f32.gmra.mxu0 %v30
  %v111 = vpop.f32.mrf.mxu0
  %v112 = vadd.f32 0.0, %v111
  %v113 = vpop.f32.mrf.mxu0
  %114 = vmatprep.mubr.f32.mxu0 0.0
  %115 = vmatmul.mubr.f32.gmra.mxu0 %v33
  %v116 = vpop.f32.mrf.mxu0
  %v117 = vadd.f32 0.0, %v116
  %v118 = vpop.f32.mrf.mxu0
  %119 = vdwg.mxu0
  %v120 = vld [vmem:[%s2] sm:$0x1]
  %v121 = vld [vmem:[%s2 + $0x1] sm:$0x1]
  %v122 = vld [vmem:[%s2 + $0x2] sm:$0x1]
  %v123 = vld [vmem:[%s2 + $0x3] sm:$0x1]
  %vm124 = vcmask 57344
  %v125 = vsel %vm124, %v120, -inf
  %126 = vmax.xlane.f32.xlu0 %v125
  %v127 = vpop.xlane.xlu0 %126
  %v128 = vsel %vm124, %v121, -inf
  %129 = vmax.xlane.f32.xlu0 %v128
  %v130 = vpop.xlane.xlu0 %129
  %v131 = vsel %vm124, %v122, -inf
  %132 = vmax.xlane.f32.xlu0 %v131
  %v133 = vpop.xlane.xlu0 %132
  %v134 = vsel %vm124, %v123, -inf
  %135 = vmax.xlane.f32.xlu0 %v134
  %v136 = vpop.xlane.xlu0 %135
  %vm137 = vcmp.ge.f32.partialorder %v127, 0.0
  %vm138 = vcmp.ge.f32.partialorder %v130, 0.0
  %vm139 = vcmp.ge.f32.partialorder %v133, 0.0
  %vm140 = vcmp.ge.f32.partialorder %v136, 0.0
  %v141 = vsel %vm137, 1, 0
  %v142 = vsel %vm138, 1, 0
  %v143 = vsel %vm139, 1, 0
  %v144 = vsel %vm140, 1, 0
  %v145 = vcvt.s32.f32 %v141
  %v146 = vcvt.s32.f32 %v142
  %v147 = vcvt.s32.f32 %v143
  %v148 = vcvt.s32.f32 %v144
  %v149 = vmul.f32 %v102, 0.35355338
  %v150 = vmul.f32 %v107, 0.35355338
  %v151 = vmul.f32 %v112, 0.35355338
  %v152 = vmul.f32 %v117, 0.35355338
  %v157 = vlaneseq
  %v158 = vshrl.u32 %v157, 7
  %v159 = vsub.s32 0, %v158
  %v160 = vrot.slane %v120, %v159
  %v161 = vlaneseq
  %v162 = vshrl.u32 %v161, 7
  %v163 = vsub.s32 0, %v162
  %v164 = vrot.slane %v121, %v163
  %v165 = vlaneseq
  %v166 = vshrl.u32 %v165, 7
  %v167 = vsub.s32 0, %v166
  %v168 = vrot.slane %v122, %v167
  %v169 = vlaneseq
  %v170 = vshrl.u32 %v169, 7
  %v171 = vsub.s32 0, %v170
  %v172 = vrot.slane %v123, %v171
  %vm177 = vcmask 64512
  %v179 = vsel %vm177, %v149, 0
  %v182 = vsel %vm177, %v102, 0
  %184 = vmatprep.subr.mxu0 0.0
  %185 = vmatpush1.xpose.msra.mxu0 0.0
  %186 = vmatprep.subr.mxu0 0.0
  %187 = vmatpush1.xpose.msra.mxu0 0.0
  %188 = vmatprep.subr.mxu0 0.0
  %189 = vmatpush1.xpose.msra.mxu0 0.0
  %190 = vmatprep.subr.mxu0 0.0
  %191 = vmatpush1.xpose.msra.mxu0 0.0
  %192 = vmatprep.subr.mxu0 0.0
  %193 = vmatpush1.xpose.msra.mxu0 0.0
  %194 = vmatprep.subr.mxu0 0.0
  %195 = vmatpush1.xpose.msra.mxu0 0.0
  %196 = vmatprep.subr.mxu0 0.0
  %197 = vmatpush1.xpose.msra.mxu0 0.0
  %198 = vmatprep.subr.mxu0 0.0
  %199 = vmatpush1.xpose.msra.mxu0 0.0
  %200 = vmatprep.subr.mxu0 0.0
  %201 = vmatpush1.xpose.msra.mxu0 0.0
  %202 = vmatprep.subr.mxu0 0.0
  %203 = vmatpush1.xpose.msra.mxu0 0.0
  %204 = vmatprep.subr.mxu0 0.0
  %205 = vmatpush1.xpose.msra.mxu0 0.0
  %206 = vmatprep.subr.mxu0 0.0
  %207 = vmatpush1.xpose.msra.mxu0 0.0
  %208 = vmatprep.subr.mxu0 0.0
  %209 = vmatpush1.xpose.msra.mxu0 0.0
  %210 = vmatprep.subr.mxu0 0.0
  %211 = vmatpush1.xpose.msra.mxu0 0.0
  %212 = vmatprep.subr.mxu0 0.0
  %213 = vmatpush1.xpose.msra.mxu0 0.0
  %214 = vmatprep.subr.mxu0 0.0
  %215 = vmatpush1.xpose.msra.mxu0 %v182
  %216 = vmatprep.subr.mxu0 0.0
  %217 = vmatpush2.xpose.msra.mxu0 0.0
  %218 = vmatprep.subr.mxu0 0.0
  %219 = vmatpush2.xpose.msra.mxu0 0.0
  %220 = vmatprep.subr.mxu0 0.0
  %221 = vmatpush2.xpose.msra.mxu0 0.0
  %222 = vmatprep.subr.mxu0 0.0
  %223 = vmatpush2.xpose.msra.mxu0 0.0
  %224 = vmatprep.subr.mxu0 0.0
  %225 = vmatpush2.xpose.msra.mxu0 0.0
  %226 = vmatprep.subr.mxu0 0.0
  %227 = vmatpush2.xpose.msra.mxu0 0.0
  %228 = vmatprep.subr.mxu0 0.0
  %229 = vmatpush2.xpose.msra.mxu0 0.0
  %230 = vmatprep.subr.mxu0 0.0
  %231 = vmatpush2.xpose.msra.mxu0 0.0
  %232 = vmatprep.subr.mxu0 0.0
  %233 = vmatpush2.xpose.msra.mxu0 0.0
  %234 = vmatprep.subr.mxu0 0.0
  %235 = vmatpush2.xpose.msra.mxu0 0.0
  %236 = vmatprep.subr.mxu0 0.0
  %237 = vmatpush2.xpose.msra.mxu0 0.0
  %238 = vmatprep.subr.mxu0 0.0
  %239 = vmatpush2.xpose.msra.mxu0 0.0
  %240 = vmatprep.subr.mxu0 0.0
  %241 = vmatpush2.xpose.msra.mxu0 0.0
  %242 = vmatprep.subr.mxu0 0.0
  %243 = vmatpush2.xpose.msra.mxu0 0.0
  %244 = vmatprep.subr.mxu0 0.0
  %245 = vmatpush2.xpose.msra.mxu0 0.0
  %246 = vmatprep.subr.mxu0 0.0
  %247 = vmatpush2.xpose.msra.mxu0 0.0
  %248 = vmatprep.mubr.f32.mxu0 0.0
  %249 = vmatmul.mubr.f32.gmra.mxu0 %v179
  %v250 = vpop.f32.mrf.mxu0
  %v251 = vadd.f32 %v160, %v250
  %v252 = vpop.f32.mrf.mxu0
  %253 = vdwg.mxu0
  %v255 = vsel %vm177, %v150, 0
  %v258 = vsel %vm177, %v107, 0
  %260 = vmatprep.subr.mxu0 0.0
  %261 = vmatpush1.xpose.msra.mxu0 0.0
  %262 = vmatprep.subr.mxu0 0.0
  %263 = vmatpush1.xpose.msra.mxu0 0.0
  %264 = vmatprep.subr.mxu0 0.0
  %265 = vmatpush1.xpose.msra.mxu0 0.0
  %266 = vmatprep.subr.mxu0 0.0
  %267 = vmatpush1.xpose.msra.mxu0 0.0
  %268 = vmatprep.subr.mxu0 0.0
  %269 = vmatpush1.xpose.msra.mxu0 0.0
  %270 = vmatprep.subr.mxu0 0.0
  %271 = vmatpush1.xpose.msra.mxu0 0.0
  %272 = vmatprep.subr.mxu0 0.0
  %273 = vmatpush1.xpose.msra.mxu0 0.0
  %274 = vmatprep.subr.mxu0 0.0
  %275 = vmatpush1.xpose.msra.mxu0 0.0
  %276 = vmatprep.subr.mxu0 0.0
  %277 = vmatpush1.xpose.msra.mxu0 0.0
  %278 = vmatprep.subr.mxu0 0.0
  %279 = vmatpush1.xpose.msra.mxu0 0.0
  %280 = vmatprep.subr.mxu0 0.0
  %281 = vmatpush1.xpose.msra.mxu0 0.0
  %282 = vmatprep.subr.mxu0 0.0
  %283 = vmatpush1.xpose.msra.mxu0 0.0
  %284 = vmatprep.subr.mxu0 0.0
  %285 = vmatpush1.xpose.msra.mxu0 0.0
  %286 = vmatprep.subr.mxu0 0.0
  %287 = vmatpush1.xpose.msra.mxu0 0.0
  %288 = vmatprep.subr.mxu0 0.0
  %289 = vmatpush1.xpose.msra.mxu0 0.0
  %290 = vmatprep.subr.mxu0 0.0
  %291 = vmatpush1.xpose.msra.mxu0 %v258
  %292 = vmatprep.subr.mxu0 0.0
  %293 = vmatpush2.xpose.msra.mxu0 0.0
  %294 = vmatprep.subr.mxu0 0.0
  %295 = vmatpush2.xpose.msra.mxu0 0.0
  %296 = vmatprep.subr.mxu0 0.0
  %297 = vmatpush2.xpose.msra.mxu0 0.0
  %298 = vmatprep.subr.mxu0 0.0
  %299 = vmatpush2.xpose.msra.mxu0 0.0
  %300 = vmatprep.subr.mxu0 0.0
  %301 = vmatpush2.xpose.msra.mxu0 0.0
  %302 = vmatprep.subr.mxu0 0.0
  %303 = vmatpush2.xpose.msra.mxu0 0.0
  %304 = vmatprep.subr.mxu0 0.0
  %305 = vmatpush2.xpose.msra.mxu0 0.0
  %306 = vmatprep.subr.mxu0 0.0
  %307 = vmatpush2.xpose.msra.mxu0 0.0
  %308 = vmatprep.subr.mxu0 0.0
  %309 = vmatpush2.xpose.msra.mxu0 0.0
  %310 = vmatprep.subr.mxu0 0.0
  %311 = vmatpush2.xpose.msra.mxu0 0.0
  %312 = vmatprep.subr.mxu0 0.0
  %313 = vmatpush2.xpose.msra.mxu0 0.0
  %314 = vmatprep.subr.mxu0 0.0
  %315 = vmatpush2.xpose.msra.mxu0 0.0
  %316 = vmatprep.subr.mxu0 0.0
  %317 = vmatpush2.xpose.msra.mxu0 0.0
  %318 = vmatprep.subr.mxu0 0.0
  %319 = vmatpush2.xpose.msra.mxu0 0.0
  %320 = vmatprep.subr.mxu0 0.0
  %321 = vmatpush2.xpose.msra.mxu0 0.0
  %322 = vmatprep.subr.mxu0 0.0
  %323 = vmatpush2.xpose.msra.mxu0 0.0
  %324 = vmatprep.mubr.f32.mxu0 0.0
  %325 = vmatmul.mubr.f32.gmra.mxu0 %v255
  %v326 = vpop.f32.mrf.mxu0
  %v327 = vadd.f32 %v164, %v326
  %v328 = vpop.f32.mrf.mxu0
  %329 = vdwg.mxu0
  %v331 = vsel %vm177, %v151, 0
  %v334 = vsel %vm177, %v112, 0
  %336 = vmatprep.subr.mxu0 0.0
  %337 = vmatpush1.xpose.msra.mxu0 0.0
  %338 = vmatprep.subr.mxu0 0.0
  %339 = vmatpush1.xpose.msra.mxu0 0.0
  %340 = vmatprep.subr.mxu0 0.0
  %341 = vmatpush1.xpose.msra.mxu0 0.0
  %342 = vmatprep.subr.mxu0 0.0
  %343 = vmatpush1.xpose.msra.mxu0 0.0
  %344 = vmatprep.subr.mxu0 0.0
  %345 = vmatpush1.xpose.msra.mxu0 0.0
  %346 = vmatprep.subr.mxu0 0.0
  %347 = vmatpush1.xpose.msra.mxu0 0.0
  %348 = vmatprep.subr.mxu0 0.0
  %349 = vmatpush1.xpose.msra.mxu0 0.0
  %350 = vmatprep.subr.mxu0 0.0
  %351 = vmatpush1.xpose.msra.mxu0 0.0
  %352 = vmatprep.subr.mxu0 0.0
  %353 = vmatpush1.xpose.msra.mxu0 0.0
  %354 = vmatprep.subr.mxu0 0.0
  %355 = vmatpush1.xpose.msra.mxu0 0.0
  %356 = vmatprep.subr.mxu0 0.0
  %357 = vmatpush1.xpose.msra.mxu0 0.0
  %358 = vmatprep.subr.mxu0 0.0
  %359 = vmatpush1.xpose.msra.mxu0 0.0
  %360 = vmatprep.subr.mxu0 0.0
  %361 = vmatpush1.xpose.msra.mxu0 0.0
  %362 = vmatprep.subr.mxu0 0.0
  %363 = vmatpush1.xpose.msra.mxu0 0.0
  %364 = vmatprep.subr.mxu0 0.0
  %365 = vmatpush1.xpose.msra.mxu0 0.0
  %366 = vmatprep.subr.mxu0 0.0
  %367 = vmatpush1.xpose.msra.mxu0 %v334
  %368 = vmatprep.subr.mxu0 0.0
  %369 = vmatpush2.xpose.msra.mxu0 0.0
  %370 = vmatprep.subr.mxu0 0.0
  %371 = vmatpush2.xpose.msra.mxu0 0.0
  %372 = vmatprep.subr.mxu0 0.0
  %373 = vmatpush2.xpose.msra.mxu0 0.0
  %374 = vmatprep.subr.mxu0 0.0
  %375 = vmatpush2.xpose.msra.mxu0 0.0
  %376 = vmatprep.subr.mxu0 0.0
  %377 = vmatpush2.xpose.msra.mxu0 0.0
  %378 = vmatprep.subr.mxu0 0.0
  %379 = vmatpush2.xpose.msra.mxu0 0.0
  %380 = vmatprep.subr.mxu0 0.0
  %381 = vmatpush2.xpose.msra.mxu0 0.0
  %382 = vmatprep.subr.mxu0 0.0
  %383 = vmatpush2.xpose.msra.mxu0 0.0
  %384 = vmatprep.subr.mxu0 0.0
  %385 = vmatpush2.xpose.msra.mxu0 0.0
  %386 = vmatprep.subr.mxu0 0.0
  %387 = vmatpush2.xpose.msra.mxu0 0.0
  %388 = vmatprep.subr.mxu0 0.0
  %389 = vmatpush2.xpose.msra.mxu0 0.0
  %390 = vmatprep.subr.mxu0 0.0
  %391 = vmatpush2.xpose.msra.mxu0 0.0
  %392 = vmatprep.subr.mxu0 0.0
  %393 = vmatpush2.xpose.msra.mxu0 0.0
  %394 = vmatprep.subr.mxu0 0.0
  %395 = vmatpush2.xpose.msra.mxu0 0.0
  %396 = vmatprep.subr.mxu0 0.0
  %397 = vmatpush2.xpose.msra.mxu0 0.0
  %398 = vmatprep.subr.mxu0 0.0
  %399 = vmatpush2.xpose.msra.mxu0 0.0
  %400 = vmatprep.mubr.f32.mxu0 0.0
  %401 = vmatmul.mubr.f32.gmra.mxu0 %v331
  %v402 = vpop.f32.mrf.mxu0
  %v403 = vadd.f32 %v168, %v402
  %v404 = vpop.f32.mrf.mxu0
  %405 = vdwg.mxu0
  %v407 = vsel %vm177, %v152, 0
  %v410 = vsel %vm177, %v117, 0
  %412 = vmatprep.subr.mxu0 0.0
  %413 = vmatpush1.xpose.msra.mxu0 0.0
  %414 = vmatprep.subr.mxu0 0.0
  %415 = vmatpush1.xpose.msra.mxu0 0.0
  %416 = vmatprep.subr.mxu0 0.0
  %417 = vmatpush1.xpose.msra.mxu0 0.0
  %418 = vmatprep.subr.mxu0 0.0
  %419 = vmatpush1.xpose.msra.mxu0 0.0
  %420 = vmatprep.subr.mxu0 0.0
  %421 = vmatpush1.xpose.msra.mxu0 0.0
  %422 = vmatprep.subr.mxu0 0.0
  %423 = vmatpush1.xpose.msra.mxu0 0.0
  %424 = vmatprep.subr.mxu0 0.0
  %425 = vmatpush1.xpose.msra.mxu0 0.0
  %426 = vmatprep.subr.mxu0 0.0
  %427 = vmatpush1.xpose.msra.mxu0 0.0
  %428 = vmatprep.subr.mxu0 0.0
  %429 = vmatpush1.xpose.msra.mxu0 0.0
  %430 = vmatprep.subr.mxu0 0.0
  %431 = vmatpush1.xpose.msra.mxu0 0.0
  %432 = vmatprep.subr.mxu0 0.0
  %433 = vmatpush1.xpose.msra.mxu0 0.0
  %434 = vmatprep.subr.mxu0 0.0
  %435 = vmatpush1.xpose.msra.mxu0 0.0
  %436 = vmatprep.subr.mxu0 0.0
  %437 = vmatpush1.xpose.msra.mxu0 0.0
  %438 = vmatprep.subr.mxu0 0.0
  %439 = vmatpush1.xpose.msra.mxu0 0.0
  %440 = vmatprep.subr.mxu0 0.0
  %441 = vmatpush1.xpose.msra.mxu0 0.0
  %442 = vmatprep.subr.mxu0 0.0
  %443 = vmatpush1.xpose.msra.mxu0 %v410
  %444 = vmatprep.subr.mxu0 0.0
  %445 = vmatpush2.xpose.msra.mxu0 0.0
  %446 = vmatprep.subr.mxu0 0.0
  %447 = vmatpush2.xpose.msra.mxu0 0.0
  %448 = vmatprep.subr.mxu0 0.0
  %449 = vmatpush2.xpose.msra.mxu0 0.0
  %450 = vmatprep.subr.mxu0 0.0
  %451 = vmatpush2.xpose.msra.mxu0 0.0
  %452 = vmatprep.subr.mxu0 0.0
  %453 = vmatpush2.xpose.msra.mxu0 0.0
  %454 = vmatprep.subr.mxu0 0.0
  %455 = vmatpush2.xpose.msra.mxu0 0.0
  %456 = vmatprep.subr.mxu0 0.0
  %457 = vmatpush2.xpose.msra.mxu0 0.0
  %458 = vmatprep.subr.mxu0 0.0
  %459 = vmatpush2.xpose.msra.mxu0 0.0
  %460 = vmatprep.subr.mxu0 0.0
  %461 = vmatpush2.xpose.msra.mxu0 0.0
  %462 = vmatprep.subr.mxu0 0.0
  %463 = vmatpush2.xpose.msra.mxu0 0.0
  %464 = vmatprep.subr.mxu0 0.0
  %465 = vmatpush2.xpose.msra.mxu0 0.0
  %466 = vmatprep.subr.mxu0 0.0
  %467 = vmatpush2.xpose.msra.mxu0 0.0
  %468 = vmatprep.subr.mxu0 0.0
  %469 = vmatpush2.xpose.msra.mxu0 0.0
  %470 = vmatprep.subr.mxu0 0.0
  %471 = vmatpush2.xpose.msra.mxu0 0.0
  %472 = vmatprep.subr.mxu0 0.0
  %473 = vmatpush2.xpose.msra.mxu0 0.0
  %474 = vmatprep.subr.mxu0 0.0
  %475 = vmatpush2.xpose.msra.mxu0 0.0
  %476 = vmatprep.mubr.f32.mxu0 0.0
  %477 = vmatmul.mubr.f32.gmra.mxu0 %v407
  %v478 = vpop.f32.mrf.mxu0
  %v479 = vadd.f32 %v172, %v478
  %v480 = vpop.f32.mrf.mxu0
  %481 = vdwg.mxu0
  %v482 = vsel %vm177, %v251, -inf
  %483 = vmax.xlane.f32.xlu0 %v482
  %v484 = vpop.xlane.xlu0 %483
  %v485 = vsel %vm177, %v327, -inf
  %486 = vmax.xlane.f32.xlu0 %v485
  %v487 = vpop.xlane.xlu0 %486
  %v488 = vsel %vm177, %v403, -inf
  %489 = vmax.xlane.f32.xlu0 %v488
  %v490 = vpop.xlane.xlu0 %489
  %v491 = vsel %vm177, %v479, -inf
  %492 = vmax.xlane.f32.xlu0 %v491
  %v493 = vpop.xlane.xlu0 %492
  %v494 = vsub.f32 %v251, %v484
  %v495 = vsub.f32 %v327, %v487
  %v496 = vsub.f32 %v403, %v490
  %v497 = vsub.f32 %v479, %v493
  %v498 = vmul.f32 %v494, 1.442695
  %v499 = vpow.pop %v498
  %v500 = vmul.f32 %v495, 1.442695
  %v501 = vpow.pop %v500
  %v502 = vmul.f32 %v496, 1.442695
  %v503 = vpow.pop %v502
  %v504 = vmul.f32 %v497, 1.442695
  %v505 = vpow.pop %v504
  %v506 = vsel %vm177, %v499, 0.0
  %507 = vadd.xlane.f32.xlu0 %v506
  %v508 = vpop.xlane.xlu0 %507
  %v509 = vsel %vm177, %v501, 0.0
  %510 = vadd.xlane.f32.xlu0 %v509
  %v511 = vpop.xlane.xlu0 %510
  %v512 = vsel %vm177, %v503, 0.0
  %513 = vadd.xlane.f32.xlu0 %v512
  %v514 = vpop.xlane.xlu0 %513
  %v515 = vsel %vm177, %v505, 0.0
  %516 = vadd.xlane.f32.xlu0 %v515
  %v517 = vpop.xlane.xlu0 %516
  %v518 = vrcp.pop %v508
  %v519 = vrcp.pop %v511
  %v520 = vrcp.pop %v514
  %v521 = vrcp.pop %v517
  %v522 = vmul.f32 %v499, %v518
  %v523 = vmul.f32 %v501, %v519
  %v524 = vmul.f32 %v503, %v520
  %v525 = vmul.f32 %v505, %v521
  %v526 = vlaneseq
  %v527 = vshrl.u32 %v526, 7
  %v528 = vsub.s32 0, %v527
  %v529 = vrot.slane %v145, %v528
  %v530 = vlaneseq
  %v531 = vshrl.u32 %v530, 7
  %v532 = vsub.s32 0, %v531
  %v533 = vrot.slane %v146, %v532
  %v534 = vlaneseq
  %v535 = vshrl.u32 %v534, 7
  %v536 = vsub.s32 0, %v535
  %v537 = vrot.slane %v147, %v536
  %v538 = vlaneseq
  %v539 = vshrl.u32 %v538, 7
  %v540 = vsub.s32 0, %v539
  %v541 = vrot.slane %v148, %v540
  %v542 = vmul.f32 %v522, %v529
  %v543 = vmul.f32 %v523, %v533
  %v544 = vmul.f32 %v524, %v537
  %v545 = vmul.f32 %v525, %v541
  %v547 = vsel %vm177, %v542, 0
  %549 = vmatprep.subr.mxu0 0.0
  %550 = vmatpush1.msra.mxu0 0.0
  %551 = vmatprep.subr.mxu0 0.0
  %552 = vmatpush1.msra.mxu0 0.0
  %553 = vmatprep.subr.mxu0 0.0
  %554 = vmatpush1.msra.mxu0 0.0
  %555 = vmatprep.subr.mxu0 0.0
  %556 = vmatpush1.msra.mxu0 0.0
  %557 = vmatprep.subr.mxu0 0.0
  %558 = vmatpush1.msra.mxu0 0.0
  %559 = vmatprep.subr.mxu0 0.0
  %560 = vmatpush1.msra.mxu0 0.0
  %561 = vmatprep.subr.mxu0 0.0
  %562 = vmatpush1.msra.mxu0 0.0
  %563 = vmatprep.subr.mxu0 0.0
  %564 = vmatpush1.msra.mxu0 0.0
  %565 = vmatprep.subr.mxu0 0.0
  %566 = vmatpush1.msra.mxu0 0.0
  %567 = vmatprep.subr.mxu0 0.0
  %568 = vmatpush1.msra.mxu0 0.0
  %569 = vmatprep.subr.mxu0 0.0
  %570 = vmatpush1.msra.mxu0 0.0
  %571 = vmatprep.subr.mxu0 0.0
  %572 = vmatpush1.msra.mxu0 0.0
  %573 = vmatprep.subr.mxu0 0.0
  %574 = vmatpush1.msra.mxu0 0.0
  %575 = vmatprep.subr.mxu0 0.0
  %576 = vmatpush1.msra.mxu0 0.0
  %577 = vmatprep.subr.mxu0 0.0
  %578 = vmatpush1.msra.mxu0 0.0
  %579 = vmatprep.subr.mxu0 0.0
  %580 = vmatpush1.msra.mxu0 %v102
  %581 = vmatprep.subr.mxu0 0.0
  %582 = vmatpush2.msra.mxu0 0.0
  %583 = vmatprep.subr.mxu0 0.0
  %584 = vmatpush2.msra.mxu0 0.0
  %585 = vmatprep.subr.mxu0 0.0
  %586 = vmatpush2.msra.mxu0 0.0
  %587 = vmatprep.subr.mxu0 0.0
  %588 = vmatpush2.msra.mxu0 0.0
  %589 = vmatprep.subr.mxu0 0.0
  %590 = vmatpush2.msra.mxu0 0.0
  %591 = vmatprep.subr.mxu0 0.0
  %592 = vmatpush2.msra.mxu0 0.0
  %593 = vmatprep.subr.mxu0 0.0
  %594 = vmatpush2.msra.mxu0 0.0
  %595 = vmatprep.subr.mxu0 0.0
  %596 = vmatpush2.msra.mxu0 0.0
  %597 = vmatprep.subr.mxu0 0.0
  %598 = vmatpush2.msra.mxu0 0.0
  %599 = vmatprep.subr.mxu0 0.0
  %600 = vmatpush2.msra.mxu0 0.0
  %601 = vmatprep.subr.mxu0 0.0
  %602 = vmatpush2.msra.mxu0 0.0
  %603 = vmatprep.subr.mxu0 0.0
  %604 = vmatpush2.msra.mxu0 0.0
  %605 = vmatprep.subr.mxu0 0.0
  %606 = vmatpush2.msra.mxu0 0.0
  %607 = vmatprep.subr.mxu0 0.0
  %608 = vmatpush2.msra.mxu0 0.0
  %609 = vmatprep.subr.mxu0 0.0
  %610 = vmatpush2.msra.mxu0 0.0
  %611 = vmatprep.subr.mxu0 0.0
  %612 = vmatpush2.msra.mxu0 0.0
  %613 = vmatprep.mubr.f32.mxu0 0.0
  %614 = vmatmul.mubr.f32.gmra.mxu0 %v547
  %v615 = vpop.f32.mrf.mxu0
  %v616 = vadd.f32 0.0, %v615
  %v617 = vpop.f32.mrf.mxu0
  %618 = vdwg.mxu0
  %v620 = vsel %vm177, %v543, 0
  %622 = vmatprep.subr.mxu0 0.0
  %623 = vmatpush1.msra.mxu0 0.0
  %624 = vmatprep.subr.mxu0 0.0
  %625 = vmatpush1.msra.mxu0 0.0
  %626 = vmatprep.subr.mxu0 0.0
  %627 = vmatpush1.msra.mxu0 0.0
  %628 = vmatprep.subr.mxu0 0.0
  %629 = vmatpush1.msra.mxu0 0.0
  %630 = vmatprep.subr.mxu0 0.0
  %631 = vmatpush1.msra.mxu0 0.0
  %632 = vmatprep.subr.mxu0 0.0
  %633 = vmatpush1.msra.mxu0 0.0
  %634 = vmatprep.subr.mxu0 0.0
  %635 = vmatpush1.msra.mxu0 0.0
  %636 = vmatprep.subr.mxu0 0.0
  %637 = vmatpush1.msra.mxu0 0.0
  %638 = vmatprep.subr.mxu0 0.0
  %639 = vmatpush1.msra.mxu0 0.0
  %640 = vmatprep.subr.mxu0 0.0
  %641 = vmatpush1.msra.mxu0 0.0
  %642 = vmatprep.subr.mxu0 0.0
  %643 = vmatpush1.msra.mxu0 0.0
  %644 = vmatprep.subr.mxu0 0.0
  %645 = vmatpush1.msra.mxu0 0.0
  %646 = vmatprep.subr.mxu0 0.0
  %647 = vmatpush1.msra.mxu0 0.0
  %648 = vmatprep.subr.mxu0 0.0
  %649 = vmatpush1.msra.mxu0 0.0
  %650 = vmatprep.subr.mxu0 0.0
  %651 = vmatpush1.msra.mxu0 0.0
  %652 = vmatprep.subr.mxu0 0.0
  %653 = vmatpush1.msra.mxu0 %v107
  %654 = vmatprep.subr.mxu0 0.0
  %655 = vmatpush2.msra.mxu0 0.0
  %656 = vmatprep.subr.mxu0 0.0
  %657 = vmatpush2.msra.mxu0 0.0
  %658 = vmatprep.subr.mxu0 0.0
  %659 = vmatpush2.msra.mxu0 0.0
  %660 = vmatprep.subr.mxu0 0.0
  %661 = vmatpush2.msra.mxu0 0.0
  %662 = vmatprep.subr.mxu0 0.0
  %663 = vmatpush2.msra.mxu0 0.0
  %664 = vmatprep.subr.mxu0 0.0
  %665 = vmatpush2.msra.mxu0 0.0
  %666 = vmatprep.subr.mxu0 0.0
  %667 = vmatpush2.msra.mxu0 0.0
  %668 = vmatprep.subr.mxu0 0.0
  %669 = vmatpush2.msra.mxu0 0.0
  %670 = vmatprep.subr.mxu0 0.0
  %671 = vmatpush2.msra.mxu0 0.0
  %672 = vmatprep.subr.mxu0 0.0
  %673 = vmatpush2.msra.mxu0 0.0
  %674 = vmatprep.subr.mxu0 0.0
  %675 = vmatpush2.msra.mxu0 0.0
  %676 = vmatprep.subr.mxu0 0.0
  %677 = vmatpush2.msra.mxu0 0.0
  %678 = vmatprep.subr.mxu0 0.0
  %679 = vmatpush2.msra.mxu0 0.0
  %680 = vmatprep.subr.mxu0 0.0
  %681 = vmatpush2.msra.mxu0 0.0
  %682 = vmatprep.subr.mxu0 0.0
  %683 = vmatpush2.msra.mxu0 0.0
  %684 = vmatprep.subr.mxu0 0.0
  %685 = vmatpush2.msra.mxu0 0.0
  %686 = vmatprep.mubr.f32.mxu0 0.0
  %687 = vmatmul.mubr.f32.gmra.mxu0 %v620
  %v688 = vpop.f32.mrf.mxu0
  %v689 = vadd.f32 0.0, %v688
  %v690 = vpop.f32.mrf.mxu0
  %691 = vdwg.mxu0
  %v693 = vsel %vm177, %v544, 0
  %695 = vmatprep.subr.mxu0 0.0
  %696 = vmatpush1.msra.mxu0 0.0
  %697 = vmatprep.subr.mxu0 0.0
  %698 = vmatpush1.msra.mxu0 0.0
  %699 = vmatprep.subr.mxu0 0.0
  %700 = vmatpush1.msra.mxu0 0.0
  %701 = vmatprep.subr.mxu0 0.0
  %702 = vmatpush1.msra.mxu0 0.0
  %703 = vmatprep.subr.mxu0 0.0
  %704 = vmatpush1.msra.mxu0 0.0
  %705 = vmatprep.subr.mxu0 0.0
  %706 = vmatpush1.msra.mxu0 0.0
  %707 = vmatprep.subr.mxu0 0.0
  %708 = vmatpush1.msra.mxu0 0.0
  %709 = vmatprep.subr.mxu0 0.0
  %710 = vmatpush1.msra.mxu0 0.0
  %711 = vmatprep.subr.mxu0 0.0
  %712 = vmatpush1.msra.mxu0 0.0
  %713 = vmatprep.subr.mxu0 0.0
  %714 = vmatpush1.msra.mxu0 0.0
  %715 = vmatprep.subr.mxu0 0.0
  %716 = vmatpush1.msra.mxu0 0.0
  %717 = vmatprep.subr.mxu0 0.0
  %718 = vmatpush1.msra.mxu0 0.0
  %719 = vmatprep.subr.mxu0 0.0
  %720 = vmatpush1.msra.mxu0 0.0
  %721 = vmatprep.subr.mxu0 0.0
  %722 = vmatpush1.msra.mxu0 0.0
  %723 = vmatprep.subr.mxu0 0.0
  %724 = vmatpush1.msra.mxu0 0.0
  %725 = vmatprep.subr.mxu0 0.0
  %726 = vmatpush1.msra.mxu0 %v112
  %727 = vmatprep.subr.mxu0 0.0
  %728 = vmatpush2.msra.mxu0 0.0
  %729 = vmatprep.subr.mxu0 0.0
  %730 = vmatpush2.msra.mxu0 0.0
  %731 = vmatprep.subr.mxu0 0.0
  %732 = vmatpush2.msra.mxu0 0.0
  %733 = vmatprep.subr.mxu0 0.0
  %734 = vmatpush2.msra.mxu0 0.0
  %735 = vmatprep.subr.mxu0 0.0
  %736 = vmatpush2.msra.mxu0 0.0
  %737 = vmatprep.subr.mxu0 0.0
  %738 = vmatpush2.msra.mxu0 0.0
  %739 = vmatprep.subr.mxu0 0.0
  %740 = vmatpush2.msra.mxu0 0.0
  %741 = vmatprep.subr.mxu0 0.0
  %742 = vmatpush2.msra.mxu0 0.0
  %743 = vmatprep.subr.mxu0 0.0
  %744 = vmatpush2.msra.mxu0 0.0
  %745 = vmatprep.subr.mxu0 0.0
  %746 = vmatpush2.msra.mxu0 0.0
  %747 = vmatprep.subr.mxu0 0.0
  %748 = vmatpush2.msra.mxu0 0.0
  %749 = vmatprep.subr.mxu0 0.0
  %750 = vmatpush2.msra.mxu0 0.0
  %751 = vmatprep.subr.mxu0 0.0
  %752 = vmatpush2.msra.mxu0 0.0
  %753 = vmatprep.subr.mxu0 0.0
  %754 = vmatpush2.msra.mxu0 0.0
  %755 = vmatprep.subr.mxu0 0.0
  %756 = vmatpush2.msra.mxu0 0.0
  %757 = vmatprep.subr.mxu0 0.0
  %758 = vmatpush2.msra.mxu0 0.0
  %759 = vmatprep.mubr.f32.mxu0 0.0
  %760 = vmatmul.mubr.f32.gmra.mxu0 %v693
  %v761 = vpop.f32.mrf.mxu0
  %v762 = vadd.f32 0.0, %v761
  %v763 = vpop.f32.mrf.mxu0
  %764 = vdwg.mxu0
  %v766 = vsel %vm177, %v545, 0
  %768 = vmatprep.subr.mxu0 0.0
  %769 = vmatpush1.msra.mxu0 0.0
  %770 = vmatprep.subr.mxu0 0.0
  %771 = vmatpush1.msra.mxu0 0.0
  %772 = vmatprep.subr.mxu0 0.0
  %773 = vmatpush1.msra.mxu0 0.0
  %774 = vmatprep.subr.mxu0 0.0
  %775 = vmatpush1.msra.mxu0 0.0
  %776 = vmatprep.subr.mxu0 0.0
  %777 = vmatpush1.msra.mxu0 0.0
  %778 = vmatprep.subr.mxu0 0.0
  %779 = vmatpush1.msra.mxu0 0.0
  %780 = vmatprep.subr.mxu0 0.0
  %781 = vmatpush1.msra.mxu0 0.0
  %782 = vmatprep.subr.mxu0 0.0
  %783 = vmatpush1.msra.mxu0 0.0
  %784 = vmatprep.subr.mxu0 0.0
  %785 = vmatpush1.msra.mxu0 0.0
  %786 = vmatprep.subr.mxu0 0.0
  %787 = vmatpush1.msra.mxu0 0.0
  %788 = vmatprep.subr.mxu0 0.0
  %789 = vmatpush1.msra.mxu0 0.0
  %790 = vmatprep.subr.mxu0 0.0
  %791 = vmatpush1.msra.mxu0 0.0
  %792 = vmatprep.subr.mxu0 0.0
  %793 = vmatpush1.msra.mxu0 0.0
  %794 = vmatprep.subr.mxu0 0.0
  %795 = vmatpush1.msra.mxu0 0.0
  %796 = vmatprep.subr.mxu0 0.0
  %797 = vmatpush1.msra.mxu0 0.0
  %798 = vmatprep.subr.mxu0 0.0
  %799 = vmatpush1.msra.mxu0 %v117
  %800 = vmatprep.subr.mxu0 0.0
  %801 = vmatpush2.msra.mxu0 0.0
  %802 = vmatprep.subr.mxu0 0.0
  %803 = vmatpush2.msra.mxu0 0.0
  %804 = vmatprep.subr.mxu0 0.0
  %805 = vmatpush2.msra.mxu0 0.0
  %806 = vmatprep.subr.mxu0 0.0
  %807 = vmatpush2.msra.mxu0 0.0
  %808 = vmatprep.subr.mxu0 0.0
  %809 = vmatpush2.msra.mxu0 0.0
  %810 = vmatprep.subr.mxu0 0.0
  %811 = vmatpush2.msra.mxu0 0.0
  %812 = vmatprep.subr.mxu0 0.0
  %813 = vmatpush2.msra.mxu0 0.0
  %814 = vmatprep.subr.mxu0 0.0
  %815 = vmatpush2.msra.mxu0 0.0
  %816 = vmatprep.subr.mxu0 0.0
  %817 = vmatpush2.msra.mxu0 0.0
  %818 = vmatprep.subr.mxu0 0.0
  %819 = vmatpush2.msra.mxu0 0.0
  %820 = vmatprep.subr.mxu0 0.0
  %821 = vmatpush2.msra.mxu0 0.0
  %822 = vmatprep.subr.mxu0 0.0
  %823 = vmatpush2.msra.mxu0 0.0
  %824 = vmatprep.subr.mxu0 0.0
  %825 = vmatpush2.msra.mxu0 0.0
  %826 = vmatprep.subr.mxu0 0.0
  %827 = vmatpush2.msra.mxu0 0.0
  %828 = vmatprep.subr.mxu0 0.0
  %829 = vmatpush2.msra.mxu0 0.0
  %830 = vmatprep.subr.mxu0 0.0
  %831 = vmatpush2.msra.mxu0 0.0
  %832 = vmatprep.mubr.f32.mxu0 0.0
  %833 = vmatmul.mubr.f32.gmra.mxu0 %v766
  %v834 = vpop.f32.mrf.mxu0
  %v835 = vadd.f32 0.0, %v834
  %v836 = vpop.f32.mrf.mxu0
  %837 = vdwg.mxu0
  %838 = vst.msk [vmem:[%s3] sm:$0xff] %vm177, %v616
  %839 = vst.msk [vmem:[%s3 + $0x8] sm:$0xff] %vm177, %v689
  %840 = vst.msk [vmem:[%s3 + $0x10] sm:$0xff] %vm177, %v762
  %841 = vst.msk [vmem:[%s3 + $0x18] sm:$0xff] %vm177, %v835
  %842 = vrot.lane.b32.xlu0 %v149, 120
  %v843 = vpop.permute.xlu0 %842
  %844 = vrot.lane.b32.xlu0 %v102, 120
  %v845 = vpop.permute.xlu0 %844
  %v846 = vsel %vm177, %v843, 0
  %v848 = vsel %vm177, %v845, 0
  %850 = vmatprep.subr.mxu0 0.0
  %851 = vmatpush1.xpose.msra.mxu0 0.0
  %852 = vmatprep.subr.mxu0 0.0
  %853 = vmatpush1.xpose.msra.mxu0 0.0
  %854 = vmatprep.subr.mxu0 0.0
  %855 = vmatpush1.xpose.msra.mxu0 0.0
  %856 = vmatprep.subr.mxu0 0.0
  %857 = vmatpush1.xpose.msra.mxu0 0.0
  %858 = vmatprep.subr.mxu0 0.0
  %859 = vmatpush1.xpose.msra.mxu0 0.0
  %860 = vmatprep.subr.mxu0 0.0
  %861 = vmatpush1.xpose.msra.mxu0 0.0
  %862 = vmatprep.subr.mxu0 0.0
  %863 = vmatpush1.xpose.msra.mxu0 0.0
  %864 = vmatprep.subr.mxu0 0.0
  %865 = vmatpush1.xpose.msra.mxu0 0.0
  %866 = vmatprep.subr.mxu0 0.0
  %867 = vmatpush1.xpose.msra.mxu0 0.0
  %868 = vmatprep.subr.mxu0 0.0
  %869 = vmatpush1.xpose.msra.mxu0 0.0
  %870 = vmatprep.subr.mxu0 0.0
  %871 = vmatpush1.xpose.msra.mxu0 0.0
  %872 = vmatprep.subr.mxu0 0.0
  %873 = vmatpush1.xpose.msra.mxu0 0.0
  %874 = vmatprep.subr.mxu0 0.0
  %875 = vmatpush1.xpose.msra.mxu0 0.0
  %876 = vmatprep.subr.mxu0 0.0
  %877 = vmatpush1.xpose.msra.mxu0 0.0
  %878 = vmatprep.subr.mxu0 0.0
  %879 = vmatpush1.xpose.msra.mxu0 0.0
  %880 = vmatprep.subr.mxu0 0.0
  %881 = vmatpush1.xpose.msra.mxu0 %v848
  %882 = vmatprep.subr.mxu0 0.0
  %883 = vmatpush2.xpose.msra.mxu0 0.0
  %884 = vmatprep.subr.mxu0 0.0
  %885 = vmatpush2.xpose.msra.mxu0 0.0
  %886 = vmatprep.subr.mxu0 0.0
  %887 = vmatpush2.xpose.msra.mxu0 0.0
  %888 = vmatprep.subr.mxu0 0.0
  %889 = vmatpush2.xpose.msra.mxu0 0.0
  %890 = vmatprep.subr.mxu0 0.0
  %891 = vmatpush2.xpose.msra.mxu0 0.0
  %892 = vmatprep.subr.mxu0 0.0
  %893 = vmatpush2.xpose.msra.mxu0 0.0
  %894 = vmatprep.subr.mxu0 0.0
  %895 = vmatpush2.xpose.msra.mxu0 0.0
  %896 = vmatprep.subr.mxu0 0.0
  %897 = vmatpush2.xpose.msra.mxu0 0.0
  %898 = vmatprep.subr.mxu0 0.0
  %899 = vmatpush2.xpose.msra.mxu0 0.0
  %900 = vmatprep.subr.mxu0 0.0
  %901 = vmatpush2.xpose.msra.mxu0 0.0
  %902 = vmatprep.subr.mxu0 0.0
  %903 = vmatpush2.xpose.msra.mxu0 0.0
  %904 = vmatprep.subr.mxu0 0.0
  %905 = vmatpush2.xpose.msra.mxu0 0.0
  %906 = vmatprep.subr.mxu0 0.0
  %907 = vmatpush2.xpose.msra.mxu0 0.0
  %908 = vmatprep.subr.mxu0 0.0
  %909 = vmatpush2.xpose.msra.mxu0 0.0
  %910 = vmatprep.subr.mxu0 0.0
  %911 = vmatpush2.xpose.msra.mxu0 0.0
  %912 = vmatprep.subr.mxu0 0.0
  %913 = vmatpush2.xpose.msra.mxu0 0.0
  %914 = vmatprep.mubr.f32.mxu0 0.0
  %915 = vmatmul.mubr.f32.gmra.mxu0 %v846
  %v916 = vpop.f32.mrf.mxu0
  %v917 = vadd.f32 %v160, %v916
  %v918 = vpop.f32.mrf.mxu0
  %919 = vdwg.mxu0
  %920 = vrot.lane.b32.xlu0 %v150, 120
  %v921 = vpop.permute.xlu0 %920
  %922 = vrot.lane.b32.xlu0 %v107, 120
  %v923 = vpop.permute.xlu0 %922
  %v924 = vsel %vm177, %v921, 0
  %v926 = vsel %vm177, %v923, 0
  %928 = vmatprep.subr.mxu0 0.0
  %929 = vmatpush1.xpose.msra.mxu0 0.0
  %930 = vmatprep.subr.mxu0 0.0
  %931 = vmatpush1.xpose.msra.mxu0 0.0
  %932 = vmatprep.subr.mxu0 0.0
  %933 = vmatpush1.xpose.msra.mxu0 0.0
  %934 = vmatprep.subr.mxu0 0.0
  %935 = vmatpush1.xpose.msra.mxu0 0.0
  %936 = vmatprep.subr.mxu0 0.0
  %937 = vmatpush1.xpose.msra.mxu0 0.0
  %938 = vmatprep.subr.mxu0 0.0
  %939 = vmatpush1.xpose.msra.mxu0 0.0
  %940 = vmatprep.subr.mxu0 0.0
  %941 = vmatpush1.xpose.msra.mxu0 0.0
  %942 = vmatprep.subr.mxu0 0.0
  %943 = vmatpush1.xpose.msra.mxu0 0.0
  %944 = vmatprep.subr.mxu0 0.0
  %945 = vmatpush1.xpose.msra.mxu0 0.0
  %946 = vmatprep.subr.mxu0 0.0
  %947 = vmatpush1.xpose.msra.mxu0 0.0
  %948 = vmatprep.subr.mxu0 0.0
  %949 = vmatpush1.xpose.msra.mxu0 0.0
  %950 = vmatprep.subr.mxu0 0.0
  %951 = vmatpush1.xpose.msra.mxu0 0.0
  %952 = vmatprep.subr.mxu0 0.0
  %953 = vmatpush1.xpose.msra.mxu0 0.0
  %954 = vmatprep.subr.mxu0 0.0
  %955 = vmatpush1.xpose.msra.mxu0 0.0
  %956 = vmatprep.subr.mxu0 0.0
  %957 = vmatpush1.xpose.msra.mxu0 0.0
  %958 = vmatprep.subr.mxu0 0.0
  %959 = vmatpush1.xpose.msra.mxu0 %v926
  %960 = vmatprep.subr.mxu0 0.0
  %961 = vmatpush2.xpose.msra.mxu0 0.0
  %962 = vmatprep.subr.mxu0 0.0
  %963 = vmatpush2.xpose.msra.mxu0 0.0
  %964 = vmatprep.subr.mxu0 0.0
  %965 = vmatpush2.xpose.msra.mxu0 0.0
  %966 = vmatprep.subr.mxu0 0.0
  %967 = vmatpush2.xpose.msra.mxu0 0.0
  %968 = vmatprep.subr.mxu0 0.0
  %969 = vmatpush2.xpose.msra.mxu0 0.0
  %970 = vmatprep.subr.mxu0 0.0
  %971 = vmatpush2.xpose.msra.mxu0 0.0
  %972 = vmatprep.subr.mxu0 0.0
  %973 = vmatpush2.xpose.msra.mxu0 0.0
  %974 = vmatprep.subr.mxu0 0.0
  %975 = vmatpush2.xpose.msra.mxu0 0.0
  %976 = vmatprep.subr.mxu0 0.0
  %977 = vmatpush2.xpose.msra.mxu0 0.0
  %978 = vmatprep.subr.mxu0 0.0
  %979 = vmatpush2.xpose.msra.mxu0 0.0
  %980 = vmatprep.subr.mxu0 0.0
  %981 = vmatpush2.xpose.msra.mxu0 0.0
  %982 = vmatprep.subr.mxu0 0.0
  %983 = vmatpush2.xpose.msra.mxu0 0.0
  %984 = vmatprep.subr.mxu0 0.0
  %985 = vmatpush2.xpose.msra.mxu0 0.0
  %986 = vmatprep.subr.mxu0 0.0
  %987 = vmatpush2.xpose.msra.mxu0 0.0
  %988 = vmatprep.subr.mxu0 0.0
  %989 = vmatpush2.xpose.msra.mxu0 0.0
  %990 = vmatprep.subr.mxu0 0.0
  %991 = vmatpush2.xpose.msra.mxu0 0.0
  %992 = vmatprep.mubr.f32.mxu0 0.0
  %993 = vmatmul.mubr.f32.gmra.mxu0 %v924
  %v994 = vpop.f32.mrf.mxu0
  %v995 = vadd.f32 %v164, %v994
  %v996 = vpop.f32.mrf.mxu0
  %997 = vdwg.mxu0
  %998 = vrot.lane.b32.xlu0 %v151, 120
  %v999 = vpop.permute.xlu0 %998
  %1000 = vrot.lane.b32.xlu0 %v112, 120
  %v1001 = vpop.permute.xlu0 %1000
  %v1002 = vsel %vm177, %v999, 0
  %v1004 = vsel %vm177, %v1001, 0
  %1006 = vmatprep.subr.mxu0 0.0
  %1007 = vmatpush1.xpose.msra.mxu0 0.0
  %1008 = vmatprep.subr.mxu0 0.0
  %1009 = vmatpush1.xpose.msra.mxu0 0.0
  %1010 = vmatprep.subr.mxu0 0.0
  %1011 = vmatpush1.xpose.msra.mxu0 0.0
  %1012 = vmatprep.subr.mxu0 0.0
  %1013 = vmatpush1.xpose.msra.mxu0 0.0
  %1014 = vmatprep.subr.mxu0 0.0
  %1015 = vmatpush1.xpose.msra.mxu0 0.0
  %1016 = vmatprep.subr.mxu0 0.0
  %1017 = vmatpush1.xpose.msra.mxu0 0.0
  %1018 = vmatprep.subr.mxu0 0.0
  %1019 = vmatpush1.xpose.msra.mxu0 0.0
  %1020 = vmatprep.subr.mxu0 0.0
  %1021 = vmatpush1.xpose.msra.mxu0 0.0
  %1022 = vmatprep.subr.mxu0 0.0
  %1023 = vmatpush1.xpose.msra.mxu0 0.0
  %1024 = vmatprep.subr.mxu0 0.0
  %1025 = vmatpush1.xpose.msra.mxu0 0.0
  %1026 = vmatprep.subr.mxu0 0.0
  %1027 = vmatpush1.xpose.msra.mxu0 0.0
  %1028 = vmatprep.subr.mxu0 0.0
  %1029 = vmatpush1.xpose.msra.mxu0 0.0
  %1030 = vmatprep.subr.mxu0 0.0
  %1031 = vmatpush1.xpose.msra.mxu0 0.0
  %1032 = vmatprep.subr.mxu0 0.0
  %1033 = vmatpush1.xpose.msra.mxu0 0.0
  %1034 = vmatprep.subr.mxu0 0.0
  %1035 = vmatpush1.xpose.msra.mxu0 0.0
  %1036 = vmatprep.subr.mxu0 0.0
  %1037 = vmatpush1.xpose.msra.mxu0 %v1004
  %1038 = vmatprep.subr.mxu0 0.0
  %1039 = vmatpush2.xpose.msra.mxu0 0.0
  %1040 = vmatprep.subr.mxu0 0.0
  %1041 = vmatpush2.xpose.msra.mxu0 0.0
  %1042 = vmatprep.subr.mxu0 0.0
  %1043 = vmatpush2.xpose.msra.mxu0 0.0
  %1044 = vmatprep.subr.mxu0 0.0
  %1045 = vmatpush2.xpose.msra.mxu0 0.0
  %1046 = vmatprep.subr.mxu0 0.0
  %1047 = vmatpush2.xpose.msra.mxu0 0.0
  %1048 = vmatprep.subr.mxu0 0.0
  %1049 = vmatpush2.xpose.msra.mxu0 0.0
  %1050 = vmatprep.subr.mxu0 0.0
  %1051 = vmatpush2.xpose.msra.mxu0 0.0
  %1052 = vmatprep.subr.mxu0 0.0
  %1053 = vmatpush2.xpose.msra.mxu0 0.0
  %1054 = vmatprep.subr.mxu0 0.0
  %1055 = vmatpush2.xpose.msra.mxu0 0.0
  %1056 = vmatprep.subr.mxu0 0.0
  %1057 = vmatpush2.xpose.msra.mxu0 0.0
  %1058 = vmatprep.subr.mxu0 0.0
  %1059 = vmatpush2.xpose.msra.mxu0 0.0
  %1060 = vmatprep.subr.mxu0 0.0
  %1061 = vmatpush2.xpose.msra.mxu0 0.0
  %1062 = vmatprep.subr.mxu0 0.0
  %1063 = vmatpush2.xpose.msra.mxu0 0.0
  %1064 = vmatprep.subr.mxu0 0.0
  %1065 = vmatpush2.xpose.msra.mxu0 0.0
  %1066 = vmatprep.subr.mxu0 0.0
  %1067 = vmatpush2.xpose.msra.mxu0 0.0
  %1068 = vmatprep.subr.mxu0 0.0
  %1069 = vmatpush2.xpose.msra.mxu0 0.0
  %1070 = vmatprep.mubr.f32.mxu0 0.0
  %1071 = vmatmul.mubr.f32.gmra.mxu0 %v1002
  %v1072 = vpop.f32.mrf.mxu0
  %v1073 = vadd.f32 %v168, %v1072
  %v1074 = vpop.f32.mrf.mxu0
  %1075 = vdwg.mxu0
  %1076 = vrot.lane.b32.xlu0 %v152, 120
  %v1077 = vpop.permute.xlu0 %1076
  %1078 = vrot.lane.b32.xlu0 %v117, 120
  %v1079 = vpop.permute.xlu0 %1078
  %v1080 = vsel %vm177, %v1077, 0
  %v1082 = vsel %vm177, %v1079, 0
  %1084 = vmatprep.subr.mxu0 0.0
  %1085 = vmatpush1.xpose.msra.mxu0 0.0
  %1086 = vmatprep.subr.mxu0 0.0
  %1087 = vmatpush1.xpose.msra.mxu0 0.0
  %1088 = vmatprep.subr.mxu0 0.0
  %1089 = vmatpush1.xpose.msra.mxu0 0.0
  %1090 = vmatprep.subr.mxu0 0.0
  %1091 = vmatpush1.xpose.msra.mxu0 0.0
  %1092 = vmatprep.subr.mxu0 0.0
  %1093 = vmatpush1.xpose.msra.mxu0 0.0
  %1094 = vmatprep.subr.mxu0 0.0
  %1095 = vmatpush1.xpose.msra.mxu0 0.0
  %1096 = vmatprep.subr.mxu0 0.0
  %1097 = vmatpush1.xpose.msra.mxu0 0.0
  %1098 = vmatprep.subr.mxu0 0.0
  %1099 = vmatpush1.xpose.msra.mxu0 0.0
  %1100 = vmatprep.subr.mxu0 0.0
  %1101 = vmatpush1.xpose.msra.mxu0 0.0
  %1102 = vmatprep.subr.mxu0 0.0
  %1103 = vmatpush1.xpose.msra.mxu0 0.0
  %1104 = vmatprep.subr.mxu0 0.0
  %1105 = vmatpush1.xpose.msra.mxu0 0.0
  %1106 = vmatprep.subr.mxu0 0.0
  %1107 = vmatpush1.xpose.msra.mxu0 0.0
  %1108 = vmatprep.subr.mxu0 0.0
  %1109 = vmatpush1.xpose.msra.mxu0 0.0
  %1110 = vmatprep.subr.mxu0 0.0
  %1111 = vmatpush1.xpose.msra.mxu0 0.0
  %1112 = vmatprep.subr.mxu0 0.0
  %1113 = vmatpush1.xpose.msra.mxu0 0.0
  %1114 = vmatprep.subr.mxu0 0.0
  %1115 = vmatpush1.xpose.msra.mxu0 %v1082
  %1116 = vmatprep.subr.mxu0 0.0
  %1117 = vmatpush2.xpose.msra.mxu0 0.0
  %1118 = vmatprep.subr.mxu0 0.0
  %1119 = vmatpush2.xpose.msra.mxu0 0.0
  %1120 = vmatprep.subr.mxu0 0.0
  %1121 = vmatpush2.xpose.msra.mxu0 0.0
  %1122 = vmatprep.subr.mxu0 0.0
  %1123 = vmatpush2.xpose.msra.mxu0 0.0
  %1124 = vmatprep.subr.mxu0 0.0
  %1125 = vmatpush2.xpose.msra.mxu0 0.0
  %1126 = vmatprep.subr.mxu0 0.0
  %1127 = vmatpush2.xpose.msra.mxu0 0.0
  %1128 = vmatprep.subr.mxu0 0.0
  %1129 = vmatpush2.xpose.msra.mxu0 0.0
  %1130 = vmatprep.subr.mxu0 0.0
  %1131 = vmatpush2.xpose.msra.mxu0 0.0
  %1132 = vmatprep.subr.mxu0 0.0
  %1133 = vmatpush2.xpose.msra.mxu0 0.0
  %1134 = vmatprep.subr.mxu0 0.0
  %1135 = vmatpush2.xpose.msra.mxu0 0.0
  %1136 = vmatprep.subr.mxu0 0.0
  %1137 = vmatpush2.xpose.msra.mxu0 0.0
  %1138 = vmatprep.subr.mxu0 0.0
  %1139 = vmatpush2.xpose.msra.mxu0 0.0
  %1140 = vmatprep.subr.mxu0 0.0
  %1141 = vmatpush2.xpose.msra.mxu0 0.0
  %1142 = vmatprep.subr.mxu0 0.0
  %1143 = vmatpush2.xpose.msra.mxu0 0.0
  %1144 = vmatprep.subr.mxu0 0.0
  %1145 = vmatpush2.xpose.msra.mxu0 0.0
  %1146 = vmatprep.subr.mxu0 0.0
  %1147 = vmatpush2.xpose.msra.mxu0 0.0
  %1148 = vmatprep.mubr.f32.mxu0 0.0
  %1149 = vmatmul.mubr.f32.gmra.mxu0 %v1080
  %v1150 = vpop.f32.mrf.mxu0
  %v1151 = vadd.f32 %v172, %v1150
  %v1152 = vpop.f32.mrf.mxu0
  %1153 = vdwg.mxu0
  %v1154 = vsel %vm177, %v917, -inf
  %1155 = vmax.xlane.f32.xlu0 %v1154
  %v1156 = vpop.xlane.xlu0 %1155
  %v1157 = vsel %vm177, %v995, -inf
  %1158 = vmax.xlane.f32.xlu0 %v1157
  %v1159 = vpop.xlane.xlu0 %1158
  %v1160 = vsel %vm177, %v1073, -inf
  %1161 = vmax.xlane.f32.xlu0 %v1160
  %v1162 = vpop.xlane.xlu0 %1161
  %v1163 = vsel %vm177, %v1151, -inf
  %1164 = vmax.xlane.f32.xlu0 %v1163
  %v1165 = vpop.xlane.xlu0 %1164
  %v1166 = vsub.f32 %v917, %v1156
  %v1167 = vsub.f32 %v995, %v1159
  %v1168 = vsub.f32 %v1073, %v1162
  %v1169 = vsub.f32 %v1151, %v1165
  %v1170 = vmul.f32 %v1166, 1.442695
  %v1171 = vpow.pop %v1170
  %v1172 = vmul.f32 %v1167, 1.442695
  %v1173 = vpow.pop %v1172
  %v1174 = vmul.f32 %v1168, 1.442695
  %v1175 = vpow.pop %v1174
  %v1176 = vmul.f32 %v1169, 1.442695
  %v1177 = vpow.pop %v1176
  %v1178 = vsel %vm177, %v1171, 0.0
  %1179 = vadd.xlane.f32.xlu0 %v1178
  %v1180 = vpop.xlane.xlu0 %1179
  %v1181 = vsel %vm177, %v1173, 0.0
  %1182 = vadd.xlane.f32.xlu0 %v1181
  %v1183 = vpop.xlane.xlu0 %1182
  %v1184 = vsel %vm177, %v1175, 0.0
  %1185 = vadd.xlane.f32.xlu0 %v1184
  %v1186 = vpop.xlane.xlu0 %1185
  %v1187 = vsel %vm177, %v1177, 0.0
  %1188 = vadd.xlane.f32.xlu0 %v1187
  %v1189 = vpop.xlane.xlu0 %1188
  %v1190 = vrcp.pop %v1180
  %v1191 = vrcp.pop %v1183
  %v1192 = vrcp.pop %v1186
  %v1193 = vrcp.pop %v1189
  %v1194 = vmul.f32 %v1171, %v1190
  %v1195 = vmul.f32 %v1173, %v1191
  %v1196 = vmul.f32 %v1175, %v1192
  %v1197 = vmul.f32 %v1177, %v1193
  %v1198 = vmul.f32 %v1194, %v529
  %v1199 = vmul.f32 %v1195, %v533
  %v1200 = vmul.f32 %v1196, %v537
  %v1201 = vmul.f32 %v1197, %v541
  %v1204 = vsel %vm177, %v1198, 0
  %1206 = vmatprep.subr.mxu0 0.0
  %1207 = vmatpush1.msra.mxu0 0.0
  %1208 = vmatprep.subr.mxu0 0.0
  %1209 = vmatpush1.msra.mxu0 0.0
  %1210 = vmatprep.subr.mxu0 0.0
  %1211 = vmatpush1.msra.mxu0 0.0
  %1212 = vmatprep.subr.mxu0 0.0
  %1213 = vmatpush1.msra.mxu0 0.0
  %1214 = vmatprep.subr.mxu0 0.0
  %1215 = vmatpush1.msra.mxu0 0.0
  %1216 = vmatprep.subr.mxu0 0.0
  %1217 = vmatpush1.msra.mxu0 0.0
  %1218 = vmatprep.subr.mxu0 0.0
  %1219 = vmatpush1.msra.mxu0 0.0
  %1220 = vmatprep.subr.mxu0 0.0
  %1221 = vmatpush1.msra.mxu0 0.0
  %1222 = vmatprep.subr.mxu0 0.0
  %1223 = vmatpush1.msra.mxu0 0.0
  %1224 = vmatprep.subr.mxu0 0.0
  %1225 = vmatpush1.msra.mxu0 0.0
  %1226 = vmatprep.subr.mxu0 0.0
  %1227 = vmatpush1.msra.mxu0 0.0
  %1228 = vmatprep.subr.mxu0 0.0
  %1229 = vmatpush1.msra.mxu0 0.0
  %1230 = vmatprep.subr.mxu0 0.0
  %1231 = vmatpush1.msra.mxu0 0.0
  %1232 = vmatprep.subr.mxu0 0.0
  %1233 = vmatpush1.msra.mxu0 0.0
  %1234 = vmatprep.subr.mxu0 0.0
  %1235 = vmatpush1.msra.mxu0 0.0
  %1236 = vmatprep.subr.mxu0 0.0
  %1237 = vmatpush1.msra.mxu0 %v845
  %1238 = vmatprep.subr.mxu0 0.0
  %1239 = vmatpush2.msra.mxu0 0.0
  %1240 = vmatprep.subr.mxu0 0.0
  %1241 = vmatpush2.msra.mxu0 0.0
  %1242 = vmatprep.subr.mxu0 0.0
  %1243 = vmatpush2.msra.mxu0 0.0
  %1244 = vmatprep.subr.mxu0 0.0
  %1245 = vmatpush2.msra.mxu0 0.0
  %1246 = vmatprep.subr.mxu0 0.0
  %1247 = vmatpush2.msra.mxu0 0.0
  %1248 = vmatprep.subr.mxu0 0.0
  %1249 = vmatpush2.msra.mxu0 0.0
  %1250 = vmatprep.subr.mxu0 0.0
  %1251 = vmatpush2.msra.mxu0 0.0
  %1252 = vmatprep.subr.mxu0 0.0
  %1253 = vmatpush2.msra.mxu0 0.0
  %1254 = vmatprep.subr.mxu0 0.0
  %1255 = vmatpush2.msra.mxu0 0.0
  %1256 = vmatprep.subr.mxu0 0.0
  %1257 = vmatpush2.msra.mxu0 0.0
  %1258 = vmatprep.subr.mxu0 0.0
  %1259 = vmatpush2.msra.mxu0 0.0
  %1260 = vmatprep.subr.mxu0 0.0
  %1261 = vmatpush2.msra.mxu0 0.0
  %1262 = vmatprep.subr.mxu0 0.0
  %1263 = vmatpush2.msra.mxu0 0.0
  %1264 = vmatprep.subr.mxu0 0.0
  %1265 = vmatpush2.msra.mxu0 0.0
  %1266 = vmatprep.subr.mxu0 0.0
  %1267 = vmatpush2.msra.mxu0 0.0
  %1268 = vmatprep.subr.mxu0 0.0
  %1269 = vmatpush2.msra.mxu0 0.0
  %1270 = vmatprep.mubr.f32.mxu0 0.0
  %1271 = vmatmul.mubr.f32.gmra.mxu0 %v1204
  %v1272 = vpop.f32.mrf.mxu0
  %v1273 = vadd.f32 0.0, %v1272
  %v1274 = vpop.f32.mrf.mxu0
  %1275 = vdwg.mxu0
  %v1278 = vsel %vm177, %v1199, 0
  %1280 = vmatprep.subr.mxu0 0.0
  %1281 = vmatpush1.msra.mxu0 0.0
  %1282 = vmatprep.subr.mxu0 0.0
  %1283 = vmatpush1.msra.mxu0 0.0
  %1284 = vmatprep.subr.mxu0 0.0
  %1285 = vmatpush1.msra.mxu0 0.0
  %1286 = vmatprep.subr.mxu0 0.0
  %1287 = vmatpush1.msra.mxu0 0.0
  %1288 = vmatprep.subr.mxu0 0.0
  %1289 = vmatpush1.msra.mxu0 0.0
  %1290 = vmatprep.subr.mxu0 0.0
  %1291 = vmatpush1.msra.mxu0 0.0
  %1292 = vmatprep.subr.mxu0 0.0
  %1293 = vmatpush1.msra.mxu0 0.0
  %1294 = vmatprep.subr.mxu0 0.0
  %1295 = vmatpush1.msra.mxu0 0.0
  %1296 = vmatprep.subr.mxu0 0.0
  %1297 = vmatpush1.msra.mxu0 0.0
  %1298 = vmatprep.subr.mxu0 0.0
  %1299 = vmatpush1.msra.mxu0 0.0
  %1300 = vmatprep.subr.mxu0 0.0
  %1301 = vmatpush1.msra.mxu0 0.0
  %1302 = vmatprep.subr.mxu0 0.0
  %1303 = vmatpush1.msra.mxu0 0.0
  %1304 = vmatprep.subr.mxu0 0.0
  %1305 = vmatpush1.msra.mxu0 0.0
  %1306 = vmatprep.subr.mxu0 0.0
  %1307 = vmatpush1.msra.mxu0 0.0
  %1308 = vmatprep.subr.mxu0 0.0
  %1309 = vmatpush1.msra.mxu0 0.0
  %1310 = vmatprep.subr.mxu0 0.0
  %1311 = vmatpush1.msra.mxu0 %v923
  %1312 = vmatprep.subr.mxu0 0.0
  %1313 = vmatpush2.msra.mxu0 0.0
  %1314 = vmatprep.subr.mxu0 0.0
  %1315 = vmatpush2.msra.mxu0 0.0
  %1316 = vmatprep.subr.mxu0 0.0
  %1317 = vmatpush2.msra.mxu0 0.0
  %1318 = vmatprep.subr.mxu0 0.0
  %1319 = vmatpush2.msra.mxu0 0.0
  %1320 = vmatprep.subr.mxu0 0.0
  %1321 = vmatpush2.msra.mxu0 0.0
  %1322 = vmatprep.subr.mxu0 0.0
  %1323 = vmatpush2.msra.mxu0 0.0
  %1324 = vmatprep.subr.mxu0 0.0
  %1325 = vmatpush2.msra.mxu0 0.0
  %1326 = vmatprep.subr.mxu0 0.0
  %1327 = vmatpush2.msra.mxu0 0.0
  %1328 = vmatprep.subr.mxu0 0.0
  %1329 = vmatpush2.msra.mxu0 0.0
  %1330 = vmatprep.subr.mxu0 0.0
  %1331 = vmatpush2.msra.mxu0 0.0
  %1332 = vmatprep.subr.mxu0 0.0
  %1333 = vmatpush2.msra.mxu0 0.0
  %1334 = vmatprep.subr.mxu0 0.0
  %1335 = vmatpush2.msra.mxu0 0.0
  %1336 = vmatprep.subr.mxu0 0.0
  %1337 = vmatpush2.msra.mxu0 0.0
  %1338 = vmatprep.subr.mxu0 0.0
  %1339 = vmatpush2.msra.mxu0 0.0
  %1340 = vmatprep.subr.mxu0 0.0
  %1341 = vmatpush2.msra.mxu0 0.0
  %1342 = vmatprep.subr.mxu0 0.0
  %1343 = vmatpush2.msra.mxu0 0.0
  %1344 = vmatprep.mubr.f32.mxu0 0.0
  %1345 = vmatmul.mubr.f32.gmra.mxu0 %v1278
  %v1346 = vpop.f32.mrf.mxu0
  %v1347 = vadd.f32 0.0, %v1346
  %v1348 = vpop.f32.mrf.mxu0
  %1349 = vdwg.mxu0
  %v1352 = vsel %vm177, %v1200, 0
  %1354 = vmatprep.subr.mxu0 0.0
  %1355 = vmatpush1.msra.mxu0 0.0
  %1356 = vmatprep.subr.mxu0 0.0
  %1357 = vmatpush1.msra.mxu0 0.0
  %1358 = vmatprep.subr.mxu0 0.0
  %1359 = vmatpush1.msra.mxu0 0.0
  %1360 = vmatprep.subr.mxu0 0.0
  %1361 = vmatpush1.msra.mxu0 0.0
  %1362 = vmatprep.subr.mxu0 0.0
  %1363 = vmatpush1.msra.mxu0 0.0
  %1364 = vmatprep.subr.mxu0 0.0
  %1365 = vmatpush1.msra.mxu0 0.0
  %1366 = vmatprep.subr.mxu0 0.0
  %1367 = vmatpush1.msra.mxu0 0.0
  %1368 = vmatprep.subr.mxu0 0.0
  %1369 = vmatpush1.msra.mxu0 0.0
  %1370 = vmatprep.subr.mxu0 0.0
  %1371 = vmatpush1.msra.mxu0 0.0
  %1372 = vmatprep.subr.mxu0 0.0
  %1373 = vmatpush1.msra.mxu0 0.0
  %1374 = vmatprep.subr.mxu0 0.0
  %1375 = vmatpush1.msra.mxu0 0.0
  %1376 = vmatprep.subr.mxu0 0.0
  %1377 = vmatpush1.msra.mxu0 0.0
  %1378 = vmatprep.subr.mxu0 0.0
  %1379 = vmatpush1.msra.mxu0 0.0
  %1380 = vmatprep.subr.mxu0 0.0
  %1381 = vmatpush1.msra.mxu0 0.0
  %1382 = vmatprep.subr.mxu0 0.0
  %1383 = vmatpush1.msra.mxu0 0.0
  %1384 = vmatprep.subr.mxu0 0.0
  %1385 = vmatpush1.msra.mxu0 %v1001
  %1386 = vmatprep.subr.mxu0 0.0
  %1387 = vmatpush2.msra.mxu0 0.0
  %1388 = vmatprep.subr.mxu0 0.0
  %1389 = vmatpush2.msra.mxu0 0.0
  %1390 = vmatprep.subr.mxu0 0.0
  %1391 = vmatpush2.msra.mxu0 0.0
  %1392 = vmatprep.subr.mxu0 0.0
  %1393 = vmatpush2.msra.mxu0 0.0
  %1394 = vmatprep.subr.mxu0 0.0
  %1395 = vmatpush2.msra.mxu0 0.0
  %1396 = vmatprep.subr.mxu0 0.0
  %1397 = vmatpush2.msra.mxu0 0.0
  %1398 = vmatprep.subr.mxu0 0.0
  %1399 = vmatpush2.msra.mxu0 0.0
  %1400 = vmatprep.subr.mxu0 0.0
  %1401 = vmatpush2.msra.mxu0 0.0
  %1402 = vmatprep.subr.mxu0 0.0
  %1403 = vmatpush2.msra.mxu0 0.0
  %1404 = vmatprep.subr.mxu0 0.0
  %1405 = vmatpush2.msra.mxu0 0.0
  %1406 = vmatprep.subr.mxu0 0.0
  %1407 = vmatpush2.msra.mxu0 0.0
  %1408 = vmatprep.subr.mxu0 0.0
  %1409 = vmatpush2.msra.mxu0 0.0
  %1410 = vmatprep.subr.mxu0 0.0
  %1411 = vmatpush2.msra.mxu0 0.0
  %1412 = vmatprep.subr.mxu0 0.0
  %1413 = vmatpush2.msra.mxu0 0.0
  %1414 = vmatprep.subr.mxu0 0.0
  %1415 = vmatpush2.msra.mxu0 0.0
  %1416 = vmatprep.subr.mxu0 0.0
  %1417 = vmatpush2.msra.mxu0 0.0
  %1418 = vmatprep.mubr.f32.mxu0 0.0
  %1419 = vmatmul.mubr.f32.gmra.mxu0 %v1352
  %v1420 = vpop.f32.mrf.mxu0
  %v1421 = vadd.f32 0.0, %v1420
  %v1422 = vpop.f32.mrf.mxu0
  %1423 = vdwg.mxu0
  %v1426 = vsel %vm177, %v1201, 0
  %1428 = vmatprep.subr.mxu0 0.0
  %1429 = vmatpush1.msra.mxu0 0.0
  %1430 = vmatprep.subr.mxu0 0.0
  %1431 = vmatpush1.msra.mxu0 0.0
  %1432 = vmatprep.subr.mxu0 0.0
  %1433 = vmatpush1.msra.mxu0 0.0
  %1434 = vmatprep.subr.mxu0 0.0
  %1435 = vmatpush1.msra.mxu0 0.0
  %1436 = vmatprep.subr.mxu0 0.0
  %1437 = vmatpush1.msra.mxu0 0.0
  %1438 = vmatprep.subr.mxu0 0.0
  %1439 = vmatpush1.msra.mxu0 0.0
  %1440 = vmatprep.subr.mxu0 0.0
  %1441 = vmatpush1.msra.mxu0 0.0
  %1442 = vmatprep.subr.mxu0 0.0
  %1443 = vmatpush1.msra.mxu0 0.0
  %1444 = vmatprep.subr.mxu0 0.0
  %1445 = vmatpush1.msra.mxu0 0.0
  %1446 = vmatprep.subr.mxu0 0.0
  %1447 = vmatpush1.msra.mxu0 0.0
  %1448 = vmatprep.subr.mxu0 0.0
  %1449 = vmatpush1.msra.mxu0 0.0
  %1450 = vmatprep.subr.mxu0 0.0
  %1451 = vmatpush1.msra.mxu0 0.0
  %1452 = vmatprep.subr.mxu0 0.0
  %1453 = vmatpush1.msra.mxu0 0.0
  %1454 = vmatprep.subr.mxu0 0.0
  %1455 = vmatpush1.msra.mxu0 0.0
  %1456 = vmatprep.subr.mxu0 0.0
  %1457 = vmatpush1.msra.mxu0 0.0
  %1458 = vmatprep.subr.mxu0 0.0
  %1459 = vmatpush1.msra.mxu0 %v1079
  %1460 = vmatprep.subr.mxu0 0.0
  %1461 = vmatpush2.msra.mxu0 0.0
  %1462 = vmatprep.subr.mxu0 0.0
  %1463 = vmatpush2.msra.mxu0 0.0
  %1464 = vmatprep.subr.mxu0 0.0
  %1465 = vmatpush2.msra.mxu0 0.0
  %1466 = vmatprep.subr.mxu0 0.0
  %1467 = vmatpush2.msra.mxu0 0.0
  %1468 = vmatprep.subr.mxu0 0.0
  %1469 = vmatpush2.msra.mxu0 0.0
  %1470 = vmatprep.subr.mxu0 0.0
  %1471 = vmatpush2.msra.mxu0 0.0
  %1472 = vmatprep.subr.mxu0 0.0
  %1473 = vmatpush2.msra.mxu0 0.0
  %1474 = vmatprep.subr.mxu0 0.0
  %1475 = vmatpush2.msra.mxu0 0.0
  %1476 = vmatprep.subr.mxu0 0.0
  %1477 = vmatpush2.msra.mxu0 0.0
  %1478 = vmatprep.subr.mxu0 0.0
  %1479 = vmatpush2.msra.mxu0 0.0
  %1480 = vmatprep.subr.mxu0 0.0
  %1481 = vmatpush2.msra.mxu0 0.0
  %1482 = vmatprep.subr.mxu0 0.0
  %1483 = vmatpush2.msra.mxu0 0.0
  %1484 = vmatprep.subr.mxu0 0.0
  %1485 = vmatpush2.msra.mxu0 0.0
  %1486 = vmatprep.subr.mxu0 0.0
  %1487 = vmatpush2.msra.mxu0 0.0
  %1488 = vmatprep.subr.mxu0 0.0
  %1489 = vmatpush2.msra.mxu0 0.0
  %1490 = vmatprep.subr.mxu0 0.0
  %1491 = vmatpush2.msra.mxu0 0.0
  %1492 = vmatprep.mubr.f32.mxu0 0.0
  %1493 = vmatmul.mubr.f32.gmra.mxu0 %v1426
  %v1494 = vpop.f32.mrf.mxu0
  %v1495 = vadd.f32 0.0, %v1494
  %v1496 = vpop.f32.mrf.mxu0
  %1497 = vdwg.mxu0
  %1502 = vrot.lane.b32.xlu0 %v1273, 8
  %v1503 = vpop.permute.xlu0 %1502
  %1504 = vrot.lane.b32.xlu0 %v1347, 8
  %v1505 = vpop.permute.xlu0 %1504
  %1506 = vrot.lane.b32.xlu0 %v1421, 8
  %v1507 = vpop.permute.xlu0 %1506
  %1508 = vrot.lane.b32.xlu0 %v1495, 8
  %v1509 = vpop.permute.xlu0 %1508
  %vm1514 = vcmask 130112
  %1515 = vst.msk [vmem:[%s3] sm:$0xff] %vm1514, %v1503
  %1516 = vst.msk [vmem:[%s3 + $0x8] sm:$0xff] %vm1514, %v1505
  %1517 = vst.msk [vmem:[%s3 + $0x10] sm:$0xff] %vm1514, %v1507
  %1518 = vst.msk [vmem:[%s3 + $0x18] sm:$0xff] %vm1514, %v1509
  %1519 = vrot.lane.b32.xlu0 %v149, 112
  %v1520 = vpop.permute.xlu0 %1519
  %1521 = vrot.lane.b32.xlu0 %v102, 112
  %v1522 = vpop.permute.xlu0 %1521
  %v1523 = vsel %vm177, %v1520, 0
  %v1525 = vsel %vm177, %v1522, 0
  %1527 = vmatprep.subr.mxu0 0.0
  %1528 = vmatpush1.xpose.msra.mxu0 0.0
  %1529 = vmatprep.subr.mxu0 0.0
  %1530 = vmatpush1.xpose.msra.mxu0 0.0
  %1531 = vmatprep.subr.mxu0 0.0
  %1532 = vmatpush1.xpose.msra.mxu0 0.0
  %1533 = vmatprep.subr.mxu0 0.0
  %1534 = vmatpush1.xpose.msra.mxu0 0.0
  %1535 = vmatprep.subr.mxu0 0.0
  %1536 = vmatpush1.xpose.msra.mxu0 0.0
  %1537 = vmatprep.subr.mxu0 0.0
  %1538 = vmatpush1.xpose.msra.mxu0 0.0
  %1539 = vmatprep.subr.mxu0 0.0
  %1540 = vmatpush1.xpose.msra.mxu0 0.0
  %1541 = vmatprep.subr.mxu0 0.0
  %1542 = vmatpush1.xpose.msra.mxu0 0.0
  %1543 = vmatprep.subr.mxu0 0.0
  %1544 = vmatpush1.xpose.msra.mxu0 0.0
  %1545 = vmatprep.subr.mxu0 0.0
  %1546 = vmatpush1.xpose.msra.mxu0 0.0
  %1547 = vmatprep.subr.mxu0 0.0
  %1548 = vmatpush1.xpose.msra.mxu0 0.0
  %1549 = vmatprep.subr.mxu0 0.0
  %1550 = vmatpush1.xpose.msra.mxu0 0.0
  %1551 = vmatprep.subr.mxu0 0.0
  %1552 = vmatpush1.xpose.msra.mxu0 0.0
  %1553 = vmatprep.subr.mxu0 0.0
  %1554 = vmatpush1.xpose.msra.mxu0 0.0
  %1555 = vmatprep.subr.mxu0 0.0
  %1556 = vmatpush1.xpose.msra.mxu0 0.0
  %1557 = vmatprep.subr.mxu0 0.0
  %1558 = vmatpush1.xpose.msra.mxu0 %v1525
  %1559 = vmatprep.subr.mxu0 0.0
  %1560 = vmatpush2.xpose.msra.mxu0 0.0
  %1561 = vmatprep.subr.mxu0 0.0
  %1562 = vmatpush2.xpose.msra.mxu0 0.0
  %1563 = vmatprep.subr.mxu0 0.0
  %1564 = vmatpush2.xpose.msra.mxu0 0.0
  %1565 = vmatprep.subr.mxu0 0.0
  %1566 = vmatpush2.xpose.msra.mxu0 0.0
  %1567 = vmatprep.subr.mxu0 0.0
  %1568 = vmatpush2.xpose.msra.mxu0 0.0
  %1569 = vmatprep.subr.mxu0 0.0
  %1570 = vmatpush2.xpose.msra.mxu0 0.0
  %1571 = vmatprep.subr.mxu0 0.0
  %1572 = vmatpush2.xpose.msra.mxu0 0.0
  %1573 = vmatprep.subr.mxu0 0.0
  %1574 = vmatpush2.xpose.msra.mxu0 0.0
  %1575 = vmatprep.subr.mxu0 0.0
  %1576 = vmatpush2.xpose.msra.mxu0 0.0
  %1577 = vmatprep.subr.mxu0 0.0
  %1578 = vmatpush2.xpose.msra.mxu0 0.0
  %1579 = vmatprep.subr.mxu0 0.0
  %1580 = vmatpush2.xpose.msra.mxu0 0.0
  %1581 = vmatprep.subr.mxu0 0.0
  %1582 = vmatpush2.xpose.msra.mxu0 0.0
  %1583 = vmatprep.subr.mxu0 0.0
  %1584 = vmatpush2.xpose.msra.mxu0 0.0
  %1585 = vmatprep.subr.mxu0 0.0
  %1586 = vmatpush2.xpose.msra.mxu0 0.0
  %1587 = vmatprep.subr.mxu0 0.0
  %1588 = vmatpush2.xpose.msra.mxu0 0.0
  %1589 = vmatprep.subr.mxu0 0.0
  %1590 = vmatpush2.xpose.msra.mxu0 0.0
  %1591 = vmatprep.mubr.f32.mxu0 0.0
  %1592 = vmatmul.mubr.f32.gmra.mxu0 %v1523
  %v1593 = vpop.f32.mrf.mxu0
  %v1594 = vadd.f32 %v160, %v1593
  %v1595 = vpop.f32.mrf.mxu0
  %1596 = vdwg.mxu0
  %1597 = vrot.lane.b32.xlu0 %v150, 112
  %v1598 = vpop.permute.xlu0 %1597
  %1599 = vrot.lane.b32.xlu0 %v107, 112
  %v1600 = vpop.permute.xlu0 %1599
  %v1601 = vsel %vm177, %v1598, 0
  %v1603 = vsel %vm177, %v1600, 0
  %1605 = vmatprep.subr.mxu0 0.0
  %1606 = vmatpush1.xpose.msra.mxu0 0.0
  %1607 = vmatprep.subr.mxu0 0.0
  %1608 = vmatpush1.xpose.msra.mxu0 0.0
  %1609 = vmatprep.subr.mxu0 0.0
  %1610 = vmatpush1.xpose.msra.mxu0 0.0
  %1611 = vmatprep.subr.mxu0 0.0
  %1612 = vmatpush1.xpose.msra.mxu0 0.0
  %1613 = vmatprep.subr.mxu0 0.0
  %1614 = vmatpush1.xpose.msra.mxu0 0.0
  %1615 = vmatprep.subr.mxu0 0.0
  %1616 = vmatpush1.xpose.msra.mxu0 0.0
  %1617 = vmatprep.subr.mxu0 0.0
  %1618 = vmatpush1.xpose.msra.mxu0 0.0
  %1619 = vmatprep.subr.mxu0 0.0
  %1620 = vmatpush1.xpose.msra.mxu0 0.0
  %1621 = vmatprep.subr.mxu0 0.0
  %1622 = vmatpush1.xpose.msra.mxu0 0.0
  %1623 = vmatprep.subr.mxu0 0.0
  %1624 = vmatpush1.xpose.msra.mxu0 0.0
  %1625 = vmatprep.subr.mxu0 0.0
  %1626 = vmatpush1.xpose.msra.mxu0 0.0
  %1627 = vmatprep.subr.mxu0 0.0
  %1628 = vmatpush1.xpose.msra.mxu0 0.0
  %1629 = vmatprep.subr.mxu0 0.0
  %1630 = vmatpush1.xpose.msra.mxu0 0.0
  %1631 = vmatprep.subr.mxu0 0.0
  %1632 = vmatpush1.xpose.msra.mxu0 0.0
  %1633 = vmatprep.subr.mxu0 0.0
  %1634 = vmatpush1.xpose.msra.mxu0 0.0
  %1635 = vmatprep.subr.mxu0 0.0
  %1636 = vmatpush1.xpose.msra.mxu0 %v1603
  %1637 = vmatprep.subr.mxu0 0.0
  %1638 = vmatpush2.xpose.msra.mxu0 0.0
  %1639 = vmatprep.subr.mxu0 0.0
  %1640 = vmatpush2.xpose.msra.mxu0 0.0
  %1641 = vmatprep.subr.mxu0 0.0
  %1642 = vmatpush2.xpose.msra.mxu0 0.0
  %1643 = vmatprep.subr.mxu0 0.0
  %1644 = vmatpush2.xpose.msra.mxu0 0.0
  %1645 = vmatprep.subr.mxu0 0.0
  %1646 = vmatpush2.xpose.msra.mxu0 0.0
  %1647 = vmatprep.subr.mxu0 0.0
  %1648 = vmatpush2.xpose.msra.mxu0 0.0
  %1649 = vmatprep.subr.mxu0 0.0
  %1650 = vmatpush2.xpose.msra.mxu0 0.0
  %1651 = vmatprep.subr.mxu0 0.0
  %1652 = vmatpush2.xpose.msra.mxu0 0.0
  %1653 = vmatprep.subr.mxu0 0.0
  %1654 = vmatpush2.xpose.msra.mxu0 0.0
  %1655 = vmatprep.subr.mxu0 0.0
  %1656 = vmatpush2.xpose.msra.mxu0 0.0
  %1657 = vmatprep.subr.mxu0 0.0
  %1658 = vmatpush2.xpose.msra.mxu0 0.0
  %1659 = vmatprep.subr.mxu0 0.0
  %1660 = vmatpush2.xpose.msra.mxu0 0.0
  %1661 = vmatprep.subr.mxu0 0.0
  %1662 = vmatpush2.xpose.msra.mxu0 0.0
  %1663 = vmatprep.subr.mxu0 0.0
  %1664 = vmatpush2.xpose.msra.mxu0 0.0
  %1665 = vmatprep.subr.mxu0 0.0
  %1666 = vmatpush2.xpose.msra.mxu0 0.0
  %1667 = vmatprep.subr.mxu0 0.0
  %1668 = vmatpush2.xpose.msra.mxu0 0.0
  %1669 = vmatprep.mubr.f32.mxu0 0.0
  %1670 = vmatmul.mubr.f32.gmra.mxu0 %v1601
  %v1671 = vpop.f32.mrf.mxu0
  %v1672 = vadd.f32 %v164, %v1671
  %v1673 = vpop.f32.mrf.mxu0
  %1674 = vdwg.mxu0
  %1675 = vrot.lane.b32.xlu0 %v151, 112
  %v1676 = vpop.permute.xlu0 %1675
  %1677 = vrot.lane.b32.xlu0 %v112, 112
  %v1678 = vpop.permute.xlu0 %1677
  %v1679 = vsel %vm177, %v1676, 0
  %v1681 = vsel %vm177, %v1678, 0
  %1683 = vmatprep.subr.mxu0 0.0
  %1684 = vmatpush1.xpose.msra.mxu0 0.0
  %1685 = vmatprep.subr.mxu0 0.0
  %1686 = vmatpush1.xpose.msra.mxu0 0.0
  %1687 = vmatprep.subr.mxu0 0.0
  %1688 = vmatpush1.xpose.msra.mxu0 0.0
  %1689 = vmatprep.subr.mxu0 0.0
  %1690 = vmatpush1.xpose.msra.mxu0 0.0
  %1691 = vmatprep.subr.mxu0 0.0
  %1692 = vmatpush1.xpose.msra.mxu0 0.0
  %1693 = vmatprep.subr.mxu0 0.0
  %1694 = vmatpush1.xpose.msra.mxu0 0.0
  %1695 = vmatprep.subr.mxu0 0.0
  %1696 = vmatpush1.xpose.msra.mxu0 0.0
  %1697 = vmatprep.subr.mxu0 0.0
  %1698 = vmatpush1.xpose.msra.mxu0 0.0
  %1699 = vmatprep.subr.mxu0 0.0
  %1700 = vmatpush1.xpose.msra.mxu0 0.0
  %1701 = vmatprep.subr.mxu0 0.0
  %1702 = vmatpush1.xpose.msra.mxu0 0.0
  %1703 = vmatprep.subr.mxu0 0.0
  %1704 = vmatpush1.xpose.msra.mxu0 0.0
  %1705 = vmatprep.subr.mxu0 0.0
  %1706 = vmatpush1.xpose.msra.mxu0 0.0
  %1707 = vmatprep.subr.mxu0 0.0
  %1708 = vmatpush1.xpose.msra.mxu0 0.0
  %1709 = vmatprep.subr.mxu0 0.0
  %1710 = vmatpush1.xpose.msra.mxu0 0.0
  %1711 = vmatprep.subr.mxu0 0.0
  %1712 = vmatpush1.xpose.msra.mxu0 0.0
  %1713 = vmatprep.subr.mxu0 0.0
  %1714 = vmatpush1.xpose.msra.mxu0 %v1681
  %1715 = vmatprep.subr.mxu0 0.0
  %1716 = vmatpush2.xpose.msra.mxu0 0.0
  %1717 = vmatprep.subr.mxu0 0.0
  %1718 = vmatpush2.xpose.msra.mxu0 0.0
  %1719 = vmatprep.subr.mxu0 0.0
  %1720 = vmatpush2.xpose.msra.mxu0 0.0
  %1721 = vmatprep.subr.mxu0 0.0
  %1722 = vmatpush2.xpose.msra.mxu0 0.0
  %1723 = vmatprep.subr.mxu0 0.0
  %1724 = vmatpush2.xpose.msra.mxu0 0.0
  %1725 = vmatprep.subr.mxu0 0.0
  %1726 = vmatpush2.xpose.msra.mxu0 0.0
  %1727 = vmatprep.subr.mxu0 0.0
  %1728 = vmatpush2.xpose.msra.mxu0 0.0
  %1729 = vmatprep.subr.mxu0 0.0
  %1730 = vmatpush2.xpose.msra.mxu0 0.0
  %1731 = vmatprep.subr.mxu0 0.0
  %1732 = vmatpush2.xpose.msra.mxu0 0.0
  %1733 = vmatprep.subr.mxu0 0.0
  %1734 = vmatpush2.xpose.msra.mxu0 0.0
  %1735 = vmatprep.subr.mxu0 0.0
  %1736 = vmatpush2.xpose.msra.mxu0 0.0
  %1737 = vmatprep.subr.mxu0 0.0
  %1738 = vmatpush2.xpose.msra.mxu0 0.0
  %1739 = vmatprep.subr.mxu0 0.0
  %1740 = vmatpush2.xpose.msra.mxu0 0.0
  %1741 = vmatprep.subr.mxu0 0.0
  %1742 = vmatpush2.xpose.msra.mxu0 0.0
  %1743 = vmatprep.subr.mxu0 0.0
  %1744 = vmatpush2.xpose.msra.mxu0 0.0
  %1745 = vmatprep.subr.mxu0 0.0
  %1746 = vmatpush2.xpose.msra.mxu0 0.0
  %1747 = vmatprep.mubr.f32.mxu0 0.0
  %1748 = vmatmul.mubr.f32.gmra.mxu0 %v1679
  %v1749 = vpop.f32.mrf.mxu0
  %v1750 = vadd.f32 %v168, %v1749
  %v1751 = vpop.f32.mrf.mxu0
  %1752 = vdwg.mxu0
  %1753 = vrot.lane.b32.xlu0 %v152, 112
  %v1754 = vpop.permute.xlu0 %1753
  %1755 = vrot.lane.b32.xlu0 %v117, 112
  %v1756 = vpop.permute.xlu0 %1755
  %v1757 = vsel %vm177, %v1754, 0
  %v1759 = vsel %vm177, %v1756, 0
  %1761 = vmatprep.subr.mxu0 0.0
  %1762 = vmatpush1.xpose.msra.mxu0 0.0
  %1763 = vmatprep.subr.mxu0 0.0
  %1764 = vmatpush1.xpose.msra.mxu0 0.0
  %1765 = vmatprep.subr.mxu0 0.0
  %1766 = vmatpush1.xpose.msra.mxu0 0.0
  %1767 = vmatprep.subr.mxu0 0.0
  %1768 = vmatpush1.xpose.msra.mxu0 0.0
  %1769 = vmatprep.subr.mxu0 0.0
  %1770 = vmatpush1.xpose.msra.mxu0 0.0
  %1771 = vmatprep.subr.mxu0 0.0
  %1772 = vmatpush1.xpose.msra.mxu0 0.0
  %1773 = vmatprep.subr.mxu0 0.0
  %1774 = vmatpush1.xpose.msra.mxu0 0.0
  %1775 = vmatprep.subr.mxu0 0.0
  %1776 = vmatpush1.xpose.msra.mxu0 0.0
  %1777 = vmatprep.subr.mxu0 0.0
  %1778 = vmatpush1.xpose.msra.mxu0 0.0
  %1779 = vmatprep.subr.mxu0 0.0
  %1780 = vmatpush1.xpose.msra.mxu0 0.0
  %1781 = vmatprep.subr.mxu0 0.0
  %1782 = vmatpush1.xpose.msra.mxu0 0.0
  %1783 = vmatprep.subr.mxu0 0.0
  %1784 = vmatpush1.xpose.msra.mxu0 0.0
  %1785 = vmatprep.subr.mxu0 0.0
  %1786 = vmatpush1.xpose.msra.mxu0 0.0
  %1787 = vmatprep.subr.mxu0 0.0
  %1788 = vmatpush1.xpose.msra.mxu0 0.0
  %1789 = vmatprep.subr.mxu0 0.0
  %1790 = vmatpush1.xpose.msra.mxu0 0.0
  %1791 = vmatprep.subr.mxu0 0.0
  %1792 = vmatpush1.xpose.msra.mxu0 %v1759
  %1793 = vmatprep.subr.mxu0 0.0
  %1794 = vmatpush2.xpose.msra.mxu0 0.0
  %1795 = vmatprep.subr.mxu0 0.0
  %1796 = vmatpush2.xpose.msra.mxu0 0.0
  %1797 = vmatprep.subr.mxu0 0.0
  %1798 = vmatpush2.xpose.msra.mxu0 0.0
  %1799 = vmatprep.subr.mxu0 0.0
  %1800 = vmatpush2.xpose.msra.mxu0 0.0
  %1801 = vmatprep.subr.mxu0 0.0
  %1802 = vmatpush2.xpose.msra.mxu0 0.0
  %1803 = vmatprep.subr.mxu0 0.0
  %1804 = vmatpush2.xpose.msra.mxu0 0.0
  %1805 = vmatprep.subr.mxu0 0.0
  %1806 = vmatpush2.xpose.msra.mxu0 0.0
  %1807 = vmatprep.subr.mxu0 0.0
  %1808 = vmatpush2.xpose.msra.mxu0 0.0
  %1809 = vmatprep.subr.mxu0 0.0
  %1810 = vmatpush2.xpose.msra.mxu0 0.0
  %1811 = vmatprep.subr.mxu0 0.0
  %1812 = vmatpush2.xpose.msra.mxu0 0.0
  %1813 = vmatprep.subr.mxu0 0.0
  %1814 = vmatpush2.xpose.msra.mxu0 0.0
  %1815 = vmatprep.subr.mxu0 0.0
  %1816 = vmatpush2.xpose.msra.mxu0 0.0
  %1817 = vmatprep.subr.mxu0 0.0
  %1818 = vmatpush2.xpose.msra.mxu0 0.0
  %1819 = vmatprep.subr.mxu0 0.0
  %1820 = vmatpush2.xpose.msra.mxu0 0.0
  %1821 = vmatprep.subr.mxu0 0.0
  %1822 = vmatpush2.xpose.msra.mxu0 0.0
  %1823 = vmatprep.subr.mxu0 0.0
  %1824 = vmatpush2.xpose.msra.mxu0 0.0
  %1825 = vmatprep.mubr.f32.mxu0 0.0
  %1826 = vmatmul.mubr.f32.gmra.mxu0 %v1757
  %v1827 = vpop.f32.mrf.mxu0
  %v1828 = vadd.f32 %v172, %v1827
  %v1829 = vpop.f32.mrf.mxu0
  %1830 = vdwg.mxu0
  %v1831 = vsel %vm177, %v1594, -inf
  %1832 = vmax.xlane.f32.xlu0 %v1831
  %v1833 = vpop.xlane.xlu0 %1832
  %v1834 = vsel %vm177, %v1672, -inf
  %1835 = vmax.xlane.f32.xlu0 %v1834
  %v1836 = vpop.xlane.xlu0 %1835
  %v1837 = vsel %vm177, %v1750, -inf
  %1838 = vmax.xlane.f32.xlu0 %v1837
  %v1839 = vpop.xlane.xlu0 %1838
  %v1840 = vsel %vm177, %v1828, -inf
  %1841 = vmax.xlane.f32.xlu0 %v1840
  %v1842 = vpop.xlane.xlu0 %1841
  %v1843 = vsub.f32 %v1594, %v1833
  %v1844 = vsub.f32 %v1672, %v1836
  %v1845 = vsub.f32 %v1750, %v1839
  %v1846 = vsub.f32 %v1828, %v1842
  %v1847 = vmul.f32 %v1843, 1.442695
  %v1848 = vpow.pop %v1847
  %v1849 = vmul.f32 %v1844, 1.442695
  %v1850 = vpow.pop %v1849
  %v1851 = vmul.f32 %v1845, 1.442695
  %v1852 = vpow.pop %v1851
  %v1853 = vmul.f32 %v1846, 1.442695
  %v1854 = vpow.pop %v1853
  %v1855 = vsel %vm177, %v1848, 0.0
  %1856 = vadd.xlane.f32.xlu0 %v1855
  %v1857 = vpop.xlane.xlu0 %1856
  %v1858 = vsel %vm177, %v1850, 0.0
  %1859 = vadd.xlane.f32.xlu0 %v1858
  %v1860 = vpop.xlane.xlu0 %1859
  %v1861 = vsel %vm177, %v1852, 0.0
  %1862 = vadd.xlane.f32.xlu0 %v1861
  %v1863 = vpop.xlane.xlu0 %1862
  %v1864 = vsel %vm177, %v1854, 0.0
  %1865 = vadd.xlane.f32.xlu0 %v1864
  %v1866 = vpop.xlane.xlu0 %1865
  %v1867 = vrcp.pop %v1857
  %v1868 = vrcp.pop %v1860
  %v1869 = vrcp.pop %v1863
  %v1870 = vrcp.pop %v1866
  %v1871 = vmul.f32 %v1848, %v1867
  %v1872 = vmul.f32 %v1850, %v1868
  %v1873 = vmul.f32 %v1852, %v1869
  %v1874 = vmul.f32 %v1854, %v1870
  %v1875 = vmul.f32 %v1871, %v529
  %v1876 = vmul.f32 %v1872, %v533
  %v1877 = vmul.f32 %v1873, %v537
  %v1878 = vmul.f32 %v1874, %v541
  %v1881 = vsel %vm177, %v1875, 0
  %1883 = vmatprep.subr.mxu0 0.0
  %1884 = vmatpush1.msra.mxu0 0.0
  %1885 = vmatprep.subr.mxu0 0.0
  %1886 = vmatpush1.msra.mxu0 0.0
  %1887 = vmatprep.subr.mxu0 0.0
  %1888 = vmatpush1.msra.mxu0 0.0
  %1889 = vmatprep.subr.mxu0 0.0
  %1890 = vmatpush1.msra.mxu0 0.0
  %1891 = vmatprep.subr.mxu0 0.0
  %1892 = vmatpush1.msra.mxu0 0.0
  %1893 = vmatprep.subr.mxu0 0.0
  %1894 = vmatpush1.msra.mxu0 0.0
  %1895 = vmatprep.subr.mxu0 0.0
  %1896 = vmatpush1.msra.mxu0 0.0
  %1897 = vmatprep.subr.mxu0 0.0
  %1898 = vmatpush1.msra.mxu0 0.0
  %1899 = vmatprep.subr.mxu0 0.0
  %1900 = vmatpush1.msra.mxu0 0.0
  %1901 = vmatprep.subr.mxu0 0.0
  %1902 = vmatpush1.msra.mxu0 0.0
  %1903 = vmatprep.subr.mxu0 0.0
  %1904 = vmatpush1.msra.mxu0 0.0
  %1905 = vmatprep.subr.mxu0 0.0
  %1906 = vmatpush1.msra.mxu0 0.0
  %1907 = vmatprep.subr.mxu0 0.0
  %1908 = vmatpush1.msra.mxu0 0.0
  %1909 = vmatprep.subr.mxu0 0.0
  %1910 = vmatpush1.msra.mxu0 0.0
  %1911 = vmatprep.subr.mxu0 0.0
  %1912 = vmatpush1.msra.mxu0 0.0
  %1913 = vmatprep.subr.mxu0 0.0
  %1914 = vmatpush1.msra.mxu0 %v1522
  %1915 = vmatprep.subr.mxu0 0.0
  %1916 = vmatpush2.msra.mxu0 0.0
  %1917 = vmatprep.subr.mxu0 0.0
  %1918 = vmatpush2.msra.mxu0 0.0
  %1919 = vmatprep.subr.mxu0 0.0
  %1920 = vmatpush2.msra.mxu0 0.0
  %1921 = vmatprep.subr.mxu0 0.0
  %1922 = vmatpush2.msra.mxu0 0.0
  %1923 = vmatprep.subr.mxu0 0.0
  %1924 = vmatpush2.msra.mxu0 0.0
  %1925 = vmatprep.subr.mxu0 0.0
  %1926 = vmatpush2.msra.mxu0 0.0
  %1927 = vmatprep.subr.mxu0 0.0
  %1928 = vmatpush2.msra.mxu0 0.0
  %1929 = vmatprep.subr.mxu0 0.0
  %1930 = vmatpush2.msra.mxu0 0.0
  %1931 = vmatprep.subr.mxu0 0.0
  %1932 = vmatpush2.msra.mxu0 0.0
  %1933 = vmatprep.subr.mxu0 0.0
  %1934 = vmatpush2.msra.mxu0 0.0
  %1935 = vmatprep.subr.mxu0 0.0
  %1936 = vmatpush2.msra.mxu0 0.0
  %1937 = vmatprep.subr.mxu0 0.0
  %1938 = vmatpush2.msra.mxu0 0.0
  %1939 = vmatprep.subr.mxu0 0.0
  %1940 = vmatpush2.msra.mxu0 0.0
  %1941 = vmatprep.subr.mxu0 0.0
  %1942 = vmatpush2.msra.mxu0 0.0
  %1943 = vmatprep.subr.mxu0 0.0
  %1944 = vmatpush2.msra.mxu0 0.0
  %1945 = vmatprep.subr.mxu0 0.0
  %1946 = vmatpush2.msra.mxu0 0.0
  %1947 = vmatprep.mubr.f32.mxu0 0.0
  %1948 = vmatmul.mubr.f32.gmra.mxu0 %v1881
  %v1949 = vpop.f32.mrf.mxu0
  %v1950 = vadd.f32 0.0, %v1949
  %v1951 = vpop.f32.mrf.mxu0
  %1952 = vdwg.mxu0
  %v1955 = vsel %vm177, %v1876, 0
  %1957 = vmatprep.subr.mxu0 0.0
  %1958 = vmatpush1.msra.mxu0 0.0
  %1959 = vmatprep.subr.mxu0 0.0
  %1960 = vmatpush1.msra.mxu0 0.0
  %1961 = vmatprep.subr.mxu0 0.0
  %1962 = vmatpush1.msra.mxu0 0.0
  %1963 = vmatprep.subr.mxu0 0.0
  %1964 = vmatpush1.msra.mxu0 0.0
  %1965 = vmatprep.subr.mxu0 0.0
  %1966 = vmatpush1.msra.mxu0 0.0
  %1967 = vmatprep.subr.mxu0 0.0
  %1968 = vmatpush1.msra.mxu0 0.0
  %1969 = vmatprep.subr.mxu0 0.0
  %1970 = vmatpush1.msra.mxu0 0.0
  %1971 = vmatprep.subr.mxu0 0.0
  %1972 = vmatpush1.msra.mxu0 0.0
  %1973 = vmatprep.subr.mxu0 0.0
  %1974 = vmatpush1.msra.mxu0 0.0
  %1975 = vmatprep.subr.mxu0 0.0
  %1976 = vmatpush1.msra.mxu0 0.0
  %1977 = vmatprep.subr.mxu0 0.0
  %1978 = vmatpush1.msra.mxu0 0.0
  %1979 = vmatprep.subr.mxu0 0.0
  %1980 = vmatpush1.msra.mxu0 0.0
  %1981 = vmatprep.subr.mxu0 0.0
  %1982 = vmatpush1.msra.mxu0 0.0
  %1983 = vmatprep.subr.mxu0 0.0
  %1984 = vmatpush1.msra.mxu0 0.0
  %1985 = vmatprep.subr.mxu0 0.0
  %1986 = vmatpush1.msra.mxu0 0.0
  %1987 = vmatprep.subr.mxu0 0.0
  %1988 = vmatpush1.msra.mxu0 %v1600
  %1989 = vmatprep.subr.mxu0 0.0
  %1990 = vmatpush2.msra.mxu0 0.0
  %1991 = vmatprep.subr.mxu0 0.0
  %1992 = vmatpush2.msra.mxu0 0.0
  %1993 = vmatprep.subr.mxu0 0.0
  %1994 = vmatpush2.msra.mxu0 0.0
  %1995 = vmatprep.subr.mxu0 0.0
  %1996 = vmatpush2.msra.mxu0 0.0
  %1997 = vmatprep.subr.mxu0 0.0
  %1998 = vmatpush2.msra.mxu0 0.0
  %1999 = vmatprep.subr.mxu0 0.0
  %2000 = vmatpush2.msra.mxu0 0.0
  %2001 = vmatprep.subr.mxu0 0.0
  %2002 = vmatpush2.msra.mxu0 0.0
  %2003 = vmatprep.subr.mxu0 0.0
  %2004 = vmatpush2.msra.mxu0 0.0
  %2005 = vmatprep.subr.mxu0 0.0
  %2006 = vmatpush2.msra.mxu0 0.0
  %2007 = vmatprep.subr.mxu0 0.0
  %2008 = vmatpush2.msra.mxu0 0.0
  %2009 = vmatprep.subr.mxu0 0.0
  %2010 = vmatpush2.msra.mxu0 0.0
  %2011 = vmatprep.subr.mxu0 0.0
  %2012 = vmatpush2.msra.mxu0 0.0
  %2013 = vmatprep.subr.mxu0 0.0
  %2014 = vmatpush2.msra.mxu0 0.0
  %2015 = vmatprep.subr.mxu0 0.0
  %2016 = vmatpush2.msra.mxu0 0.0
  %2017 = vmatprep.subr.mxu0 0.0
  %2018 = vmatpush2.msra.mxu0 0.0
  %2019 = vmatprep.subr.mxu0 0.0
  %2020 = vmatpush2.msra.mxu0 0.0
  %2021 = vmatprep.mubr.f32.mxu0 0.0
  %2022 = vmatmul.mubr.f32.gmra.mxu0 %v1955
  %v2023 = vpop.f32.mrf.mxu0
  %v2024 = vadd.f32 0.0, %v2023
  %v2025 = vpop.f32.mrf.mxu0
  %2026 = vdwg.mxu0
  %v2029 = vsel %vm177, %v1877, 0
  %2031 = vmatprep.subr.mxu0 0.0
  %2032 = vmatpush1.msra.mxu0 0.0
  %2033 = vmatprep.subr.mxu0 0.0
  %2034 = vmatpush1.msra.mxu0 0.0
  %2035 = vmatprep.subr.mxu0 0.0
  %2036 = vmatpush1.msra.mxu0 0.0
  %2037 = vmatprep.subr.mxu0 0.0
  %2038 = vmatpush1.msra.mxu0 0.0
  %2039 = vmatprep.subr.mxu0 0.0
  %2040 = vmatpush1.msra.mxu0 0.0
  %2041 = vmatprep.subr.mxu0 0.0
  %2042 = vmatpush1.msra.mxu0 0.0
  %2043 = vmatprep.subr.mxu0 0.0
  %2044 = vmatpush1.msra.mxu0 0.0
  %2045 = vmatprep.subr.mxu0 0.0
  %2046 = vmatpush1.msra.mxu0 0.0
  %2047 = vmatprep.subr.mxu0 0.0
  %2048 = vmatpush1.msra.mxu0 0.0
  %2049 = vmatprep.subr.mxu0 0.0
  %2050 = vmatpush1.msra.mxu0 0.0
  %2051 = vmatprep.subr.mxu0 0.0
  %2052 = vmatpush1.msra.mxu0 0.0
  %2053 = vmatprep.subr.mxu0 0.0
  %2054 = vmatpush1.msra.mxu0 0.0
  %2055 = vmatprep.subr.mxu0 0.0
  %2056 = vmatpush1.msra.mxu0 0.0
  %2057 = vmatprep.subr.mxu0 0.0
  %2058 = vmatpush1.msra.mxu0 0.0
  %2059 = vmatprep.subr.mxu0 0.0
  %2060 = vmatpush1.msra.mxu0 0.0
  %2061 = vmatprep.subr.mxu0 0.0
  %2062 = vmatpush1.msra.mxu0 %v1678
  %2063 = vmatprep.subr.mxu0 0.0
  %2064 = vmatpush2.msra.mxu0 0.0
  %2065 = vmatprep.subr.mxu0 0.0
  %2066 = vmatpush2.msra.mxu0 0.0
  %2067 = vmatprep.subr.mxu0 0.0
  %2068 = vmatpush2.msra.mxu0 0.0
  %2069 = vmatprep.subr.mxu0 0.0
  %2070 = vmatpush2.msra.mxu0 0.0
  %2071 = vmatprep.subr.mxu0 0.0
  %2072 = vmatpush2.msra.mxu0 0.0
  %2073 = vmatprep.subr.mxu0 0.0
  %2074 = vmatpush2.msra.mxu0 0.0
  %2075 = vmatprep.subr.mxu0 0.0
  %2076 = vmatpush2.msra.mxu0 0.0
  %2077 = vmatprep.subr.mxu0 0.0
  %2078 = vmatpush2.msra.mxu0 0.0
  %2079 = vmatprep.subr.mxu0 0.0
  %2080 = vmatpush2.msra.mxu0 0.0
  %2081 = vmatprep.subr.mxu0 0.0
  %2082 = vmatpush2.msra.mxu0 0.0
  %2083 = vmatprep.subr.mxu0 0.0
  %2084 = vmatpush2.msra.mxu0 0.0
  %2085 = vmatprep.subr.mxu0 0.0
  %2086 = vmatpush2.msra.mxu0 0.0
  %2087 = vmatprep.subr.mxu0 0.0
  %2088 = vmatpush2.msra.mxu0 0.0
  %2089 = vmatprep.subr.mxu0 0.0
  %2090 = vmatpush2.msra.mxu0 0.0
  %2091 = vmatprep.subr.mxu0 0.0
  %2092 = vmatpush2.msra.mxu0 0.0
  %2093 = vmatprep.subr.mxu0 0.0
  %2094 = vmatpush2.msra.mxu0 0.0
  %2095 = vmatprep.mubr.f32.mxu0 0.0
  %2096 = vmatmul.mubr.f32.gmra.mxu0 %v2029
  %v2097 = vpop.f32.mrf.mxu0
  %v2098 = vadd.f32 0.0, %v2097
  %v2099 = vpop.f32.mrf.mxu0
  %2100 = vdwg.mxu0
  %v2103 = vsel %vm177, %v1878, 0
  %2105 = vmatprep.subr.mxu0 0.0
  %2106 = vmatpush1.msra.mxu0 0.0
  %2107 = vmatprep.subr.mxu0 0.0
  %2108 = vmatpush1.msra.mxu0 0.0
  %2109 = vmatprep.subr.mxu0 0.0
  %2110 = vmatpush1.msra.mxu0 0.0
  %2111 = vmatprep.subr.mxu0 0.0
  %2112 = vmatpush1.msra.mxu0 0.0
  %2113 = vmatprep.subr.mxu0 0.0
  %2114 = vmatpush1.msra.mxu0 0.0
  %2115 = vmatprep.subr.mxu0 0.0
  %2116 = vmatpush1.msra.mxu0 0.0
  %2117 = vmatprep.subr.mxu0 0.0
  %2118 = vmatpush1.msra.mxu0 0.0
  %2119 = vmatprep.subr.mxu0 0.0
  %2120 = vmatpush1.msra.mxu0 0.0
  %2121 = vmatprep.subr.mxu0 0.0
  %2122 = vmatpush1.msra.mxu0 0.0
  %2123 = vmatprep.subr.mxu0 0.0
  %2124 = vmatpush1.msra.mxu0 0.0
  %2125 = vmatprep.subr.mxu0 0.0
  %2126 = vmatpush1.msra.mxu0 0.0
  %2127 = vmatprep.subr.mxu0 0.0
  %2128 = vmatpush1.msra.mxu0 0.0
  %2129 = vmatprep.subr.mxu0 0.0
  %2130 = vmatpush1.msra.mxu0 0.0
  %2131 = vmatprep.subr.mxu0 0.0
  %2132 = vmatpush1.msra.mxu0 0.0
  %2133 = vmatprep.subr.mxu0 0.0
  %2134 = vmatpush1.msra.mxu0 0.0
  %2135 = vmatprep.subr.mxu0 0.0
  %2136 = vmatpush1.msra.mxu0 %v1756
  %2137 = vmatprep.subr.mxu0 0.0
  %2138 = vmatpush2.msra.mxu0 0.0
  %2139 = vmatprep.subr.mxu0 0.0
  %2140 = vmatpush2.msra.mxu0 0.0
  %2141 = vmatprep.subr.mxu0 0.0
  %2142 = vmatpush2.msra.mxu0 0.0
  %2143 = vmatprep.subr.mxu0 0.0
  %2144 = vmatpush2.msra.mxu0 0.0
  %2145 = vmatprep.subr.mxu0 0.0
  %2146 = vmatpush2.msra.mxu0 0.0
  %2147 = vmatprep.subr.mxu0 0.0
  %2148 = vmatpush2.msra.mxu0 0.0
  %2149 = vmatprep.subr.mxu0 0.0
  %2150 = vmatpush2.msra.mxu0 0.0
  %2151 = vmatprep.subr.mxu0 0.0
  %2152 = vmatpush2.msra.mxu0 0.0
  %2153 = vmatprep.subr.mxu0 0.0
  %2154 = vmatpush2.msra.mxu0 0.0
  %2155 = vmatprep.subr.mxu0 0.0
  %2156 = vmatpush2.msra.mxu0 0.0
  %2157 = vmatprep.subr.mxu0 0.0
  %2158 = vmatpush2.msra.mxu0 0.0
  %2159 = vmatprep.subr.mxu0 0.0
  %2160 = vmatpush2.msra.mxu0 0.0
  %2161 = vmatprep.subr.mxu0 0.0
  %2162 = vmatpush2.msra.mxu0 0.0
  %2163 = vmatprep.subr.mxu0 0.0
  %2164 = vmatpush2.msra.mxu0 0.0
  %2165 = vmatprep.subr.mxu0 0.0
  %2166 = vmatpush2.msra.mxu0 0.0
  %2167 = vmatprep.subr.mxu0 0.0
  %2168 = vmatpush2.msra.mxu0 0.0
  %2169 = vmatprep.mubr.f32.mxu0 0.0
  %2170 = vmatmul.mubr.f32.gmra.mxu0 %v2103
  %v2171 = vpop.f32.mrf.mxu0
  %v2172 = vadd.f32 0.0, %v2171
  %v2173 = vpop.f32.mrf.mxu0
  %2174 = vdwg.mxu0
  %2179 = vrot.lane.b32.xlu0 %v1950, 16
  %v2180 = vpop.permute.xlu0 %2179
  %2181 = vrot.lane.b32.xlu0 %v2024, 16
  %v2182 = vpop.permute.xlu0 %2181
  %2183 = vrot.lane.b32.xlu0 %v2098, 16
  %v2184 = vpop.permute.xlu0 %2183
  %2185 = vrot.lane.b32.xlu0 %v2172, 16
  %v2186 = vpop.permute.xlu0 %2185
  %vm2191 = vcmask 195712
  %2192 = vst.msk [vmem:[%s3] sm:$0xff] %vm2191, %v2180
  %2193 = vst.msk [vmem:[%s3 + $0x8] sm:$0xff] %vm2191, %v2182
  %2194 = vst.msk [vmem:[%s3 + $0x10] sm:$0xff] %vm2191, %v2184
  %2195 = vst.msk [vmem:[%s3 + $0x18] sm:$0xff] %vm2191, %v2186
  %2196 = vrot.lane.b32.xlu0 %v149, 104
  %v2197 = vpop.permute.xlu0 %2196
  %2198 = vrot.lane.b32.xlu0 %v102, 104
  %v2199 = vpop.permute.xlu0 %2198
  %v2200 = vsel %vm177, %v2197, 0
  %v2202 = vsel %vm177, %v2199, 0
  %2204 = vmatprep.subr.mxu0 0.0
  %2205 = vmatpush1.xpose.msra.mxu0 0.0
  %2206 = vmatprep.subr.mxu0 0.0
  %2207 = vmatpush1.xpose.msra.mxu0 0.0
  %2208 = vmatprep.subr.mxu0 0.0
  %2209 = vmatpush1.xpose.msra.mxu0 0.0
  %2210 = vmatprep.subr.mxu0 0.0
  %2211 = vmatpush1.xpose.msra.mxu0 0.0
  %2212 = vmatprep.subr.mxu0 0.0
  %2213 = vmatpush1.xpose.msra.mxu0 0.0
  %2214 = vmatprep.subr.mxu0 0.0
  %2215 = vmatpush1.xpose.msra.mxu0 0.0
  %2216 = vmatprep.subr.mxu0 0.0
  %2217 = vmatpush1.xpose.msra.mxu0 0.0
  %2218 = vmatprep.subr.mxu0 0.0
  %2219 = vmatpush1.xpose.msra.mxu0 0.0
  %2220 = vmatprep.subr.mxu0 0.0
  %2221 = vmatpush1.xpose.msra.mxu0 0.0
  %2222 = vmatprep.subr.mxu0 0.0
  %2223 = vmatpush1.xpose.msra.mxu0 0.0
  %2224 = vmatprep.subr.mxu0 0.0
  %2225 = vmatpush1.xpose.msra.mxu0 0.0
  %2226 = vmatprep.subr.mxu0 0.0
  %2227 = vmatpush1.xpose.msra.mxu0 0.0
  %2228 = vmatprep.subr.mxu0 0.0
  %2229 = vmatpush1.xpose.msra.mxu0 0.0
  %2230 = vmatprep.subr.mxu0 0.0
  %2231 = vmatpush1.xpose.msra.mxu0 0.0
  %2232 = vmatprep.subr.mxu0 0.0
  %2233 = vmatpush1.xpose.msra.mxu0 0.0
  %2234 = vmatprep.subr.mxu0 0.0
  %2235 = vmatpush1.xpose.msra.mxu0 %v2202
  %2236 = vmatprep.subr.mxu0 0.0
  %2237 = vmatpush2.xpose.msra.mxu0 0.0
  %2238 = vmatprep.subr.mxu0 0.0
  %2239 = vmatpush2.xpose.msra.mxu0 0.0
  %2240 = vmatprep.subr.mxu0 0.0
  %2241 = vmatpush2.xpose.msra.mxu0 0.0
  %2242 = vmatprep.subr.mxu0 0.0
  %2243 = vmatpush2.xpose.msra.mxu0 0.0
  %2244 = vmatprep.subr.mxu0 0.0
  %2245 = vmatpush2.xpose.msra.mxu0 0.0
  %2246 = vmatprep.subr.mxu0 0.0
  %2247 = vmatpush2.xpose.msra.mxu0 0.0
  %2248 = vmatprep.subr.mxu0 0.0
  %2249 = vmatpush2.xpose.msra.mxu0 0.0
  %2250 = vmatprep.subr.mxu0 0.0
  %2251 = vmatpush2.xpose.msra.mxu0 0.0
  %2252 = vmatprep.subr.mxu0 0.0
  %2253 = vmatpush2.xpose.msra.mxu0 0.0
  %2254 = vmatprep.subr.mxu0 0.0
  %2255 = vmatpush2.xpose.msra.mxu0 0.0
  %2256 = vmatprep.subr.mxu0 0.0
  %2257 = vmatpush2.xpose.msra.mxu0 0.0
  %2258 = vmatprep.subr.mxu0 0.0
  %2259 = vmatpush2.xpose.msra.mxu0 0.0
  %2260 = vmatprep.subr.mxu0 0.0
  %2261 = vmatpush2.xpose.msra.mxu0 0.0
  %2262 = vmatprep.subr.mxu0 0.0
  %2263 = vmatpush2.xpose.msra.mxu0 0.0
  %2264 = vmatprep.subr.mxu0 0.0
  %2265 = vmatpush2.xpose.msra.mxu0 0.0
  %2266 = vmatprep.subr.mxu0 0.0
  %2267 = vmatpush2.xpose.msra.mxu0 0.0
  %2268 = vmatprep.mubr.f32.mxu0 0.0
  %2269 = vmatmul.mubr.f32.gmra.mxu0 %v2200
  %v2270 = vpop.f32.mrf.mxu0
  %v2271 = vadd.f32 %v160, %v2270
  %v2272 = vpop.f32.mrf.mxu0
  %2273 = vdwg.mxu0
  %2274 = vrot.lane.b32.xlu0 %v150, 104
  %v2275 = vpop.permute.xlu0 %2274
  %2276 = vrot.lane.b32.xlu0 %v107, 104
  %v2277 = vpop.permute.xlu0 %2276
  %v2278 = vsel %vm177, %v2275, 0
  %v2280 = vsel %vm177, %v2277, 0
  %2282 = vmatprep.subr.mxu0 0.0
  %2283 = vmatpush1.xpose.msra.mxu0 0.0
  %2284 = vmatprep.subr.mxu0 0.0
  %2285 = vmatpush1.xpose.msra.mxu0 0.0
  %2286 = vmatprep.subr.mxu0 0.0
  %2287 = vmatpush1.xpose.msra.mxu0 0.0
  %2288 = vmatprep.subr.mxu0 0.0
  %2289 = vmatpush1.xpose.msra.mxu0 0.0
  %2290 = vmatprep.subr.mxu0 0.0
  %2291 = vmatpush1.xpose.msra.mxu0 0.0
  %2292 = vmatprep.subr.mxu0 0.0
  %2293 = vmatpush1.xpose.msra.mxu0 0.0
  %2294 = vmatprep.subr.mxu0 0.0
  %2295 = vmatpush1.xpose.msra.mxu0 0.0
  %2296 = vmatprep.subr.mxu0 0.0
  %2297 = vmatpush1.xpose.msra.mxu0 0.0
  %2298 = vmatprep.subr.mxu0 0.0
  %2299 = vmatpush1.xpose.msra.mxu0 0.0
  %2300 = vmatprep.subr.mxu0 0.0
  %2301 = vmatpush1.xpose.msra.mxu0 0.0
  %2302 = vmatprep.subr.mxu0 0.0
  %2303 = vmatpush1.xpose.msra.mxu0 0.0
  %2304 = vmatprep.subr.mxu0 0.0
  %2305 = vmatpush1.xpose.msra.mxu0 0.0
  %2306 = vmatprep.subr.mxu0 0.0
  %2307 = vmatpush1.xpose.msra.mxu0 0.0
  %2308 = vmatprep.subr.mxu0 0.0
  %2309 = vmatpush1.xpose.msra.mxu0 0.0
  %2310 = vmatprep.subr.mxu0 0.0
  %2311 = vmatpush1.xpose.msra.mxu0 0.0
  %2312 = vmatprep.subr.mxu0 0.0
  %2313 = vmatpush1.xpose.msra.mxu0 %v2280
  %2314 = vmatprep.subr.mxu0 0.0
  %2315 = vmatpush2.xpose.msra.mxu0 0.0
  %2316 = vmatprep.subr.mxu0 0.0
  %2317 = vmatpush2.xpose.msra.mxu0 0.0
  %2318 = vmatprep.subr.mxu0 0.0
  %2319 = vmatpush2.xpose.msra.mxu0 0.0
  %2320 = vmatprep.subr.mxu0 0.0
  %2321 = vmatpush2.xpose.msra.mxu0 0.0
  %2322 = vmatprep.subr.mxu0 0.0
  %2323 = vmatpush2.xpose.msra.mxu0 0.0
  %2324 = vmatprep.subr.mxu0 0.0
  %2325 = vmatpush2.xpose.msra.mxu0 0.0
  %2326 = vmatprep.subr.mxu0 0.0
  %2327 = vmatpush2.xpose.msra.mxu0 0.0
  %2328 = vmatprep.subr.mxu0 0.0
  %2329 = vmatpush2.xpose.msra.mxu0 0.0
  %2330 = vmatprep.subr.mxu0 0.0
  %2331 = vmatpush2.xpose.msra.mxu0 0.0
  %2332 = vmatprep.subr.mxu0 0.0
  %2333 = vmatpush2.xpose.msra.mxu0 0.0
  %2334 = vmatprep.subr.mxu0 0.0
  %2335 = vmatpush2.xpose.msra.mxu0 0.0
  %2336 = vmatprep.subr.mxu0 0.0
  %2337 = vmatpush2.xpose.msra.mxu0 0.0
  %2338 = vmatprep.subr.mxu0 0.0
  %2339 = vmatpush2.xpose.msra.mxu0 0.0
  %2340 = vmatprep.subr.mxu0 0.0
  %2341 = vmatpush2.xpose.msra.mxu0 0.0
  %2342 = vmatprep.subr.mxu0 0.0
  %2343 = vmatpush2.xpose.msra.mxu0 0.0
  %2344 = vmatprep.subr.mxu0 0.0
  %2345 = vmatpush2.xpose.msra.mxu0 0.0
  %2346 = vmatprep.mubr.f32.mxu0 0.0
  %2347 = vmatmul.mubr.f32.gmra.mxu0 %v2278
  %v2348 = vpop.f32.mrf.mxu0
  %v2349 = vadd.f32 %v164, %v2348
  %v2350 = vpop.f32.mrf.mxu0
  %2351 = vdwg.mxu0
  %2352 = vrot.lane.b32.xlu0 %v151, 104
  %v2353 = vpop.permute.xlu0 %2352
  %2354 = vrot.lane.b32.xlu0 %v112, 104
  %v2355 = vpop.permute.xlu0 %2354
  %v2356 = vsel %vm177, %v2353, 0
  %v2358 = vsel %vm177, %v2355, 0
  %2360 = vmatprep.subr.mxu0 0.0
  %2361 = vmatpush1.xpose.msra.mxu0 0.0
  %2362 = vmatprep.subr.mxu0 0.0
  %2363 = vmatpush1.xpose.msra.mxu0 0.0
  %2364 = vmatprep.subr.mxu0 0.0
  %2365 = vmatpush1.xpose.msra.mxu0 0.0
  %2366 = vmatprep.subr.mxu0 0.0
  %2367 = vmatpush1.xpose.msra.mxu0 0.0
  %2368 = vmatprep.subr.mxu0 0.0
  %2369 = vmatpush1.xpose.msra.mxu0 0.0
  %2370 = vmatprep.subr.mxu0 0.0
  %2371 = vmatpush1.xpose.msra.mxu0 0.0
  %2372 = vmatprep.subr.mxu0 0.0
  %2373 = vmatpush1.xpose.msra.mxu0 0.0
  %2374 = vmatprep.subr.mxu0 0.0
  %2375 = vmatpush1.xpose.msra.mxu0 0.0
  %2376 = vmatprep.subr.mxu0 0.0
  %2377 = vmatpush1.xpose.msra.mxu0 0.0
  %2378 = vmatprep.subr.mxu0 0.0
  %2379 = vmatpush1.xpose.msra.mxu0 0.0
  %2380 = vmatprep.subr.mxu0 0.0
  %2381 = vmatpush1.xpose.msra.mxu0 0.0
  %2382 = vmatprep.subr.mxu0 0.0
  %2383 = vmatpush1.xpose.msra.mxu0 0.0
  %2384 = vmatprep.subr.mxu0 0.0
  %2385 = vmatpush1.xpose.msra.mxu0 0.0
  %2386 = vmatprep.subr.mxu0 0.0
  %2387 = vmatpush1.xpose.msra.mxu0 0.0
  %2388 = vmatprep.subr.mxu0 0.0
  %2389 = vmatpush1.xpose.msra.mxu0 0.0
  %2390 = vmatprep.subr.mxu0 0.0
  %2391 = vmatpush1.xpose.msra.mxu0 %v2358
  %2392 = vmatprep.subr.mxu0 0.0
  %2393 = vmatpush2.xpose.msra.mxu0 0.0
  %2394 = vmatprep.subr.mxu0 0.0
  %2395 = vmatpush2.xpose.msra.mxu0 0.0
  %2396 = vmatprep.subr.mxu0 0.0
  %2397 = vmatpush2.xpose.msra.mxu0 0.0
  %2398 = vmatprep.subr.mxu0 0.0
  %2399 = vmatpush2.xpose.msra.mxu0 0.0
  %2400 = vmatprep.subr.mxu0 0.0
  %2401 = vmatpush2.xpose.msra.mxu0 0.0
  %2402 = vmatprep.subr.mxu0 0.0
  %2403 = vmatpush2.xpose.msra.mxu0 0.0
  %2404 = vmatprep.subr.mxu0 0.0
  %2405 = vmatpush2.xpose.msra.mxu0 0.0
  %2406 = vmatprep.subr.mxu0 0.0
  %2407 = vmatpush2.xpose.msra.mxu0 0.0
  %2408 = vmatprep.subr.mxu0 0.0
  %2409 = vmatpush2.xpose.msra.mxu0 0.0
  %2410 = vmatprep.subr.mxu0 0.0
  %2411 = vmatpush2.xpose.msra.mxu0 0.0
  %2412 = vmatprep.subr.mxu0 0.0
  %2413 = vmatpush2.xpose.msra.mxu0 0.0
  %2414 = vmatprep.subr.mxu0 0.0
  %2415 = vmatpush2.xpose.msra.mxu0 0.0
  %2416 = vmatprep.subr.mxu0 0.0
  %2417 = vmatpush2.xpose.msra.mxu0 0.0
  %2418 = vmatprep.subr.mxu0 0.0
  %2419 = vmatpush2.xpose.msra.mxu0 0.0
  %2420 = vmatprep.subr.mxu0 0.0
  %2421 = vmatpush2.xpose.msra.mxu0 0.0
  %2422 = vmatprep.subr.mxu0 0.0
  %2423 = vmatpush2.xpose.msra.mxu0 0.0
  %2424 = vmatprep.mubr.f32.mxu0 0.0
  %2425 = vmatmul.mubr.f32.gmra.mxu0 %v2356
  %v2426 = vpop.f32.mrf.mxu0
  %v2427 = vadd.f32 %v168, %v2426
  %v2428 = vpop.f32.mrf.mxu0
  %2429 = vdwg.mxu0
  %2430 = vrot.lane.b32.xlu0 %v152, 104
  %v2431 = vpop.permute.xlu0 %2430
  %2432 = vrot.lane.b32.xlu0 %v117, 104
  %v2433 = vpop.permute.xlu0 %2432
  %v2434 = vsel %vm177, %v2431, 0
  %v2436 = vsel %vm177, %v2433, 0
  %2438 = vmatprep.subr.mxu0 0.0
  %2439 = vmatpush1.xpose.msra.mxu0 0.0
  %2440 = vmatprep.subr.mxu0 0.0
  %2441 = vmatpush1.xpose.msra.mxu0 0.0
  %2442 = vmatprep.subr.mxu0 0.0
  %2443 = vmatpush1.xpose.msra.mxu0 0.0
  %2444 = vmatprep.subr.mxu0 0.0
  %2445 = vmatpush1.xpose.msra.mxu0 0.0
  %2446 = vmatprep.subr.mxu0 0.0
  %2447 = vmatpush1.xpose.msra.mxu0 0.0
  %2448 = vmatprep.subr.mxu0 0.0
  %2449 = vmatpush1.xpose.msra.mxu0 0.0
  %2450 = vmatprep.subr.mxu0 0.0
  %2451 = vmatpush1.xpose.msra.mxu0 0.0
  %2452 = vmatprep.subr.mxu0 0.0
  %2453 = vmatpush1.xpose.msra.mxu0 0.0
  %2454 = vmatprep.subr.mxu0 0.0
  %2455 = vmatpush1.xpose.msra.mxu0 0.0
  %2456 = vmatprep.subr.mxu0 0.0
  %2457 = vmatpush1.xpose.msra.mxu0 0.0
  %2458 = vmatprep.subr.mxu0 0.0
  %2459 = vmatpush1.xpose.msra.mxu0 0.0
  %2460 = vmatprep.subr.mxu0 0.0
  %2461 = vmatpush1.xpose.msra.mxu0 0.0
  %2462 = vmatprep.subr.mxu0 0.0
  %2463 = vmatpush1.xpose.msra.mxu0 0.0
  %2464 = vmatprep.subr.mxu0 0.0
  %2465 = vmatpush1.xpose.msra.mxu0 0.0
  %2466 = vmatprep.subr.mxu0 0.0
  %2467 = vmatpush1.xpose.msra.mxu0 0.0
  %2468 = vmatprep.subr.mxu0 0.0
  %2469 = vmatpush1.xpose.msra.mxu0 %v2436
  %2470 = vmatprep.subr.mxu0 0.0
  %2471 = vmatpush2.xpose.msra.mxu0 0.0
  %2472 = vmatprep.subr.mxu0 0.0
  %2473 = vmatpush2.xpose.msra.mxu0 0.0
  %2474 = vmatprep.subr.mxu0 0.0
  %2475 = vmatpush2.xpose.msra.mxu0 0.0
  %2476 = vmatprep.subr.mxu0 0.0
  %2477 = vmatpush2.xpose.msra.mxu0 0.0
  %2478 = vmatprep.subr.mxu0 0.0
  %2479 = vmatpush2.xpose.msra.mxu0 0.0
  %2480 = vmatprep.subr.mxu0 0.0
  %2481 = vmatpush2.xpose.msra.mxu0 0.0
  %2482 = vmatprep.subr.mxu0 0.0
  %2483 = vmatpush2.xpose.msra.mxu0 0.0
  %2484 = vmatprep.subr.mxu0 0.0
  %2485 = vmatpush2.xpose.msra.mxu0 0.0
  %2486 = vmatprep.subr.mxu0 0.0
  %2487 = vmatpush2.xpose.msra.mxu0 0.0
  %2488 = vmatprep.subr.mxu0 0.0
  %2489 = vmatpush2.xpose.msra.mxu0 0.0
  %2490 = vmatprep.subr.mxu0 0.0
  %2491 = vmatpush2.xpose.msra.mxu0 0.0
  %2492 = vmatprep.subr.mxu0 0.0
  %2493 = vmatpush2.xpose.msra.mxu0 0.0
  %2494 = vmatprep.subr.mxu0 0.0
  %2495 = vmatpush2.xpose.msra.mxu0 0.0
  %2496 = vmatprep.subr.mxu0 0.0
  %2497 = vmatpush2.xpose.msra.mxu0 0.0
  %2498 = vmatprep.subr.mxu0 0.0
  %2499 = vmatpush2.xpose.msra.mxu0 0.0
  %2500 = vmatprep.subr.mxu0 0.0
  %2501 = vmatpush2.xpose.msra.mxu0 0.0
  %2502 = vmatprep.mubr.f32.mxu0 0.0
  %2503 = vmatmul.mubr.f32.gmra.mxu0 %v2434
  %v2504 = vpop.f32.mrf.mxu0
  %v2505 = vadd.f32 %v172, %v2504
  %v2506 = vpop.f32.mrf.mxu0
  %2507 = vdwg.mxu0
  %v2508 = vsel %vm177, %v2271, -inf
  %2509 = vmax.xlane.f32.xlu0 %v2508
  %v2510 = vpop.xlane.xlu0 %2509
  %v2511 = vsel %vm177, %v2349, -inf
  %2512 = vmax.xlane.f32.xlu0 %v2511
  %v2513 = vpop.xlane.xlu0 %2512
  %v2514 = vsel %vm177, %v2427, -inf
  %2515 = vmax.xlane.f32.xlu0 %v2514
  %v2516 = vpop.xlane.xlu0 %2515
  %v2517 = vsel %vm177, %v2505, -inf
  %2518 = vmax.xlane.f32.xlu0 %v2517
  %v2519 = vpop.xlane.xlu0 %2518
  %v2520 = vsub.f32 %v2271, %v2510
  %v2521 = vsub.f32 %v2349, %v2513
  %v2522 = vsub.f32 %v2427, %v2516
  %v2523 = vsub.f32 %v2505, %v2519
  %v2524 = vmul.f32 %v2520, 1.442695
  %v2525 = vpow.pop %v2524
  %v2526 = vmul.f32 %v2521, 1.442695
  %v2527 = vpow.pop %v2526
  %v2528 = vmul.f32 %v2522, 1.442695
  %v2529 = vpow.pop %v2528
  %v2530 = vmul.f32 %v2523, 1.442695
  %v2531 = vpow.pop %v2530
  %v2532 = vsel %vm177, %v2525, 0.0
  %2533 = vadd.xlane.f32.xlu0 %v2532
  %v2534 = vpop.xlane.xlu0 %2533
  %v2535 = vsel %vm177, %v2527, 0.0
  %2536 = vadd.xlane.f32.xlu0 %v2535
  %v2537 = vpop.xlane.xlu0 %2536
  %v2538 = vsel %vm177, %v2529, 0.0
  %2539 = vadd.xlane.f32.xlu0 %v2538
  %v2540 = vpop.xlane.xlu0 %2539
  %v2541 = vsel %vm177, %v2531, 0.0
  %2542 = vadd.xlane.f32.xlu0 %v2541
  %v2543 = vpop.xlane.xlu0 %2542
  %v2544 = vrcp.pop %v2534
  %v2545 = vrcp.pop %v2537
  %v2546 = vrcp.pop %v2540
  %v2547 = vrcp.pop %v2543
  %v2548 = vmul.f32 %v2525, %v2544
  %v2549 = vmul.f32 %v2527, %v2545
  %v2550 = vmul.f32 %v2529, %v2546
  %v2551 = vmul.f32 %v2531, %v2547
  %v2552 = vmul.f32 %v2548, %v529
  %v2553 = vmul.f32 %v2549, %v533
  %v2554 = vmul.f32 %v2550, %v537
  %v2555 = vmul.f32 %v2551, %v541
  %v2558 = vsel %vm177, %v2552, 0
  %2560 = vmatprep.subr.mxu0 0.0
  %2561 = vmatpush1.msra.mxu0 0.0
  %2562 = vmatprep.subr.mxu0 0.0
  %2563 = vmatpush1.msra.mxu0 0.0
  %2564 = vmatprep.subr.mxu0 0.0
  %2565 = vmatpush1.msra.mxu0 0.0
  %2566 = vmatprep.subr.mxu0 0.0
  %2567 = vmatpush1.msra.mxu0 0.0
  %2568 = vmatprep.subr.mxu0 0.0
  %2569 = vmatpush1.msra.mxu0 0.0
  %2570 = vmatprep.subr.mxu0 0.0
  %2571 = vmatpush1.msra.mxu0 0.0
  %2572 = vmatprep.subr.mxu0 0.0
  %2573 = vmatpush1.msra.mxu0 0.0
  %2574 = vmatprep.subr.mxu0 0.0
  %2575 = vmatpush1.msra.mxu0 0.0
  %2576 = vmatprep.subr.mxu0 0.0
  %2577 = vmatpush1.msra.mxu0 0.0
  %2578 = vmatprep.subr.mxu0 0.0
  %2579 = vmatpush1.msra.mxu0 0.0
  %2580 = vmatprep.subr.mxu0 0.0
  %2581 = vmatpush1.msra.mxu0 0.0
  %2582 = vmatprep.subr.mxu0 0.0
  %2583 = vmatpush1.msra.mxu0 0.0
  %2584 = vmatprep.subr.mxu0 0.0
  %2585 = vmatpush1.msra.mxu0 0.0
  %2586 = vmatprep.subr.mxu0 0.0
  %2587 = vmatpush1.msra.mxu0 0.0
  %2588 = vmatprep.subr.mxu0 0.0
  %2589 = vmatpush1.msra.mxu0 0.0
  %2590 = vmatprep.subr.mxu0 0.0
  %2591 = vmatpush1.msra.mxu0 %v2199
  %2592 = vmatprep.subr.mxu0 0.0
  %2593 = vmatpush2.msra.mxu0 0.0
  %2594 = vmatprep.subr.mxu0 0.0
  %2595 = vmatpush2.msra.mxu0 0.0
  %2596 = vmatprep.subr.mxu0 0.0
  %2597 = vmatpush2.msra.mxu0 0.0
  %2598 = vmatprep.subr.mxu0 0.0
  %2599 = vmatpush2.msra.mxu0 0.0
  %2600 = vmatprep.subr.mxu0 0.0
  %2601 = vmatpush2.msra.mxu0 0.0
  %2602 = vmatprep.subr.mxu0 0.0
  %2603 = vmatpush2.msra.mxu0 0.0
  %2604 = vmatprep.subr.mxu0 0.0
  %2605 = vmatpush2.msra.mxu0 0.0
  %2606 = vmatprep.subr.mxu0 0.0
  %2607 = vmatpush2.msra.mxu0 0.0
  %2608 = vmatprep.subr.mxu0 0.0
  %2609 = vmatpush2.msra.mxu0 0.0
  %2610 = vmatprep.subr.mxu0 0.0
  %2611 = vmatpush2.msra.mxu0 0.0
  %2612 = vmatprep.subr.mxu0 0.0
  %2613 = vmatpush2.msra.mxu0 0.0
  %2614 = vmatprep.subr.mxu0 0.0
  %2615 = vmatpush2.msra.mxu0 0.0
  %2616 = vmatprep.subr.mxu0 0.0
  %2617 = vmatpush2.msra.mxu0 0.0
  %2618 = vmatprep.subr.mxu0 0.0
  %2619 = vmatpush2.msra.mxu0 0.0
  %2620 = vmatprep.subr.mxu0 0.0
  %2621 = vmatpush2.msra.mxu0 0.0
  %2622 = vmatprep.subr.mxu0 0.0
  %2623 = vmatpush2.msra.mxu0 0.0
  %2624 = vmatprep.mubr.f32.mxu0 0.0
  %2625 = vmatmul.mubr.f32.gmra.mxu0 %v2558
  %v2626 = vpop.f32.mrf.mxu0
  %v2627 = vadd.f32 0.0, %v2626
  %v2628 = vpop.f32.mrf.mxu0
  %2629 = vdwg.mxu0
  %v2632 = vsel %vm177, %v2553, 0
  %2634 = vmatprep.subr.mxu0 0.0
  %2635 = vmatpush1.msra.mxu0 0.0
  %2636 = vmatprep.subr.mxu0 0.0
  %2637 = vmatpush1.msra.mxu0 0.0
  %2638 = vmatprep.subr.mxu0 0.0
  %2639 = vmatpush1.msra.mxu0 0.0
  %2640 = vmatprep.subr.mxu0 0.0
  %2641 = vmatpush1.msra.mxu0 0.0
  %2642 = vmatprep.subr.mxu0 0.0
  %2643 = vmatpush1.msra.mxu0 0.0
  %2644 = vmatprep.subr.mxu0 0.0
  %2645 = vmatpush1.msra.mxu0 0.0
  %2646 = vmatprep.subr.mxu0 0.0
  %2647 = vmatpush1.msra.mxu0 0.0
  %2648 = vmatprep.subr.mxu0 0.0
  %2649 = vmatpush1.msra.mxu0 0.0
  %2650 = vmatprep.subr.mxu0 0.0
  %2651 = vmatpush1.msra.mxu0 0.0
  %2652 = vmatprep.subr.mxu0 0.0
  %2653 = vmatpush1.msra.mxu0 0.0
  %2654 = vmatprep.subr.mxu0 0.0
  %2655 = vmatpush1.msra.mxu0 0.0
  %2656 = vmatprep.subr.mxu0 0.0
  %2657 = vmatpush1.msra.mxu0 0.0
  %2658 = vmatprep.subr.mxu0 0.0
  %2659 = vmatpush1.msra.mxu0 0.0
  %2660 = vmatprep.subr.mxu0 0.0
  %2661 = vmatpush1.msra.mxu0 0.0
  %2662 = vmatprep.subr.mxu0 0.0
  %2663 = vmatpush1.msra.mxu0 0.0
  %2664 = vmatprep.subr.mxu0 0.0
  %2665 = vmatpush1.msra.mxu0 %v2277
  %2666 = vmatprep.subr.mxu0 0.0
  %2667 = vmatpush2.msra.mxu0 0.0
  %2668 = vmatprep.subr.mxu0 0.0
  %2669 = vmatpush2.msra.mxu0 0.0
  %2670 = vmatprep.subr.mxu0 0.0
  %2671 = vmatpush2.msra.mxu0 0.0
  %2672 = vmatprep.subr.mxu0 0.0
  %2673 = vmatpush2.msra.mxu0 0.0
  %2674 = vmatprep.subr.mxu0 0.0
  %2675 = vmatpush2.msra.mxu0 0.0
  %2676 = vmatprep.subr.mxu0 0.0
  %2677 = vmatpush2.msra.mxu0 0.0
  %2678 = vmatprep.subr.mxu0 0.0
  %2679 = vmatpush2.msra.mxu0 0.0
  %2680 = vmatprep.subr.mxu0 0.0
  %2681 = vmatpush2.msra.mxu0 0.0
  %2682 = vmatprep.subr.mxu0 0.0
  %2683 = vmatpush2.msra.mxu0 0.0
  %2684 = vmatprep.subr.mxu0 0.0
  %2685 = vmatpush2.msra.mxu0 0.0
  %2686 = vmatprep.subr.mxu0 0.0
  %2687 = vmatpush2.msra.mxu0 0.0
  %2688 = vmatprep.subr.mxu0 0.0
  %2689 = vmatpush2.msra.mxu0 0.0
  %2690 = vmatprep.subr.mxu0 0.0
  %2691 = vmatpush2.msra.mxu0 0.0
  %2692 = vmatprep.subr.mxu0 0.0
  %2693 = vmatpush2.msra.mxu0 0.0
  %2694 = vmatprep.subr.mxu0 0.0
  %2695 = vmatpush2.msra.mxu0 0.0
  %2696 = vmatprep.subr.mxu0 0.0
  %2697 = vmatpush2.msra.mxu0 0.0
  %2698 = vmatprep.mubr.f32.mxu0 0.0
  %2699 = vmatmul.mubr.f32.gmra.mxu0 %v2632
  %v2700 = vpop.f32.mrf.mxu0
  %v2701 = vadd.f32 0.0, %v2700
  %v2702 = vpop.f32.mrf.mxu0
  %2703 = vdwg.mxu0
  %v2706 = vsel %vm177, %v2554, 0
  %2708 = vmatprep.subr.mxu0 0.0
  %2709 = vmatpush1.msra.mxu0 0.0
  %2710 = vmatprep.subr.mxu0 0.0
  %2711 = vmatpush1.msra.mxu0 0.0
  %2712 = vmatprep.subr.mxu0 0.0
  %2713 = vmatpush1.msra.mxu0 0.0
  %2714 = vmatprep.subr.mxu0 0.0
  %2715 = vmatpush1.msra.mxu0 0.0
  %2716 = vmatprep.subr.mxu0 0.0
  %2717 = vmatpush1.msra.mxu0 0.0
  %2718 = vmatprep.subr.mxu0 0.0
  %2719 = vmatpush1.msra.mxu0 0.0
  %2720 = vmatprep.subr.mxu0 0.0
  %2721 = vmatpush1.msra.mxu0 0.0
  %2722 = vmatprep.subr.mxu0 0.0
  %2723 = vmatpush1.msra.mxu0 0.0
  %2724 = vmatprep.subr.mxu0 0.0
  %2725 = vmatpush1.msra.mxu0 0.0
  %2726 = vmatprep.subr.mxu0 0.0
  %2727 = vmatpush1.msra.mxu0 0.0
  %2728 = vmatprep.subr.mxu0 0.0
  %2729 = vmatpush1.msra.mxu0 0.0
  %2730 = vmatprep.subr.mxu0 0.0
  %2731 = vmatpush1.msra.mxu0 0.0
  %2732 = vmatprep.subr.mxu0 0.0
  %2733 = vmatpush1.msra.mxu0 0.0
  %2734 = vmatprep.subr.mxu0 0.0
  %2735 = vmatpush1.msra.mxu0 0.0
  %2736 = vmatprep.subr.mxu0 0.0
  %2737 = vmatpush1.msra.mxu0 0.0
  %2738 = vmatprep.subr.mxu0 0.0
  %2739 = vmatpush1.msra.mxu0 %v2355
  %2740 = vmatprep.subr.mxu0 0.0
  %2741 = vmatpush2.msra.mxu0 0.0
  %2742 = vmatprep.subr.mxu0 0.0
  %2743 = vmatpush2.msra.mxu0 0.0
  %2744 = vmatprep.subr.mxu0 0.0
  %2745 = vmatpush2.msra.mxu0 0.0
  %2746 = vmatprep.subr.mxu0 0.0
  %2747 = vmatpush2.msra.mxu0 0.0
  %2748 = vmatprep.subr.mxu0 0.0
  %2749 = vmatpush2.msra.mxu0 0.0
  %2750 = vmatprep.subr.mxu0 0.0
  %2751 = vmatpush2.msra.mxu0 0.0
  %2752 = vmatprep.subr.mxu0 0.0
  %2753 = vmatpush2.msra.mxu0 0.0
  %2754 = vmatprep.subr.mxu0 0.0
  %2755 = vmatpush2.msra.mxu0 0.0
  %2756 = vmatprep.subr.mxu0 0.0
  %2757 = vmatpush2.msra.mxu0 0.0
  %2758 = vmatprep.subr.mxu0 0.0
  %2759 = vmatpush2.msra.mxu0 0.0
  %2760 = vmatprep.subr.mxu0 0.0
  %2761 = vmatpush2.msra.mxu0 0.0
  %2762 = vmatprep.subr.mxu0 0.0
  %2763 = vmatpush2.msra.mxu0 0.0
  %2764 = vmatprep.subr.mxu0 0.0
  %2765 = vmatpush2.msra.mxu0 0.0
  %2766 = vmatprep.subr.mxu0 0.0
  %2767 = vmatpush2.msra.mxu0 0.0
  %2768 = vmatprep.subr.mxu0 0.0
  %2769 = vmatpush2.msra.mxu0 0.0
  %2770 = vmatprep.subr.mxu0 0.0
  %2771 = vmatpush2.msra.mxu0 0.0
  %2772 = vmatprep.mubr.f32.mxu0 0.0
  %2773 = vmatmul.mubr.f32.gmra.mxu0 %v2706
  %v2774 = vpop.f32.mrf.mxu0
  %v2775 = vadd.f32 0.0, %v2774
  %v2776 = vpop.f32.mrf.mxu0
  %2777 = vdwg.mxu0
  %v2780 = vsel %vm177, %v2555, 0
  %2782 = vmatprep.subr.mxu0 0.0
  %2783 = vmatpush1.msra.mxu0 0.0
  %2784 = vmatprep.subr.mxu0 0.0
  %2785 = vmatpush1.msra.mxu0 0.0
  %2786 = vmatprep.subr.mxu0 0.0
  %2787 = vmatpush1.msra.mxu0 0.0
  %2788 = vmatprep.subr.mxu0 0.0
  %2789 = vmatpush1.msra.mxu0 0.0
  %2790 = vmatprep.subr.mxu0 0.0
  %2791 = vmatpush1.msra.mxu0 0.0
  %2792 = vmatprep.subr.mxu0 0.0
  %2793 = vmatpush1.msra.mxu0 0.0
  %2794 = vmatprep.subr.mxu0 0.0
  %2795 = vmatpush1.msra.mxu0 0.0
  %2796 = vmatprep.subr.mxu0 0.0
  %2797 = vmatpush1.msra.mxu0 0.0
  %2798 = vmatprep.subr.mxu0 0.0
  %2799 = vmatpush1.msra.mxu0 0.0
  %2800 = vmatprep.subr.mxu0 0.0
  %2801 = vmatpush1.msra.mxu0 0.0
  %2802 = vmatprep.subr.mxu0 0.0
  %2803 = vmatpush1.msra.mxu0 0.0
  %2804 = vmatprep.subr.mxu0 0.0
  %2805 = vmatpush1.msra.mxu0 0.0
  %2806 = vmatprep.subr.mxu0 0.0
  %2807 = vmatpush1.msra.mxu0 0.0
  %2808 = vmatprep.subr.mxu0 0.0
  %2809 = vmatpush1.msra.mxu0 0.0
  %2810 = vmatprep.subr.mxu0 0.0
  %2811 = vmatpush1.msra.mxu0 0.0
  %2812 = vmatprep.subr.mxu0 0.0
  %2813 = vmatpush1.msra.mxu0 %v2433
  %2814 = vmatprep.subr.mxu0 0.0
  %2815 = vmatpush2.msra.mxu0 0.0
  %2816 = vmatprep.subr.mxu0 0.0
  %2817 = vmatpush2.msra.mxu0 0.0
  %2818 = vmatprep.subr.mxu0 0.0
  %2819 = vmatpush2.msra.mxu0 0.0
  %2820 = vmatprep.subr.mxu0 0.0
  %2821 = vmatpush2.msra.mxu0 0.0
  %2822 = vmatprep.subr.mxu0 0.0
  %2823 = vmatpush2.msra.mxu0 0.0
  %2824 = vmatprep.subr.mxu0 0.0
  %2825 = vmatpush2.msra.mxu0 0.0
  %2826 = vmatprep.subr.mxu0 0.0
  %2827 = vmatpush2.msra.mxu0 0.0
  %2828 = vmatprep.subr.mxu0 0.0
  %2829 = vmatpush2.msra.mxu0 0.0
  %2830 = vmatprep.subr.mxu0 0.0
  %2831 = vmatpush2.msra.mxu0 0.0
  %2832 = vmatprep.subr.mxu0 0.0
  %2833 = vmatpush2.msra.mxu0 0.0
  %2834 = vmatprep.subr.mxu0 0.0
  %2835 = vmatpush2.msra.mxu0 0.0
  %2836 = vmatprep.subr.mxu0 0.0
  %2837 = vmatpush2.msra.mxu0 0.0
  %2838 = vmatprep.subr.mxu0 0.0
  %2839 = vmatpush2.msra.mxu0 0.0
  %2840 = vmatprep.subr.mxu0 0.0
  %2841 = vmatpush2.msra.mxu0 0.0
  %2842 = vmatprep.subr.mxu0 0.0
  %2843 = vmatpush2.msra.mxu0 0.0
  %2844 = vmatprep.subr.mxu0 0.0
  %2845 = vmatpush2.msra.mxu0 0.0
  %2846 = vmatprep.mubr.f32.mxu0 0.0
  %2847 = vmatmul.mubr.f32.gmra.mxu0 %v2780
  %v2848 = vpop.f32.mrf.mxu0
  %v2849 = vadd.f32 0.0, %v2848
  %v2850 = vpop.f32.mrf.mxu0
  %2851 = vdwg.mxu0
  %2856 = vrot.lane.b32.xlu0 %v2627, 24
  %v2857 = vpop.permute.xlu0 %2856
  %2858 = vrot.lane.b32.xlu0 %v2701, 24
  %v2859 = vpop.permute.xlu0 %2858
  %2860 = vrot.lane.b32.xlu0 %v2775, 24
  %v2861 = vpop.permute.xlu0 %2860
  %2862 = vrot.lane.b32.xlu0 %v2849, 24
  %v2863 = vpop.permute.xlu0 %2862
  %vm2868 = vcmask 261312
  %2869 = vst.msk [vmem:[%s3] sm:$0xff] %vm2868, %v2857
  %2870 = vst.msk [vmem:[%s3 + $0x8] sm:$0xff] %vm2868, %v2859
  %2871 = vst.msk [vmem:[%s3 + $0x10] sm:$0xff] %vm2868, %v2861
  %2872 = vst.msk [vmem:[%s3 + $0x18] sm:$0xff] %vm2868, %v2863
  // Predicated region
  $region14: #{_lambda_.11} parent=0 // pred_check
    _
  $region15: #{_lambda_.11} parent=0 // pred_check_branch
    %2874 = sbr.rel (0) target = $region17
  $region16: #{_lambda_.11} parent=0 // pred_region
    _
  $region17: #{_lambda_.11} parent=0 // pred_fallthru
    _
  // Predicated region
  $region18: #{_lambda_.11} parent=0 // pred_check
    _
  $region19: #{_lambda_.11} parent=0 // pred_check_branch
    %2876 = sbr.rel (0) target = $region21
  $region20: #{_lambda_.11} parent=0 // pred_region
    _
  $region21: #{_lambda_.11} parent=0 // pred_fallthru
    _

// kernel: _lambda_.14
$region0: #{_lambda_.14}
  #allocation0 [shape = 'u32[]', space=smem, size = 0x4, offset = 0x4, fixed_abs, tag = 'smem constant byte address 0x4 - core index']
  #allocation1 [shape = 'u32[144,128]{1,0:T(1,128)}', space=vmem, size = 0x12000, scoped, tag = 'internal scratch']
  %s0 = inlined_call_operand.vmem [shape: f32[32,32], index: 0, kind: input, shape index: {}]
  %s1 = inlined_call_operand.vmem [shape: f32[32,32], index: 1, kind: input, shape index: {}]
  %s2 = inlined_call_operand.vmem [shape: f32[1,32], index: 2, kind: input, shape index: {}]
  %s3 = inlined_call_operand.vmem [shape: f32[1,32], index: 3, kind: input, shape index: {}]
  %s4 = inlined_call_operand.vmem [shape: f32[1,32], index: 4, kind: input, shape index: {}]
  %s5 = inlined_call_operand.vmem [shape: f32[32,32], index: 5, kind: output, shape index: {}]
  %s6 = sld [smem:[#allocation0]]
  $region30: #{_lambda_.14} parent=0
    _
  %s8 = ssub.s32 1, %s6
  %s9 = scalar_select 0, %s8, %s6
  // Predicated region
  $region2: #{_lambda_.14} parent=0 // pred_check
    _
  $region3: #{_lambda_.14} parent=0 // pred_check_branch
    %11 = sbr.rel (0) target = $region5
  $region4: #{_lambda_.14} parent=0 // pred_region
    _
  $region5: #{_lambda_.14} parent=0 // pred_fallthru
    _
  // Predicated region
  $region6: #{_lambda_.14} parent=0 // pred_check
    _
  $region7: #{_lambda_.14} parent=0 // pred_check_branch
    %13 = sbr.rel (0) target = $region9
  $region8: #{_lambda_.14} parent=0 // pred_region
    _
  $region9: #{_lambda_.14} parent=0 // pred_fallthru
    _
  // Predicated region
  $region10: #{_lambda_.14} parent=0 // pred_check
    _
  $region11: #{_lambda_.14} parent=0 // pred_check_branch
    %15 = sbr.rel (0) target = $region13
  $region12: #{_lambda_.14} parent=0 // pred_region
    _
  $region13: #{_lambda_.14} parent=0 // pred_fallthru
    _
  // Predicated region
  $region14: #{_lambda_.14} parent=0 // pred_check
    _
  $region15: #{_lambda_.14} parent=0 // pred_check_branch
    %17 = sbr.rel (0) target = $region17
  $region16: #{_lambda_.14} parent=0 // pred_region
    _
  $region17: #{_lambda_.14} parent=0 // pred_fallthru
    _
  // Predicated region
  $region18: #{_lambda_.14} parent=0 // pred_check
    _
  $region19: #{_lambda_.14} parent=0 // pred_check_branch
    %19 = sbr.rel (0) target = $region21
  $region20: #{_lambda_.14} parent=0 // pred_region
    _
  $region21: #{_lambda_.14} parent=0 // pred_fallthru
    _
  %v20 = vld [vmem:[%s0] sm:$0xff]
  %v21 = vld [vmem:[%s0 + $0x8] sm:$0xff]
  %v22 = vld [vmem:[%s0 + $0x10] sm:$0xff]
  %v23 = vld [vmem:[%s0 + $0x18] sm:$0xff]
  %v24 = vld [vmem:[%s1] sm:$0xff]
  %v25 = vld [vmem:[%s1 + $0x8] sm:$0xff]
  %v26 = vld [vmem:[%s1 + $0x10] sm:$0xff]
  %v27 = vld [vmem:[%s1 + $0x18] sm:$0xff]
  %v28 = vld [vmem:[%s2] sm:$0x1]
  %v30 = vlaneseq
  %v31 = vshrl.u32 %v30, 7
  %v32 = vsub.s32 0, %v31
  %v33 = vrot.slane %v28, %v32
  %vm35 = vcmask 261120
  %v37 = vsel %vm35, %v20, 0
  %v40 = vsel %vm35, %v21, 0
  %v43 = vsel %vm35, %v22, 0
  %v46 = vsel %vm35, %v23, 0
  %48 = vmatprep.subr.mxu0 0.0
  %49 = vmatpush1.msra.mxu0 0.0
  %50 = vmatprep.subr.mxu0 0.0
  %51 = vmatpush1.msra.mxu0 0.0
  %52 = vmatprep.subr.mxu0 0.0
  %53 = vmatpush1.msra.mxu0 0.0
  %54 = vmatprep.subr.mxu0 0.0
  %55 = vmatpush1.msra.mxu0 0.0
  %56 = vmatprep.subr.mxu0 0.0
  %57 = vmatpush1.msra.mxu0 0.0
  %58 = vmatprep.subr.mxu0 0.0
  %59 = vmatpush1.msra.mxu0 0.0
  %60 = vmatprep.subr.mxu0 0.0
  %61 = vmatpush1.msra.mxu0 0.0
  %62 = vmatprep.subr.mxu0 0.0
  %63 = vmatpush1.msra.mxu0 0.0
  %64 = vmatprep.subr.mxu0 0.0
  %65 = vmatpush1.msra.mxu0 0.0
  %66 = vmatprep.subr.mxu0 0.0
  %67 = vmatpush1.msra.mxu0 0.0
  %68 = vmatprep.subr.mxu0 0.0
  %69 = vmatpush1.msra.mxu0 0.0
  %70 = vmatprep.subr.mxu0 0.0
  %71 = vmatpush1.msra.mxu0 0.0
  %72 = vmatprep.subr.mxu0 0.0
  %73 = vmatpush1.msra.mxu0 %v27
  %74 = vmatprep.subr.mxu0 0.0
  %75 = vmatpush1.msra.mxu0 %v26
  %76 = vmatprep.subr.mxu0 0.0
  %77 = vmatpush1.msra.mxu0 %v25
  %78 = vmatprep.subr.mxu0 0.0
  %79 = vmatpush1.msra.mxu0 %v24
  %80 = vmatprep.subr.mxu0 0.0
  %81 = vmatpush2.msra.mxu0 0.0
  %82 = vmatprep.subr.mxu0 0.0
  %83 = vmatpush2.msra.mxu0 0.0
  %84 = vmatprep.subr.mxu0 0.0
  %85 = vmatpush2.msra.mxu0 0.0
  %86 = vmatprep.subr.mxu0 0.0
  %87 = vmatpush2.msra.mxu0 0.0
  %88 = vmatprep.subr.mxu0 0.0
  %89 = vmatpush2.msra.mxu0 0.0
  %90 = vmatprep.subr.mxu0 0.0
  %91 = vmatpush2.msra.mxu0 0.0
  %92 = vmatprep.subr.mxu0 0.0
  %93 = vmatpush2.msra.mxu0 0.0
  %94 = vmatprep.subr.mxu0 0.0
  %95 = vmatpush2.msra.mxu0 0.0
  %96 = vmatprep.subr.mxu0 0.0
  %97 = vmatpush2.msra.mxu0 0.0
  %98 = vmatprep.subr.mxu0 0.0
  %99 = vmatpush2.msra.mxu0 0.0
  %100 = vmatprep.subr.mxu0 0.0
  %101 = vmatpush2.msra.mxu0 0.0
  %102 = vmatprep.subr.mxu0 0.0
  %103 = vmatpush2.msra.mxu0 0.0
  %104 = vmatprep.subr.mxu0 0.0
  %105 = vmatpush2.msra.mxu0 0.0
  %106 = vmatprep.subr.mxu0 0.0
  %107 = vmatpush2.msra.mxu0 0.0
  %108 = vmatprep.subr.mxu0 0.0
  %109 = vmatpush2.msra.mxu0 0.0
  %110 = vmatprep.subr.mxu0 0.0
  %111 = vmatpush2.msra.mxu0 0.0
  %112 = vmatprep.mubr.f32.mxu0 0.0
  %113 = vmatmul.mubr.f32.gmra.mxu0 %v37
  %v114 = vpop.f32.mrf.mxu0
  %v115 = vadd.f32 %v33, %v114
  %v116 = vpop.f32.mrf.mxu0
  %117 = vmatprep.mubr.f32.mxu0 0.0
  %118 = vmatmul.mubr.f32.gmra.mxu0 %v40
  %v119 = vpop.f32.mrf.mxu0
  %v120 = vadd.f32 %v33, %v119
  %v121 = vpop.f32.mrf.mxu0
  %122 = vmatprep.mubr.f32.mxu0 0.0
  %123 = vmatmul.mubr.f32.gmra.mxu0 %v43
  %v124 = vpop.f32.mrf.mxu0
  %v125 = vadd.f32 %v33, %v124
  %v126 = vpop.f32.mrf.mxu0
  %127 = vmatprep.mubr.f32.mxu0 0.0
  %128 = vmatmul.mubr.f32.gmra.mxu0 %v46
  %v129 = vpop.f32.mrf.mxu0
  %v130 = vadd.f32 %v33, %v129
  %v131 = vpop.f32.mrf.mxu0
  %132 = vdwg.mxu0
  %v133 = vsel %vm35, %v115, 0.0
  %134 = vadd.xlane.f32.xlu0 %v133
  %v135 = vpop.xlane.xlu0 %134
  %v136 = vsel %vm35, %v120, 0.0
  %137 = vadd.xlane.f32.xlu0 %v136
  %v138 = vpop.xlane.xlu0 %137
  %v139 = vsel %vm35, %v125, 0.0
  %140 = vadd.xlane.f32.xlu0 %v139
  %v141 = vpop.xlane.xlu0 %140
  %v142 = vsel %vm35, %v130, 0.0
  %143 = vadd.xlane.f32.xlu0 %v142
  %v144 = vpop.xlane.xlu0 %143
  %v145 = vrcp.pop 32.0
  %v146 = vmul.f32 %v135, %v145
  %v147 = vmul.f32 %v138, %v145
  %v148 = vmul.f32 %v141, %v145
  %v149 = vmul.f32 %v144, %v145
  %v150 = vsub.f32 %v115, %v146
  %v151 = vsub.f32 %v120, %v147
  %v152 = vsub.f32 %v125, %v148
  %v153 = vsub.f32 %v130, %v149
  %v154 = vmul.f32 %v150, %v150
  %v155 = vmul.f32 %v151, %v151
  %v156 = vmul.f32 %v152, %v152
  %v157 = vmul.f32 %v153, %v153
  %v158 = vsel %vm35, %v154, 0.0
  %159 = vadd.xlane.f32.xlu0 %v158
  %v160 = vpop.xlane.xlu0 %159
  %v161 = vsel %vm35, %v155, 0.0
  %162 = vadd.xlane.f32.xlu0 %v161
  %v163 = vpop.xlane.xlu0 %162
  %v164 = vsel %vm35, %v156, 0.0
  %165 = vadd.xlane.f32.xlu0 %v164
  %v166 = vpop.xlane.xlu0 %165
  %v167 = vsel %vm35, %v157, 0.0
  %168 = vadd.xlane.f32.xlu0 %v167
  %v169 = vpop.xlane.xlu0 %168
  %v170 = vmul.f32 %v160, %v145
  %v171 = vmul.f32 %v163, %v145
  %v172 = vmul.f32 %v166, %v145
  %v173 = vmul.f32 %v169, %v145
  %v174 = vadd.f32 %v170, 1e-12
  %v175 = vadd.f32 %v171, 1e-12
  %v176 = vadd.f32 %v172, 1e-12
  %v177 = vadd.f32 %v173, 1e-12
  %v178 = vrsqrt.pop %v174
  %v179 = vrsqrt.pop %v175
  %v180 = vrsqrt.pop %v176
  %v181 = vrsqrt.pop %v177
  %v182 = vmul.f32 %v150, %v178
  %v183 = vmul.f32 %v151, %v179
  %v184 = vmul.f32 %v152, %v180
  %v185 = vmul.f32 %v153, %v181
  %v186 = vld [vmem:[%s3] sm:$0x1]
  %v188 = vlaneseq
  %v189 = vshrl.u32 %v188, 7
  %v190 = vsub.s32 0, %v189
  %v191 = vrot.slane %v186, %v190
  %v193 = vmul.f32 %v182, %v191
  %v194 = vmul.f32 %v183, %v191
  %v195 = vmul.f32 %v184, %v191
  %v196 = vmul.f32 %v185, %v191
  %v197 = vld [vmem:[%s4] sm:$0x1]
  %v199 = vlaneseq
  %v200 = vshrl.u32 %v199, 7
  %v201 = vsub.s32 0, %v200
  %v202 = vrot.slane %v197, %v201
  %v204 = vadd.f32 %v193, %v202
  %v205 = vadd.f32 %v194, %v202
  %v206 = vadd.f32 %v195, %v202
  %v207 = vadd.f32 %v196, %v202
  %208 = vst.msk [vmem:[%s5] sm:$0xff] %vm35, %v204
  %209 = vst.msk [vmem:[%s5 + $0x8] sm:$0xff] %vm35, %v205
  %210 = vst.msk [vmem:[%s5 + $0x10] sm:$0xff] %vm35, %v206
  %211 = vst.msk [vmem:[%s5 + $0x18] sm:$0xff] %vm35, %v207
  // Predicated region
  $region22: #{_lambda_.14} parent=0 // pred_check
    _
  $region23: #{_lambda_.14} parent=0 // pred_check_branch
    %213 = sbr.rel (0) target = $region25
  $region24: #{_lambda_.14} parent=0 // pred_region
    _
  $region25: #{_lambda_.14} parent=0 // pred_fallthru
    _
  // Predicated region
  $region26: #{_lambda_.14} parent=0 // pred_check
    _
  $region27: #{_lambda_.14} parent=0 // pred_check_branch
    %215 = sbr.rel (0) target = $region29
  $region28: #{_lambda_.14} parent=0 // pred_region
    _
  $region29: #{_lambda_.14} parent=0 // pred_fallthru
    _

// kernel: _lambda_.19
$region0: #{_lambda_.19}
  #allocation0 [shape = 'u32[]', space=smem, size = 0x4, offset = 0x4, fixed_abs, tag = 'smem constant byte address 0x4 - core index']
  #allocation1 [shape = 'u32[144,128]{1,0:T(1,128)}', space=vmem, size = 0x12000, scoped, tag = 'internal scratch']
  %s0 = inlined_call_operand.vmem [shape: f32[32,32], index: 0, kind: input, shape index: {}]
  %s1 = inlined_call_operand.vmem [shape: f32[32,64], index: 1, kind: input, shape index: {}]
  %s2 = inlined_call_operand.vmem [shape: f32[1,64], index: 2, kind: input, shape index: {}]
  %s3 = inlined_call_operand.hbm [shape: f32[32,64], index: 3, kind: output, shape index: {}]
  %s4 = sld [smem:[#allocation0]]
  $region22: #{_lambda_.19} parent=0
    _
  %s6 = ssub.s32 1, %s4
  %s7 = scalar_select 0, %s6, %s4
  $region1: #{_lambda_.19} parent=0
    #allocation2 [shape = 'u8[16384]{0}', space=vmem, size = 0x4000, scoped, tag = 'output window, operand 0, single buffered']
    #allocation3 [shape = 's32[1]{0}', space=sflag, size = 0x4, scoped, tag = 'scoped memory for _lambda_.19']
    %8 = vsyncpa [#allocation3], 0
    // Predicated region
    $region2: #{_lambda_.19} parent=1 // pred_check
      _
    $region3: #{_lambda_.19} parent=1 // pred_check_branch
      %10 = sbr.rel (0) target = $region5
    $region4: #{_lambda_.19} parent=1 // pred_region
      _
    $region5: #{_lambda_.19} parent=1 // pred_fallthru
      _
    // Predicated region
    $region6: #{_lambda_.19} parent=1 // pred_check
      _
    $region7: #{_lambda_.19} parent=1 // pred_check_branch
      %12 = sbr.rel (0) target = $region9
    $region8: #{_lambda_.19} parent=1 // pred_region
      _
    $region9: #{_lambda_.19} parent=1 // pred_fallthru
      _
    // Predicated region
    $region10: #{_lambda_.19} parent=1 // pred_check
      _
    $region11: #{_lambda_.19} parent=1 // pred_check_branch
      %14 = sbr.rel (0) target = $region13
    $region12: #{_lambda_.19} parent=1 // pred_region
      _
    $region13: #{_lambda_.19} parent=1 // pred_fallthru
      _
    %v15 = vld [vmem:[%s0] sm:$0xff]
    %v16 = vld [vmem:[%s0 + $0x8] sm:$0xff]
    %v17 = vld [vmem:[%s0 + $0x10] sm:$0xff]
    %v18 = vld [vmem:[%s0 + $0x18] sm:$0xff]
    %v19 = vld [vmem:[%s1] sm:$0xff]
    %v20 = vld [vmem:[%s1 + $0x8] sm:$0xff]
    %v21 = vld [vmem:[%s1 + $0x10] sm:$0xff]
    %v22 = vld [vmem:[%s1 + $0x18] sm:$0xff]
    %v23 = vld [vmem:[%s2] sm:$0x1]
    %v25 = vlaneseq
    %v26 = vshrl.u32 %v25, 7
    %v27 = vsub.s32 0, %v26
    %v28 = vrot.slane %v23, %v27
    %vm30 = vcmask 261120
    %v32 = vsel %vm30, %v15, 0
    %v35 = vsel %vm30, %v16, 0
    %v38 = vsel %vm30, %v17, 0
    %v41 = vsel %vm30, %v18, 0
    %43 = vmatprep.subr.mxu0 0.0
    %44 = vmatpush1.msra.mxu0 0.0
    %45 = vmatprep.subr.mxu0 0.0
    %46 = vmatpush1.msra.mxu0 0.0
    %47 = vmatprep.subr.mxu0 0.0
    %48 = vmatpush1.msra.mxu0 0.0
    %49 = vmatprep.subr.mxu0 0.0
    %50 = vmatpush1.msra.mxu0 0.0
    %51 = vmatprep.subr.mxu0 0.0
    %52 = vmatpush1.msra.mxu0 0.0
    %53 = vmatprep.subr.mxu0 0.0
    %54 = vmatpush1.msra.mxu0 0.0
    %55 = vmatprep.subr.mxu0 0.0
    %56 = vmatpush1.msra.mxu0 0.0
    %57 = vmatprep.subr.mxu0 0.0
    %58 = vmatpush1.msra.mxu0 0.0
    %59 = vmatprep.subr.mxu0 0.0
    %60 = vmatpush1.msra.mxu0 0.0
    %61 = vmatprep.subr.mxu0 0.0
    %62 = vmatpush1.msra.mxu0 0.0
    %63 = vmatprep.subr.mxu0 0.0
    %64 = vmatpush1.msra.mxu0 0.0
    %65 = vmatprep.subr.mxu0 0.0
    %66 = vmatpush1.msra.mxu0 0.0
    %67 = vmatprep.subr.mxu0 0.0
    %68 = vmatpush1.msra.mxu0 %v22
    %69 = vmatprep.subr.mxu0 0.0
    %70 = vmatpush1.msra.mxu0 %v21
    %71 = vmatprep.subr.mxu0 0.0
    %72 = vmatpush1.msra.mxu0 %v20
    %73 = vmatprep.subr.mxu0 0.0
    %74 = vmatpush1.msra.mxu0 %v19
    %75 = vmatprep.subr.mxu0 0.0
    %76 = vmatpush2.msra.mxu0 0.0
    %77 = vmatprep.subr.mxu0 0.0
    %78 = vmatpush2.msra.mxu0 0.0
    %79 = vmatprep.subr.mxu0 0.0
    %80 = vmatpush2.msra.mxu0 0.0
    %81 = vmatprep.subr.mxu0 0.0
    %82 = vmatpush2.msra.mxu0 0.0
    %83 = vmatprep.subr.mxu0 0.0
    %84 = vmatpush2.msra.mxu0 0.0
    %85 = vmatprep.subr.mxu0 0.0
    %86 = vmatpush2.msra.mxu0 0.0
    %87 = vmatprep.subr.mxu0 0.0
    %88 = vmatpush2.msra.mxu0 0.0
    %89 = vmatprep.subr.mxu0 0.0
    %90 = vmatpush2.msra.mxu0 0.0
    %91 = vmatprep.subr.mxu0 0.0
    %92 = vmatpush2.msra.mxu0 0.0
    %93 = vmatprep.subr.mxu0 0.0
    %94 = vmatpush2.msra.mxu0 0.0
    %95 = vmatprep.subr.mxu0 0.0
    %96 = vmatpush2.msra.mxu0 0.0
    %97 = vmatprep.subr.mxu0 0.0
    %98 = vmatpush2.msra.mxu0 0.0
    %99 = vmatprep.subr.mxu0 0.0
    %100 = vmatpush2.msra.mxu0 0.0
    %101 = vmatprep.subr.mxu0 0.0
    %102 = vmatpush2.msra.mxu0 0.0
    %103 = vmatprep.subr.mxu0 0.0
    %104 = vmatpush2.msra.mxu0 0.0
    %105 = vmatprep.subr.mxu0 0.0
    %106 = vmatpush2.msra.mxu0 0.0
    %107 = vmatprep.mubr.f32.mxu0 0.0
    %108 = vmatmul.mubr.f32.gmra.mxu0 %v32
    %v109 = vpop.f32.mrf.mxu0
    %v110 = vadd.f32 %v28, %v109
    %v111 = vpop.f32.mrf.mxu0
    %112 = vmatprep.mubr.f32.mxu0 0.0
    %113 = vmatmul.mubr.f32.gmra.mxu0 %v35
    %v114 = vpop.f32.mrf.mxu0
    %v115 = vadd.f32 %v28, %v114
    %v116 = vpop.f32.mrf.mxu0
    %117 = vmatprep.mubr.f32.mxu0 0.0
    %118 = vmatmul.mubr.f32.gmra.mxu0 %v38
    %v119 = vpop.f32.mrf.mxu0
    %v120 = vadd.f32 %v28, %v119
    %v121 = vpop.f32.mrf.mxu0
    %122 = vmatprep.mubr.f32.mxu0 0.0
    %123 = vmatmul.mubr.f32.gmra.mxu0 %v41
    %v124 = vpop.f32.mrf.mxu0
    %v125 = vadd.f32 %v28, %v124
    %v126 = vpop.f32.mrf.mxu0
    %127 = vdwg.mxu0
    %vm128 = vcmask 523264
    %129 = vst.msk [vmem:[#allocation2] sm:$0xff] %vm128, %v110
    %130 = vst.msk [vmem:[#allocation2 + $0x8] sm:$0xff] %vm128, %v115
    %131 = vst.msk [vmem:[#allocation2 + $0x10] sm:$0xff] %vm128, %v120
    %132 = vst.msk [vmem:[#allocation2 + $0x18] sm:$0xff] %vm128, %v125
    // Predicated region
    $region14: #{_lambda_.19} parent=1 // pred_check
      _
    $region15: #{_lambda_.19} parent=1 // pred_check_branch
      %134 = sbr.rel (0) target = $region17
    $region16: #{_lambda_.19} parent=1 // pred_region
      %s136 = ssub.s32 512, 512
      %137 = vsyncadd [#allocation3], %s136
      %s138 = sshll.u32 [#allocation2], 4
      %s139 = int_to_ptr.vmem [resolvable:$true] %s138
      %144 = dma.vmem_to_hbm [thread:$0]  %s139, 512, %s3, [#allocation3], 128, 128, 8
    $region17: #{_lambda_.19} parent=1 // pred_fallthru
      _
    // Predicated region
    $region18: #{_lambda_.19} parent=1 // pred_check
      _
    $region19: #{_lambda_.19} parent=1 // pred_check_branch
      %146 = sbr.rel (0) target = $region21
    $region20: #{_lambda_.19} parent=1 // pred_region
      %147 = dma.done [#allocation3], 512
    $region21: #{_lambda_.19} parent=1 // pred_fallthru
      _
    %148 = vsyncpa [#allocation3], 1

// kernel: _lambda_.12
$region0: #{_lambda_.12}
  #allocation0 [shape = 'u32[]', space=smem, size = 0x4, offset = 0x4, fixed_abs, tag = 'smem constant byte address 0x4 - core index']
  #allocation1 [shape = 'u32[144,128]{1,0:T(1,128)}', space=vmem, size = 0x12000, scoped, tag = 'internal scratch']
  %s0 = inlined_call_operand.vmem [shape: f32[4,6,32], index: 0, kind: input, shape index: {}]
  %s1 = inlined_call_operand.vmem [shape: f32[32,32], index: 1, kind: input, shape index: {}]
  %s2 = inlined_call_operand.vmem [shape: f32[4,1,6], index: 2, kind: input, shape index: {}]
  %s3 = inlined_call_operand.vmem [shape: f32[4,6,32], index: 3, kind: output, shape index: {}]
  %s4 = sld [smem:[#allocation0]]
  $region22: #{_lambda_.12} parent=0
    _
  %s6 = ssub.s32 1, %s4
  %s7 = scalar_select 0, %s6, %s4
  // Predicated region
  $region2: #{_lambda_.12} parent=0 // pred_check
    _
  $region3: #{_lambda_.12} parent=0 // pred_check_branch
    %9 = sbr.rel (0) target = $region5
  $region4: #{_lambda_.12} parent=0 // pred_region
    _
  $region5: #{_lambda_.12} parent=0 // pred_fallthru
    _
  // Predicated region
  $region6: #{_lambda_.12} parent=0 // pred_check
    _
  $region7: #{_lambda_.12} parent=0 // pred_check_branch
    %11 = sbr.rel (0) target = $region9
  $region8: #{_lambda_.12} parent=0 // pred_region
    _
  $region9: #{_lambda_.12} parent=0 // pred_fallthru
    _
  // Predicated region
  $region10: #{_lambda_.12} parent=0 // pred_check
    _
  $region11: #{_lambda_.12} parent=0 // pred_check_branch
    %13 = sbr.rel (0) target = $region13
  $region12: #{_lambda_.12} parent=0 // pred_region
    _
  $region13: #{_lambda_.12} parent=0 // pred_fallthru
    _
  %v14 = vld [vmem:[%s0] sm:$0x3f]
  %v15 = vld [vmem:[%s0 + $0x8] sm:$0x3f]
  %v16 = vld [vmem:[%s0 + $0x10] sm:$0x3f]
  %v17 = vld [vmem:[%s0 + $0x18] sm:$0x3f]
  %v22 = vcombine.high %v14, %v14
  %v24 = vunpack.c.l.s4 1983009808
  %v25 = vunpack.c.0.s8 %v24
  %v26 = vlaneseq
  %v27 = vshrl.u32 %v26, 7
  %v28 = vsub.s32 %v25, %v27
  %v29 = vrot.slane %v14, %v28
  %v31 = vunpack.c.l.s4 1983009808
  %v32 = vunpack.c.0.s8 %v31
  %v33 = vlaneseq
  %v34 = vshrl.u32 %v33, 7
  %v35 = vsub.s32 %v32, %v34
  %v36 = vrot.slane %v22, %v35
  %v37 = vcombine.high %v29, %v29
  %v38 = vcombine.high %v15, %v15
  %v40 = vunpack.c.l.s4 1983009808
  %v41 = vunpack.c.0.s8 %v40
  %v42 = vlaneseq
  %v43 = vshrl.u32 %v42, 7
  %v44 = vsub.s32 %v41, %v43
  %v45 = vrot.slane %v15, %v44
  %v47 = vunpack.c.l.s4 1983009808
  %v48 = vunpack.c.0.s8 %v47
  %v49 = vlaneseq
  %v50 = vshrl.u32 %v49, 7
  %v51 = vsub.s32 %v48, %v50
  %v52 = vrot.slane %v38, %v51
  %v53 = vcombine.high %v45, %v45
  %v54 = vcombine.high %v16, %v16
  %v56 = vunpack.c.l.s4 1983009808
  %v57 = vunpack.c.0.s8 %v56
  %v58 = vlaneseq
  %v59 = vshrl.u32 %v58, 7
  %v60 = vsub.s32 %v57, %v59
  %v61 = vrot.slane %v16, %v60
  %v63 = vunpack.c.l.s4 1983009808
  %v64 = vunpack.c.0.s8 %v63
  %v65 = vlaneseq
  %v66 = vshrl.u32 %v65, 7
  %v67 = vsub.s32 %v64, %v66
  %v68 = vrot.slane %v54, %v67
  %v69 = vcombine.high %v61, %v61
  %v70 = vcombine.high %v17, %v17
  %v72 = vunpack.c.l.s4 1983009808
  %v73 = vunpack.c.0.s8 %v72
  %v74 = vlaneseq
  %v75 = vshrl.u32 %v74, 7
  %v76 = vsub.s32 %v73, %v75
  %v77 = vrot.slane %v17, %v76
  %v79 = vunpack.c.l.s4 1983009808
  %v80 = vunpack.c.0.s8 %v79
  %v81 = vlaneseq
  %v82 = vshrl.u32 %v81, 7
  %v83 = vsub.s32 %v80, %v82
  %v84 = vrot.slane %v70, %v83
  %v85 = vcombine.high %v77, %v77
  %v86 = vld [vmem:[%s1] sm:$0xff]
  %v87 = vld [vmem:[%s1 + $0x8] sm:$0xff]
  %v88 = vld [vmem:[%s1 + $0x10] sm:$0xff]
  %v89 = vld [vmem:[%s1 + $0x18] sm:$0xff]
  %v90 = vcombine.low %v29, %v37
  %v91 = vcombine.low %v36, %v45
  %v93 = vunpack.c.l.s4 1983009808
  %v94 = vunpack.c.0.s8 %v93
  %v95 = vlaneseq
  %v96 = vshrl.u32 %v95, 7
  %v97 = vsub.s32 %v94, %v96
  %v98 = vrot.slane %v90, %v97
  %v100 = vunpack.c.l.s4 1983009808
  %v101 = vunpack.c.0.s8 %v100
  %v102 = vlaneseq
  %v103 = vshrl.u32 %v102, 7
  %v104 = vsub.s32 %v101, %v103
  %v105 = vrot.slane %v91, %v104
  %v106 = vcombine.low %v98, %v105
  %v107 = vcombine.low %v53, %v52
  %v108 = vcombine.low %v61, %v69
  %v110 = vunpack.c.l.s4 1983009808
  %v111 = vunpack.c.0.s8 %v110
  %v112 = vlaneseq
  %v113 = vshrl.u32 %v112, 7
  %v114 = vsub.s32 %v111, %v113
  %v115 = vrot.slane %v107, %v114
  %v117 = vunpack.c.l.s4 1983009808
  %v118 = vunpack.c.0.s8 %v117
  %v119 = vlaneseq
  %v120 = vshrl.u32 %v119, 7
  %v121 = vsub.s32 %v118, %v120
  %v122 = vrot.slane %v108, %v121
  %v123 = vcombine.low %v115, %v122
  %v124 = vcombine.low %v68, %v77
  %v125 = vcombine.low %v85, %v84
  %v127 = vunpack.c.l.s4 1983009808
  %v128 = vunpack.c.0.s8 %v127
  %v129 = vlaneseq
  %v130 = vshrl.u32 %v129, 7
  %v131 = vsub.s32 %v128, %v130
  %v132 = vrot.slane %v124, %v131
  %v134 = vunpack.c.l.s4 1983009808
  %v135 = vunpack.c.0.s8 %v134
  %v136 = vlaneseq
  %v137 = vshrl.u32 %v136, 7
  %v138 = vsub.s32 %v135, %v137
  %v139 = vrot.slane %v125, %v138
  %v140 = vcombine.low %v132, %v139
  %vm141 = vcmask 261120
  %v142 = vsel %vm141, %v106, 0
  %v144 = vsel %vm141, %v123, 0
  %v146 = vsel %vm141, %v140, 0
  %148 = vmatprep.subr.mxu0 0.0
  %149 = vmatpush1.msra.mxu0 0.0
  %150 = vmatprep.subr.mxu0 0.0
  %151 = vmatpush1.msra.mxu0 0.0
  %152 = vmatprep.subr.mxu0 0.0
  %153 = vmatpush1.msra.mxu0 0.0
  %154 = vmatprep.subr.mxu0 0.0
  %155 = vmatpush1.msra.mxu0 0.0
  %156 = vmatprep.subr.mxu0 0.0
  %157 = vmatpush1.msra.mxu0 0.0
  %158 = vmatprep.subr.mxu0 0.0
  %159 = vmatpush1.msra.mxu0 0.0
  %160 = vmatprep.subr.mxu0 0.0
  %161 = vmatpush1.msra.mxu0 0.0
  %162 = vmatprep.subr.mxu0 0.0
  %163 = vmatpush1.msra.mxu0 0.0
  %164 = vmatprep.subr.mxu0 0.0
  %165 = vmatpush1.msra.mxu0 0.0
  %166 = vmatprep.subr.mxu0 0.0
  %167 = vmatpush1.msra.mxu0 0.0
  %168 = vmatprep.subr.mxu0 0.0
  %169 = vmatpush1.msra.mxu0 0.0
  %170 = vmatprep.subr.mxu0 0.0
  %171 = vmatpush1.msra.mxu0 0.0
  %172 = vmatprep.subr.mxu0 0.0
  %173 = vmatpush1.msra.mxu0 %v89
  %174 = vmatprep.subr.mxu0 0.0
  %175 = vmatpush1.msra.mxu0 %v88
  %176 = vmatprep.subr.mxu0 0.0
  %177 = vmatpush1.msra.mxu0 %v87
  %178 = vmatprep.subr.mxu0 0.0
  %179 = vmatpush1.msra.mxu0 %v86
  %180 = vmatprep.subr.mxu0 0.0
  %181 = vmatpush2.msra.mxu0 0.0
  %182 = vmatprep.subr.mxu0 0.0
  %183 = vmatpush2.msra.mxu0 0.0
  %184 = vmatprep.subr.mxu0 0.0
  %185 = vmatpush2.msra.mxu0 0.0
  %186 = vmatprep.subr.mxu0 0.0
  %187 = vmatpush2.msra.mxu0 0.0
  %188 = vmatprep.subr.mxu0 0.0
  %189 = vmatpush2.msra.mxu0 0.0
  %190 = vmatprep.subr.mxu0 0.0
  %191 = vmatpush2.msra.mxu0 0.0
  %192 = vmatprep.subr.mxu0 0.0
  %193 = vmatpush2.msra.mxu0 0.0
  %194 = vmatprep.subr.mxu0 0.0
  %195 = vmatpush2.msra.mxu0 0.0
  %196 = vmatprep.subr.mxu0 0.0
  %197 = vmatpush2.msra.mxu0 0.0
  %198 = vmatprep.subr.mxu0 0.0
  %199 = vmatpush2.msra.mxu0 0.0
  %200 = vmatprep.subr.mxu0 0.0
  %201 = vmatpush2.msra.mxu0 0.0
  %202 = vmatprep.subr.mxu0 0.0
  %203 = vmatpush2.msra.mxu0 0.0
  %204 = vmatprep.subr.mxu0 0.0
  %205 = vmatpush2.msra.mxu0 0.0
  %206 = vmatprep.subr.mxu0 0.0
  %207 = vmatpush2.msra.mxu0 0.0
  %208 = vmatprep.subr.mxu0 0.0
  %209 = vmatpush2.msra.mxu0 0.0
  %210 = vmatprep.subr.mxu0 0.0
  %211 = vmatpush2.msra.mxu0 0.0
  %212 = vmatprep.mubr.f32.mxu0 0.0
  %213 = vmatmul.mubr.f32.gmra.mxu0 %v142
  %v214 = vpop.f32.mrf.mxu0
  %v215 = vadd.f32 0.0, %v214
  %v216 = vpop.f32.mrf.mxu0
  %217 = vmatprep.mubr.f32.mxu0 0.0
  %218 = vmatmul.mubr.f32.gmra.mxu0 %v144
  %v219 = vpop.f32.mrf.mxu0
  %v220 = vadd.f32 0.0, %v219
  %v221 = vpop.f32.mrf.mxu0
  %222 = vmatprep.mubr.f32.mxu0 0.0
  %223 = vmatmul.mubr.f32.gmra.mxu0 %v146
  %v224 = vpop.f32.mrf.mxu0
  %v225 = vadd.f32 0.0, %v224
  %v226 = vpop.f32.mrf.mxu0
  %227 = vdwg.mxu0
  %v231 = vcombine.high %v215, %v215
  %v233 = vunpack.c.l.s4 1983009808
  %v234 = vunpack.c.0.s8 %v233
  %v235 = vlaneseq
  %v236 = vshrl.u32 %v235, 7
  %v237 = vsub.s32 %v234, %v236
  %v238 = vrot.slane %v215, %v237
  %v240 = vunpack.c.l.s4 1983009808
  %v241 = vunpack.c.0.s8 %v240
  %v242 = vlaneseq
  %v243 = vshrl.u32 %v242, 7
  %v244 = vsub.s32 %v241, %v243
  %v245 = vrot.slane %v231, %v244
  %v246 = vcombine.high %v238, %v238
  %v247 = vcombine.high %v245, %v245
  %v248 = vcombine.high %v220, %v220
  %v250 = vunpack.c.l.s4 1983009808
  %v251 = vunpack.c.0.s8 %v250
  %v252 = vlaneseq
  %v253 = vshrl.u32 %v252, 7
  %v254 = vsub.s32 %v251, %v253
  %v255 = vrot.slane %v220, %v254
  %v257 = vunpack.c.l.s4 1983009808
  %v258 = vunpack.c.0.s8 %v257
  %v259 = vlaneseq
  %v260 = vshrl.u32 %v259, 7
  %v261 = vsub.s32 %v258, %v260
  %v262 = vrot.slane %v248, %v261
  %v263 = vcombine.high %v255, %v255
  %v264 = vcombine.high %v262, %v262
  %v265 = vcombine.high %v225, %v225
  %v267 = vunpack.c.l.s4 1983009808
  %v268 = vunpack.c.0.s8 %v267
  %v269 = vlaneseq
  %v270 = vshrl.u32 %v269, 7
  %v271 = vsub.s32 %v268, %v270
  %v272 = vrot.slane %v225, %v271
  %v274 = vunpack.c.l.s4 1983009808
  %v275 = vunpack.c.0.s8 %v274
  %v276 = vlaneseq
  %v277 = vshrl.u32 %v276, 7
  %v278 = vsub.s32 %v275, %v277
  %v279 = vrot.slane %v265, %v278
  %v280 = vcombine.high %v272, %v272
  %v281 = vcombine.high %v279, %v279
  %v294 = vld [vmem:[%s2] sm:$0x1]
  %v295 = vld [vmem:[%s2 + $0x1] sm:$0x1]
  %v296 = vld [vmem:[%s2 + $0x2] sm:$0x1]
  %v297 = vld [vmem:[%s2 + $0x3] sm:$0x1]
  %vm298 = vcmask 40960
  %v299 = vsel %vm298, %v294, -inf
  %300 = vmax.xlane.f32.xlu0 %v299
  %v301 = vpop.xlane.xlu0 %300
  %v302 = vsel %vm298, %v295, -inf
  %303 = vmax.xlane.f32.xlu0 %v302
  %v304 = vpop.xlane.xlu0 %303
  %v305 = vsel %vm298, %v296, -inf
  %306 = vmax.xlane.f32.xlu0 %v305
  %v307 = vpop.xlane.xlu0 %306
  %v308 = vsel %vm298, %v297, -inf
  %309 = vmax.xlane.f32.xlu0 %v308
  %v310 = vpop.xlane.xlu0 %309
  %vm311 = vcmp.ge.f32.partialorder %v301, 0.0
  %vm312 = vcmp.ge.f32.partialorder %v304, 0.0
  %vm313 = vcmp.ge.f32.partialorder %v307, 0.0
  %vm314 = vcmp.ge.f32.partialorder %v310, 0.0
  %v315 = vsel %vm311, 1, 0
  %v316 = vsel %vm312, 1, 0
  %v317 = vsel %vm313, 1, 0
  %v318 = vsel %vm314, 1, 0
  %v319 = vcvt.s32.f32 %v315
  %v320 = vcvt.s32.f32 %v316
  %v321 = vcvt.s32.f32 %v317
  %v322 = vcvt.s32.f32 %v318
  %v323 = vmul.f32 %v238, 0.35355338
  %v324 = vmul.f32 %v246, 0.35355338
  %v325 = vmul.f32 %v245, 0.35355338
  %v326 = vmul.f32 %v247, 0.35355338
  %v327 = vmul.f32 %v255, 0.35355338
  %v328 = vmul.f32 %v263, 0.35355338
  %v329 = vmul.f32 %v262, 0.35355338
  %v330 = vmul.f32 %v264, 0.35355338
  %v331 = vmul.f32 %v272, 0.35355338
  %v332 = vmul.f32 %v280, 0.35355338
  %v333 = vmul.f32 %v279, 0.35355338
  %v334 = vmul.f32 %v281, 0.35355338
  %v339 = vlaneseq
  %v340 = vshrl.u32 %v339, 7
  %v341 = vsub.s32 0, %v340
  %v342 = vrot.slane %v294, %v341
  %v343 = vlaneseq
  %v344 = vshrl.u32 %v343, 7
  %v345 = vsub.s32 0, %v344
  %v346 = vrot.slane %v295, %v345
  %v347 = vlaneseq
  %v348 = vshrl.u32 %v347, 7
  %v349 = vsub.s32 0, %v348
  %v350 = vrot.slane %v296, %v349
  %v351 = vlaneseq
  %v352 = vshrl.u32 %v351, 7
  %v353 = vsub.s32 0, %v352
  %v354 = vrot.slane %v297, %v353
  %v362 = vcombine.low %v323, %v324
  %v364 = vunpack.c.l.s4 1983009808
  %v365 = vunpack.c.0.s8 %v364
  %v366 = vlaneseq
  %v367 = vshrl.u32 %v366, 7
  %v368 = vsub.s32 %v365, %v367
  %v369 = vrot.slane %v362, %v368
  %v371 = vunpack.c.l.s4 1983009808
  %v372 = vunpack.c.0.s8 %v371
  %v373 = vlaneseq
  %v374 = vshrl.u32 %v373, 7
  %v375 = vsub.s32 %v372, %v374
  %v376 = vrot.slane %v325, %v375
  %v377 = vcombine.low %v369, %v376
  %v378 = vcombine.low %v238, %v246
  %v380 = vunpack.c.l.s4 1983009808
  %v381 = vunpack.c.0.s8 %v380
  %v382 = vlaneseq
  %v383 = vshrl.u32 %v382, 7
  %v384 = vsub.s32 %v381, %v383
  %v385 = vrot.slane %v378, %v384
  %v387 = vunpack.c.l.s4 1983009808
  %v388 = vunpack.c.0.s8 %v387
  %v389 = vlaneseq
  %v390 = vshrl.u32 %v389, 7
  %v391 = vsub.s32 %v388, %v390
  %v392 = vrot.slane %v245, %v391
  %v393 = vcombine.low %v385, %v392
  %vm394 = vcmask 64512
  %v395 = vsel %vm394, %v377, 0
  %v397 = vsel %vm394, %v393, 0
  %399 = vmatprep.subr.mxu0 0.0
  %400 = vmatpush1.xpose.msra.mxu0 0.0
  %401 = vmatprep.subr.mxu0 0.0
  %402 = vmatpush1.xpose.msra.mxu0 0.0
  %403 = vmatprep.subr.mxu0 0.0
  %404 = vmatpush1.xpose.msra.mxu0 0.0
  %405 = vmatprep.subr.mxu0 0.0
  %406 = vmatpush1.xpose.msra.mxu0 0.0
  %407 = vmatprep.subr.mxu0 0.0
  %408 = vmatpush1.xpose.msra.mxu0 0.0
  %409 = vmatprep.subr.mxu0 0.0
  %410 = vmatpush1.xpose.msra.mxu0 0.0
  %411 = vmatprep.subr.mxu0 0.0
  %412 = vmatpush1.xpose.msra.mxu0 0.0
  %413 = vmatprep.subr.mxu0 0.0
  %414 = vmatpush1.xpose.msra.mxu0 0.0
  %415 = vmatprep.subr.mxu0 0.0
  %416 = vmatpush1.xpose.msra.mxu0 0.0
  %417 = vmatprep.subr.mxu0 0.0
  %418 = vmatpush1.xpose.msra.mxu0 0.0
  %419 = vmatprep.subr.mxu0 0.0
  %420 = vmatpush1.xpose.msra.mxu0 0.0
  %421 = vmatprep.subr.mxu0 0.0
  %422 = vmatpush1.xpose.msra.mxu0 0.0
  %423 = vmatprep.subr.mxu0 0.0
  %424 = vmatpush1.xpose.msra.mxu0 0.0
  %425 = vmatprep.subr.mxu0 0.0
  %426 = vmatpush1.xpose.msra.mxu0 0.0
  %427 = vmatprep.subr.mxu0 0.0
  %428 = vmatpush1.xpose.msra.mxu0 0.0
  %429 = vmatprep.subr.mxu0 0.0
  %430 = vmatpush1.xpose.msra.mxu0 %v397
  %431 = vmatprep.subr.mxu0 0.0
  %432 = vmatpush2.xpose.msra.mxu0 0.0
  %433 = vmatprep.subr.mxu0 0.0
  %434 = vmatpush2.xpose.msra.mxu0 0.0
  %435 = vmatprep.subr.mxu0 0.0
  %436 = vmatpush2.xpose.msra.mxu0 0.0
  %437 = vmatprep.subr.mxu0 0.0
  %438 = vmatpush2.xpose.msra.mxu0 0.0
  %439 = vmatprep.subr.mxu0 0.0
  %440 = vmatpush2.xpose.msra.mxu0 0.0
  %441 = vmatprep.subr.mxu0 0.0
  %442 = vmatpush2.xpose.msra.mxu0 0.0
  %443 = vmatprep.subr.mxu0 0.0
  %444 = vmatpush2.xpose.msra.mxu0 0.0
  %445 = vmatprep.subr.mxu0 0.0
  %446 = vmatpush2.xpose.msra.mxu0 0.0
  %447 = vmatprep.subr.mxu0 0.0
  %448 = vmatpush2.xpose.msra.mxu0 0.0
  %449 = vmatprep.subr.mxu0 0.0
  %450 = vmatpush2.xpose.msra.mxu0 0.0
  %451 = vmatprep.subr.mxu0 0.0
  %452 = vmatpush2.xpose.msra.mxu0 0.0
  %453 = vmatprep.subr.mxu0 0.0
  %454 = vmatpush2.xpose.msra.mxu0 0.0
  %455 = vmatprep.subr.mxu0 0.0
  %456 = vmatpush2.xpose.msra.mxu0 0.0
  %457 = vmatprep.subr.mxu0 0.0
  %458 = vmatpush2.xpose.msra.mxu0 0.0
  %459 = vmatprep.subr.mxu0 0.0
  %460 = vmatpush2.xpose.msra.mxu0 0.0
  %461 = vmatprep.subr.mxu0 0.0
  %462 = vmatpush2.xpose.msra.mxu0 0.0
  %463 = vmatprep.mubr.f32.mxu0 0.0
  %464 = vmatmul.mubr.f32.gmra.mxu0 %v395
  %v465 = vpop.f32.mrf.mxu0
  %v466 = vadd.f32 %v342, %v465
  %v467 = vpop.f32.mrf.mxu0
  %468 = vdwg.mxu0
  %v472 = vcombine.low %v326, %v327
  %v474 = vunpack.c.l.s4 1983009808
  %v475 = vunpack.c.0.s8 %v474
  %v476 = vlaneseq
  %v477 = vshrl.u32 %v476, 7
  %v478 = vsub.s32 %v475, %v477
  %v479 = vrot.slane %v472, %v478
  %v481 = vunpack.c.l.s4 1983009808
  %v482 = vunpack.c.0.s8 %v481
  %v483 = vlaneseq
  %v484 = vshrl.u32 %v483, 7
  %v485 = vsub.s32 %v482, %v484
  %v486 = vrot.slane %v328, %v485
  %v487 = vcombine.low %v479, %v486
  %v488 = vcombine.low %v247, %v255
  %v490 = vunpack.c.l.s4 1983009808
  %v491 = vunpack.c.0.s8 %v490
  %v492 = vlaneseq
  %v493 = vshrl.u32 %v492, 7
  %v494 = vsub.s32 %v491, %v493
  %v495 = vrot.slane %v488, %v494
  %v497 = vunpack.c.l.s4 1983009808
  %v498 = vunpack.c.0.s8 %v497
  %v499 = vlaneseq
  %v500 = vshrl.u32 %v499, 7
  %v501 = vsub.s32 %v498, %v500
  %v502 = vrot.slane %v263, %v501
  %v503 = vcombine.low %v495, %v502
  %v504 = vsel %vm394, %v487, 0
  %v506 = vsel %vm394, %v503, 0
  %508 = vmatprep.subr.mxu0 0.0
  %509 = vmatpush1.xpose.msra.mxu0 0.0
  %510 = vmatprep.subr.mxu0 0.0
  %511 = vmatpush1.xpose.msra.mxu0 0.0
  %512 = vmatprep.subr.mxu0 0.0
  %513 = vmatpush1.xpose.msra.mxu0 0.0
  %514 = vmatprep.subr.mxu0 0.0
  %515 = vmatpush1.xpose.msra.mxu0 0.0
  %516 = vmatprep.subr.mxu0 0.0
  %517 = vmatpush1.xpose.msra.mxu0 0.0
  %518 = vmatprep.subr.mxu0 0.0
  %519 = vmatpush1.xpose.msra.mxu0 0.0
  %520 = vmatprep.subr.mxu0 0.0
  %521 = vmatpush1.xpose.msra.mxu0 0.0
  %522 = vmatprep.subr.mxu0 0.0
  %523 = vmatpush1.xpose.msra.mxu0 0.0
  %524 = vmatprep.subr.mxu0 0.0
  %525 = vmatpush1.xpose.msra.mxu0 0.0
  %526 = vmatprep.subr.mxu0 0.0
  %527 = vmatpush1.xpose.msra.mxu0 0.0
  %528 = vmatprep.subr.mxu0 0.0
  %529 = vmatpush1.xpose.msra.mxu0 0.0
  %530 = vmatprep.subr.mxu0 0.0
  %531 = vmatpush1.xpose.msra.mxu0 0.0
  %532 = vmatprep.subr.mxu0 0.0
  %533 = vmatpush1.xpose.msra.mxu0 0.0
  %534 = vmatprep.subr.mxu0 0.0
  %535 = vmatpush1.xpose.msra.mxu0 0.0
  %536 = vmatprep.subr.mxu0 0.0
  %537 = vmatpush1.xpose.msra.mxu0 0.0
  %538 = vmatprep.subr.mxu0 0.0
  %539 = vmatpush1.xpose.msra.mxu0 %v506
  %540 = vmatprep.subr.mxu0 0.0
  %541 = vmatpush2.xpose.msra.mxu0 0.0
  %542 = vmatprep.subr.mxu0 0.0
  %543 = vmatpush2.xpose.msra.mxu0 0.0
  %544 = vmatprep.subr.mxu0 0.0
  %545 = vmatpush2.xpose.msra.mxu0 0.0
  %546 = vmatprep.subr.mxu0 0.0
  %547 = vmatpush2.xpose.msra.mxu0 0.0
  %548 = vmatprep.subr.mxu0 0.0
  %549 = vmatpush2.xpose.msra.mxu0 0.0
  %550 = vmatprep.subr.mxu0 0.0
  %551 = vmatpush2.xpose.msra.mxu0 0.0
  %552 = vmatprep.subr.mxu0 0.0
  %553 = vmatpush2.xpose.msra.mxu0 0.0
  %554 = vmatprep.subr.mxu0 0.0
  %555 = vmatpush2.xpose.msra.mxu0 0.0
  %556 = vmatprep.subr.mxu0 0.0
  %557 = vmatpush2.xpose.msra.mxu0 0.0
  %558 = vmatprep.subr.mxu0 0.0
  %559 = vmatpush2.xpose.msra.mxu0 0.0
  %560 = vmatprep.subr.mxu0 0.0
  %561 = vmatpush2.xpose.msra.mxu0 0.0
  %562 = vmatprep.subr.mxu0 0.0
  %563 = vmatpush2.xpose.msra.mxu0 0.0
  %564 = vmatprep.subr.mxu0 0.0
  %565 = vmatpush2.xpose.msra.mxu0 0.0
  %566 = vmatprep.subr.mxu0 0.0
  %567 = vmatpush2.xpose.msra.mxu0 0.0
  %568 = vmatprep.subr.mxu0 0.0
  %569 = vmatpush2.xpose.msra.mxu0 0.0
  %570 = vmatprep.subr.mxu0 0.0
  %571 = vmatpush2.xpose.msra.mxu0 0.0
  %572 = vmatprep.mubr.f32.mxu0 0.0
  %573 = vmatmul.mubr.f32.gmra.mxu0 %v504
  %v574 = vpop.f32.mrf.mxu0
  %v575 = vadd.f32 %v346, %v574
  %v576 = vpop.f32.mrf.mxu0
  %577 = vdwg.mxu0
  %v581 = vcombine.low %v329, %v330
  %v583 = vunpack.c.l.s4 1983009808
  %v584 = vunpack.c.0.s8 %v583
  %v585 = vlaneseq
  %v586 = vshrl.u32 %v585, 7
  %v587 = vsub.s32 %v584, %v586
  %v588 = vrot.slane %v581, %v587
  %v590 = vunpack.c.l.s4 1983009808
  %v591 = vunpack.c.0.s8 %v590
  %v592 = vlaneseq
  %v593 = vshrl.u32 %v592, 7
  %v594 = vsub.s32 %v591, %v593
  %v595 = vrot.slane %v331, %v594
  %v596 = vcombine.low %v588, %v595
  %v597 = vcombine.low %v262, %v264
  %v599 = vunpack.c.l.s4 1983009808
  %v600 = vunpack.c.0.s8 %v599
  %v601 = vlaneseq
  %v602 = vshrl.u32 %v601, 7
  %v603 = vsub.s32 %v600, %v602
  %v604 = vrot.slane %v597, %v603
  %v606 = vunpack.c.l.s4 1983009808
  %v607 = vunpack.c.0.s8 %v606
  %v608 = vlaneseq
  %v609 = vshrl.u32 %v608, 7
  %v610 = vsub.s32 %v607, %v609
  %v611 = vrot.slane %v272, %v610
  %v612 = vcombine.low %v604, %v611
  %v613 = vsel %vm394, %v596, 0
  %v615 = vsel %vm394, %v612, 0
  %617 = vmatprep.subr.mxu0 0.0
  %618 = vmatpush1.xpose.msra.mxu0 0.0
  %619 = vmatprep.subr.mxu0 0.0
  %620 = vmatpush1.xpose.msra.mxu0 0.0
  %621 = vmatprep.subr.mxu0 0.0
  %622 = vmatpush1.xpose.msra.mxu0 0.0
  %623 = vmatprep.subr.mxu0 0.0
  %624 = vmatpush1.xpose.msra.mxu0 0.0
  %625 = vmatprep.subr.mxu0 0.0
  %626 = vmatpush1.xpose.msra.mxu0 0.0
  %627 = vmatprep.subr.mxu0 0.0
  %628 = vmatpush1.xpose.msra.mxu0 0.0
  %629 = vmatprep.subr.mxu0 0.0
  %630 = vmatpush1.xpose.msra.mxu0 0.0
  %631 = vmatprep.subr.mxu0 0.0
  %632 = vmatpush1.xpose.msra.mxu0 0.0
  %633 = vmatprep.subr.mxu0 0.0
  %634 = vmatpush1.xpose.msra.mxu0 0.0
  %635 = vmatprep.subr.mxu0 0.0
  %636 = vmatpush1.xpose.msra.mxu0 0.0
  %637 = vmatprep.subr.mxu0 0.0
  %638 = vmatpush1.xpose.msra.mxu0 0.0
  %639 = vmatprep.subr.mxu0 0.0
  %640 = vmatpush1.xpose.msra.mxu0 0.0
  %641 = vmatprep.subr.mxu0 0.0
  %642 = vmatpush1.xpose.msra.mxu0 0.0
  %643 = vmatprep.subr.mxu0 0.0
  %644 = vmatpush1.xpose.msra.mxu0 0.0
  %645 = vmatprep.subr.mxu0 0.0
  %646 = vmatpush1.xpose.msra.mxu0 0.0
  %647 = vmatprep.subr.mxu0 0.0
  %648 = vmatpush1.xpose.msra.mxu0 %v615
  %649 = vmatprep.subr.mxu0 0.0
  %650 = vmatpush2.xpose.msra.mxu0 0.0
  %651 = vmatprep.subr.mxu0 0.0
  %652 = vmatpush2.xpose.msra.mxu0 0.0
  %653 = vmatprep.subr.mxu0 0.0
  %654 = vmatpush2.xpose.msra.mxu0 0.0
  %655 = vmatprep.subr.mxu0 0.0
  %656 = vmatpush2.xpose.msra.mxu0 0.0
  %657 = vmatprep.subr.mxu0 0.0
  %658 = vmatpush2.xpose.msra.mxu0 0.0
  %659 = vmatprep.subr.mxu0 0.0
  %660 = vmatpush2.xpose.msra.mxu0 0.0
  %661 = vmatprep.subr.mxu0 0.0
  %662 = vmatpush2.xpose.msra.mxu0 0.0
  %663 = vmatprep.subr.mxu0 0.0
  %664 = vmatpush2.xpose.msra.mxu0 0.0
  %665 = vmatprep.subr.mxu0 0.0
  %666 = vmatpush2.xpose.msra.mxu0 0.0
  %667 = vmatprep.subr.mxu0 0.0
  %668 = vmatpush2.xpose.msra.mxu0 0.0
  %669 = vmatprep.subr.mxu0 0.0
  %670 = vmatpush2.xpose.msra.mxu0 0.0
  %671 = vmatprep.subr.mxu0 0.0
  %672 = vmatpush2.xpose.msra.mxu0 0.0
  %673 = vmatprep.subr.mxu0 0.0
  %674 = vmatpush2.xpose.msra.mxu0 0.0
  %675 = vmatprep.subr.mxu0 0.0
  %676 = vmatpush2.xpose.msra.mxu0 0.0
  %677 = vmatprep.subr.mxu0 0.0
  %678 = vmatpush2.xpose.msra.mxu0 0.0
  %679 = vmatprep.subr.mxu0 0.0
  %680 = vmatpush2.xpose.msra.mxu0 0.0
  %681 = vmatprep.mubr.f32.mxu0 0.0
  %682 = vmatmul.mubr.f32.gmra.mxu0 %v613
  %v683 = vpop.f32.mrf.mxu0
  %v684 = vadd.f32 %v350, %v683
  %v685 = vpop.f32.mrf.mxu0
  %686 = vdwg.mxu0
  %v690 = vcombine.low %v332, %v333
  %v692 = vunpack.c.l.s4 1983009808
  %v693 = vunpack.c.0.s8 %v692
  %v694 = vlaneseq
  %v695 = vshrl.u32 %v694, 7
  %v696 = vsub.s32 %v693, %v695
  %v697 = vrot.slane %v690, %v696
  %v699 = vunpack.c.l.s4 1983009808
  %v700 = vunpack.c.0.s8 %v699
  %v701 = vlaneseq
  %v702 = vshrl.u32 %v701, 7
  %v703 = vsub.s32 %v700, %v702
  %v704 = vrot.slane %v334, %v703
  %v705 = vcombine.low %v697, %v704
  %v706 = vcombine.low %v280, %v279
  %v708 = vunpack.c.l.s4 1983009808
  %v709 = vunpack.c.0.s8 %v708
  %v710 = vlaneseq
  %v711 = vshrl.u32 %v710, 7
  %v712 = vsub.s32 %v709, %v711
  %v713 = vrot.slane %v706, %v712
  %v715 = vunpack.c.l.s4 1983009808
  %v716 = vunpack.c.0.s8 %v715
  %v717 = vlaneseq
  %v718 = vshrl.u32 %v717, 7
  %v719 = vsub.s32 %v716, %v718
  %v720 = vrot.slane %v281, %v719
  %v721 = vcombine.low %v713, %v720
  %v722 = vsel %vm394, %v705, 0
  %v724 = vsel %vm394, %v721, 0
  %726 = vmatprep.subr.mxu0 0.0
  %727 = vmatpush1.xpose.msra.mxu0 0.0
  %728 = vmatprep.subr.mxu0 0.0
  %729 = vmatpush1.xpose.msra.mxu0 0.0
  %730 = vmatprep.subr.mxu0 0.0
  %731 = vmatpush1.xpose.msra.mxu0 0.0
  %732 = vmatprep.subr.mxu0 0.0
  %733 = vmatpush1.xpose.msra.mxu0 0.0
  %734 = vmatprep.subr.mxu0 0.0
  %735 = vmatpush1.xpose.msra.mxu0 0.0
  %736 = vmatprep.subr.mxu0 0.0
  %737 = vmatpush1.xpose.msra.mxu0 0.0
  %738 = vmatprep.subr.mxu0 0.0
  %739 = vmatpush1.xpose.msra.mxu0 0.0
  %740 = vmatprep.subr.mxu0 0.0
  %741 = vmatpush1.xpose.msra.mxu0 0.0
  %742 = vmatprep.subr.mxu0 0.0
  %743 = vmatpush1.xpose.msra.mxu0 0.0
  %744 = vmatprep.subr.mxu0 0.0
  %745 = vmatpush1.xpose.msra.mxu0 0.0
  %746 = vmatprep.subr.mxu0 0.0
  %747 = vmatpush1.xpose.msra.mxu0 0.0
  %748 = vmatprep.subr.mxu0 0.0
  %749 = vmatpush1.xpose.msra.mxu0 0.0
  %750 = vmatprep.subr.mxu0 0.0
  %751 = vmatpush1.xpose.msra.mxu0 0.0
  %752 = vmatprep.subr.mxu0 0.0
  %753 = vmatpush1.xpose.msra.mxu0 0.0
  %754 = vmatprep.subr.mxu0 0.0
  %755 = vmatpush1.xpose.msra.mxu0 0.0
  %756 = vmatprep.subr.mxu0 0.0
  %757 = vmatpush1.xpose.msra.mxu0 %v724
  %758 = vmatprep.subr.mxu0 0.0
  %759 = vmatpush2.xpose.msra.mxu0 0.0
  %760 = vmatprep.subr.mxu0 0.0
  %761 = vmatpush2.xpose.msra.mxu0 0.0
  %762 = vmatprep.subr.mxu0 0.0
  %763 = vmatpush2.xpose.msra.mxu0 0.0
  %764 = vmatprep.subr.mxu0 0.0
  %765 = vmatpush2.xpose.msra.mxu0 0.0
  %766 = vmatprep.subr.mxu0 0.0
  %767 = vmatpush2.xpose.msra.mxu0 0.0
  %768 = vmatprep.subr.mxu0 0.0
  %769 = vmatpush2.xpose.msra.mxu0 0.0
  %770 = vmatprep.subr.mxu0 0.0
  %771 = vmatpush2.xpose.msra.mxu0 0.0
  %772 = vmatprep.subr.mxu0 0.0
  %773 = vmatpush2.xpose.msra.mxu0 0.0
  %774 = vmatprep.subr.mxu0 0.0
  %775 = vmatpush2.xpose.msra.mxu0 0.0
  %776 = vmatprep.subr.mxu0 0.0
  %777 = vmatpush2.xpose.msra.mxu0 0.0
  %778 = vmatprep.subr.mxu0 0.0
  %779 = vmatpush2.xpose.msra.mxu0 0.0
  %780 = vmatprep.subr.mxu0 0.0
  %781 = vmatpush2.xpose.msra.mxu0 0.0
  %782 = vmatprep.subr.mxu0 0.0
  %783 = vmatpush2.xpose.msra.mxu0 0.0
  %784 = vmatprep.subr.mxu0 0.0
  %785 = vmatpush2.xpose.msra.mxu0 0.0
  %786 = vmatprep.subr.mxu0 0.0
  %787 = vmatpush2.xpose.msra.mxu0 0.0
  %788 = vmatprep.subr.mxu0 0.0
  %789 = vmatpush2.xpose.msra.mxu0 0.0
  %790 = vmatprep.mubr.f32.mxu0 0.0
  %791 = vmatmul.mubr.f32.gmra.mxu0 %v722
  %v792 = vpop.f32.mrf.mxu0
  %v793 = vadd.f32 %v354, %v792
  %v794 = vpop.f32.mrf.mxu0
  %795 = vdwg.mxu0
  %vm796 = vcmask 46080
  %v797 = vsel %vm796, %v466, -inf
  %798 = vmax.xlane.f32.xlu0 %v797
  %v799 = vpop.xlane.xlu0 %798
  %v800 = vsel %vm796, %v575, -inf
  %801 = vmax.xlane.f32.xlu0 %v800
  %v802 = vpop.xlane.xlu0 %801
  %v803 = vsel %vm796, %v684, -inf
  %804 = vmax.xlane.f32.xlu0 %v803
  %v805 = vpop.xlane.xlu0 %804
  %v806 = vsel %vm796, %v793, -inf
  %807 = vmax.xlane.f32.xlu0 %v806
  %v808 = vpop.xlane.xlu0 %807
  %v809 = vsub.f32 %v466, %v799
  %v810 = vsub.f32 %v575, %v802
  %v811 = vsub.f32 %v684, %v805
  %v812 = vsub.f32 %v793, %v808
  %v813 = vmul.f32 %v809, 1.442695
  %v814 = vpow.pop %v813
  %v815 = vmul.f32 %v810, 1.442695
  %v816 = vpow.pop %v815
  %v817 = vmul.f32 %v811, 1.442695
  %v818 = vpow.pop %v817
  %v819 = vmul.f32 %v812, 1.442695
  %v820 = vpow.pop %v819
  %v821 = vsel %vm796, %v814, 0.0
  %822 = vadd.xlane.f32.xlu0 %v821
  %v823 = vpop.xlane.xlu0 %822
  %v824 = vsel %vm796, %v816, 0.0
  %825 = vadd.xlane.f32.xlu0 %v824
  %v826 = vpop.xlane.xlu0 %825
  %v827 = vsel %vm796, %v818, 0.0
  %828 = vadd.xlane.f32.xlu0 %v827
  %v829 = vpop.xlane.xlu0 %828
  %v830 = vsel %vm796, %v820, 0.0
  %831 = vadd.xlane.f32.xlu0 %v830
  %v832 = vpop.xlane.xlu0 %831
  %v833 = vrcp.pop %v823
  %v834 = vrcp.pop %v826
  %v835 = vrcp.pop %v829
  %v836 = vrcp.pop %v832
  %v837 = vmul.f32 %v814, %v833
  %v838 = vmul.f32 %v816, %v834
  %v839 = vmul.f32 %v818, %v835
  %v840 = vmul.f32 %v820, %v836
  %v841 = vlaneseq
  %v842 = vshrl.u32 %v841, 7
  %v843 = vsub.s32 0, %v842
  %v844 = vrot.slane %v319, %v843
  %v845 = vlaneseq
  %v846 = vshrl.u32 %v845, 7
  %v847 = vsub.s32 0, %v846
  %v848 = vrot.slane %v320, %v847
  %v849 = vlaneseq
  %v850 = vshrl.u32 %v849, 7
  %v851 = vsub.s32 0, %v850
  %v852 = vrot.slane %v321, %v851
  %v853 = vlaneseq
  %v854 = vshrl.u32 %v853, 7
  %v855 = vsub.s32 0, %v854
  %v856 = vrot.slane %v322, %v855
  %v857 = vmul.f32 %v837, %v844
  %v858 = vmul.f32 %v838, %v848
  %v859 = vmul.f32 %v839, %v852
  %v860 = vmul.f32 %v840, %v856
  %vm861 = vcmask 48128
  %v863 = vsel %vm861, %v857, 0
  %vm865 = vcmask 1045504
  %v866 = vsel %vm865, %v393, 0
  %868 = vmatprep.subr.mxu0 0.0
  %869 = vmatpush1.msra.mxu0 0.0
  %870 = vmatprep.subr.mxu0 0.0
  %871 = vmatpush1.msra.mxu0 0.0
  %872 = vmatprep.subr.mxu0 0.0
  %873 = vmatpush1.msra.mxu0 0.0
  %874 = vmatprep.subr.mxu0 0.0
  %875 = vmatpush1.msra.mxu0 0.0
  %876 = vmatprep.subr.mxu0 0.0
  %877 = vmatpush1.msra.mxu0 0.0
  %878 = vmatprep.subr.mxu0 0.0
  %879 = vmatpush1.msra.mxu0 0.0
  %880 = vmatprep.subr.mxu0 0.0
  %881 = vmatpush1.msra.mxu0 0.0
  %882 = vmatprep.subr.mxu0 0.0
  %883 = vmatpush1.msra.mxu0 0.0
  %884 = vmatprep.subr.mxu0 0.0
  %885 = vmatpush1.msra.mxu0 0.0
  %886 = vmatprep.subr.mxu0 0.0
  %887 = vmatpush1.msra.mxu0 0.0
  %888 = vmatprep.subr.mxu0 0.0
  %889 = vmatpush1.msra.mxu0 0.0
  %890 = vmatprep.subr.mxu0 0.0
  %891 = vmatpush1.msra.mxu0 0.0
  %892 = vmatprep.subr.mxu0 0.0
  %893 = vmatpush1.msra.mxu0 0.0
  %894 = vmatprep.subr.mxu0 0.0
  %895 = vmatpush1.msra.mxu0 0.0
  %896 = vmatprep.subr.mxu0 0.0
  %897 = vmatpush1.msra.mxu0 0.0
  %898 = vmatprep.subr.mxu0 0.0
  %899 = vmatpush1.msra.mxu0 %v866
  %900 = vmatprep.subr.mxu0 0.0
  %901 = vmatpush2.msra.mxu0 0.0
  %902 = vmatprep.subr.mxu0 0.0
  %903 = vmatpush2.msra.mxu0 0.0
  %904 = vmatprep.subr.mxu0 0.0
  %905 = vmatpush2.msra.mxu0 0.0
  %906 = vmatprep.subr.mxu0 0.0
  %907 = vmatpush2.msra.mxu0 0.0
  %908 = vmatprep.subr.mxu0 0.0
  %909 = vmatpush2.msra.mxu0 0.0
  %910 = vmatprep.subr.mxu0 0.0
  %911 = vmatpush2.msra.mxu0 0.0
  %912 = vmatprep.subr.mxu0 0.0
  %913 = vmatpush2.msra.mxu0 0.0
  %914 = vmatprep.subr.mxu0 0.0
  %915 = vmatpush2.msra.mxu0 0.0
  %916 = vmatprep.subr.mxu0 0.0
  %917 = vmatpush2.msra.mxu0 0.0
  %918 = vmatprep.subr.mxu0 0.0
  %919 = vmatpush2.msra.mxu0 0.0
  %920 = vmatprep.subr.mxu0 0.0
  %921 = vmatpush2.msra.mxu0 0.0
  %922 = vmatprep.subr.mxu0 0.0
  %923 = vmatpush2.msra.mxu0 0.0
  %924 = vmatprep.subr.mxu0 0.0
  %925 = vmatpush2.msra.mxu0 0.0
  %926 = vmatprep.subr.mxu0 0.0
  %927 = vmatpush2.msra.mxu0 0.0
  %928 = vmatprep.subr.mxu0 0.0
  %929 = vmatpush2.msra.mxu0 0.0
  %930 = vmatprep.subr.mxu0 0.0
  %931 = vmatpush2.msra.mxu0 0.0
  %932 = vmatprep.mubr.f32.mxu0 0.0
  %933 = vmatmul.mubr.f32.gmra.mxu0 %v863
  %v934 = vpop.f32.mrf.mxu0
  %v935 = vadd.f32 0.0, %v934
  %v936 = vpop.f32.mrf.mxu0
  %937 = vdwg.mxu0
  %v939 = vsel %vm861, %v858, 0
  %v941 = vsel %vm865, %v503, 0
  %943 = vmatprep.subr.mxu0 0.0
  %944 = vmatpush1.msra.mxu0 0.0
  %945 = vmatprep.subr.mxu0 0.0
  %946 = vmatpush1.msra.mxu0 0.0
  %947 = vmatprep.subr.mxu0 0.0
  %948 = vmatpush1.msra.mxu0 0.0
  %949 = vmatprep.subr.mxu0 0.0
  %950 = vmatpush1.msra.mxu0 0.0
  %951 = vmatprep.subr.mxu0 0.0
  %952 = vmatpush1.msra.mxu0 0.0
  %953 = vmatprep.subr.mxu0 0.0
  %954 = vmatpush1.msra.mxu0 0.0
  %955 = vmatprep.subr.mxu0 0.0
  %956 = vmatpush1.msra.mxu0 0.0
  %957 = vmatprep.subr.mxu0 0.0
  %958 = vmatpush1.msra.mxu0 0.0
  %959 = vmatprep.subr.mxu0 0.0
  %960 = vmatpush1.msra.mxu0 0.0
  %961 = vmatprep.subr.mxu0 0.0
  %962 = vmatpush1.msra.mxu0 0.0
  %963 = vmatprep.subr.mxu0 0.0
  %964 = vmatpush1.msra.mxu0 0.0
  %965 = vmatprep.subr.mxu0 0.0
  %966 = vmatpush1.msra.mxu0 0.0
  %967 = vmatprep.subr.mxu0 0.0
  %968 = vmatpush1.msra.mxu0 0.0
  %969 = vmatprep.subr.mxu0 0.0
  %970 = vmatpush1.msra.mxu0 0.0
  %971 = vmatprep.subr.mxu0 0.0
  %972 = vmatpush1.msra.mxu0 0.0
  %973 = vmatprep.subr.mxu0 0.0
  %974 = vmatpush1.msra.mxu0 %v941
  %975 = vmatprep.subr.mxu0 0.0
  %976 = vmatpush2.msra.mxu0 0.0
  %977 = vmatprep.subr.mxu0 0.0
  %978 = vmatpush2.msra.mxu0 0.0
  %979 = vmatprep.subr.mxu0 0.0
  %980 = vmatpush2.msra.mxu0 0.0
  %981 = vmatprep.subr.mxu0 0.0
  %982 = vmatpush2.msra.mxu0 0.0
  %983 = vmatprep.subr.mxu0 0.0
  %984 = vmatpush2.msra.mxu0 0.0
  %985 = vmatprep.subr.mxu0 0.0
  %986 = vmatpush2.msra.mxu0 0.0
  %987 = vmatprep.subr.mxu0 0.0
  %988 = vmatpush2.msra.mxu0 0.0
  %989 = vmatprep.subr.mxu0 0.0
  %990 = vmatpush2.msra.mxu0 0.0
  %991 = vmatprep.subr.mxu0 0.0
  %992 = vmatpush2.msra.mxu0 0.0
  %993 = vmatprep.subr.mxu0 0.0
  %994 = vmatpush2.msra.mxu0 0.0
  %995 = vmatprep.subr.mxu0 0.0
  %996 = vmatpush2.msra.mxu0 0.0
  %997 = vmatprep.subr.mxu0 0.0
  %998 = vmatpush2.msra.mxu0 0.0
  %999 = vmatprep.subr.mxu0 0.0
  %1000 = vmatpush2.msra.mxu0 0.0
  %1001 = vmatprep.subr.mxu0 0.0
  %1002 = vmatpush2.msra.mxu0 0.0
  %1003 = vmatprep.subr.mxu0 0.0
  %1004 = vmatpush2.msra.mxu0 0.0
  %1005 = vmatprep.subr.mxu0 0.0
  %1006 = vmatpush2.msra.mxu0 0.0
  %1007 = vmatprep.mubr.f32.mxu0 0.0
  %1008 = vmatmul.mubr.f32.gmra.mxu0 %v939
  %v1009 = vpop.f32.mrf.mxu0
  %v1010 = vadd.f32 0.0, %v1009
  %v1011 = vpop.f32.mrf.mxu0
  %1012 = vdwg.mxu0
  %v1014 = vsel %vm861, %v859, 0
  %v1016 = vsel %vm865, %v612, 0
  %1018 = vmatprep.subr.mxu0 0.0
  %1019 = vmatpush1.msra.mxu0 0.0
  %1020 = vmatprep.subr.mxu0 0.0
  %1021 = vmatpush1.msra.mxu0 0.0
  %1022 = vmatprep.subr.mxu0 0.0
  %1023 = vmatpush1.msra.mxu0 0.0
  %1024 = vmatprep.subr.mxu0 0.0
  %1025 = vmatpush1.msra.mxu0 0.0
  %1026 = vmatprep.subr.mxu0 0.0
  %1027 = vmatpush1.msra.mxu0 0.0
  %1028 = vmatprep.subr.mxu0 0.0
  %1029 = vmatpush1.msra.mxu0 0.0
  %1030 = vmatprep.subr.mxu0 0.0
  %1031 = vmatpush1.msra.mxu0 0.0
  %1032 = vmatprep.subr.mxu0 0.0
  %1033 = vmatpush1.msra.mxu0 0.0
  %1034 = vmatprep.subr.mxu0 0.0
  %1035 = vmatpush1.msra.mxu0 0.0
  %1036 = vmatprep.subr.mxu0 0.0
  %1037 = vmatpush1.msra.mxu0 0.0
  %1038 = vmatprep.subr.mxu0 0.0
  %1039 = vmatpush1.msra.mxu0 0.0
  %1040 = vmatprep.subr.mxu0 0.0
  %1041 = vmatpush1.msra.mxu0 0.0
  %1042 = vmatprep.subr.mxu0 0.0
  %1043 = vmatpush1.msra.mxu0 0.0
  %1044 = vmatprep.subr.mxu0 0.0
  %1045 = vmatpush1.msra.mxu0 0.0
  %1046 = vmatprep.subr.mxu0 0.0
  %1047 = vmatpush1.msra.mxu0 0.0
  %1048 = vmatprep.subr.mxu0 0.0
  %1049 = vmatpush1.msra.mxu0 %v1016
  %1050 = vmatprep.subr.mxu0 0.0
  %1051 = vmatpush2.msra.mxu0 0.0
  %1052 = vmatprep.subr.mxu0 0.0
  %1053 = vmatpush2.msra.mxu0 0.0
  %1054 = vmatprep.subr.mxu0 0.0
  %1055 = vmatpush2.msra.mxu0 0.0
  %1056 = vmatprep.subr.mxu0 0.0
  %1057 = vmatpush2.msra.mxu0 0.0
  %1058 = vmatprep.subr.mxu0 0.0
  %1059 = vmatpush2.msra.mxu0 0.0
  %1060 = vmatprep.subr.mxu0 0.0
  %1061 = vmatpush2.msra.mxu0 0.0
  %1062 = vmatprep.subr.mxu0 0.0
  %1063 = vmatpush2.msra.mxu0 0.0
  %1064 = vmatprep.subr.mxu0 0.0
  %1065 = vmatpush2.msra.mxu0 0.0
  %1066 = vmatprep.subr.mxu0 0.0
  %1067 = vmatpush2.msra.mxu0 0.0
  %1068 = vmatprep.subr.mxu0 0.0
  %1069 = vmatpush2.msra.mxu0 0.0
  %1070 = vmatprep.subr.mxu0 0.0
  %1071 = vmatpush2.msra.mxu0 0.0
  %1072 = vmatprep.subr.mxu0 0.0
  %1073 = vmatpush2.msra.mxu0 0.0
  %1074 = vmatprep.subr.mxu0 0.0
  %1075 = vmatpush2.msra.mxu0 0.0
  %1076 = vmatprep.subr.mxu0 0.0
  %1077 = vmatpush2.msra.mxu0 0.0
  %1078 = vmatprep.subr.mxu0 0.0
  %1079 = vmatpush2.msra.mxu0 0.0
  %1080 = vmatprep.subr.mxu0 0.0
  %1081 = vmatpush2.msra.mxu0 0.0
  %1082 = vmatprep.mubr.f32.mxu0 0.0
  %1083 = vmatmul.mubr.f32.gmra.mxu0 %v1014
  %v1084 = vpop.f32.mrf.mxu0
  %v1085 = vadd.f32 0.0, %v1084
  %v1086 = vpop.f32.mrf.mxu0
  %1087 = vdwg.mxu0
  %v1089 = vsel %vm861, %v860, 0
  %v1091 = vsel %vm865, %v721, 0
  %1093 = vmatprep.subr.mxu0 0.0
  %1094 = vmatpush1.msra.mxu0 0.0
  %1095 = vmatprep.subr.mxu0 0.0
  %1096 = vmatpush1.msra.mxu0 0.0
  %1097 = vmatprep.subr.mxu0 0.0
  %1098 = vmatpush1.msra.mxu0 0.0
  %1099 = vmatprep.subr.mxu0 0.0
  %1100 = vmatpush1.msra.mxu0 0.0
  %1101 = vmatprep.subr.mxu0 0.0
  %1102 = vmatpush1.msra.mxu0 0.0
  %1103 = vmatprep.subr.mxu0 0.0
  %1104 = vmatpush1.msra.mxu0 0.0
  %1105 = vmatprep.subr.mxu0 0.0
  %1106 = vmatpush1.msra.mxu0 0.0
  %1107 = vmatprep.subr.mxu0 0.0
  %1108 = vmatpush1.msra.mxu0 0.0
  %1109 = vmatprep.subr.mxu0 0.0
  %1110 = vmatpush1.msra.mxu0 0.0
  %1111 = vmatprep.subr.mxu0 0.0
  %1112 = vmatpush1.msra.mxu0 0.0
  %1113 = vmatprep.subr.mxu0 0.0
  %1114 = vmatpush1.msra.mxu0 0.0
  %1115 = vmatprep.subr.mxu0 0.0
  %1116 = vmatpush1.msra.mxu0 0.0
  %1117 = vmatprep.subr.mxu0 0.0
  %1118 = vmatpush1.msra.mxu0 0.0
  %1119 = vmatprep.subr.mxu0 0.0
  %1120 = vmatpush1.msra.mxu0 0.0
  %1121 = vmatprep.subr.mxu0 0.0
  %1122 = vmatpush1.msra.mxu0 0.0
  %1123 = vmatprep.subr.mxu0 0.0
  %1124 = vmatpush1.msra.mxu0 %v1091
  %1125 = vmatprep.subr.mxu0 0.0
  %1126 = vmatpush2.msra.mxu0 0.0
  %1127 = vmatprep.subr.mxu0 0.0
  %1128 = vmatpush2.msra.mxu0 0.0
  %1129 = vmatprep.subr.mxu0 0.0
  %1130 = vmatpush2.msra.mxu0 0.0
  %1131 = vmatprep.subr.mxu0 0.0
  %1132 = vmatpush2.msra.mxu0 0.0
  %1133 = vmatprep.subr.mxu0 0.0
  %1134 = vmatpush2.msra.mxu0 0.0
  %1135 = vmatprep.subr.mxu0 0.0
  %1136 = vmatpush2.msra.mxu0 0.0
  %1137 = vmatprep.subr.mxu0 0.0
  %1138 = vmatpush2.msra.mxu0 0.0
  %1139 = vmatprep.subr.mxu0 0.0
  %1140 = vmatpush2.msra.mxu0 0.0
  %1141 = vmatprep.subr.mxu0 0.0
  %1142 = vmatpush2.msra.mxu0 0.0
  %1143 = vmatprep.subr.mxu0 0.0
  %1144 = vmatpush2.msra.mxu0 0.0
  %1145 = vmatprep.subr.mxu0 0.0
  %1146 = vmatpush2.msra.mxu0 0.0
  %1147 = vmatprep.subr.mxu0 0.0
  %1148 = vmatpush2.msra.mxu0 0.0
  %1149 = vmatprep.subr.mxu0 0.0
  %1150 = vmatpush2.msra.mxu0 0.0
  %1151 = vmatprep.subr.mxu0 0.0
  %1152 = vmatpush2.msra.mxu0 0.0
  %1153 = vmatprep.subr.mxu0 0.0
  %1154 = vmatpush2.msra.mxu0 0.0
  %1155 = vmatprep.subr.mxu0 0.0
  %1156 = vmatpush2.msra.mxu0 0.0
  %1157 = vmatprep.mubr.f32.mxu0 0.0
  %1158 = vmatmul.mubr.f32.gmra.mxu0 %v1089
  %v1159 = vpop.f32.mrf.mxu0
  %v1160 = vadd.f32 0.0, %v1159
  %v1161 = vpop.f32.mrf.mxu0
  %1162 = vdwg.mxu0
  %vm1163 = vcmask 62464
  %1164 = vst.msk [vmem:[%s3] sm:$0x3f] %vm1163, %v935
  %1165 = vst.msk [vmem:[%s3 + $0x8] sm:$0x3f] %vm1163, %v1010
  %1166 = vst.msk [vmem:[%s3 + $0x10] sm:$0x3f] %vm1163, %v1085
  %1167 = vst.msk [vmem:[%s3 + $0x18] sm:$0x3f] %vm1163, %v1160
  %1168 = vrot.lane.b32.xlu0 %v377, 120
  %v1169 = vpop.permute.xlu0 %1168
  %1170 = vrot.lane.b32.xlu0 %v393, 120
  %v1171 = vpop.permute.xlu0 %1170
  %v1172 = vsel %vm394, %v1169, 0
  %v1174 = vsel %vm394, %v1171, 0
  %1176 = vmatprep.subr.mxu0 0.0
  %1177 = vmatpush1.xpose.msra.mxu0 0.0
  %1178 = vmatprep.subr.mxu0 0.0
  %1179 = vmatpush1.xpose.msra.mxu0 0.0
  %1180 = vmatprep.subr.mxu0 0.0
  %1181 = vmatpush1.xpose.msra.mxu0 0.0
  %1182 = vmatprep.subr.mxu0 0.0
  %1183 = vmatpush1.xpose.msra.mxu0 0.0
  %1184 = vmatprep.subr.mxu0 0.0
  %1185 = vmatpush1.xpose.msra.mxu0 0.0
  %1186 = vmatprep.subr.mxu0 0.0
  %1187 = vmatpush1.xpose.msra.mxu0 0.0
  %1188 = vmatprep.subr.mxu0 0.0
  %1189 = vmatpush1.xpose.msra.mxu0 0.0
  %1190 = vmatprep.subr.mxu0 0.0
  %1191 = vmatpush1.xpose.msra.mxu0 0.0
  %1192 = vmatprep.subr.mxu0 0.0
  %1193 = vmatpush1.xpose.msra.mxu0 0.0
  %1194 = vmatprep.subr.mxu0 0.0
  %1195 = vmatpush1.xpose.msra.mxu0 0.0
  %1196 = vmatprep.subr.mxu0 0.0
  %1197 = vmatpush1.xpose.msra.mxu0 0.0
  %1198 = vmatprep.subr.mxu0 0.0
  %1199 = vmatpush1.xpose.msra.mxu0 0.0
  %1200 = vmatprep.subr.mxu0 0.0
  %1201 = vmatpush1.xpose.msra.mxu0 0.0
  %1202 = vmatprep.subr.mxu0 0.0
  %1203 = vmatpush1.xpose.msra.mxu0 0.0
  %1204 = vmatprep.subr.mxu0 0.0
  %1205 = vmatpush1.xpose.msra.mxu0 0.0
  %1206 = vmatprep.subr.mxu0 0.0
  %1207 = vmatpush1.xpose.msra.mxu0 %v1174
  %1208 = vmatprep.subr.mxu0 0.0
  %1209 = vmatpush2.xpose.msra.mxu0 0.0
  %1210 = vmatprep.subr.mxu0 0.0
  %1211 = vmatpush2.xpose.msra.mxu0 0.0
  %1212 = vmatprep.subr.mxu0 0.0
  %1213 = vmatpush2.xpose.msra.mxu0 0.0
  %1214 = vmatprep.subr.mxu0 0.0
  %1215 = vmatpush2.xpose.msra.mxu0 0.0
  %1216 = vmatprep.subr.mxu0 0.0
  %1217 = vmatpush2.xpose.msra.mxu0 0.0
  %1218 = vmatprep.subr.mxu0 0.0
  %1219 = vmatpush2.xpose.msra.mxu0 0.0
  %1220 = vmatprep.subr.mxu0 0.0
  %1221 = vmatpush2.xpose.msra.mxu0 0.0
  %1222 = vmatprep.subr.mxu0 0.0
  %1223 = vmatpush2.xpose.msra.mxu0 0.0
  %1224 = vmatprep.subr.mxu0 0.0
  %1225 = vmatpush2.xpose.msra.mxu0 0.0
  %1226 = vmatprep.subr.mxu0 0.0
  %1227 = vmatpush2.xpose.msra.mxu0 0.0
  %1228 = vmatprep.subr.mxu0 0.0
  %1229 = vmatpush2.xpose.msra.mxu0 0.0
  %1230 = vmatprep.subr.mxu0 0.0
  %1231 = vmatpush2.xpose.msra.mxu0 0.0
  %1232 = vmatprep.subr.mxu0 0.0
  %1233 = vmatpush2.xpose.msra.mxu0 0.0
  %1234 = vmatprep.subr.mxu0 0.0
  %1235 = vmatpush2.xpose.msra.mxu0 0.0
  %1236 = vmatprep.subr.mxu0 0.0
  %1237 = vmatpush2.xpose.msra.mxu0 0.0
  %1238 = vmatprep.subr.mxu0 0.0
  %1239 = vmatpush2.xpose.msra.mxu0 0.0
  %1240 = vmatprep.mubr.f32.mxu0 0.0
  %1241 = vmatmul.mubr.f32.gmra.mxu0 %v1172
  %v1242 = vpop.f32.mrf.mxu0
  %v1243 = vadd.f32 %v342, %v1242
  %v1244 = vpop.f32.mrf.mxu0
  %1245 = vdwg.mxu0
  %1246 = vrot.lane.b32.xlu0 %v487, 120
  %v1247 = vpop.permute.xlu0 %1246
  %1248 = vrot.lane.b32.xlu0 %v503, 120
  %v1249 = vpop.permute.xlu0 %1248
  %v1250 = vsel %vm394, %v1247, 0
  %v1252 = vsel %vm394, %v1249, 0
  %1254 = vmatprep.subr.mxu0 0.0
  %1255 = vmatpush1.xpose.msra.mxu0 0.0
  %1256 = vmatprep.subr.mxu0 0.0
  %1257 = vmatpush1.xpose.msra.mxu0 0.0
  %1258 = vmatprep.subr.mxu0 0.0
  %1259 = vmatpush1.xpose.msra.mxu0 0.0
  %1260 = vmatprep.subr.mxu0 0.0
  %1261 = vmatpush1.xpose.msra.mxu0 0.0
  %1262 = vmatprep.subr.mxu0 0.0
  %1263 = vmatpush1.xpose.msra.mxu0 0.0
  %1264 = vmatprep.subr.mxu0 0.0
  %1265 = vmatpush1.xpose.msra.mxu0 0.0
  %1266 = vmatprep.subr.mxu0 0.0
  %1267 = vmatpush1.xpose.msra.mxu0 0.0
  %1268 = vmatprep.subr.mxu0 0.0
  %1269 = vmatpush1.xpose.msra.mxu0 0.0
  %1270 = vmatprep.subr.mxu0 0.0
  %1271 = vmatpush1.xpose.msra.mxu0 0.0
  %1272 = vmatprep.subr.mxu0 0.0
  %1273 = vmatpush1.xpose.msra.mxu0 0.0
  %1274 = vmatprep.subr.mxu0 0.0
  %1275 = vmatpush1.xpose.msra.mxu0 0.0
  %1276 = vmatprep.subr.mxu0 0.0
  %1277 = vmatpush1.xpose.msra.mxu0 0.0
  %1278 = vmatprep.subr.mxu0 0.0
  %1279 = vmatpush1.xpose.msra.mxu0 0.0
  %1280 = vmatprep.subr.mxu0 0.0
  %1281 = vmatpush1.xpose.msra.mxu0 0.0
  %1282 = vmatprep.subr.mxu0 0.0
  %1283 = vmatpush1.xpose.msra.mxu0 0.0
  %1284 = vmatprep.subr.mxu0 0.0
  %1285 = vmatpush1.xpose.msra.mxu0 %v1252
  %1286 = vmatprep.subr.mxu0 0.0
  %1287 = vmatpush2.xpose.msra.mxu0 0.0
  %1288 = vmatprep.subr.mxu0 0.0
  %1289 = vmatpush2.xpose.msra.mxu0 0.0
  %1290 = vmatprep.subr.mxu0 0.0
  %1291 = vmatpush2.xpose.msra.mxu0 0.0
  %1292 = vmatprep.subr.mxu0 0.0
  %1293 = vmatpush2.xpose.msra.mxu0 0.0
  %1294 = vmatprep.subr.mxu0 0.0
  %1295 = vmatpush2.xpose.msra.mxu0 0.0
  %1296 = vmatprep.subr.mxu0 0.0
  %1297 = vmatpush2.xpose.msra.mxu0 0.0
  %1298 = vmatprep.subr.mxu0 0.0
  %1299 = vmatpush2.xpose.msra.mxu0 0.0
  %1300 = vmatprep.subr.mxu0 0.0
  %1301 = vmatpush2.xpose.msra.mxu0 0.0
  %1302 = vmatprep.subr.mxu0 0.0
  %1303 = vmatpush2.xpose.msra.mxu0 0.0
  %1304 = vmatprep.subr.mxu0 0.0
  %1305 = vmatpush2.xpose.msra.mxu0 0.0
  %1306 = vmatprep.subr.mxu0 0.0
  %1307 = vmatpush2.xpose.msra.mxu0 0.0
  %1308 = vmatprep.subr.mxu0 0.0
  %1309 = vmatpush2.xpose.msra.mxu0 0.0
  %1310 = vmatprep.subr.mxu0 0.0
  %1311 = vmatpush2.xpose.msra.mxu0 0.0
  %1312 = vmatprep.subr.mxu0 0.0
  %1313 = vmatpush2.xpose.msra.mxu0 0.0
  %1314 = vmatprep.subr.mxu0 0.0
  %1315 = vmatpush2.xpose.msra.mxu0 0.0
  %1316 = vmatprep.subr.mxu0 0.0
  %1317 = vmatpush2.xpose.msra.mxu0 0.0
  %1318 = vmatprep.mubr.f32.mxu0 0.0
  %1319 = vmatmul.mubr.f32.gmra.mxu0 %v1250
  %v1320 = vpop.f32.mrf.mxu0
  %v1321 = vadd.f32 %v346, %v1320
  %v1322 = vpop.f32.mrf.mxu0
  %1323 = vdwg.mxu0
  %1324 = vrot.lane.b32.xlu0 %v596, 120
  %v1325 = vpop.permute.xlu0 %1324
  %1326 = vrot.lane.b32.xlu0 %v612, 120
  %v1327 = vpop.permute.xlu0 %1326
  %v1328 = vsel %vm394, %v1325, 0
  %v1330 = vsel %vm394, %v1327, 0
  %1332 = vmatprep.subr.mxu0 0.0
  %1333 = vmatpush1.xpose.msra.mxu0 0.0
  %1334 = vmatprep.subr.mxu0 0.0
  %1335 = vmatpush1.xpose.msra.mxu0 0.0
  %1336 = vmatprep.subr.mxu0 0.0
  %1337 = vmatpush1.xpose.msra.mxu0 0.0
  %1338 = vmatprep.subr.mxu0 0.0
  %1339 = vmatpush1.xpose.msra.mxu0 0.0
  %1340 = vmatprep.subr.mxu0 0.0
  %1341 = vmatpush1.xpose.msra.mxu0 0.0
  %1342 = vmatprep.subr.mxu0 0.0
  %1343 = vmatpush1.xpose.msra.mxu0 0.0
  %1344 = vmatprep.subr.mxu0 0.0
  %1345 = vmatpush1.xpose.msra.mxu0 0.0
  %1346 = vmatprep.subr.mxu0 0.0
  %1347 = vmatpush1.xpose.msra.mxu0 0.0
  %1348 = vmatprep.subr.mxu0 0.0
  %1349 = vmatpush1.xpose.msra.mxu0 0.0
  %1350 = vmatprep.subr.mxu0 0.0
  %1351 = vmatpush1.xpose.msra.mxu0 0.0
  %1352 = vmatprep.subr.mxu0 0.0
  %1353 = vmatpush1.xpose.msra.mxu0 0.0
  %1354 = vmatprep.subr.mxu0 0.0
  %1355 = vmatpush1.xpose.msra.mxu0 0.0
  %1356 = vmatprep.subr.mxu0 0.0
  %1357 = vmatpush1.xpose.msra.mxu0 0.0
  %1358 = vmatprep.subr.mxu0 0.0
  %1359 = vmatpush1.xpose.msra.mxu0 0.0
  %1360 = vmatprep.subr.mxu0 0.0
  %1361 = vmatpush1.xpose.msra.mxu0 0.0
  %1362 = vmatprep.subr.mxu0 0.0
  %1363 = vmatpush1.xpose.msra.mxu0 %v1330
  %1364 = vmatprep.subr.mxu0 0.0
  %1365 = vmatpush2.xpose.msra.mxu0 0.0
  %1366 = vmatprep.subr.mxu0 0.0
  %1367 = vmatpush2.xpose.msra.mxu0 0.0
  %1368 = vmatprep.subr.mxu0 0.0
  %1369 = vmatpush2.xpose.msra.mxu0 0.0
  %1370 = vmatprep.subr.mxu0 0.0
  %1371 = vmatpush2.xpose.msra.mxu0 0.0
  %1372 = vmatprep.subr.mxu0 0.0
  %1373 = vmatpush2.xpose.msra.mxu0 0.0
  %1374 = vmatprep.subr.mxu0 0.0
  %1375 = vmatpush2.xpose.msra.mxu0 0.0
  %1376 = vmatprep.subr.mxu0 0.0
  %1377 = vmatpush2.xpose.msra.mxu0 0.0
  %1378 = vmatprep.subr.mxu0 0.0
  %1379 = vmatpush2.xpose.msra.mxu0 0.0
  %1380 = vmatprep.subr.mxu0 0.0
  %1381 = vmatpush2.xpose.msra.mxu0 0.0
  %1382 = vmatprep.subr.mxu0 0.0
  %1383 = vmatpush2.xpose.msra.mxu0 0.0
  %1384 = vmatprep.subr.mxu0 0.0
  %1385 = vmatpush2.xpose.msra.mxu0 0.0
  %1386 = vmatprep.subr.mxu0 0.0
  %1387 = vmatpush2.xpose.msra.mxu0 0.0
  %1388 = vmatprep.subr.mxu0 0.0
  %1389 = vmatpush2.xpose.msra.mxu0 0.0
  %1390 = vmatprep.subr.mxu0 0.0
  %1391 = vmatpush2.xpose.msra.mxu0 0.0
  %1392 = vmatprep.subr.mxu0 0.0
  %1393 = vmatpush2.xpose.msra.mxu0 0.0
  %1394 = vmatprep.subr.mxu0 0.0
  %1395 = vmatpush2.xpose.msra.mxu0 0.0
  %1396 = vmatprep.mubr.f32.mxu0 0.0
  %1397 = vmatmul.mubr.f32.gmra.mxu0 %v1328
  %v1398 = vpop.f32.mrf.mxu0
  %v1399 = vadd.f32 %v350, %v1398
  %v1400 = vpop.f32.mrf.mxu0
  %1401 = vdwg.mxu0
  %1402 = vrot.lane.b32.xlu0 %v705, 120
  %v1403 = vpop.permute.xlu0 %1402
  %1404 = vrot.lane.b32.xlu0 %v721, 120
  %v1405 = vpop.permute.xlu0 %1404
  %v1406 = vsel %vm394, %v1403, 0
  %v1408 = vsel %vm394, %v1405, 0
  %1410 = vmatprep.subr.mxu0 0.0
  %1411 = vmatpush1.xpose.msra.mxu0 0.0
  %1412 = vmatprep.subr.mxu0 0.0
  %1413 = vmatpush1.xpose.msra.mxu0 0.0
  %1414 = vmatprep.subr.mxu0 0.0
  %1415 = vmatpush1.xpose.msra.mxu0 0.0
  %1416 = vmatprep.subr.mxu0 0.0
  %1417 = vmatpush1.xpose.msra.mxu0 0.0
  %1418 = vmatprep.subr.mxu0 0.0
  %1419 = vmatpush1.xpose.msra.mxu0 0.0
  %1420 = vmatprep.subr.mxu0 0.0
  %1421 = vmatpush1.xpose.msra.mxu0 0.0
  %1422 = vmatprep.subr.mxu0 0.0
  %1423 = vmatpush1.xpose.msra.mxu0 0.0
  %1424 = vmatprep.subr.mxu0 0.0
  %1425 = vmatpush1.xpose.msra.mxu0 0.0
  %1426 = vmatprep.subr.mxu0 0.0
  %1427 = vmatpush1.xpose.msra.mxu0 0.0
  %1428 = vmatprep.subr.mxu0 0.0
  %1429 = vmatpush1.xpose.msra.mxu0 0.0
  %1430 = vmatprep.subr.mxu0 0.0
  %1431 = vmatpush1.xpose.msra.mxu0 0.0
  %1432 = vmatprep.subr.mxu0 0.0
  %1433 = vmatpush1.xpose.msra.mxu0 0.0
  %1434 = vmatprep.subr.mxu0 0.0
  %1435 = vmatpush1.xpose.msra.mxu0 0.0
  %1436 = vmatprep.subr.mxu0 0.0
  %1437 = vmatpush1.xpose.msra.mxu0 0.0
  %1438 = vmatprep.subr.mxu0 0.0
  %1439 = vmatpush1.xpose.msra.mxu0 0.0
  %1440 = vmatprep.subr.mxu0 0.0
  %1441 = vmatpush1.xpose.msra.mxu0 %v1408
  %1442 = vmatprep.subr.mxu0 0.0
  %1443 = vmatpush2.xpose.msra.mxu0 0.0
  %1444 = vmatprep.subr.mxu0 0.0
  %1445 = vmatpush2.xpose.msra.mxu0 0.0
  %1446 = vmatprep.subr.mxu0 0.0
  %1447 = vmatpush2.xpose.msra.mxu0 0.0
  %1448 = vmatprep.subr.mxu0 0.0
  %1449 = vmatpush2.xpose.msra.mxu0 0.0
  %1450 = vmatprep.subr.mxu0 0.0
  %1451 = vmatpush2.xpose.msra.mxu0 0.0
  %1452 = vmatprep.subr.mxu0 0.0
  %1453 = vmatpush2.xpose.msra.mxu0 0.0
  %1454 = vmatprep.subr.mxu0 0.0
  %1455 = vmatpush2.xpose.msra.mxu0 0.0
  %1456 = vmatprep.subr.mxu0 0.0
  %1457 = vmatpush2.xpose.msra.mxu0 0.0
  %1458 = vmatprep.subr.mxu0 0.0
  %1459 = vmatpush2.xpose.msra.mxu0 0.0
  %1460 = vmatprep.subr.mxu0 0.0
  %1461 = vmatpush2.xpose.msra.mxu0 0.0
  %1462 = vmatprep.subr.mxu0 0.0
  %1463 = vmatpush2.xpose.msra.mxu0 0.0
  %1464 = vmatprep.subr.mxu0 0.0
  %1465 = vmatpush2.xpose.msra.mxu0 0.0
  %1466 = vmatprep.subr.mxu0 0.0
  %1467 = vmatpush2.xpose.msra.mxu0 0.0
  %1468 = vmatprep.subr.mxu0 0.0
  %1469 = vmatpush2.xpose.msra.mxu0 0.0
  %1470 = vmatprep.subr.mxu0 0.0
  %1471 = vmatpush2.xpose.msra.mxu0 0.0
  %1472 = vmatprep.subr.mxu0 0.0
  %1473 = vmatpush2.xpose.msra.mxu0 0.0
  %1474 = vmatprep.mubr.f32.mxu0 0.0
  %1475 = vmatmul.mubr.f32.gmra.mxu0 %v1406
  %v1476 = vpop.f32.mrf.mxu0
  %v1477 = vadd.f32 %v354, %v1476
  %v1478 = vpop.f32.mrf.mxu0
  %1479 = vdwg.mxu0
  %v1480 = vsel %vm796, %v1243, -inf
  %1481 = vmax.xlane.f32.xlu0 %v1480
  %v1482 = vpop.xlane.xlu0 %1481
  %v1483 = vsel %vm796, %v1321, -inf
  %1484 = vmax.xlane.f32.xlu0 %v1483
  %v1485 = vpop.xlane.xlu0 %1484
  %v1486 = vsel %vm796, %v1399, -inf
  %1487 = vmax.xlane.f32.xlu0 %v1486
  %v1488 = vpop.xlane.xlu0 %1487
  %v1489 = vsel %vm796, %v1477, -inf
  %1490 = vmax.xlane.f32.xlu0 %v1489
  %v1491 = vpop.xlane.xlu0 %1490
  %v1492 = vsub.f32 %v1243, %v1482
  %v1493 = vsub.f32 %v1321, %v1485
  %v1494 = vsub.f32 %v1399, %v1488
  %v1495 = vsub.f32 %v1477, %v1491
  %v1496 = vmul.f32 %v1492, 1.442695
  %v1497 = vpow.pop %v1496
  %v1498 = vmul.f32 %v1493, 1.442695
  %v1499 = vpow.pop %v1498
  %v1500 = vmul.f32 %v1494, 1.442695
  %v1501 = vpow.pop %v1500
  %v1502 = vmul.f32 %v1495, 1.442695
  %v1503 = vpow.pop %v1502
  %v1504 = vsel %vm796, %v1497, 0.0
  %1505 = vadd.xlane.f32.xlu0 %v1504
  %v1506 = vpop.xlane.xlu0 %1505
  %v1507 = vsel %vm796, %v1499, 0.0
  %1508 = vadd.xlane.f32.xlu0 %v1507
  %v1509 = vpop.xlane.xlu0 %1508
  %v1510 = vsel %vm796, %v1501, 0.0
  %1511 = vadd.xlane.f32.xlu0 %v1510
  %v1512 = vpop.xlane.xlu0 %1511
  %v1513 = vsel %vm796, %v1503, 0.0
  %1514 = vadd.xlane.f32.xlu0 %v1513
  %v1515 = vpop.xlane.xlu0 %1514
  %v1516 = vrcp.pop %v1506
  %v1517 = vrcp.pop %v1509
  %v1518 = vrcp.pop %v1512
  %v1519 = vrcp.pop %v1515
  %v1520 = vmul.f32 %v1497, %v1516
  %v1521 = vmul.f32 %v1499, %v1517
  %v1522 = vmul.f32 %v1501, %v1518
  %v1523 = vmul.f32 %v1503, %v1519
  %v1524 = vmul.f32 %v1520, %v844
  %v1525 = vmul.f32 %v1521, %v848
  %v1526 = vmul.f32 %v1522, %v852
  %v1527 = vmul.f32 %v1523, %v856
  %v1529 = vsel %vm861, %v1524, 0
  %v1531 = vsel %vm865, %v1171, 0
  %1533 = vmatprep.subr.mxu0 0.0
  %1534 = vmatpush1.msra.mxu0 0.0
  %1535 = vmatprep.subr.mxu0 0.0
  %1536 = vmatpush1.msra.mxu0 0.0
  %1537 = vmatprep.subr.mxu0 0.0
  %1538 = vmatpush1.msra.mxu0 0.0
  %1539 = vmatprep.subr.mxu0 0.0
  %1540 = vmatpush1.msra.mxu0 0.0
  %1541 = vmatprep.subr.mxu0 0.0
  %1542 = vmatpush1.msra.mxu0 0.0
  %1543 = vmatprep.subr.mxu0 0.0
  %1544 = vmatpush1.msra.mxu0 0.0
  %1545 = vmatprep.subr.mxu0 0.0
  %1546 = vmatpush1.msra.mxu0 0.0
  %1547 = vmatprep.subr.mxu0 0.0
  %1548 = vmatpush1.msra.mxu0 0.0
  %1549 = vmatprep.subr.mxu0 0.0
  %1550 = vmatpush1.msra.mxu0 0.0
  %1551 = vmatprep.subr.mxu0 0.0
  %1552 = vmatpush1.msra.mxu0 0.0
  %1553 = vmatprep.subr.mxu0 0.0
  %1554 = vmatpush1.msra.mxu0 0.0
  %1555 = vmatprep.subr.mxu0 0.0
  %1556 = vmatpush1.msra.mxu0 0.0
  %1557 = vmatprep.subr.mxu0 0.0
  %1558 = vmatpush1.msra.mxu0 0.0
  %1559 = vmatprep.subr.mxu0 0.0
  %1560 = vmatpush1.msra.mxu0 0.0
  %1561 = vmatprep.subr.mxu0 0.0
  %1562 = vmatpush1.msra.mxu0 0.0
  %1563 = vmatprep.subr.mxu0 0.0
  %1564 = vmatpush1.msra.mxu0 %v1531
  %1565 = vmatprep.subr.mxu0 0.0
  %1566 = vmatpush2.msra.mxu0 0.0
  %1567 = vmatprep.subr.mxu0 0.0
  %1568 = vmatpush2.msra.mxu0 0.0
  %1569 = vmatprep.subr.mxu0 0.0
  %1570 = vmatpush2.msra.mxu0 0.0
  %1571 = vmatprep.subr.mxu0 0.0
  %1572 = vmatpush2.msra.mxu0 0.0
  %1573 = vmatprep.subr.mxu0 0.0
  %1574 = vmatpush2.msra.mxu0 0.0
  %1575 = vmatprep.subr.mxu0 0.0
  %1576 = vmatpush2.msra.mxu0 0.0
  %1577 = vmatprep.subr.mxu0 0.0
  %1578 = vmatpush2.msra.mxu0 0.0
  %1579 = vmatprep.subr.mxu0 0.0
  %1580 = vmatpush2.msra.mxu0 0.0
  %1581 = vmatprep.subr.mxu0 0.0
  %1582 = vmatpush2.msra.mxu0 0.0
  %1583 = vmatprep.subr.mxu0 0.0
  %1584 = vmatpush2.msra.mxu0 0.0
  %1585 = vmatprep.subr.mxu0 0.0
  %1586 = vmatpush2.msra.mxu0 0.0
  %1587 = vmatprep.subr.mxu0 0.0
  %1588 = vmatpush2.msra.mxu0 0.0
  %1589 = vmatprep.subr.mxu0 0.0
  %1590 = vmatpush2.msra.mxu0 0.0
  %1591 = vmatprep.subr.mxu0 0.0
  %1592 = vmatpush2.msra.mxu0 0.0
  %1593 = vmatprep.subr.mxu0 0.0
  %1594 = vmatpush2.msra.mxu0 0.0
  %1595 = vmatprep.subr.mxu0 0.0
  %1596 = vmatpush2.msra.mxu0 0.0
  %1597 = vmatprep.mubr.f32.mxu0 0.0
  %1598 = vmatmul.mubr.f32.gmra.mxu0 %v1529
  %v1599 = vpop.f32.mrf.mxu0
  %v1600 = vadd.f32 0.0, %v1599
  %v1601 = vpop.f32.mrf.mxu0
  %1602 = vdwg.mxu0
  %v1604 = vsel %vm861, %v1525, 0
  %v1606 = vsel %vm865, %v1249, 0
  %1608 = vmatprep.subr.mxu0 0.0
  %1609 = vmatpush1.msra.mxu0 0.0
  %1610 = vmatprep.subr.mxu0 0.0
  %1611 = vmatpush1.msra.mxu0 0.0
  %1612 = vmatprep.subr.mxu0 0.0
  %1613 = vmatpush1.msra.mxu0 0.0
  %1614 = vmatprep.subr.mxu0 0.0
  %1615 = vmatpush1.msra.mxu0 0.0
  %1616 = vmatprep.subr.mxu0 0.0
  %1617 = vmatpush1.msra.mxu0 0.0
  %1618 = vmatprep.subr.mxu0 0.0
  %1619 = vmatpush1.msra.mxu0 0.0
  %1620 = vmatprep.subr.mxu0 0.0
  %1621 = vmatpush1.msra.mxu0 0.0
  %1622 = vmatprep.subr.mxu0 0.0
  %1623 = vmatpush1.msra.mxu0 0.0
  %1624 = vmatprep.subr.mxu0 0.0
  %1625 = vmatpush1.msra.mxu0 0.0
  %1626 = vmatprep.subr.mxu0 0.0
  %1627 = vmatpush1.msra.mxu0 0.0
  %1628 = vmatprep.subr.mxu0 0.0
  %1629 = vmatpush1.msra.mxu0 0.0
  %1630 = vmatprep.subr.mxu0 0.0
  %1631 = vmatpush1.msra.mxu0 0.0
  %1632 = vmatprep.subr.mxu0 0.0
  %1633 = vmatpush1.msra.mxu0 0.0
  %1634 = vmatprep.subr.mxu0 0.0
  %1635 = vmatpush1.msra.mxu0 0.0
  %1636 = vmatprep.subr.mxu0 0.0
  %1637 = vmatpush1.msra.mxu0 0.0
  %1638 = vmatprep.subr.mxu0 0.0
  %1639 = vmatpush1.msra.mxu0 %v1606
  %1640 = vmatprep.subr.mxu0 0.0
  %1641 = vmatpush2.msra.mxu0 0.0
  %1642 = vmatprep.subr.mxu0 0.0
  %1643 = vmatpush2.msra.mxu0 0.0
  %1644 = vmatprep.subr.mxu0 0.0
  %1645 = vmatpush2.msra.mxu0 0.0
  %1646 = vmatprep.subr.mxu0 0.0
  %1647 = vmatpush2.msra.mxu0 0.0
  %1648 = vmatprep.subr.mxu0 0.0
  %1649 = vmatpush2.msra.mxu0 0.0
  %1650 = vmatprep.subr.mxu0 0.0
  %1651 = vmatpush2.msra.mxu0 0.0
  %1652 = vmatprep.subr.mxu0 0.0
  %1653 = vmatpush2.msra.mxu0 0.0
  %1654 = vmatprep.subr.mxu0 0.0
  %1655 = vmatpush2.msra.mxu0 0.0
  %1656 = vmatprep.subr.mxu0 0.0
  %1657 = vmatpush2.msra.mxu0 0.0
  %1658 = vmatprep.subr.mxu0 0.0
  %1659 = vmatpush2.msra.mxu0 0.0
  %1660 = vmatprep.subr.mxu0 0.0
  %1661 = vmatpush2.msra.mxu0 0.0
  %1662 = vmatprep.subr.mxu0 0.0
  %1663 = vmatpush2.msra.mxu0 0.0
  %1664 = vmatprep.subr.mxu0 0.0
  %1665 = vmatpush2.msra.mxu0 0.0
  %1666 = vmatprep.subr.mxu0 0.0
  %1667 = vmatpush2.msra.mxu0 0.0
  %1668 = vmatprep.subr.mxu0 0.0
  %1669 = vmatpush2.msra.mxu0 0.0
  %1670 = vmatprep.subr.mxu0 0.0
  %1671 = vmatpush2.msra.mxu0 0.0
  %1672 = vmatprep.mubr.f32.mxu0 0.0
  %1673 = vmatmul.mubr.f32.gmra.mxu0 %v1604
  %v1674 = vpop.f32.mrf.mxu0
  %v1675 = vadd.f32 0.0, %v1674
  %v1676 = vpop.f32.mrf.mxu0
  %1677 = vdwg.mxu0
  %v1679 = vsel %vm861, %v1526, 0
  %v1681 = vsel %vm865, %v1327, 0
  %1683 = vmatprep.subr.mxu0 0.0
  %1684 = vmatpush1.msra.mxu0 0.0
  %1685 = vmatprep.subr.mxu0 0.0
  %1686 = vmatpush1.msra.mxu0 0.0
  %1687 = vmatprep.subr.mxu0 0.0
  %1688 = vmatpush1.msra.mxu0 0.0
  %1689 = vmatprep.subr.mxu0 0.0
  %1690 = vmatpush1.msra.mxu0 0.0
  %1691 = vmatprep.subr.mxu0 0.0
  %1692 = vmatpush1.msra.mxu0 0.0
  %1693 = vmatprep.subr.mxu0 0.0
  %1694 = vmatpush1.msra.mxu0 0.0
  %1695 = vmatprep.subr.mxu0 0.0
  %1696 = vmatpush1.msra.mxu0 0.0
  %1697 = vmatprep.subr.mxu0 0.0
  %1698 = vmatpush1.msra.mxu0 0.0
  %1699 = vmatprep.subr.mxu0 0.0
  %1700 = vmatpush1.msra.mxu0 0.0
  %1701 = vmatprep.subr.mxu0 0.0
  %1702 = vmatpush1.msra.mxu0 0.0
  %1703 = vmatprep.subr.mxu0 0.0
  %1704 = vmatpush1.msra.mxu0 0.0
  %1705 = vmatprep.subr.mxu0 0.0
  %1706 = vmatpush1.msra.mxu0 0.0
  %1707 = vmatprep.subr.mxu0 0.0
  %1708 = vmatpush1.msra.mxu0 0.0
  %1709 = vmatprep.subr.mxu0 0.0
  %1710 = vmatpush1.msra.mxu0 0.0
  %1711 = vmatprep.subr.mxu0 0.0
  %1712 = vmatpush1.msra.mxu0 0.0
  %1713 = vmatprep.subr.mxu0 0.0
  %1714 = vmatpush1.msra.mxu0 %v1681
  %1715 = vmatprep.subr.mxu0 0.0
  %1716 = vmatpush2.msra.mxu0 0.0
  %1717 = vmatprep.subr.mxu0 0.0
  %1718 = vmatpush2.msra.mxu0 0.0
  %1719 = vmatprep.subr.mxu0 0.0
  %1720 = vmatpush2.msra.mxu0 0.0
  %1721 = vmatprep.subr.mxu0 0.0
  %1722 = vmatpush2.msra.mxu0 0.0
  %1723 = vmatprep.subr.mxu0 0.0
  %1724 = vmatpush2.msra.mxu0 0.0
  %1725 = vmatprep.subr.mxu0 0.0
  %1726 = vmatpush2.msra.mxu0 0.0
  %1727 = vmatprep.subr.mxu0 0.0
  %1728 = vmatpush2.msra.mxu0 0.0
  %1729 = vmatprep.subr.mxu0 0.0
  %1730 = vmatpush2.msra.mxu0 0.0
  %1731 = vmatprep.subr.mxu0 0.0
  %1732 = vmatpush2.msra.mxu0 0.0
  %1733 = vmatprep.subr.mxu0 0.0
  %1734 = vmatpush2.msra.mxu0 0.0
  %1735 = vmatprep.subr.mxu0 0.0
  %1736 = vmatpush2.msra.mxu0 0.0
  %1737 = vmatprep.subr.mxu0 0.0
  %1738 = vmatpush2.msra.mxu0 0.0
  %1739 = vmatprep.subr.mxu0 0.0
  %1740 = vmatpush2.msra.mxu0 0.0
  %1741 = vmatprep.subr.mxu0 0.0
  %1742 = vmatpush2.msra.mxu0 0.0
  %1743 = vmatprep.subr.mxu0 0.0
  %1744 = vmatpush2.msra.mxu0 0.0
  %1745 = vmatprep.subr.mxu0 0.0
  %1746 = vmatpush2.msra.mxu0 0.0
  %1747 = vmatprep.mubr.f32.mxu0 0.0
  %1748 = vmatmul.mubr.f32.gmra.mxu0 %v1679
  %v1749 = vpop.f32.mrf.mxu0
  %v1750 = vadd.f32 0.0, %v1749
  %v1751 = vpop.f32.mrf.mxu0
  %1752 = vdwg.mxu0
  %v1754 = vsel %vm861, %v1527, 0
  %v1756 = vsel %vm865, %v1405, 0
  %1758 = vmatprep.subr.mxu0 0.0
  %1759 = vmatpush1.msra.mxu0 0.0
  %1760 = vmatprep.subr.mxu0 0.0
  %1761 = vmatpush1.msra.mxu0 0.0
  %1762 = vmatprep.subr.mxu0 0.0
  %1763 = vmatpush1.msra.mxu0 0.0
  %1764 = vmatprep.subr.mxu0 0.0
  %1765 = vmatpush1.msra.mxu0 0.0
  %1766 = vmatprep.subr.mxu0 0.0
  %1767 = vmatpush1.msra.mxu0 0.0
  %1768 = vmatprep.subr.mxu0 0.0
  %1769 = vmatpush1.msra.mxu0 0.0
  %1770 = vmatprep.subr.mxu0 0.0
  %1771 = vmatpush1.msra.mxu0 0.0
  %1772 = vmatprep.subr.mxu0 0.0
  %1773 = vmatpush1.msra.mxu0 0.0
  %1774 = vmatprep.subr.mxu0 0.0
  %1775 = vmatpush1.msra.mxu0 0.0
  %1776 = vmatprep.subr.mxu0 0.0
  %1777 = vmatpush1.msra.mxu0 0.0
  %1778 = vmatprep.subr.mxu0 0.0
  %1779 = vmatpush1.msra.mxu0 0.0
  %1780 = vmatprep.subr.mxu0 0.0
  %1781 = vmatpush1.msra.mxu0 0.0
  %1782 = vmatprep.subr.mxu0 0.0
  %1783 = vmatpush1.msra.mxu0 0.0
  %1784 = vmatprep.subr.mxu0 0.0
  %1785 = vmatpush1.msra.mxu0 0.0
  %1786 = vmatprep.subr.mxu0 0.0
  %1787 = vmatpush1.msra.mxu0 0.0
  %1788 = vmatprep.subr.mxu0 0.0
  %1789 = vmatpush1.msra.mxu0 %v1756
  %1790 = vmatprep.subr.mxu0 0.0
  %1791 = vmatpush2.msra.mxu0 0.0
  %1792 = vmatprep.subr.mxu0 0.0
  %1793 = vmatpush2.msra.mxu0 0.0
  %1794 = vmatprep.subr.mxu0 0.0
  %1795 = vmatpush2.msra.mxu0 0.0
  %1796 = vmatprep.subr.mxu0 0.0
  %1797 = vmatpush2.msra.mxu0 0.0
  %1798 = vmatprep.subr.mxu0 0.0
  %1799 = vmatpush2.msra.mxu0 0.0
  %1800 = vmatprep.subr.mxu0 0.0
  %1801 = vmatpush2.msra.mxu0 0.0
  %1802 = vmatprep.subr.mxu0 0.0
  %1803 = vmatpush2.msra.mxu0 0.0
  %1804 = vmatprep.subr.mxu0 0.0
  %1805 = vmatpush2.msra.mxu0 0.0
  %1806 = vmatprep.subr.mxu0 0.0
  %1807 = vmatpush2.msra.mxu0 0.0
  %1808 = vmatprep.subr.mxu0 0.0
  %1809 = vmatpush2.msra.mxu0 0.0
  %1810 = vmatprep.subr.mxu0 0.0
  %1811 = vmatpush2.msra.mxu0 0.0
  %1812 = vmatprep.subr.mxu0 0.0
  %1813 = vmatpush2.msra.mxu0 0.0
  %1814 = vmatprep.subr.mxu0 0.0
  %1815 = vmatpush2.msra.mxu0 0.0
  %1816 = vmatprep.subr.mxu0 0.0
  %1817 = vmatpush2.msra.mxu0 0.0
  %1818 = vmatprep.subr.mxu0 0.0
  %1819 = vmatpush2.msra.mxu0 0.0
  %1820 = vmatprep.subr.mxu0 0.0
  %1821 = vmatpush2.msra.mxu0 0.0
  %1822 = vmatprep.mubr.f32.mxu0 0.0
  %1823 = vmatmul.mubr.f32.gmra.mxu0 %v1754
  %v1824 = vpop.f32.mrf.mxu0
  %v1825 = vadd.f32 0.0, %v1824
  %v1826 = vpop.f32.mrf.mxu0
  %1827 = vdwg.mxu0
  %1832 = vrot.lane.b32.xlu0 %v1600, 8
  %v1833 = vpop.permute.xlu0 %1832
  %1834 = vrot.lane.b32.xlu0 %v1675, 8
  %v1835 = vpop.permute.xlu0 %1834
  %1836 = vrot.lane.b32.xlu0 %v1750, 8
  %v1837 = vpop.permute.xlu0 %1836
  %1838 = vrot.lane.b32.xlu0 %v1825, 8
  %v1839 = vpop.permute.xlu0 %1838
  %vm1844 = vcmask 128064
  %1845 = vst.msk [vmem:[%s3] sm:$0x3f] %vm1844, %v1833
  %1846 = vst.msk [vmem:[%s3 + $0x8] sm:$0x3f] %vm1844, %v1835
  %1847 = vst.msk [vmem:[%s3 + $0x10] sm:$0x3f] %vm1844, %v1837
  %1848 = vst.msk [vmem:[%s3 + $0x18] sm:$0x3f] %vm1844, %v1839
  %1849 = vrot.lane.b32.xlu0 %v377, 112
  %v1850 = vpop.permute.xlu0 %1849
  %1851 = vrot.lane.b32.xlu0 %v393, 112
  %v1852 = vpop.permute.xlu0 %1851
  %v1853 = vsel %vm394, %v1850, 0
  %v1855 = vsel %vm394, %v1852, 0
  %1857 = vmatprep.subr.mxu0 0.0
  %1858 = vmatpush1.xpose.msra.mxu0 0.0
  %1859 = vmatprep.subr.mxu0 0.0
  %1860 = vmatpush1.xpose.msra.mxu0 0.0
  %1861 = vmatprep.subr.mxu0 0.0
  %1862 = vmatpush1.xpose.msra.mxu0 0.0
  %1863 = vmatprep.subr.mxu0 0.0
  %1864 = vmatpush1.xpose.msra.mxu0 0.0
  %1865 = vmatprep.subr.mxu0 0.0
  %1866 = vmatpush1.xpose.msra.mxu0 0.0
  %1867 = vmatprep.subr.mxu0 0.0
  %1868 = vmatpush1.xpose.msra.mxu0 0.0
  %1869 = vmatprep.subr.mxu0 0.0
  %1870 = vmatpush1.xpose.msra.mxu0 0.0
  %1871 = vmatprep.subr.mxu0 0.0
  %1872 = vmatpush1.xpose.msra.mxu0 0.0
  %1873 = vmatprep.subr.mxu0 0.0
  %1874 = vmatpush1.xpose.msra.mxu0 0.0
  %1875 = vmatprep.subr.mxu0 0.0
  %1876 = vmatpush1.xpose.msra.mxu0 0.0
  %1877 = vmatprep.subr.mxu0 0.0
  %1878 = vmatpush1.xpose.msra.mxu0 0.0
  %1879 = vmatprep.subr.mxu0 0.0
  %1880 = vmatpush1.xpose.msra.mxu0 0.0
  %1881 = vmatprep.subr.mxu0 0.0
  %1882 = vmatpush1.xpose.msra.mxu0 0.0
  %1883 = vmatprep.subr.mxu0 0.0
  %1884 = vmatpush1.xpose.msra.mxu0 0.0
  %1885 = vmatprep.subr.mxu0 0.0
  %1886 = vmatpush1.xpose.msra.mxu0 0.0
  %1887 = vmatprep.subr.mxu0 0.0
  %1888 = vmatpush1.xpose.msra.mxu0 %v1855
  %1889 = vmatprep.subr.mxu0 0.0
  %1890 = vmatpush2.xpose.msra.mxu0 0.0
  %1891 = vmatprep.subr.mxu0 0.0
  %1892 = vmatpush2.xpose.msra.mxu0 0.0
  %1893 = vmatprep.subr.mxu0 0.0
  %1894 = vmatpush2.xpose.msra.mxu0 0.0
  %1895 = vmatprep.subr.mxu0 0.0
  %1896 = vmatpush2.xpose.msra.mxu0 0.0
  %1897 = vmatprep.subr.mxu0 0.0
  %1898 = vmatpush2.xpose.msra.mxu0 0.0
  %1899 = vmatprep.subr.mxu0 0.0
  %1900 = vmatpush2.xpose.msra.mxu0 0.0
  %1901 = vmatprep.subr.mxu0 0.0
  %1902 = vmatpush2.xpose.msra.mxu0 0.0
  %1903 = vmatprep.subr.mxu0 0.0
  %1904 = vmatpush2.xpose.msra.mxu0 0.0
  %1905 = vmatprep.subr.mxu0 0.0
  %1906 = vmatpush2.xpose.msra.mxu0 0.0
  %1907 = vmatprep.subr.mxu0 0.0
  %1908 = vmatpush2.xpose.msra.mxu0 0.0
  %1909 = vmatprep.subr.mxu0 0.0
  %1910 = vmatpush2.xpose.msra.mxu0 0.0
  %1911 = vmatprep.subr.mxu0 0.0
  %1912 = vmatpush2.xpose.msra.mxu0 0.0
  %1913 = vmatprep.subr.mxu0 0.0
  %1914 = vmatpush2.xpose.msra.mxu0 0.0
  %1915 = vmatprep.subr.mxu0 0.0
  %1916 = vmatpush2.xpose.msra.mxu0 0.0
  %1917 = vmatprep.subr.mxu0 0.0
  %1918 = vmatpush2.xpose.msra.mxu0 0.0
  %1919 = vmatprep.subr.mxu0 0.0
  %1920 = vmatpush2.xpose.msra.mxu0 0.0
  %1921 = vmatprep.mubr.f32.mxu0 0.0
  %1922 = vmatmul.mubr.f32.gmra.mxu0 %v1853
  %v1923 = vpop.f32.mrf.mxu0
  %v1924 = vadd.f32 %v342, %v1923
  %v1925 = vpop.f32.mrf.mxu0
  %1926 = vdwg.mxu0
  %1927 = vrot.lane.b32.xlu0 %v487, 112
  %v1928 = vpop.permute.xlu0 %1927
  %1929 = vrot.lane.b32.xlu0 %v503, 112
  %v1930 = vpop.permute.xlu0 %1929
  %v1931 = vsel %vm394, %v1928, 0
  %v1933 = vsel %vm394, %v1930, 0
  %1935 = vmatprep.subr.mxu0 0.0
  %1936 = vmatpush1.xpose.msra.mxu0 0.0
  %1937 = vmatprep.subr.mxu0 0.0
  %1938 = vmatpush1.xpose.msra.mxu0 0.0
  %1939 = vmatprep.subr.mxu0 0.0
  %1940 = vmatpush1.xpose.msra.mxu0 0.0
  %1941 = vmatprep.subr.mxu0 0.0
  %1942 = vmatpush1.xpose.msra.mxu0 0.0
  %1943 = vmatprep.subr.mxu0 0.0
  %1944 = vmatpush1.xpose.msra.mxu0 0.0
  %1945 = vmatprep.subr.mxu0 0.0
  %1946 = vmatpush1.xpose.msra.mxu0 0.0
  %1947 = vmatprep.subr.mxu0 0.0
  %1948 = vmatpush1.xpose.msra.mxu0 0.0
  %1949 = vmatprep.subr.mxu0 0.0
  %1950 = vmatpush1.xpose.msra.mxu0 0.0
  %1951 = vmatprep.subr.mxu0 0.0
  %1952 = vmatpush1.xpose.msra.mxu0 0.0
  %1953 = vmatprep.subr.mxu0 0.0
  %1954 = vmatpush1.xpose.msra.mxu0 0.0
  %1955 = vmatprep.subr.mxu0 0.0
  %1956 = vmatpush1.xpose.msra.mxu0 0.0
  %1957 = vmatprep.subr.mxu0 0.0
  %1958 = vmatpush1.xpose.msra.mxu0 0.0
  %1959 = vmatprep.subr.mxu0 0.0
  %1960 = vmatpush1.xpose.msra.mxu0 0.0
  %1961 = vmatprep.subr.mxu0 0.0
  %1962 = vmatpush1.xpose.msra.mxu0 0.0
  %1963 = vmatprep.subr.mxu0 0.0
  %1964 = vmatpush1.xpose.msra.mxu0 0.0
  %1965 = vmatprep.subr.mxu0 0.0
  %1966 = vmatpush1.xpose.msra.mxu0 %v1933
  %1967 = vmatprep.subr.mxu0 0.0
  %1968 = vmatpush2.xpose.msra.mxu0 0.0
  %1969 = vmatprep.subr.mxu0 0.0
  %1970 = vmatpush2.xpose.msra.mxu0 0.0
  %1971 = vmatprep.subr.mxu0 0.0
  %1972 = vmatpush2.xpose.msra.mxu0 0.0
  %1973 = vmatprep.subr.mxu0 0.0
  %1974 = vmatpush2.xpose.msra.mxu0 0.0
  %1975 = vmatprep.subr.mxu0 0.0
  %1976 = vmatpush2.xpose.msra.mxu0 0.0
  %1977 = vmatprep.subr.mxu0 0.0
  %1978 = vmatpush2.xpose.msra.mxu0 0.0
  %1979 = vmatprep.subr.mxu0 0.0
  %1980 = vmatpush2.xpose.msra.mxu0 0.0
  %1981 = vmatprep.subr.mxu0 0.0
  %1982 = vmatpush2.xpose.msra.mxu0 0.0
  %1983 = vmatprep.subr.mxu0 0.0
  %1984 = vmatpush2.xpose.msra.mxu0 0.0
  %1985 = vmatprep.subr.mxu0 0.0
  %1986 = vmatpush2.xpose.msra.mxu0 0.0
  %1987 = vmatprep.subr.mxu0 0.0
  %1988 = vmatpush2.xpose.msra.mxu0 0.0
  %1989 = vmatprep.subr.mxu0 0.0
  %1990 = vmatpush2.xpose.msra.mxu0 0.0
  %1991 = vmatprep.subr.mxu0 0.0
  %1992 = vmatpush2.xpose.msra.mxu0 0.0
  %1993 = vmatprep.subr.mxu0 0.0
  %1994 = vmatpush2.xpose.msra.mxu0 0.0
  %1995 = vmatprep.subr.mxu0 0.0
  %1996 = vmatpush2.xpose.msra.mxu0 0.0
  %1997 = vmatprep.subr.mxu0 0.0
  %1998 = vmatpush2.xpose.msra.mxu0 0.0
  %1999 = vmatprep.mubr.f32.mxu0 0.0
  %2000 = vmatmul.mubr.f32.gmra.mxu0 %v1931
  %v2001 = vpop.f32.mrf.mxu0
  %v2002 = vadd.f32 %v346, %v2001
  %v2003 = vpop.f32.mrf.mxu0
  %2004 = vdwg.mxu0
  %2005 = vrot.lane.b32.xlu0 %v596, 112
  %v2006 = vpop.permute.xlu0 %2005
  %2007 = vrot.lane.b32.xlu0 %v612, 112
  %v2008 = vpop.permute.xlu0 %2007
  %v2009 = vsel %vm394, %v2006, 0
  %v2011 = vsel %vm394, %v2008, 0
  %2013 = vmatprep.subr.mxu0 0.0
  %2014 = vmatpush1.xpose.msra.mxu0 0.0
  %2015 = vmatprep.subr.mxu0 0.0
  %2016 = vmatpush1.xpose.msra.mxu0 0.0
  %2017 = vmatprep.subr.mxu0 0.0
  %2018 = vmatpush1.xpose.msra.mxu0 0.0
  %2019 = vmatprep.subr.mxu0 0.0
  %2020 = vmatpush1.xpose.msra.mxu0 0.0
  %2021 = vmatprep.subr.mxu0 0.0
  %2022 = vmatpush1.xpose.msra.mxu0 0.0
  %2023 = vmatprep.subr.mxu0 0.0
  %2024 = vmatpush1.xpose.msra.mxu0 0.0
  %2025 = vmatprep.subr.mxu0 0.0
  %2026 = vmatpush1.xpose.msra.mxu0 0.0
  %2027 = vmatprep.subr.mxu0 0.0
  %2028 = vmatpush1.xpose.msra.mxu0 0.0
  %2029 = vmatprep.subr.mxu0 0.0
  %2030 = vmatpush1.xpose.msra.mxu0 0.0
  %2031 = vmatprep.subr.mxu0 0.0
  %2032 = vmatpush1.xpose.msra.mxu0 0.0
  %2033 = vmatprep.subr.mxu0 0.0
  %2034 = vmatpush1.xpose.msra.mxu0 0.0
  %2035 = vmatprep.subr.mxu0 0.0
  %2036 = vmatpush1.xpose.msra.mxu0 0.0
  %2037 = vmatprep.subr.mxu0 0.0
  %2038 = vmatpush1.xpose.msra.mxu0 0.0
  %2039 = vmatprep.subr.mxu0 0.0
  %2040 = vmatpush1.xpose.msra.mxu0 0.0
  %2041 = vmatprep.subr.mxu0 0.0
  %2042 = vmatpush1.xpose.msra.mxu0 0.0
  %2043 = vmatprep.subr.mxu0 0.0
  %2044 = vmatpush1.xpose.msra.mxu0 %v2011
  %2045 = vmatprep.subr.mxu0 0.0
  %2046 = vmatpush2.xpose.msra.mxu0 0.0
  %2047 = vmatprep.subr.mxu0 0.0
  %2048 = vmatpush2.xpose.msra.mxu0 0.0
  %2049 = vmatprep.subr.mxu0 0.0
  %2050 = vmatpush2.xpose.msra.mxu0 0.0
  %2051 = vmatprep.subr.mxu0 0.0
  %2052 = vmatpush2.xpose.msra.mxu0 0.0
  %2053 = vmatprep.subr.mxu0 0.0
  %2054 = vmatpush2.xpose.msra.mxu0 0.0
  %2055 = vmatprep.subr.mxu0 0.0
  %2056 = vmatpush2.xpose.msra.mxu0 0.0
  %2057 = vmatprep.subr.mxu0 0.0
  %2058 = vmatpush2.xpose.msra.mxu0 0.0
  %2059 = vmatprep.subr.mxu0 0.0
  %2060 = vmatpush2.xpose.msra.mxu0 0.0
  %2061 = vmatprep.subr.mxu0 0.0
  %2062 = vmatpush2.xpose.msra.mxu0 0.0
  %2063 = vmatprep.subr.mxu0 0.0
  %2064 = vmatpush2.xpose.msra.mxu0 0.0
  %2065 = vmatprep.subr.mxu0 0.0
  %2066 = vmatpush2.xpose.msra.mxu0 0.0
  %2067 = vmatprep.subr.mxu0 0.0
  %2068 = vmatpush2.xpose.msra.mxu0 0.0
  %2069 = vmatprep.subr.mxu0 0.0
  %2070 = vmatpush2.xpose.msra.mxu0 0.0
  %2071 = vmatprep.subr.mxu0 0.0
  %2072 = vmatpush2.xpose.msra.mxu0 0.0
  %2073 = vmatprep.subr.mxu0 0.0
  %2074 = vmatpush2.xpose.msra.mxu0 0.0
  %2075 = vmatprep.subr.mxu0 0.0
  %2076 = vmatpush2.xpose.msra.mxu0 0.0
  %2077 = vmatprep.mubr.f32.mxu0 0.0
  %2078 = vmatmul.mubr.f32.gmra.mxu0 %v2009
  %v2079 = vpop.f32.mrf.mxu0
  %v2080 = vadd.f32 %v350, %v2079
  %v2081 = vpop.f32.mrf.mxu0
  %2082 = vdwg.mxu0
  %2083 = vrot.lane.b32.xlu0 %v705, 112
  %v2084 = vpop.permute.xlu0 %2083
  %2085 = vrot.lane.b32.xlu0 %v721, 112
  %v2086 = vpop.permute.xlu0 %2085
  %v2087 = vsel %vm394, %v2084, 0
  %v2089 = vsel %vm394, %v2086, 0
  %2091 = vmatprep.subr.mxu0 0.0
  %2092 = vmatpush1.xpose.msra.mxu0 0.0
  %2093 = vmatprep.subr.mxu0 0.0
  %2094 = vmatpush1.xpose.msra.mxu0 0.0
  %2095 = vmatprep.subr.mxu0 0.0
  %2096 = vmatpush1.xpose.msra.mxu0 0.0
  %2097 = vmatprep.subr.mxu0 0.0
  %2098 = vmatpush1.xpose.msra.mxu0 0.0
  %2099 = vmatprep.subr.mxu0 0.0
  %2100 = vmatpush1.xpose.msra.mxu0 0.0
  %2101 = vmatprep.subr.mxu0 0.0
  %2102 = vmatpush1.xpose.msra.mxu0 0.0
  %2103 = vmatprep.subr.mxu0 0.0
  %2104 = vmatpush1.xpose.msra.mxu0 0.0
  %2105 = vmatprep.subr.mxu0 0.0
  %2106 = vmatpush1.xpose.msra.mxu0 0.0
  %2107 = vmatprep.subr.mxu0 0.0
  %2108 = vmatpush1.xpose.msra.mxu0 0.0
  %2109 = vmatprep.subr.mxu0 0.0
  %2110 = vmatpush1.xpose.msra.mxu0 0.0
  %2111 = vmatprep.subr.mxu0 0.0
  %2112 = vmatpush1.xpose.msra.mxu0 0.0
  %2113 = vmatprep.subr.mxu0 0.0
  %2114 = vmatpush1.xpose.msra.mxu0 0.0
  %2115 = vmatprep.subr.mxu0 0.0
  %2116 = vmatpush1.xpose.msra.mxu0 0.0
  %2117 = vmatprep.subr.mxu0 0.0
  %2118 = vmatpush1.xpose.msra.mxu0 0.0
  %2119 = vmatprep.subr.mxu0 0.0
  %2120 = vmatpush1.xpose.msra.mxu0 0.0
  %2121 = vmatprep.subr.mxu0 0.0
  %2122 = vmatpush1.xpose.msra.mxu0 %v2089
  %2123 = vmatprep.subr.mxu0 0.0
  %2124 = vmatpush2.xpose.msra.mxu0 0.0
  %2125 = vmatprep.subr.mxu0 0.0
  %2126 = vmatpush2.xpose.msra.mxu0 0.0
  %2127 = vmatprep.subr.mxu0 0.0
  %2128 = vmatpush2.xpose.msra.mxu0 0.0
  %2129 = vmatprep.subr.mxu0 0.0
  %2130 = vmatpush2.xpose.msra.mxu0 0.0
  %2131 = vmatprep.subr.mxu0 0.0
  %2132 = vmatpush2.xpose.msra.mxu0 0.0
  %2133 = vmatprep.subr.mxu0 0.0
  %2134 = vmatpush2.xpose.msra.mxu0 0.0
  %2135 = vmatprep.subr.mxu0 0.0
  %2136 = vmatpush2.xpose.msra.mxu0 0.0
  %2137 = vmatprep.subr.mxu0 0.0
  %2138 = vmatpush2.xpose.msra.mxu0 0.0
  %2139 = vmatprep.subr.mxu0 0.0
  %2140 = vmatpush2.xpose.msra.mxu0 0.0
  %2141 = vmatprep.subr.mxu0 0.0
  %2142 = vmatpush2.xpose.msra.mxu0 0.0
  %2143 = vmatprep.subr.mxu0 0.0
  %2144 = vmatpush2.xpose.msra.mxu0 0.0
  %2145 = vmatprep.subr.mxu0 0.0
  %2146 = vmatpush2.xpose.msra.mxu0 0.0
  %2147 = vmatprep.subr.mxu0 0.0
  %2148 = vmatpush2.xpose.msra.mxu0 0.0
  %2149 = vmatprep.subr.mxu0 0.0
  %2150 = vmatpush2.xpose.msra.mxu0 0.0
  %2151 = vmatprep.subr.mxu0 0.0
  %2152 = vmatpush2.xpose.msra.mxu0 0.0
  %2153 = vmatprep.subr.mxu0 0.0
  %2154 = vmatpush2.xpose.msra.mxu0 0.0
  %2155 = vmatprep.mubr.f32.mxu0 0.0
  %2156 = vmatmul.mubr.f32.gmra.mxu0 %v2087
  %v2157 = vpop.f32.mrf.mxu0
  %v2158 = vadd.f32 %v354, %v2157
  %v2159 = vpop.f32.mrf.mxu0
  %2160 = vdwg.mxu0
  %v2161 = vsel %vm796, %v1924, -inf
  %2162 = vmax.xlane.f32.xlu0 %v2161
  %v2163 = vpop.xlane.xlu0 %2162
  %v2164 = vsel %vm796, %v2002, -inf
  %2165 = vmax.xlane.f32.xlu0 %v2164
  %v2166 = vpop.xlane.xlu0 %2165
  %v2167 = vsel %vm796, %v2080, -inf
  %2168 = vmax.xlane.f32.xlu0 %v2167
  %v2169 = vpop.xlane.xlu0 %2168
  %v2170 = vsel %vm796, %v2158, -inf
  %2171 = vmax.xlane.f32.xlu0 %v2170
  %v2172 = vpop.xlane.xlu0 %2171
  %v2173 = vsub.f32 %v1924, %v2163
  %v2174 = vsub.f32 %v2002, %v2166
  %v2175 = vsub.f32 %v2080, %v2169
  %v2176 = vsub.f32 %v2158, %v2172
  %v2177 = vmul.f32 %v2173, 1.442695
  %v2178 = vpow.pop %v2177
  %v2179 = vmul.f32 %v2174, 1.442695
  %v2180 = vpow.pop %v2179
  %v2181 = vmul.f32 %v2175, 1.442695
  %v2182 = vpow.pop %v2181
  %v2183 = vmul.f32 %v2176, 1.442695
  %v2184 = vpow.pop %v2183
  %v2185 = vsel %vm796, %v2178, 0.0
  %2186 = vadd.xlane.f32.xlu0 %v2185
  %v2187 = vpop.xlane.xlu0 %2186
  %v2188 = vsel %vm796, %v2180, 0.0
  %2189 = vadd.xlane.f32.xlu0 %v2188
  %v2190 = vpop.xlane.xlu0 %2189
  %v2191 = vsel %vm796, %v2182, 0.0
  %2192 = vadd.xlane.f32.xlu0 %v2191
  %v2193 = vpop.xlane.xlu0 %2192
  %v2194 = vsel %vm796, %v2184, 0.0
  %2195 = vadd.xlane.f32.xlu0 %v2194
  %v2196 = vpop.xlane.xlu0 %2195
  %v2197 = vrcp.pop %v2187
  %v2198 = vrcp.pop %v2190
  %v2199 = vrcp.pop %v2193
  %v2200 = vrcp.pop %v2196
  %v2201 = vmul.f32 %v2178, %v2197
  %v2202 = vmul.f32 %v2180, %v2198
  %v2203 = vmul.f32 %v2182, %v2199
  %v2204 = vmul.f32 %v2184, %v2200
  %v2205 = vmul.f32 %v2201, %v844
  %v2206 = vmul.f32 %v2202, %v848
  %v2207 = vmul.f32 %v2203, %v852
  %v2208 = vmul.f32 %v2204, %v856
  %v2210 = vsel %vm861, %v2205, 0
  %v2212 = vsel %vm865, %v1852, 0
  %2214 = vmatprep.subr.mxu0 0.0
  %2215 = vmatpush1.msra.mxu0 0.0
  %2216 = vmatprep.subr.mxu0 0.0
  %2217 = vmatpush1.msra.mxu0 0.0
  %2218 = vmatprep.subr.mxu0 0.0
  %2219 = vmatpush1.msra.mxu0 0.0
  %2220 = vmatprep.subr.mxu0 0.0
  %2221 = vmatpush1.msra.mxu0 0.0
  %2222 = vmatprep.subr.mxu0 0.0
  %2223 = vmatpush1.msra.mxu0 0.0
  %2224 = vmatprep.subr.mxu0 0.0
  %2225 = vmatpush1.msra.mxu0 0.0
  %2226 = vmatprep.subr.mxu0 0.0
  %2227 = vmatpush1.msra.mxu0 0.0
  %2228 = vmatprep.subr.mxu0 0.0
  %2229 = vmatpush1.msra.mxu0 0.0
  %2230 = vmatprep.subr.mxu0 0.0
  %2231 = vmatpush1.msra.mxu0 0.0
  %2232 = vmatprep.subr.mxu0 0.0
  %2233 = vmatpush1.msra.mxu0 0.0
  %2234 = vmatprep.subr.mxu0 0.0
  %2235 = vmatpush1.msra.mxu0 0.0
  %2236 = vmatprep.subr.mxu0 0.0
  %2237 = vmatpush1.msra.mxu0 0.0
  %2238 = vmatprep.subr.mxu0 0.0
  %2239 = vmatpush1.msra.mxu0 0.0
  %2240 = vmatprep.subr.mxu0 0.0
  %2241 = vmatpush1.msra.mxu0 0.0
  %2242 = vmatprep.subr.mxu0 0.0
  %2243 = vmatpush1.msra.mxu0 0.0
  %2244 = vmatprep.subr.mxu0 0.0
  %2245 = vmatpush1.msra.mxu0 %v2212
  %2246 = vmatprep.subr.mxu0 0.0
  %2247 = vmatpush2.msra.mxu0 0.0
  %2248 = vmatprep.subr.mxu0 0.0
  %2249 = vmatpush2.msra.mxu0 0.0
  %2250 = vmatprep.subr.mxu0 0.0
  %2251 = vmatpush2.msra.mxu0 0.0
  %2252 = vmatprep.subr.mxu0 0.0
  %2253 = vmatpush2.msra.mxu0 0.0
  %2254 = vmatprep.subr.mxu0 0.0
  %2255 = vmatpush2.msra.mxu0 0.0
  %2256 = vmatprep.subr.mxu0 0.0
  %2257 = vmatpush2.msra.mxu0 0.0
  %2258 = vmatprep.subr.mxu0 0.0
  %2259 = vmatpush2.msra.mxu0 0.0
  %2260 = vmatprep.subr.mxu0 0.0
  %2261 = vmatpush2.msra.mxu0 0.0
  %2262 = vmatprep.subr.mxu0 0.0
  %2263 = vmatpush2.msra.mxu0 0.0
  %2264 = vmatprep.subr.mxu0 0.0
  %2265 = vmatpush2.msra.mxu0 0.0
  %2266 = vmatprep.subr.mxu0 0.0
  %2267 = vmatpush2.msra.mxu0 0.0
  %2268 = vmatprep.subr.mxu0 0.0
  %2269 = vmatpush2.msra.mxu0 0.0
  %2270 = vmatprep.subr.mxu0 0.0
  %2271 = vmatpush2.msra.mxu0 0.0
  %2272 = vmatprep.subr.mxu0 0.0
  %2273 = vmatpush2.msra.mxu0 0.0
  %2274 = vmatprep.subr.mxu0 0.0
  %2275 = vmatpush2.msra.mxu0 0.0
  %2276 = vmatprep.subr.mxu0 0.0
  %2277 = vmatpush2.msra.mxu0 0.0
  %2278 = vmatprep.mubr.f32.mxu0 0.0
  %2279 = vmatmul.mubr.f32.gmra.mxu0 %v2210
  %v2280 = vpop.f32.mrf.mxu0
  %v2281 = vadd.f32 0.0, %v2280
  %v2282 = vpop.f32.mrf.mxu0
  %2283 = vdwg.mxu0
  %v2285 = vsel %vm861, %v2206, 0
  %v2287 = vsel %vm865, %v1930, 0
  %2289 = vmatprep.subr.mxu0 0.0
  %2290 = vmatpush1.msra.mxu0 0.0
  %2291 = vmatprep.subr.mxu0 0.0
  %2292 = vmatpush1.msra.mxu0 0.0
  %2293 = vmatprep.subr.mxu0 0.0
  %2294 = vmatpush1.msra.mxu0 0.0
  %2295 = vmatprep.subr.mxu0 0.0
  %2296 = vmatpush1.msra.mxu0 0.0
  %2297 = vmatprep.subr.mxu0 0.0
  %2298 = vmatpush1.msra.mxu0 0.0
  %2299 = vmatprep.subr.mxu0 0.0
  %2300 = vmatpush1.msra.mxu0 0.0
  %2301 = vmatprep.subr.mxu0 0.0
  %2302 = vmatpush1.msra.mxu0 0.0
  %2303 = vmatprep.subr.mxu0 0.0
  %2304 = vmatpush1.msra.mxu0 0.0
  %2305 = vmatprep.subr.mxu0 0.0
  %2306 = vmatpush1.msra.mxu0 0.0
  %2307 = vmatprep.subr.mxu0 0.0
  %2308 = vmatpush1.msra.mxu0 0.0
  %2309 = vmatprep.subr.mxu0 0.0
  %2310 = vmatpush1.msra.mxu0 0.0
  %2311 = vmatprep.subr.mxu0 0.0
  %2312 = vmatpush1.msra.mxu0 0.0
  %2313 = vmatprep.subr.mxu0 0.0
  %2314 = vmatpush1.msra.mxu0 0.0
  %2315 = vmatprep.subr.mxu0 0.0
  %2316 = vmatpush1.msra.mxu0 0.0
  %2317 = vmatprep.subr.mxu0 0.0
  %2318 = vmatpush1.msra.mxu0 0.0
  %2319 = vmatprep.subr.mxu0 0.0
  %2320 = vmatpush1.msra.mxu0 %v2287
  %2321 = vmatprep.subr.mxu0 0.0
  %2322 = vmatpush2.msra.mxu0 0.0
  %2323 = vmatprep.subr.mxu0 0.0
  %2324 = vmatpush2.msra.mxu0 0.0
  %2325 = vmatprep.subr.mxu0 0.0
  %2326 = vmatpush2.msra.mxu0 0.0
  %2327 = vmatprep.subr.mxu0 0.0
  %2328 = vmatpush2.msra.mxu0 0.0
  %2329 = vmatprep.subr.mxu0 0.0
  %2330 = vmatpush2.msra.mxu0 0.0
  %2331 = vmatprep.subr.mxu0 0.0
  %2332 = vmatpush2.msra.mxu0 0.0
  %2333 = vmatprep.subr.mxu0 0.0
  %2334 = vmatpush2.msra.mxu0 0.0
  %2335 = vmatprep.subr.mxu0 0.0
  %2336 = vmatpush2.msra.mxu0 0.0
  %2337 = vmatprep.subr.mxu0 0.0
  %2338 = vmatpush2.msra.mxu0 0.0
  %2339 = vmatprep.subr.mxu0 0.0
  %2340 = vmatpush2.msra.mxu0 0.0
  %2341 = vmatprep.subr.mxu0 0.0
  %2342 = vmatpush2.msra.mxu0 0.0
  %2343 = vmatprep.subr.mxu0 0.0
  %2344 = vmatpush2.msra.mxu0 0.0
  %2345 = vmatprep.subr.mxu0 0.0
  %2346 = vmatpush2.msra.mxu0 0.0
  %2347 = vmatprep.subr.mxu0 0.0
  %2348 = vmatpush2.msra.mxu0 0.0
  %2349 = vmatprep.subr.mxu0 0.0
  %2350 = vmatpush2.msra.mxu0 0.0
  %2351 = vmatprep.subr.mxu0 0.0
  %2352 = vmatpush2.msra.mxu0 0.0
  %2353 = vmatprep.mubr.f32.mxu0 0.0
  %2354 = vmatmul.mubr.f32.gmra.mxu0 %v2285
  %v2355 = vpop.f32.mrf.mxu0
  %v2356 = vadd.f32 0.0, %v2355
  %v2357 = vpop.f32.mrf.mxu0
  %2358 = vdwg.mxu0
  %v2360 = vsel %vm861, %v2207, 0
  %v2362 = vsel %vm865, %v2008, 0
  %2364 = vmatprep.subr.mxu0 0.0
  %2365 = vmatpush1.msra.mxu0 0.0
  %2366 = vmatprep.subr.mxu0 0.0
  %2367 = vmatpush1.msra.mxu0 0.0
  %2368 = vmatprep.subr.mxu0 0.0
  %2369 = vmatpush1.msra.mxu0 0.0
  %2370 = vmatprep.subr.mxu0 0.0
  %2371 = vmatpush1.msra.mxu0 0.0
  %2372 = vmatprep.subr.mxu0 0.0
  %2373 = vmatpush1.msra.mxu0 0.0
  %2374 = vmatprep.subr.mxu0 0.0
  %2375 = vmatpush1.msra.mxu0 0.0
  %2376 = vmatprep.subr.mxu0 0.0
  %2377 = vmatpush1.msra.mxu0 0.0
  %2378 = vmatprep.subr.mxu0 0.0
  %2379 = vmatpush1.msra.mxu0 0.0
  %2380 = vmatprep.subr.mxu0 0.0
  %2381 = vmatpush1.msra.mxu0 0.0
  %2382 = vmatprep.subr.mxu0 0.0
  %2383 = vmatpush1.msra.mxu0 0.0
  %2384 = vmatprep.subr.mxu0 0.0
  %2385 = vmatpush1.msra.mxu0 0.0
  %2386 = vmatprep.subr.mxu0 0.0
  %2387 = vmatpush1.msra.mxu0 0.0
  %2388 = vmatprep.subr.mxu0 0.0
  %2389 = vmatpush1.msra.mxu0 0.0
  %2390 = vmatprep.subr.mxu0 0.0
  %2391 = vmatpush1.msra.mxu0 0.0
  %2392 = vmatprep.subr.mxu0 0.0
  %2393 = vmatpush1.msra.mxu0 0.0
  %2394 = vmatprep.subr.mxu0 0.0
  %2395 = vmatpush1.msra.mxu0 %v2362
  %2396 = vmatprep.subr.mxu0 0.0
  %2397 = vmatpush2.msra.mxu0 0.0
  %2398 = vmatprep.subr.mxu0 0.0
  %2399 = vmatpush2.msra.mxu0 0.0
  %2400 = vmatprep.subr.mxu0 0.0
  %2401 = vmatpush2.msra.mxu0 0.0
  %2402 = vmatprep.subr.mxu0 0.0
  %2403 = vmatpush2.msra.mxu0 0.0
  %2404 = vmatprep.subr.mxu0 0.0
  %2405 = vmatpush2.msra.mxu0 0.0
  %2406 = vmatprep.subr.mxu0 0.0
  %2407 = vmatpush2.msra.mxu0 0.0
  %2408 = vmatprep.subr.mxu0 0.0
  %2409 = vmatpush2.msra.mxu0 0.0
  %2410 = vmatprep.subr.mxu0 0.0
  %2411 = vmatpush2.msra.mxu0 0.0
  %2412 = vmatprep.subr.mxu0 0.0
  %2413 = vmatpush2.msra.mxu0 0.0
  %2414 = vmatprep.subr.mxu0 0.0
  %2415 = vmatpush2.msra.mxu0 0.0
  %2416 = vmatprep.subr.mxu0 0.0
  %2417 = vmatpush2.msra.mxu0 0.0
  %2418 = vmatprep.subr.mxu0 0.0
  %2419 = vmatpush2.msra.mxu0 0.0
  %2420 = vmatprep.subr.mxu0 0.0
  %2421 = vmatpush2.msra.mxu0 0.0
  %2422 = vmatprep.subr.mxu0 0.0
  %2423 = vmatpush2.msra.mxu0 0.0
  %2424 = vmatprep.subr.mxu0 0.0
  %2425 = vmatpush2.msra.mxu0 0.0
  %2426 = vmatprep.subr.mxu0 0.0
  %2427 = vmatpush2.msra.mxu0 0.0
  %2428 = vmatprep.mubr.f32.mxu0 0.0
  %2429 = vmatmul.mubr.f32.gmra.mxu0 %v2360
  %v2430 = vpop.f32.mrf.mxu0
  %v2431 = vadd.f32 0.0, %v2430
  %v2432 = vpop.f32.mrf.mxu0
  %2433 = vdwg.mxu0
  %v2435 = vsel %vm861, %v2208, 0
  %v2437 = vsel %vm865, %v2086, 0
  %2439 = vmatprep.subr.mxu0 0.0
  %2440 = vmatpush1.msra.mxu0 0.0
  %2441 = vmatprep.subr.mxu0 0.0
  %2442 = vmatpush1.msra.mxu0 0.0
  %2443 = vmatprep.subr.mxu0 0.0
  %2444 = vmatpush1.msra.mxu0 0.0
  %2445 = vmatprep.subr.mxu0 0.0
  %2446 = vmatpush1.msra.mxu0 0.0
  %2447 = vmatprep.subr.mxu0 0.0
  %2448 = vmatpush1.msra.mxu0 0.0
  %2449 = vmatprep.subr.mxu0 0.0
  %2450 = vmatpush1.msra.mxu0 0.0
  %2451 = vmatprep.subr.mxu0 0.0
  %2452 = vmatpush1.msra.mxu0 0.0
  %2453 = vmatprep.subr.mxu0 0.0
  %2454 = vmatpush1.msra.mxu0 0.0
  %2455 = vmatprep.subr.mxu0 0.0
  %2456 = vmatpush1.msra.mxu0 0.0
  %2457 = vmatprep.subr.mxu0 0.0
  %2458 = vmatpush1.msra.mxu0 0.0
  %2459 = vmatprep.subr.mxu0 0.0
  %2460 = vmatpush1.msra.mxu0 0.0
  %2461 = vmatprep.subr.mxu0 0.0
  %2462 = vmatpush1.msra.mxu0 0.0
  %2463 = vmatprep.subr.mxu0 0.0
  %2464 = vmatpush1.msra.mxu0 0.0
  %2465 = vmatprep.subr.mxu0 0.0
  %2466 = vmatpush1.msra.mxu0 0.0
  %2467 = vmatprep.subr.mxu0 0.0
  %2468 = vmatpush1.msra.mxu0 0.0
  %2469 = vmatprep.subr.mxu0 0.0
  %2470 = vmatpush1.msra.mxu0 %v2437
  %2471 = vmatprep.subr.mxu0 0.0
  %2472 = vmatpush2.msra.mxu0 0.0
  %2473 = vmatprep.subr.mxu0 0.0
  %2474 = vmatpush2.msra.mxu0 0.0
  %2475 = vmatprep.subr.mxu0 0.0
  %2476 = vmatpush2.msra.mxu0 0.0
  %2477 = vmatprep.subr.mxu0 0.0
  %2478 = vmatpush2.msra.mxu0 0.0
  %2479 = vmatprep.subr.mxu0 0.0
  %2480 = vmatpush2.msra.mxu0 0.0
  %2481 = vmatprep.subr.mxu0 0.0
  %2482 = vmatpush2.msra.mxu0 0.0
  %2483 = vmatprep.subr.mxu0 0.0
  %2484 = vmatpush2.msra.mxu0 0.0
  %2485 = vmatprep.subr.mxu0 0.0
  %2486 = vmatpush2.msra.mxu0 0.0
  %2487 = vmatprep.subr.mxu0 0.0
  %2488 = vmatpush2.msra.mxu0 0.0
  %2489 = vmatprep.subr.mxu0 0.0
  %2490 = vmatpush2.msra.mxu0 0.0
  %2491 = vmatprep.subr.mxu0 0.0
  %2492 = vmatpush2.msra.mxu0 0.0
  %2493 = vmatprep.subr.mxu0 0.0
  %2494 = vmatpush2.msra.mxu0 0.0
  %2495 = vmatprep.subr.mxu0 0.0
  %2496 = vmatpush2.msra.mxu0 0.0
  %2497 = vmatprep.subr.mxu0 0.0
  %2498 = vmatpush2.msra.mxu0 0.0
  %2499 = vmatprep.subr.mxu0 0.0
  %2500 = vmatpush2.msra.mxu0 0.0
  %2501 = vmatprep.subr.mxu0 0.0
  %2502 = vmatpush2.msra.mxu0 0.0
  %2503 = vmatprep.mubr.f32.mxu0 0.0
  %2504 = vmatmul.mubr.f32.gmra.mxu0 %v2435
  %v2505 = vpop.f32.mrf.mxu0
  %v2506 = vadd.f32 0.0, %v2505
  %v2507 = vpop.f32.mrf.mxu0
  %2508 = vdwg.mxu0
  %2513 = vrot.lane.b32.xlu0 %v2281, 16
  %v2514 = vpop.permute.xlu0 %2513
  %2515 = vrot.lane.b32.xlu0 %v2356, 16
  %v2516 = vpop.permute.xlu0 %2515
  %2517 = vrot.lane.b32.xlu0 %v2431, 16
  %v2518 = vpop.permute.xlu0 %2517
  %2519 = vrot.lane.b32.xlu0 %v2506, 16
  %v2520 = vpop.permute.xlu0 %2519
  %vm2525 = vcmask 193664
  %2526 = vst.msk [vmem:[%s3] sm:$0x3f] %vm2525, %v2514
  %2527 = vst.msk [vmem:[%s3 + $0x8] sm:$0x3f] %vm2525, %v2516
  %2528 = vst.msk [vmem:[%s3 + $0x10] sm:$0x3f] %vm2525, %v2518
  %2529 = vst.msk [vmem:[%s3 + $0x18] sm:$0x3f] %vm2525, %v2520
  %2530 = vrot.lane.b32.xlu0 %v377, 104
  %v2531 = vpop.permute.xlu0 %2530
  %2532 = vrot.lane.b32.xlu0 %v393, 104
  %v2533 = vpop.permute.xlu0 %2532
  %v2534 = vsel %vm394, %v2531, 0
  %v2536 = vsel %vm394, %v2533, 0
  %2538 = vmatprep.subr.mxu0 0.0
  %2539 = vmatpush1.xpose.msra.mxu0 0.0
  %2540 = vmatprep.subr.mxu0 0.0
  %2541 = vmatpush1.xpose.msra.mxu0 0.0
  %2542 = vmatprep.subr.mxu0 0.0
  %2543 = vmatpush1.xpose.msra.mxu0 0.0
  %2544 = vmatprep.subr.mxu0 0.0
  %2545 = vmatpush1.xpose.msra.mxu0 0.0
  %2546 = vmatprep.subr.mxu0 0.0
  %2547 = vmatpush1.xpose.msra.mxu0 0.0
  %2548 = vmatprep.subr.mxu0 0.0
  %2549 = vmatpush1.xpose.msra.mxu0 0.0
  %2550 = vmatprep.subr.mxu0 0.0
  %2551 = vmatpush1.xpose.msra.mxu0 0.0
  %2552 = vmatprep.subr.mxu0 0.0
  %2553 = vmatpush1.xpose.msra.mxu0 0.0
  %2554 = vmatprep.subr.mxu0 0.0
  %2555 = vmatpush1.xpose.msra.mxu0 0.0
  %2556 = vmatprep.subr.mxu0 0.0
  %2557 = vmatpush1.xpose.msra.mxu0 0.0
  %2558 = vmatprep.subr.mxu0 0.0
  %2559 = vmatpush1.xpose.msra.mxu0 0.0
  %2560 = vmatprep.subr.mxu0 0.0
  %2561 = vmatpush1.xpose.msra.mxu0 0.0
  %2562 = vmatprep.subr.mxu0 0.0
  %2563 = vmatpush1.xpose.msra.mxu0 0.0
  %2564 = vmatprep.subr.mxu0 0.0
  %2565 = vmatpush1.xpose.msra.mxu0 0.0
  %2566 = vmatprep.subr.mxu0 0.0
  %2567 = vmatpush1.xpose.msra.mxu0 0.0
  %2568 = vmatprep.subr.mxu0 0.0
  %2569 = vmatpush1.xpose.msra.mxu0 %v2536
  %2570 = vmatprep.subr.mxu0 0.0
  %2571 = vmatpush2.xpose.msra.mxu0 0.0
  %2572 = vmatprep.subr.mxu0 0.0
  %2573 = vmatpush2.xpose.msra.mxu0 0.0
  %2574 = vmatprep.subr.mxu0 0.0
  %2575 = vmatpush2.xpose.msra.mxu0 0.0
  %2576 = vmatprep.subr.mxu0 0.0
  %2577 = vmatpush2.xpose.msra.mxu0 0.0
  %2578 = vmatprep.subr.mxu0 0.0
  %2579 = vmatpush2.xpose.msra.mxu0 0.0
  %2580 = vmatprep.subr.mxu0 0.0
  %2581 = vmatpush2.xpose.msra.mxu0 0.0
  %2582 = vmatprep.subr.mxu0 0.0
  %2583 = vmatpush2.xpose.msra.mxu0 0.0
  %2584 = vmatprep.subr.mxu0 0.0
  %2585 = vmatpush2.xpose.msra.mxu0 0.0
  %2586 = vmatprep.subr.mxu0 0.0
  %2587 = vmatpush2.xpose.msra.mxu0 0.0
  %2588 = vmatprep.subr.mxu0 0.0
  %2589 = vmatpush2.xpose.msra.mxu0 0.0
  %2590 = vmatprep.subr.mxu0 0.0
  %2591 = vmatpush2.xpose.msra.mxu0 0.0
  %2592 = vmatprep.subr.mxu0 0.0
  %2593 = vmatpush2.xpose.msra.mxu0 0.0
  %2594 = vmatprep.subr.mxu0 0.0
  %2595 = vmatpush2.xpose.msra.mxu0 0.0
  %2596 = vmatprep.subr.mxu0 0.0
  %2597 = vmatpush2.xpose.msra.mxu0 0.0
  %2598 = vmatprep.subr.mxu0 0.0
  %2599 = vmatpush2.xpose.msra.mxu0 0.0
  %2600 = vmatprep.subr.mxu0 0.0
  %2601 = vmatpush2.xpose.msra.mxu0 0.0
  %2602 = vmatprep.mubr.f32.mxu0 0.0
  %2603 = vmatmul.mubr.f32.gmra.mxu0 %v2534
  %v2604 = vpop.f32.mrf.mxu0
  %v2605 = vadd.f32 %v342, %v2604
  %v2606 = vpop.f32.mrf.mxu0
  %2607 = vdwg.mxu0
  %2608 = vrot.lane.b32.xlu0 %v487, 104
  %v2609 = vpop.permute.xlu0 %2608
  %2610 = vrot.lane.b32.xlu0 %v503, 104
  %v2611 = vpop.permute.xlu0 %2610
  %v2612 = vsel %vm394, %v2609, 0
  %v2614 = vsel %vm394, %v2611, 0
  %2616 = vmatprep.subr.mxu0 0.0
  %2617 = vmatpush1.xpose.msra.mxu0 0.0
  %2618 = vmatprep.subr.mxu0 0.0
  %2619 = vmatpush1.xpose.msra.mxu0 0.0
  %2620 = vmatprep.subr.mxu0 0.0
  %2621 = vmatpush1.xpose.msra.mxu0 0.0
  %2622 = vmatprep.subr.mxu0 0.0
  %2623 = vmatpush1.xpose.msra.mxu0 0.0
  %2624 = vmatprep.subr.mxu0 0.0
  %2625 = vmatpush1.xpose.msra.mxu0 0.0
  %2626 = vmatprep.subr.mxu0 0.0
  %2627 = vmatpush1.xpose.msra.mxu0 0.0
  %2628 = vmatprep.subr.mxu0 0.0
  %2629 = vmatpush1.xpose.msra.mxu0 0.0
  %2630 = vmatprep.subr.mxu0 0.0
  %2631 = vmatpush1.xpose.msra.mxu0 0.0
  %2632 = vmatprep.subr.mxu0 0.0
  %2633 = vmatpush1.xpose.msra.mxu0 0.0
  %2634 = vmatprep.subr.mxu0 0.0
  %2635 = vmatpush1.xpose.msra.mxu0 0.0
  %2636 = vmatprep.subr.mxu0 0.0
  %2637 = vmatpush1.xpose.msra.mxu0 0.0
  %2638 = vmatprep.subr.mxu0 0.0
  %2639 = vmatpush1.xpose.msra.mxu0 0.0
  %2640 = vmatprep.subr.mxu0 0.0
  %2641 = vmatpush1.xpose.msra.mxu0 0.0
  %2642 = vmatprep.subr.mxu0 0.0
  %2643 = vmatpush1.xpose.msra.mxu0 0.0
  %2644 = vmatprep.subr.mxu0 0.0
  %2645 = vmatpush1.xpose.msra.mxu0 0.0
  %2646 = vmatprep.subr.mxu0 0.0
  %2647 = vmatpush1.xpose.msra.mxu0 %v2614
  %2648 = vmatprep.subr.mxu0 0.0
  %2649 = vmatpush2.xpose.msra.mxu0 0.0
  %2650 = vmatprep.subr.mxu0 0.0
  %2651 = vmatpush2.xpose.msra.mxu0 0.0
  %2652 = vmatprep.subr.mxu0 0.0
  %2653 = vmatpush2.xpose.msra.mxu0 0.0
  %2654 = vmatprep.subr.mxu0 0.0
  %2655 = vmatpush2.xpose.msra.mxu0 0.0
  %2656 = vmatprep.subr.mxu0 0.0
  %2657 = vmatpush2.xpose.msra.mxu0 0.0
  %2658 = vmatprep.subr.mxu0 0.0
  %2659 = vmatpush2.xpose.msra.mxu0 0.0
  %2660 = vmatprep.subr.mxu0 0.0
  %2661 = vmatpush2.xpose.msra.mxu0 0.0
  %2662 = vmatprep.subr.mxu0 0.0
  %2663 = vmatpush2.xpose.msra.mxu0 0.0
  %2664 = vmatprep.subr.mxu0 0.0
  %2665 = vmatpush2.xpose.msra.mxu0 0.0
  %2666 = vmatprep.subr.mxu0 0.0
  %2667 = vmatpush2.xpose.msra.mxu0 0.0
  %2668 = vmatprep.subr.mxu0 0.0
  %2669 = vmatpush2.xpose.msra.mxu0 0.0
  %2670 = vmatprep.subr.mxu0 0.0
  %2671 = vmatpush2.xpose.msra.mxu0 0.0
  %2672 = vmatprep.subr.mxu0 0.0
  %2673 = vmatpush2.xpose.msra.mxu0 0.0
  %2674 = vmatprep.subr.mxu0 0.0
  %2675 = vmatpush2.xpose.msra.mxu0 0.0
  %2676 = vmatprep.subr.mxu0 0.0
  %2677 = vmatpush2.xpose.msra.mxu0 0.0
  %2678 = vmatprep.subr.mxu0 0.0
  %2679 = vmatpush2.xpose.msra.mxu0 0.0
  %2680 = vmatprep.mubr.f32.mxu0 0.0
  %2681 = vmatmul.mubr.f32.gmra.mxu0 %v2612
  %v2682 = vpop.f32.mrf.mxu0
  %v2683 = vadd.f32 %v346, %v2682
  %v2684 = vpop.f32.mrf.mxu0
  %2685 = vdwg.mxu0
  %2686 = vrot.lane.b32.xlu0 %v596, 104
  %v2687 = vpop.permute.xlu0 %2686
  %2688 = vrot.lane.b32.xlu0 %v612, 104
  %v2689 = vpop.permute.xlu0 %2688
  %v2690 = vsel %vm394, %v2687, 0
  %v2692 = vsel %vm394, %v2689, 0
  %2694 = vmatprep.subr.mxu0 0.0
  %2695 = vmatpush1.xpose.msra.mxu0 0.0
  %2696 = vmatprep.subr.mxu0 0.0
  %2697 = vmatpush1.xpose.msra.mxu0 0.0
  %2698 = vmatprep.subr.mxu0 0.0
  %2699 = vmatpush1.xpose.msra.mxu0 0.0
  %2700 = vmatprep.subr.mxu0 0.0
  %2701 = vmatpush1.xpose.msra.mxu0 0.0
  %2702 = vmatprep.subr.mxu0 0.0
  %2703 = vmatpush1.xpose.msra.mxu0 0.0
  %2704 = vmatprep.subr.mxu0 0.0
  %2705 = vmatpush1.xpose.msra.mxu0 0.0
  %2706 = vmatprep.subr.mxu0 0.0
  %2707 = vmatpush1.xpose.msra.mxu0 0.0
  %2708 = vmatprep.subr.mxu0 0.0
  %2709 = vmatpush1.xpose.msra.mxu0 0.0
  %2710 = vmatprep.subr.mxu0 0.0
  %2711 = vmatpush1.xpose.msra.mxu0 0.0
  %2712 = vmatprep.subr.mxu0 0.0
  %2713 = vmatpush1.xpose.msra.mxu0 0.0
  %2714 = vmatprep.subr.mxu0 0.0
  %2715 = vmatpush1.xpose.msra.mxu0 0.0
  %2716 = vmatprep.subr.mxu0 0.0
  %2717 = vmatpush1.xpose.msra.mxu0 0.0
  %2718 = vmatprep.subr.mxu0 0.0
  %2719 = vmatpush1.xpose.msra.mxu0 0.0
  %2720 = vmatprep.subr.mxu0 0.0
  %2721 = vmatpush1.xpose.msra.mxu0 0.0
  %2722 = vmatprep.subr.mxu0 0.0
  %2723 = vmatpush1.xpose.msra.mxu0 0.0
  %2724 = vmatprep.subr.mxu0 0.0
  %2725 = vmatpush1.xpose.msra.mxu0 %v2692
  %2726 = vmatprep.subr.mxu0 0.0
  %2727 = vmatpush2.xpose.msra.mxu0 0.0
  %2728 = vmatprep.subr.mxu0 0.0
  %2729 = vmatpush2.xpose.msra.mxu0 0.0
  %2730 = vmatprep.subr.mxu0 0.0
  %2731 = vmatpush2.xpose.msra.mxu0 0.0
  %2732 = vmatprep.subr.mxu0 0.0
  %2733 = vmatpush2.xpose.msra.mxu0 0.0
  %2734 = vmatprep.subr.mxu0 0.0
  %2735 = vmatpush2.xpose.msra.mxu0 0.0
  %2736 = vmatprep.subr.mxu0 0.0
  %2737 = vmatpush2.xpose.msra.mxu0 0.0
  %2738 = vmatprep.subr.mxu0 0.0
  %2739 = vmatpush2.xpose.msra.mxu0 0.0
  %2740 = vmatprep.subr.mxu0 0.0
  %2741 = vmatpush2.xpose.msra.mxu0 0.0
  %2742 = vmatprep.subr.mxu0 0.0
  %2743 = vmatpush2.xpose.msra.mxu0 0.0
  %2744 = vmatprep.subr.mxu0 0.0
  %2745 = vmatpush2.xpose.msra.mxu0 0.0
  %2746 = vmatprep.subr.mxu0 0.0
  %2747 = vmatpush2.xpose.msra.mxu0 0.0
  %2748 = vmatprep.subr.mxu0 0.0
  %2749 = vmatpush2.xpose.msra.mxu0 0.0
  %2750 = vmatprep.subr.mxu0 0.0
  %2751 = vmatpush2.xpose.msra.mxu0 0.0
  %2752 = vmatprep.subr.mxu0 0.0
  %2753 = vmatpush2.xpose.msra.mxu0 0.0
  %2754 = vmatprep.subr.mxu0 0.0
  %2755 = vmatpush2.xpose.msra.mxu0 0.0
  %2756 = vmatprep.subr.mxu0 0.0
  %2757 = vmatpush2.xpose.msra.mxu0 0.0
  %2758 = vmatprep.mubr.f32.mxu0 0.0
  %2759 = vmatmul.mubr.f32.gmra.mxu0 %v2690
  %v2760 = vpop.f32.mrf.mxu0
  %v2761 = vadd.f32 %v350, %v2760
  %v2762 = vpop.f32.mrf.mxu0
  %2763 = vdwg.mxu0
  %2764 = vrot.lane.b32.xlu0 %v705, 104
  %v2765 = vpop.permute.xlu0 %2764
  %2766 = vrot.lane.b32.xlu0 %v721, 104
  %v2767 = vpop.permute.xlu0 %2766
  %v2768 = vsel %vm394, %v2765, 0
  %v2770 = vsel %vm394, %v2767, 0
  %2772 = vmatprep.subr.mxu0 0.0
  %2773 = vmatpush1.xpose.msra.mxu0 0.0
  %2774 = vmatprep.subr.mxu0 0.0
  %2775 = vmatpush1.xpose.msra.mxu0 0.0
  %2776 = vmatprep.subr.mxu0 0.0
  %2777 = vmatpush1.xpose.msra.mxu0 0.0
  %2778 = vmatprep.subr.mxu0 0.0
  %2779 = vmatpush1.xpose.msra.mxu0 0.0
  %2780 = vmatprep.subr.mxu0 0.0
  %2781 = vmatpush1.xpose.msra.mxu0 0.0
  %2782 = vmatprep.subr.mxu0 0.0
  %2783 = vmatpush1.xpose.msra.mxu0 0.0
  %2784 = vmatprep.subr.mxu0 0.0
  %2785 = vmatpush1.xpose.msra.mxu0 0.0
  %2786 = vmatprep.subr.mxu0 0.0
  %2787 = vmatpush1.xpose.msra.mxu0 0.0
  %2788 = vmatprep.subr.mxu0 0.0
  %2789 = vmatpush1.xpose.msra.mxu0 0.0
  %2790 = vmatprep.subr.mxu0 0.0
  %2791 = vmatpush1.xpose.msra.mxu0 0.0
  %2792 = vmatprep.subr.mxu0 0.0
  %2793 = vmatpush1.xpose.msra.mxu0 0.0
  %2794 = vmatprep.subr.mxu0 0.0
  %2795 = vmatpush1.xpose.msra.mxu0 0.0
  %2796 = vmatprep.subr.mxu0 0.0
  %2797 = vmatpush1.xpose.msra.mxu0 0.0
  %2798 = vmatprep.subr.mxu0 0.0
  %2799 = vmatpush1.xpose.msra.mxu0 0.0
  %2800 = vmatprep.subr.mxu0 0.0
  %2801 = vmatpush1.xpose.msra.mxu0 0.0
  %2802 = vmatprep.subr.mxu0 0.0
  %2803 = vmatpush1.xpose.msra.mxu0 %v2770
  %2804 = vmatprep.subr.mxu0 0.0
  %2805 = vmatpush2.xpose.msra.mxu0 0.0
  %2806 = vmatprep.subr.mxu0 0.0
  %2807 = vmatpush2.xpose.msra.mxu0 0.0
  %2808 = vmatprep.subr.mxu0 0.0
  %2809 = vmatpush2.xpose.msra.mxu0 0.0
  %2810 = vmatprep.subr.mxu0 0.0
  %2811 = vmatpush2.xpose.msra.mxu0 0.0
  %2812 = vmatprep.subr.mxu0 0.0
  %2813 = vmatpush2.xpose.msra.mxu0 0.0
  %2814 = vmatprep.subr.mxu0 0.0
  %2815 = vmatpush2.xpose.msra.mxu0 0.0
  %2816 = vmatprep.subr.mxu0 0.0
  %2817 = vmatpush2.xpose.msra.mxu0 0.0
  %2818 = vmatprep.subr.mxu0 0.0
  %2819 = vmatpush2.xpose.msra.mxu0 0.0
  %2820 = vmatprep.subr.mxu0 0.0
  %2821 = vmatpush2.xpose.msra.mxu0 0.0
  %2822 = vmatprep.subr.mxu0 0.0
  %2823 = vmatpush2.xpose.msra.mxu0 0.0
  %2824 = vmatprep.subr.mxu0 0.0
  %2825 = vmatpush2.xpose.msra.mxu0 0.0
  %2826 = vmatprep.subr.mxu0 0.0
  %2827 = vmatpush2.xpose.msra.mxu0 0.0
  %2828 = vmatprep.subr.mxu0 0.0
  %2829 = vmatpush2.xpose.msra.mxu0 0.0
  %2830 = vmatprep.subr.mxu0 0.0
  %2831 = vmatpush2.xpose.msra.mxu0 0.0
  %2832 = vmatprep.subr.mxu0 0.0
  %2833 = vmatpush2.xpose.msra.mxu0 0.0
  %2834 = vmatprep.subr.mxu0 0.0
  %2835 = vmatpush2.xpose.msra.mxu0 0.0
  %2836 = vmatprep.mubr.f32.mxu0 0.0
  %2837 = vmatmul.mubr.f32.gmra.mxu0 %v2768
  %v2838 = vpop.f32.mrf.mxu0
  %v2839 = vadd.f32 %v354, %v2838
  %v2840 = vpop.f32.mrf.mxu0
  %2841 = vdwg.mxu0
  %v2842 = vsel %vm796, %v2605, -inf
  %2843 = vmax.xlane.f32.xlu0 %v2842
  %v2844 = vpop.xlane.xlu0 %2843
  %v2845 = vsel %vm796, %v2683, -inf
  %2846 = vmax.xlane.f32.xlu0 %v2845
  %v2847 = vpop.xlane.xlu0 %2846
  %v2848 = vsel %vm796, %v2761, -inf
  %2849 = vmax.xlane.f32.xlu0 %v2848
  %v2850 = vpop.xlane.xlu0 %2849
  %v2851 = vsel %vm796, %v2839, -inf
  %2852 = vmax.xlane.f32.xlu0 %v2851
  %v2853 = vpop.xlane.xlu0 %2852
  %v2854 = vsub.f32 %v2605, %v2844
  %v2855 = vsub.f32 %v2683, %v2847
  %v2856 = vsub.f32 %v2761, %v2850
  %v2857 = vsub.f32 %v2839, %v2853
  %v2858 = vmul.f32 %v2854, 1.442695
  %v2859 = vpow.pop %v2858
  %v2860 = vmul.f32 %v2855, 1.442695
  %v2861 = vpow.pop %v2860
  %v2862 = vmul.f32 %v2856, 1.442695
  %v2863 = vpow.pop %v2862
  %v2864 = vmul.f32 %v2857, 1.442695
  %v2865 = vpow.pop %v2864
  %v2866 = vsel %vm796, %v2859, 0.0
  %2867 = vadd.xlane.f32.xlu0 %v2866
  %v2868 = vpop.xlane.xlu0 %2867
  %v2869 = vsel %vm796, %v2861, 0.0
  %2870 = vadd.xlane.f32.xlu0 %v2869
  %v2871 = vpop.xlane.xlu0 %2870
  %v2872 = vsel %vm796, %v2863, 0.0
  %2873 = vadd.xlane.f32.xlu0 %v2872
  %v2874 = vpop.xlane.xlu0 %2873
  %v2875 = vsel %vm796, %v2865, 0.0
  %2876 = vadd.xlane.f32.xlu0 %v2875
  %v2877 = vpop.xlane.xlu0 %2876
  %v2878 = vrcp.pop %v2868
  %v2879 = vrcp.pop %v2871
  %v2880 = vrcp.pop %v2874
  %v2881 = vrcp.pop %v2877
  %v2882 = vmul.f32 %v2859, %v2878
  %v2883 = vmul.f32 %v2861, %v2879
  %v2884 = vmul.f32 %v2863, %v2880
  %v2885 = vmul.f32 %v2865, %v2881
  %v2886 = vmul.f32 %v2882, %v844
  %v2887 = vmul.f32 %v2883, %v848
  %v2888 = vmul.f32 %v2884, %v852
  %v2889 = vmul.f32 %v2885, %v856
  %v2891 = vsel %vm861, %v2886, 0
  %v2893 = vsel %vm865, %v2533, 0
  %2895 = vmatprep.subr.mxu0 0.0
  %2896 = vmatpush1.msra.mxu0 0.0
  %2897 = vmatprep.subr.mxu0 0.0
  %2898 = vmatpush1.msra.mxu0 0.0
  %2899 = vmatprep.subr.mxu0 0.0
  %2900 = vmatpush1.msra.mxu0 0.0
  %2901 = vmatprep.subr.mxu0 0.0
  %2902 = vmatpush1.msra.mxu0 0.0
  %2903 = vmatprep.subr.mxu0 0.0
  %2904 = vmatpush1.msra.mxu0 0.0
  %2905 = vmatprep.subr.mxu0 0.0
  %2906 = vmatpush1.msra.mxu0 0.0
  %2907 = vmatprep.subr.mxu0 0.0
  %2908 = vmatpush1.msra.mxu0 0.0
  %2909 = vmatprep.subr.mxu0 0.0
  %2910 = vmatpush1.msra.mxu0 0.0
  %2911 = vmatprep.subr.mxu0 0.0
  %2912 = vmatpush1.msra.mxu0 0.0
  %2913 = vmatprep.subr.mxu0 0.0
  %2914 = vmatpush1.msra.mxu0 0.0
  %2915 = vmatprep.subr.mxu0 0.0
  %2916 = vmatpush1.msra.mxu0 0.0
  %2917 = vmatprep.subr.mxu0 0.0
  %2918 = vmatpush1.msra.mxu0 0.0
  %2919 = vmatprep.subr.mxu0 0.0
  %2920 = vmatpush1.msra.mxu0 0.0
  %2921 = vmatprep.subr.mxu0 0.0
  %2922 = vmatpush1.msra.mxu0 0.0
  %2923 = vmatprep.subr.mxu0 0.0
  %2924 = vmatpush1.msra.mxu0 0.0
  %2925 = vmatprep.subr.mxu0 0.0
  %2926 = vmatpush1.msra.mxu0 %v2893
  %2927 = vmatprep.subr.mxu0 0.0
  %2928 = vmatpush2.msra.mxu0 0.0
  %2929 = vmatprep.subr.mxu0 0.0
  %2930 = vmatpush2.msra.mxu0 0.0
  %2931 = vmatprep.subr.mxu0 0.0
  %2932 = vmatpush2.msra.mxu0 0.0
  %2933 = vmatprep.subr.mxu0 0.0
  %2934 = vmatpush2.msra.mxu0 0.0
  %2935 = vmatprep.subr.mxu0 0.0
  %2936 = vmatpush2.msra.mxu0 0.0
  %2937 = vmatprep.subr.mxu0 0.0
  %2938 = vmatpush2.msra.mxu0 0.0
  %2939 = vmatprep.subr.mxu0 0.0
  %2940 = vmatpush2.msra.mxu0 0.0
  %2941 = vmatprep.subr.mxu0 0.0
  %2942 = vmatpush2.msra.mxu0 0.0
  %2943 = vmatprep.subr.mxu0 0.0
  %2944 = vmatpush2.msra.mxu0 0.0
  %2945 = vmatprep.subr.mxu0 0.0
  %2946 = vmatpush2.msra.mxu0 0.0
  %2947 = vmatprep.subr.mxu0 0.0
  %2948 = vmatpush2.msra.mxu0 0.0
  %2949 = vmatprep.subr.mxu0 0.0
  %2950 = vmatpush2.msra.mxu0 0.0
  %2951 = vmatprep.subr.mxu0 0.0
  %2952 = vmatpush2.msra.mxu0 0.0
  %2953 = vmatprep.subr.mxu0 0.0
  %2954 = vmatpush2.msra.mxu0 0.0
  %2955 = vmatprep.subr.mxu0 0.0
  %2956 = vmatpush2.msra.mxu0 0.0
  %2957 = vmatprep.subr.mxu0 0.0
  %2958 = vmatpush2.msra.mxu0 0.0
  %2959 = vmatprep.mubr.f32.mxu0 0.0
  %2960 = vmatmul.mubr.f32.gmra.mxu0 %v2891
  %v2961 = vpop.f32.mrf.mxu0
  %v2962 = vadd.f32 0.0, %v2961
  %v2963 = vpop.f32.mrf.mxu0
  %2964 = vdwg.mxu0
  %v2966 = vsel %vm861, %v2887, 0
  %v2968 = vsel %vm865, %v2611, 0
  %2970 = vmatprep.subr.mxu0 0.0
  %2971 = vmatpush1.msra.mxu0 0.0
  %2972 = vmatprep.subr.mxu0 0.0
  %2973 = vmatpush1.msra.mxu0 0.0
  %2974 = vmatprep.subr.mxu0 0.0
  %2975 = vmatpush1.msra.mxu0 0.0
  %2976 = vmatprep.subr.mxu0 0.0
  %2977 = vmatpush1.msra.mxu0 0.0
  %2978 = vmatprep.subr.mxu0 0.0
  %2979 = vmatpush1.msra.mxu0 0.0
  %2980 = vmatprep.subr.mxu0 0.0
  %2981 = vmatpush1.msra.mxu0 0.0
  %2982 = vmatprep.subr.mxu0 0.0
  %2983 = vmatpush1.msra.mxu0 0.0
  %2984 = vmatprep.subr.mxu0 0.0
  %2985 = vmatpush1.msra.mxu0 0.0
  %2986 = vmatprep.subr.mxu0 0.0
  %2987 = vmatpush1.msra.mxu0 0.0
  %2988 = vmatprep.subr.mxu0 0.0
  %2989 = vmatpush1.msra.mxu0 0.0
  %2990 = vmatprep.subr.mxu0 0.0
  %2991 = vmatpush1.msra.mxu0 0.0
  %2992 = vmatprep.subr.mxu0 0.0
  %2993 = vmatpush1.msra.mxu0 0.0
  %2994 = vmatprep.subr.mxu0 0.0
  %2995 = vmatpush1.msra.mxu0 0.0
  %2996 = vmatprep.subr.mxu0 0.0
  %2997 = vmatpush1.msra.mxu0 0.0
  %2998 = vmatprep.subr.mxu0 0.0
  %2999 = vmatpush1.msra.mxu0 0.0
  %3000 = vmatprep.subr.mxu0 0.0
  %3001 = vmatpush1.msra.mxu0 %v2968
  %3002 = vmatprep.subr.mxu0 0.0
  %3003 = vmatpush2.msra.mxu0 0.0
  %3004 = vmatprep.subr.mxu0 0.0
  %3005 = vmatpush2.msra.mxu0 0.0
  %3006 = vmatprep.subr.mxu0 0.0
  %3007 = vmatpush2.msra.mxu0 0.0
  %3008 = vmatprep.subr.mxu0 0.0
  %3009 = vmatpush2.msra.mxu0 0.0
  %3010 = vmatprep.subr.mxu0 0.0
  %3011 = vmatpush2.msra.mxu0 0.0
  %3012 = vmatprep.subr.mxu0 0.0
  %3013 = vmatpush2.msra.mxu0 0.0
  %3014 = vmatprep.subr.mxu0 0.0
  %3015 = vmatpush2.msra.mxu0 0.0
  %3016 = vmatprep.subr.mxu0 0.0
  %3017 = vmatpush2.msra.mxu0 0.0
  %3018 = vmatprep.subr.mxu0 0.0
  %3019 = vmatpush2.msra.mxu0 0.0
  %3020 = vmatprep.subr.mxu0 0.0
  %3021 = vmatpush2.msra.mxu0 0.0
  %3022 = vmatprep.subr.mxu0 0.0
  %3023 = vmatpush2.msra.mxu0 0.0
  %3024 = vmatprep.subr.mxu0 0.0
  %3025 = vmatpush2.msra.mxu0 0.0
  %3026 = vmatprep.subr.mxu0 0.0
  %3027 = vmatpush2.msra.mxu0 0.0
  %3028 = vmatprep.subr.mxu0 0.0
  %3029 = vmatpush2.msra.mxu0 0.0
  %3030 = vmatprep.subr.mxu0 0.0
  %3031 = vmatpush2.msra.mxu0 0.0
  %3032 = vmatprep.subr.mxu0 0.0
  %3033 = vmatpush2.msra.mxu0 0.0
  %3034 = vmatprep.mubr.f32.mxu0 0.0
  %3035 = vmatmul.mubr.f32.gmra.mxu0 %v2966
  %v3036 = vpop.f32.mrf.mxu0
  %v3037 = vadd.f32 0.0, %v3036
  %v3038 = vpop.f32.mrf.mxu0
  %3039 = vdwg.mxu0
  %v3041 = vsel %vm861, %v2888, 0
  %v3043 = vsel %vm865, %v2689, 0
  %3045 = vmatprep.subr.mxu0 0.0
  %3046 = vmatpush1.msra.mxu0 0.0
  %3047 = vmatprep.subr.mxu0 0.0
  %3048 = vmatpush1.msra.mxu0 0.0
  %3049 = vmatprep.subr.mxu0 0.0
  %3050 = vmatpush1.msra.mxu0 0.0
  %3051 = vmatprep.subr.mxu0 0.0
  %3052 = vmatpush1.msra.mxu0 0.0
  %3053 = vmatprep.subr.mxu0 0.0
  %3054 = vmatpush1.msra.mxu0 0.0
  %3055 = vmatprep.subr.mxu0 0.0
  %3056 = vmatpush1.msra.mxu0 0.0
  %3057 = vmatprep.subr.mxu0 0.0
  %3058 = vmatpush1.msra.mxu0 0.0
  %3059 = vmatprep.subr.mxu0 0.0
  %3060 = vmatpush1.msra.mxu0 0.0
  %3061 = vmatprep.subr.mxu0 0.0
  %3062 = vmatpush1.msra.mxu0 0.0
  %3063 = vmatprep.subr.mxu0 0.0
  %3064 = vmatpush1.msra.mxu0 0.0
  %3065 = vmatprep.subr.mxu0 0.0
  %3066 = vmatpush1.msra.mxu0 0.0
  %3067 = vmatprep.subr.mxu0 0.0
  %3068 = vmatpush1.msra.mxu0 0.0
  %3069 = vmatprep.subr.mxu0 0.0
  %3070 = vmatpush1.msra.mxu0 0.0
  %3071 = vmatprep.subr.mxu0 0.0
  %3072 = vmatpush1.msra.mxu0 0.0
  %3073 = vmatprep.subr.mxu0 0.0
  %3074 = vmatpush1.msra.mxu0 0.0
  %3075 = vmatprep.subr.mxu0 0.0
  %3076 = vmatpush1.msra.mxu0 %v3043
  %3077 = vmatprep.subr.mxu0 0.0
  %3078 = vmatpush2.msra.mxu0 0.0
  %3079 = vmatprep.subr.mxu0 0.0
  %3080 = vmatpush2.msra.mxu0 0.0
  %3081 = vmatprep.subr.mxu0 0.0
  %3082 = vmatpush2.msra.mxu0 0.0
  %3083 = vmatprep.subr.mxu0 0.0
  %3084 = vmatpush2.msra.mxu0 0.0
  %3085 = vmatprep.subr.mxu0 0.0
  %3086 = vmatpush2.msra.mxu0 0.0
  %3087 = vmatprep.subr.mxu0 0.0
  %3088 = vmatpush2.msra.mxu0 0.0
  %3089 = vmatprep.subr.mxu0 0.0
  %3090 = vmatpush2.msra.mxu0 0.0
  %3091 = vmatprep.subr.mxu0 0.0
  %3092 = vmatpush2.msra.mxu0 0.0
  %3093 = vmatprep.subr.mxu0 0.0
  %3094 = vmatpush2.msra.mxu0 0.0
  %3095 = vmatprep.subr.mxu0 0.0
  %3096 = vmatpush2.msra.mxu0 0.0
  %3097 = vmatprep.subr.mxu0 0.0
  %3098 = vmatpush2.msra.mxu0 0.0
  %3099 = vmatprep.subr.mxu0 0.0
  %3100 = vmatpush2.msra.mxu0 0.0
  %3101 = vmatprep.subr.mxu0 0.0
  %3102 = vmatpush2.msra.mxu0 0.0
  %3103 = vmatprep.subr.mxu0 0.0
  %3104 = vmatpush2.msra.mxu0 0.0
  %3105 = vmatprep.subr.mxu0 0.0
  %3106 = vmatpush2.msra.mxu0 0.0
  %3107 = vmatprep.subr.mxu0 0.0
  %3108 = vmatpush2.msra.mxu0 0.0
  %3109 = vmatprep.mubr.f32.mxu0 0.0
  %3110 = vmatmul.mubr.f32.gmra.mxu0 %v3041
  %v3111 = vpop.f32.mrf.mxu0
  %v3112 = vadd.f32 0.0, %v3111
  %v3113 = vpop.f32.mrf.mxu0
  %3114 = vdwg.mxu0
  %v3116 = vsel %vm861, %v2889, 0
  %v3118 = vsel %vm865, %v2767, 0
  %3120 = vmatprep.subr.mxu0 0.0
  %3121 = vmatpush1.msra.mxu0 0.0
  %3122 = vmatprep.subr.mxu0 0.0
  %3123 = vmatpush1.msra.mxu0 0.0
  %3124 = vmatprep.subr.mxu0 0.0
  %3125 = vmatpush1.msra.mxu0 0.0
  %3126 = vmatprep.subr.mxu0 0.0
  %3127 = vmatpush1.msra.mxu0 0.0
  %3128 = vmatprep.subr.mxu0 0.0
  %3129 = vmatpush1.msra.mxu0 0.0
  %3130 = vmatprep.subr.mxu0 0.0
  %3131 = vmatpush1.msra.mxu0 0.0
  %3132 = vmatprep.subr.mxu0 0.0
  %3133 = vmatpush1.msra.mxu0 0.0
  %3134 = vmatprep.subr.mxu0 0.0
  %3135 = vmatpush1.msra.mxu0 0.0
  %3136 = vmatprep.subr.mxu0 0.0
  %3137 = vmatpush1.msra.mxu0 0.0
  %3138 = vmatprep.subr.mxu0 0.0
  %3139 = vmatpush1.msra.mxu0 0.0
  %3140 = vmatprep.subr.mxu0 0.0
  %3141 = vmatpush1.msra.mxu0 0.0
  %3142 = vmatprep.subr.mxu0 0.0
  %3143 = vmatpush1.msra.mxu0 0.0
  %3144 = vmatprep.subr.mxu0 0.0
  %3145 = vmatpush1.msra.mxu0 0.0
  %3146 = vmatprep.subr.mxu0 0.0
  %3147 = vmatpush1.msra.mxu0 0.0
  %3148 = vmatprep.subr.mxu0 0.0
  %3149 = vmatpush1.msra.mxu0 0.0
  %3150 = vmatprep.subr.mxu0 0.0
  %3151 = vmatpush1.msra.mxu0 %v3118
  %3152 = vmatprep.subr.mxu0 0.0
  %3153 = vmatpush2.msra.mxu0 0.0
  %3154 = vmatprep.subr.mxu0 0.0
  %3155 = vmatpush2.msra.mxu0 0.0
  %3156 = vmatprep.subr.mxu0 0.0
  %3157 = vmatpush2.msra.mxu0 0.0
  %3158 = vmatprep.subr.mxu0 0.0
  %3159 = vmatpush2.msra.mxu0 0.0
  %3160 = vmatprep.subr.mxu0 0.0
  %3161 = vmatpush2.msra.mxu0 0.0
  %3162 = vmatprep.subr.mxu0 0.0
  %3163 = vmatpush2.msra.mxu0 0.0
  %3164 = vmatprep.subr.mxu0 0.0
  %3165 = vmatpush2.msra.mxu0 0.0
  %3166 = vmatprep.subr.mxu0 0.0
  %3167 = vmatpush2.msra.mxu0 0.0
  %3168 = vmatprep.subr.mxu0 0.0
  %3169 = vmatpush2.msra.mxu0 0.0
  %3170 = vmatprep.subr.mxu0 0.0
  %3171 = vmatpush2.msra.mxu0 0.0
  %3172 = vmatprep.subr.mxu0 0.0
  %3173 = vmatpush2.msra.mxu0 0.0
  %3174 = vmatprep.subr.mxu0 0.0
  %3175 = vmatpush2.msra.mxu0 0.0
  %3176 = vmatprep.subr.mxu0 0.0
  %3177 = vmatpush2.msra.mxu0 0.0
  %3178 = vmatprep.subr.mxu0 0.0
  %3179 = vmatpush2.msra.mxu0 0.0
  %3180 = vmatprep.subr.mxu0 0.0
  %3181 = vmatpush2.msra.mxu0 0.0
  %3182 = vmatprep.subr.mxu0 0.0
  %3183 = vmatpush2.msra.mxu0 0.0
  %3184 = vmatprep.mubr.f32.mxu0 0.0
  %3185 = vmatmul.mubr.f32.gmra.mxu0 %v3116
  %v3186 = vpop.f32.mrf.mxu0
  %v3187 = vadd.f32 0.0, %v3186
  %v3188 = vpop.f32.mrf.mxu0
  %3189 = vdwg.mxu0
  %3194 = vrot.lane.b32.xlu0 %v2962, 24
  %v3195 = vpop.permute.xlu0 %3194
  %3196 = vrot.lane.b32.xlu0 %v3037, 24
  %v3197 = vpop.permute.xlu0 %3196
  %3198 = vrot.lane.b32.xlu0 %v3112, 24
  %v3199 = vpop.permute.xlu0 %3198
  %3200 = vrot.lane.b32.xlu0 %v3187, 24
  %v3201 = vpop.permute.xlu0 %3200
  %vm3206 = vcmask 259264
  %3207 = vst.msk [vmem:[%s3] sm:$0x3f] %vm3206, %v3195
  %3208 = vst.msk [vmem:[%s3 + $0x8] sm:$0x3f] %vm3206, %v3197
  %3209 = vst.msk [vmem:[%s3 + $0x10] sm:$0x3f] %vm3206, %v3199
  %3210 = vst.msk [vmem:[%s3 + $0x18] sm:$0x3f] %vm3206, %v3201
  // Predicated region
  $region14: #{_lambda_.12} parent=0 // pred_check
    _
  $region15: #{_lambda_.12} parent=0 // pred_check_branch
    %3212 = sbr.rel (0) target = $region17
  $region16: #{_lambda_.12} parent=0 // pred_region
    _
  $region17: #{_lambda_.12} parent=0 // pred_fallthru
    _
  // Predicated region
  $region18: #{_lambda_.12} parent=0 // pred_check
    _
  $region19: #{_lambda_.12} parent=0 // pred_check_branch
    %3214 = sbr.rel (0) target = $region21
  $region20: #{_lambda_.12} parent=0 // pred_region
    _
  $region21: #{_lambda_.12} parent=0 // pred_fallthru
    _

</llo_original>
